<compile_context>
chip_gen: v6e
topology: v6e:2x2x1
jax: 0.10.0
libtpu: 0.0.40
codegen_flags: <defaults>
</compile_context>

<pallas_src>
import jax
import jax.numpy as jnp
from jax import lax
from jax.experimental import pallas as pl
from jax.experimental.pallas import tpu as pltpu

HIDDEN = 256  # fixed by the module (hidden_size=256)


# ----------------------------- fused Pallas kernel ---------------------------

def fused_char_lstm_kernel(gx0_ref, whh0_ref, wih1_ref, whh1_ref, b1_ref,
                           wlin_ref, blin_ref, out_ref, h_seq, gx1_sc):
    """Fused 2-layer LSTM + linear head.

    gx0_ref:  (T, B, 4H)  layer-0 gate inputs (embedding gather, bias folded in)
    whh0_ref: (H, 4H)     layer-0 hidden->gates weights (transposed)
    wih1_ref: (H, 4H)     layer-1 input->gates weights (transposed)
    whh1_ref: (H, 4H)     layer-1 hidden->gates weights (transposed)
    b1_ref:   (1, 4H)     layer-1 combined bias (b_ih + b_hh)
    wlin_ref: (H, Vp)     linear head weights (transposed, lane-padded)
    blin_ref: (1, Vp)     linear head bias (lane-padded)
    out_ref:  (T*B, Vp)   logits, time-major rows, lane-dense
    h_seq:    (T, B, H)   VMEM scratch: per-timestep hidden states (reused by both layers)
    gx1_sc:   (T, B, 4H)  VMEM scratch: layer-1 hoisted input projection
    Gate order matches PyTorch: i, f, g, o.
    """
    T, B, _ = gx0_ref.shape
    H = h_seq.shape[-1]

    def run_layer(gx_ref, whh_mat, out_seq_ref):
        zeros = jnp.zeros((B, H), jnp.float32)

        def step(t, carry):
            h, c = carry
            # Only the recurrent matmul + gate math sit on the serial path.
            g = gx_ref[t] + jnp.dot(h, whh_mat,
                                    preferred_element_type=jnp.float32)
            i_g = jax.nn.sigmoid(g[:, 0 * H:1 * H])
            f_g = jax.nn.sigmoid(g[:, 1 * H:2 * H])
            g_g = jnp.tanh(g[:, 2 * H:3 * H])
            o_g = jax.nn.sigmoid(g[:, 3 * H:4 * H])
            c = f_g * c + i_g * g_g
            h = o_g * jnp.tanh(c)
            out_seq_ref[t] = h
            return (h, c)

        # Short fixed trip count: unroll so the LLO scheduler sees across steps.
        lax.fori_loop(0, T, step, (zeros, zeros), unroll=True)

    # ---- layer 0 (input projection already hoisted to the JAX-side gather) ----
    run_layer(gx0_ref, whh0_ref[...], h_seq)

    # ---- layer 1 input projection: one big matmul with M = T*B (fills the MXU) ----
    gx1_sc[...] = (jnp.dot(h_seq[...].reshape(T * B, H), wih1_ref[...],
                           preferred_element_type=jnp.float32)
                   + b1_ref[...]).reshape(T, B, 4 * H)

    # ---- layer 1 recurrence (reuse h_seq scratch for layer-1 hidden states) ----
    run_layer(gx1_sc, whh1_ref[...], h_seq)

    # ---- linear head: one big matmul, lane-dense (Vp multiple of 128) store ----
    out_ref[...] = (jnp.dot(h_seq[...].reshape(T * B, H), wlin_ref[...],
                            preferred_element_type=jnp.float32)
                    + blin_ref[...])


# ------------------------------- wrappers -----------------------------------

def _vmem_spec():
    return pl.BlockSpec(memory_space=pltpu.MemorySpace.VMEM)


def prepare_params(params):
    """One-time weight plumbing: transpose, combine biases, pad head lanes."""
    H = HIDDEN
    V = params["vocab_len"]
    Vp = ((V + 127) // 128) * 128
    # Layer-0 input projection of a one-hot vector == row-gather of W_ih^T.
    # Fold the layer-0 combined bias straight into the gather table.
    emb0 = jnp.transpose(params["w_ih_l0"]) + (params["b_ih_l0"] + params["b_hh_l0"])[None, :]
    wlin_t = jnp.zeros((H, Vp), jnp.float32).at[:, :V].set(jnp.transpose(params["w_lin"]))
    blin = jnp.zeros((1, Vp), jnp.float32).at[:, :V].set(params["b_lin"][None, :])
    return dict(
        vocab_len=V,
        vocab_pad=Vp,
        emb0=emb0,                                                  # (V, 4H)
        whh0_t=jnp.transpose(params["w_hh_l0"]),                    # (H, 4H)
        wih1_t=jnp.transpose(params["w_ih_l1"]),                    # (H, 4H)
        whh1_t=jnp.transpose(params["w_hh_l1"]),                    # (H, 4H)
        b1=(params["b_ih_l1"] + params["b_hh_l1"]).reshape(1, 4 * H),
        wlin_t=wlin_t,                                              # (H, Vp)
        blin=blin,                                                  # (1, Vp)
    )


def character_lstm_forward(x, prepared):
    """x: (B, T) int32 character indices -> logits (B, T, V)."""
    B, T = x.shape
    V = prepared["vocab_len"]
    Vp = prepared["vocab_pad"]
    H = HIDDEN
    Bp = ((B + 7) // 8) * 8  # pad batch to a full f32 sublane group

    # Layer-0 gate inputs via embedding gather (bias folded in), time-major.
    gx0 = jnp.take(prepared["emb0"], x, axis=0)        # (B, T, 4H)
    gx0 = jnp.transpose(gx0, (1, 0, 2))                # (T, B, 4H)
    if Bp != B:
        gx0 = jnp.pad(gx0, ((0, 0), (0, Bp - B), (0, 0)))

    # nn.LSTM dropout(p=0.3) between layers: no-op in eval mode.
    out = pl.pallas_call(
        fused_char_lstm_kernel,
        out_shape=jax.ShapeDtypeStruct((T * Bp, Vp), jnp.float32),
        in_specs=[_vmem_spec()] * 7,
        out_specs=_vmem_spec(),
        scratch_shapes=[
            pltpu.VMEM((T, Bp, H), jnp.float32),        # hidden-state sequence (reused)
            pltpu.VMEM((T, Bp, 4 * H), jnp.float32),    # layer-1 hoisted input proj
        ],
    )(gx0, prepared["whh0_t"], prepared["wih1_t"], prepared["whh1_t"],
      prepared["b1"], prepared["wlin_t"], prepared["blin"])

    out = out.reshape(T, Bp, Vp)
    return jnp.transpose(out, (1, 0, 2))[:B, :, :V]     # (B, T, V)


# ------------------------- pure-JAX reference (check) ------------------------

def _lstm_ref(seq_btd, w_ih, w_hh, b_ih, b_hh):
    B = seq_btd.shape[0]
    H = HIDDEN

    def step(carry, xt):
        h, c = carry
        g = xt @ w_ih.T + h @ w_hh.T + b_ih + b_hh
        i, f, gg, o = jnp.split(g, 4, axis=-1)
        i, f, gg, o = jax.nn.sigmoid(i), jax.nn.sigmoid(f), jnp.tanh(gg), jax.nn.sigmoid(o)
        c = f * c + i * gg
        h = o * jnp.tanh(c)
        return (h, c), h

    xs = jnp.transpose(seq_btd, (1, 0, 2))
    (_, _), hs = lax.scan(step, (jnp.zeros((B, H), jnp.float32),
                                 jnp.zeros((B, H), jnp.float32)), xs)
    return jnp.transpose(hs, (1, 0, 2))


def character_lstm_reference(x, params):
    V = params["vocab_len"]
    onehot = (jnp.arange(V)[None, None, :] == x[:, :, None]).astype(jnp.float32)
    h = _lstm_ref(onehot, params["w_ih_l0"], params["w_hh_l0"],
                  params["b_ih_l0"], params["b_hh_l0"])
    h = _lstm_ref(h, params["w_ih_l1"], params["w_hh_l1"],
                  params["b_ih_l1"], params["b_hh_l1"])
    return h @ params["w_lin"].T + params["b_lin"]


# ---------------------------------- params ----------------------------------

def init_params(key, vocab_len):
    H = HIDDEN
    bound = 1.0 / (H ** 0.5)  # PyTorch LSTM/Linear-style uniform init bound
    keys = jax.random.split(key, 10)

    def u(k_, shape):
        return jax.random.uniform(k_, shape, jnp.float32, -bound, bound)

    return dict(
        vocab_len=vocab_len,
        w_ih_l0=u(keys[0], (4 * H, vocab_len)),
        w_hh_l0=u(keys[1], (4 * H, H)),
        b_ih_l0=u(keys[2], (4 * H,)),
        b_hh_l0=u(keys[3], (4 * H,)),
        w_ih_l1=u(keys[4], (4 * H, H)),
        w_hh_l1=u(keys[5], (4 * H, H)),
        b_ih_l1=u(keys[6], (4 * H,)),
        b_hh_l1=u(keys[7], (4 * H,)),
        w_lin=u(keys[8], (vocab_len, H)),
        b_lin=u(keys[9], (vocab_len,)),
    )


if __name__ == "__main__":
    VOCAB = 32
    B, T = 2, 8

    key = jax.random.PRNGKey(0)
    k_param, k_x = jax.random.split(key)
    params = init_params(k_param, VOCAB)
    prepared = prepare_params(params)
    x = jax.random.randint(k_x, (B, T), 0, VOCAB, dtype=jnp.int32)

    out = character_lstm_forward(x, prepared)
    out = jax.block_until_ready(out)
    assert out.shape == (B, T, VOCAB), out.shape

    ref = jax.block_until_ready(character_lstm_reference(x, params))
    assert jnp.allclose(out, ref, rtol=1e-4, atol=1e-4), float(jnp.max(jnp.abs(out - ref)))

    print("KERNEL_OK")
</pallas_src>

<mosaic_0001>
module attributes {stable_mosaic.version = 11 : i64} {
  func.func @fused_char_lstm_kernel(%arg0: memref<8x8x1024xf32, #tpu.memory_space<vmem>>, %arg1: memref<256x1024xf32, #tpu.memory_space<vmem>>, %arg2: memref<256x1024xf32, #tpu.memory_space<vmem>>, %arg3: memref<256x1024xf32, #tpu.memory_space<vmem>>, %arg4: memref<1x1024xf32, #tpu.memory_space<vmem>>, %arg5: memref<256x128xf32, #tpu.memory_space<vmem>>, %arg6: memref<1x128xf32, #tpu.memory_space<vmem>>, %arg7: memref<64x128xf32, #tpu.memory_space<vmem>>, %arg8: memref<8x8x256xf32, #tpu.memory_space<vmem>>, %arg9: memref<8x8x1024xf32, #tpu.memory_space<vmem>>) attributes {dimension_semantics = [], scalar_prefetch = 0 : i64, scratch_operands = 2 : i64, tpu.core_type = #tpu.core_type<tc>} {
    %c0 = arith.constant 0 : index
    %c0_0 = arith.constant 0 : index
    %0 = vector.load %arg1[%c0, %c0_0] : memref<256x1024xf32, #tpu.memory_space<vmem>>, vector<256x1024xf32>
    %cst = arith.constant 0.000000e+00 : f32
    %1 = vector.broadcast %cst : f32 to vector<8x256xf32>
    %c0_i32 = arith.constant 0 : i32
    %2 = arith.index_cast %c0_i32 : i32 to index
    %c0_1 = arith.constant 0 : index
    %c0_2 = arith.constant 0 : index
    %3 = vector.load %arg0[%2, %c0_1, %c0_2] : memref<8x8x1024xf32, #tpu.memory_space<vmem>>, vector<1x8x1024xf32>
    %4 = vector.shape_cast %3 : vector<1x8x1024xf32> to vector<8x1024xf32>
    %cst_3 = arith.constant dense<0.000000e+00> : vector<8x1024xf32>
    %5 = tpu.matmul %1, %0, %cst_3 {dimension_numbers = #tpu.dot_dimension_numbers<[1], [0], [0], [1], [0, 0, 1, 1], [], []>} : vector<8x256xf32>, vector<256x1024xf32>, vector<8x1024xf32> -> vector<8x1024xf32>
    %6 = arith.addf %4, %5 : vector<8x1024xf32>
    %7 = vector.extract_strided_slice %6 {offsets = [0, 0], sizes = [8, 256], strides = [1, 1]} : vector<8x1024xf32> to vector<8x256xf32>
    %8 = arith.negf %7 : vector<8x256xf32>
    %9 = math.exp %8 : vector<8x256xf32>
    %cst_4 = arith.constant 1.000000e+00 : f32
    %10 = vector.broadcast %cst_4 : f32 to vector<8x256xf32>
    %11 = arith.addf %10, %9 : vector<8x256xf32>
    %12 = arith.divf %10, %11 : vector<8x256xf32>
    %13 = vector.extract_strided_slice %6 {offsets = [0, 256], sizes = [8, 256], strides = [1, 1]} : vector<8x1024xf32> to vector<8x256xf32>
    %14 = arith.negf %13 : vector<8x256xf32>
    %15 = math.exp %14 : vector<8x256xf32>
    %cst_5 = arith.constant 1.000000e+00 : f32
    %16 = vector.broadcast %cst_5 : f32 to vector<8x256xf32>
    %17 = arith.addf %16, %15 : vector<8x256xf32>
    %18 = arith.divf %16, %17 : vector<8x256xf32>
    %19 = vector.extract_strided_slice %6 {offsets = [0, 512], sizes = [8, 256], strides = [1, 1]} : vector<8x1024xf32> to vector<8x256xf32>
    %20 = math.tanh %19 : vector<8x256xf32>
    %21 = vector.extract_strided_slice %6 {offsets = [0, 768], sizes = [8, 256], strides = [1, 1]} : vector<8x1024xf32> to vector<8x256xf32>
    %22 = arith.negf %21 : vector<8x256xf32>
    %23 = math.exp %22 : vector<8x256xf32>
    %cst_6 = arith.constant 1.000000e+00 : f32
    %24 = vector.broadcast %cst_6 : f32 to vector<8x256xf32>
    %25 = arith.addf %24, %23 : vector<8x256xf32>
    %26 = arith.divf %24, %25 : vector<8x256xf32>
    %27 = arith.mulf %18, %1 : vector<8x256xf32>
    %28 = arith.mulf %12, %20 : vector<8x256xf32>
    %29 = arith.addf %27, %28 : vector<8x256xf32>
    %30 = math.tanh %29 : vector<8x256xf32>
    %31 = arith.mulf %26, %30 : vector<8x256xf32>
    %32 = arith.index_cast %c0_i32 : i32 to index
    %c0_7 = arith.constant 0 : index
    %c0_8 = arith.constant 0 : index
    %33 = vector.load %arg8[%32, %c0_7, %c0_8] : memref<8x8x256xf32, #tpu.memory_space<vmem>>, vector<1x8x256xf32>
    %34 = vector.shape_cast %33 : vector<1x8x256xf32> to vector<8x256xf32>
    %35 = vector.shape_cast %31 : vector<8x256xf32> to vector<1x8x256xf32>
    tpu.vector_store %arg8[%32, %c0_7, %c0_8], %35 {strides = array<i32>} : memref<8x8x256xf32, #tpu.memory_space<vmem>>, vector<1x8x256xf32>,
    %c1_i32 = arith.constant 1 : i32
    %36 = arith.index_cast %c1_i32 : i32 to index
    %c0_9 = arith.constant 0 : index
    %c0_10 = arith.constant 0 : index
    %37 = vector.load %arg0[%36, %c0_9, %c0_10] : memref<8x8x1024xf32, #tpu.memory_space<vmem>>, vector<1x8x1024xf32>
    %38 = vector.shape_cast %37 : vector<1x8x1024xf32> to vector<8x1024xf32>
    %cst_11 = arith.constant dense<0.000000e+00> : vector<8x1024xf32>
    %39 = tpu.matmul %31, %0, %cst_11 {dimension_numbers = #tpu.dot_dimension_numbers<[1], [0], [0], [1], [0, 0, 1, 1], [], []>} : vector<8x256xf32>, vector<256x1024xf32>, vector<8x1024xf32> -> vector<8x1024xf32>
    %40 = arith.addf %38, %39 : vector<8x1024xf32>
    %41 = vector.extract_strided_slice %40 {offsets = [0, 0], sizes = [8, 256], strides = [1, 1]} : vector<8x1024xf32> to vector<8x256xf32>
    %42 = arith.negf %41 : vector<8x256xf32>
    %43 = math.exp %42 : vector<8x256xf32>
    %cst_12 = arith.constant 1.000000e+00 : f32
    %44 = vector.broadcast %cst_12 : f32 to vector<8x256xf32>
    %45 = arith.addf %44, %43 : vector<8x256xf32>
    %46 = arith.divf %44, %45 : vector<8x256xf32>
    %47 = vector.extract_strided_slice %40 {offsets = [0, 256], sizes = [8, 256], strides = [1, 1]} : vector<8x1024xf32> to vector<8x256xf32>
    %48 = arith.negf %47 : vector<8x256xf32>
    %49 = math.exp %48 : vector<8x256xf32>
    %cst_13 = arith.constant 1.000000e+00 : f32
    %50 = vector.broadcast %cst_13 : f32 to vector<8x256xf32>
    %51 = arith.addf %50, %49 : vector<8x256xf32>
    %52 = arith.divf %50, %51 : vector<8x256xf32>
    %53 = vector.extract_strided_slice %40 {offsets = [0, 512], sizes = [8, 256], strides = [1, 1]} : vector<8x1024xf32> to vector<8x256xf32>
    %54 = math.tanh %53 : vector<8x256xf32>
    %55 = vector.extract_strided_slice %40 {offsets = [0, 768], sizes = [8, 256], strides = [1, 1]} : vector<8x1024xf32> to vector<8x256xf32>
    %56 = arith.negf %55 : vector<8x256xf32>
    %57 = math.exp %56 : vector<8x256xf32>
    %cst_14 = arith.constant 1.000000e+00 : f32
    %58 = vector.broadcast %cst_14 : f32 to vector<8x256xf32>
    %59 = arith.addf %58, %57 : vector<8x256xf32>
    %60 = arith.divf %58, %59 : vector<8x256xf32>
    %61 = arith.mulf %52, %29 : vector<8x256xf32>
    %62 = arith.mulf %46, %54 : vector<8x256xf32>
    %63 = arith.addf %61, %62 : vector<8x256xf32>
    %64 = math.tanh %63 : vector<8x256xf32>
    %65 = arith.mulf %60, %64 : vector<8x256xf32>
    %66 = arith.index_cast %c1_i32 : i32 to index
    %c0_15 = arith.constant 0 : index
    %c0_16 = arith.constant 0 : index
    %67 = vector.load %arg8[%66, %c0_15, %c0_16] : memref<8x8x256xf32, #tpu.memory_space<vmem>>, vector<1x8x256xf32>
    %68 = vector.shape_cast %67 : vector<1x8x256xf32> to vector<8x256xf32>
    %69 = vector.shape_cast %65 : vector<8x256xf32> to vector<1x8x256xf32>
    tpu.vector_store %arg8[%66, %c0_15, %c0_16], %69 {strides = array<i32>} : memref<8x8x256xf32, #tpu.memory_space<vmem>>, vector<1x8x256xf32>,
    %c2_i32 = arith.constant 2 : i32
    %70 = arith.index_cast %c2_i32 : i32 to index
    %c0_17 = arith.constant 0 : index
    %c0_18 = arith.constant 0 : index
    %71 = vector.load %arg0[%70, %c0_17, %c0_18] : memref<8x8x1024xf32, #tpu.memory_space<vmem>>, vector<1x8x1024xf32>
    %72 = vector.shape_cast %71 : vector<1x8x1024xf32> to vector<8x1024xf32>
    %cst_19 = arith.constant dense<0.000000e+00> : vector<8x1024xf32>
    %73 = tpu.matmul %65, %0, %cst_19 {dimension_numbers = #tpu.dot_dimension_numbers<[1], [0], [0], [1], [0, 0, 1, 1], [], []>} : vector<8x256xf32>, vector<256x1024xf32>, vector<8x1024xf32> -> vector<8x1024xf32>
    %74 = arith.addf %72, %73 : vector<8x1024xf32>
    %75 = vector.extract_strided_slice %74 {offsets = [0, 0], sizes = [8, 256], strides = [1, 1]} : vector<8x1024xf32> to vector<8x256xf32>
    %76 = arith.negf %75 : vector<8x256xf32>
    %77 = math.exp %76 : vector<8x256xf32>
    %cst_20 = arith.constant 1.000000e+00 : f32
    %78 = vector.broadcast %cst_20 : f32 to vector<8x256xf32>
    %79 = arith.addf %78, %77 : vector<8x256xf32>
    %80 = arith.divf %78, %79 : vector<8x256xf32>
    %81 = vector.extract_strided_slice %74 {offsets = [0, 256], sizes = [8, 256], strides = [1, 1]} : vector<8x1024xf32> to vector<8x256xf32>
    %82 = arith.negf %81 : vector<8x256xf32>
    %83 = math.exp %82 : vector<8x256xf32>
    %cst_21 = arith.constant 1.000000e+00 : f32
    %84 = vector.broadcast %cst_21 : f32 to vector<8x256xf32>
    %85 = arith.addf %84, %83 : vector<8x256xf32>
    %86 = arith.divf %84, %85 : vector<8x256xf32>
    %87 = vector.extract_strided_slice %74 {offsets = [0, 512], sizes = [8, 256], strides = [1, 1]} : vector<8x1024xf32> to vector<8x256xf32>
    %88 = math.tanh %87 : vector<8x256xf32>
    %89 = vector.extract_strided_slice %74 {offsets = [0, 768], sizes = [8, 256], strides = [1, 1]} : vector<8x1024xf32> to vector<8x256xf32>
    %90 = arith.negf %89 : vector<8x256xf32>
    %91 = math.exp %90 : vector<8x256xf32>
    %cst_22 = arith.constant 1.000000e+00 : f32
    %92 = vector.broadcast %cst_22 : f32 to vector<8x256xf32>
    %93 = arith.addf %92, %91 : vector<8x256xf32>
    %94 = arith.divf %92, %93 : vector<8x256xf32>
    %95 = arith.mulf %86, %63 : vector<8x256xf32>
    %96 = arith.mulf %80, %88 : vector<8x256xf32>
    %97 = arith.addf %95, %96 : vector<8x256xf32>
    %98 = math.tanh %97 : vector<8x256xf32>
    %99 = arith.mulf %94, %98 : vector<8x256xf32>
    %100 = arith.index_cast %c2_i32 : i32 to index
    %c0_23 = arith.constant 0 : index
    %c0_24 = arith.constant 0 : index
    %101 = vector.load %arg8[%100, %c0_23, %c0_24] : memref<8x8x256xf32, #tpu.memory_space<vmem>>, vector<1x8x256xf32>
    %102 = vector.shape_cast %101 : vector<1x8x256xf32> to vector<8x256xf32>
    %103 = vector.shape_cast %99 : vector<8x256xf32> to vector<1x8x256xf32>
    tpu.vector_store %arg8[%100, %c0_23, %c0_24], %103 {strides = array<i32>} : memref<8x8x256xf32, #tpu.memory_space<vmem>>, vector<1x8x256xf32>,
    %c3_i32 = arith.constant 3 : i32
    %104 = arith.index_cast %c3_i32 : i32 to index
    %c0_25 = arith.constant 0 : index
    %c0_26 = arith.constant 0 : index
    %105 = vector.load %arg0[%104, %c0_25, %c0_26] : memref<8x8x1024xf32, #tpu.memory_space<vmem>>, vector<1x8x1024xf32>
    %106 = vector.shape_cast %105 : vector<1x8x1024xf32> to vector<8x1024xf32>
    %cst_27 = arith.constant dense<0.000000e+00> : vector<8x1024xf32>
    %107 = tpu.matmul %99, %0, %cst_27 {dimension_numbers = #tpu.dot_dimension_numbers<[1], [0], [0], [1], [0, 0, 1, 1], [], []>} : vector<8x256xf32>, vector<256x1024xf32>, vector<8x1024xf32> -> vector<8x1024xf32>
    %108 = arith.addf %106, %107 : vector<8x1024xf32>
    %109 = vector.extract_strided_slice %108 {offsets = [0, 0], sizes = [8, 256], strides = [1, 1]} : vector<8x1024xf32> to vector<8x256xf32>
    %110 = arith.negf %109 : vector<8x256xf32>
    %111 = math.exp %110 : vector<8x256xf32>
    %cst_28 = arith.constant 1.000000e+00 : f32
    %112 = vector.broadcast %cst_28 : f32 to vector<8x256xf32>
    %113 = arith.addf %112, %111 : vector<8x256xf32>
    %114 = arith.divf %112, %113 : vector<8x256xf32>
    %115 = vector.extract_strided_slice %108 {offsets = [0, 256], sizes = [8, 256], strides = [1, 1]} : vector<8x1024xf32> to vector<8x256xf32>
    %116 = arith.negf %115 : vector<8x256xf32>
    %117 = math.exp %116 : vector<8x256xf32>
    %cst_29 = arith.constant 1.000000e+00 : f32
    %118 = vector.broadcast %cst_29 : f32 to vector<8x256xf32>
    %119 = arith.addf %118, %117 : vector<8x256xf32>
    %120 = arith.divf %118, %119 : vector<8x256xf32>
    %121 = vector.extract_strided_slice %108 {offsets = [0, 512], sizes = [8, 256], strides = [1, 1]} : vector<8x1024xf32> to vector<8x256xf32>
    %122 = math.tanh %121 : vector<8x256xf32>
    %123 = vector.extract_strided_slice %108 {offsets = [0, 768], sizes = [8, 256], strides = [1, 1]} : vector<8x1024xf32> to vector<8x256xf32>
    %124 = arith.negf %123 : vector<8x256xf32>
    %125 = math.exp %124 : vector<8x256xf32>
    %cst_30 = arith.constant 1.000000e+00 : f32
    %126 = vector.broadcast %cst_30 : f32 to vector<8x256xf32>
    %127 = arith.addf %126, %125 : vector<8x256xf32>
    %128 = arith.divf %126, %127 : vector<8x256xf32>
    %129 = arith.mulf %120, %97 : vector<8x256xf32>
    %130 = arith.mulf %114, %122 : vector<8x256xf32>
    %131 = arith.addf %129, %130 : vector<8x256xf32>
    %132 = math.tanh %131 : vector<8x256xf32>
    %133 = arith.mulf %128, %132 : vector<8x256xf32>
    %134 = arith.index_cast %c3_i32 : i32 to index
    %c0_31 = arith.constant 0 : index
    %c0_32 = arith.constant 0 : index
    %135 = vector.load %arg8[%134, %c0_31, %c0_32] : memref<8x8x256xf32, #tpu.memory_space<vmem>>, vector<1x8x256xf32>
    %136 = vector.shape_cast %135 : vector<1x8x256xf32> to vector<8x256xf32>
    %137 = vector.shape_cast %133 : vector<8x256xf32> to vector<1x8x256xf32>
    tpu.vector_store %arg8[%134, %c0_31, %c0_32], %137 {strides = array<i32>} : memref<8x8x256xf32, #tpu.memory_space<vmem>>, vector<1x8x256xf32>,
    %c4_i32 = arith.constant 4 : i32
    %138 = arith.index_cast %c4_i32 : i32 to index
    %c0_33 = arith.constant 0 : index
    %c0_34 = arith.constant 0 : index
    %139 = vector.load %arg0[%138, %c0_33, %c0_34] : memref<8x8x1024xf32, #tpu.memory_space<vmem>>, vector<1x8x1024xf32>
    %140 = vector.shape_cast %139 : vector<1x8x1024xf32> to vector<8x1024xf32>
    %cst_35 = arith.constant dense<0.000000e+00> : vector<8x1024xf32>
    %141 = tpu.matmul %133, %0, %cst_35 {dimension_numbers = #tpu.dot_dimension_numbers<[1], [0], [0], [1], [0, 0, 1, 1], [], []>} : vector<8x256xf32>, vector<256x1024xf32>, vector<8x1024xf32> -> vector<8x1024xf32>
    %142 = arith.addf %140, %141 : vector<8x1024xf32>
    %143 = vector.extract_strided_slice %142 {offsets = [0, 0], sizes = [8, 256], strides = [1, 1]} : vector<8x1024xf32> to vector<8x256xf32>
    %144 = arith.negf %143 : vector<8x256xf32>
    %145 = math.exp %144 : vector<8x256xf32>
    %cst_36 = arith.constant 1.000000e+00 : f32
    %146 = vector.broadcast %cst_36 : f32 to vector<8x256xf32>
    %147 = arith.addf %146, %145 : vector<8x256xf32>
    %148 = arith.divf %146, %147 : vector<8x256xf32>
    %149 = vector.extract_strided_slice %142 {offsets = [0, 256], sizes = [8, 256], strides = [1, 1]} : vector<8x1024xf32> to vector<8x256xf32>
    %150 = arith.negf %149 : vector<8x256xf32>
    %151 = math.exp %150 : vector<8x256xf32>
    %cst_37 = arith.constant 1.000000e+00 : f32
    %152 = vector.broadcast %cst_37 : f32 to vector<8x256xf32>
    %153 = arith.addf %152, %151 : vector<8x256xf32>
    %154 = arith.divf %152, %153 : vector<8x256xf32>
    %155 = vector.extract_strided_slice %142 {offsets = [0, 512], sizes = [8, 256], strides = [1, 1]} : vector<8x1024xf32> to vector<8x256xf32>
    %156 = math.tanh %155 : vector<8x256xf32>
    %157 = vector.extract_strided_slice %142 {offsets = [0, 768], sizes = [8, 256], strides = [1, 1]} : vector<8x1024xf32> to vector<8x256xf32>
    %158 = arith.negf %157 : vector<8x256xf32>
    %159 = math.exp %158 : vector<8x256xf32>
    %cst_38 = arith.constant 1.000000e+00 : f32
    %160 = vector.broadcast %cst_38 : f32 to vector<8x256xf32>
    %161 = arith.addf %160, %159 : vector<8x256xf32>
    %162 = arith.divf %160, %161 : vector<8x256xf32>
    %163 = arith.mulf %154, %131 : vector<8x256xf32>
    %164 = arith.mulf %148, %156 : vector<8x256xf32>
    %165 = arith.addf %163, %164 : vector<8x256xf32>
    %166 = math.tanh %165 : vector<8x256xf32>
    %167 = arith.mulf %162, %166 : vector<8x256xf32>
    %168 = arith.index_cast %c4_i32 : i32 to index
    %c0_39 = arith.constant 0 : index
    %c0_40 = arith.constant 0 : index
    %169 = vector.load %arg8[%168, %c0_39, %c0_40] : memref<8x8x256xf32, #tpu.memory_space<vmem>>, vector<1x8x256xf32>
    %170 = vector.shape_cast %169 : vector<1x8x256xf32> to vector<8x256xf32>
    %171 = vector.shape_cast %167 : vector<8x256xf32> to vector<1x8x256xf32>
    tpu.vector_store %arg8[%168, %c0_39, %c0_40], %171 {strides = array<i32>} : memref<8x8x256xf32, #tpu.memory_space<vmem>>, vector<1x8x256xf32>,
    %c5_i32 = arith.constant 5 : i32
    %172 = arith.index_cast %c5_i32 : i32 to index
    %c0_41 = arith.constant 0 : index
    %c0_42 = arith.constant 0 : index
    %173 = vector.load %arg0[%172, %c0_41, %c0_42] : memref<8x8x1024xf32, #tpu.memory_space<vmem>>, vector<1x8x1024xf32>
    %174 = vector.shape_cast %173 : vector<1x8x1024xf32> to vector<8x1024xf32>
    %cst_43 = arith.constant dense<0.000000e+00> : vector<8x1024xf32>
    %175 = tpu.matmul %167, %0, %cst_43 {dimension_numbers = #tpu.dot_dimension_numbers<[1], [0], [0], [1], [0, 0, 1, 1], [], []>} : vector<8x256xf32>, vector<256x1024xf32>, vector<8x1024xf32> -> vector<8x1024xf32>
    %176 = arith.addf %174, %175 : vector<8x1024xf32>
    %177 = vector.extract_strided_slice %176 {offsets = [0, 0], sizes = [8, 256], strides = [1, 1]} : vector<8x1024xf32> to vector<8x256xf32>
    %178 = arith.negf %177 : vector<8x256xf32>
    %179 = math.exp %178 : vector<8x256xf32>
    %cst_44 = arith.constant 1.000000e+00 : f32
    %180 = vector.broadcast %cst_44 : f32 to vector<8x256xf32>
    %181 = arith.addf %180, %179 : vector<8x256xf32>
    %182 = arith.divf %180, %181 : vector<8x256xf32>
    %183 = vector.extract_strided_slice %176 {offsets = [0, 256], sizes = [8, 256], strides = [1, 1]} : vector<8x1024xf32> to vector<8x256xf32>
    %184 = arith.negf %183 : vector<8x256xf32>
    %185 = math.exp %184 : vector<8x256xf32>
    %cst_45 = arith.constant 1.000000e+00 : f32
    %186 = vector.broadcast %cst_45 : f32 to vector<8x256xf32>
    %187 = arith.addf %186, %185 : vector<8x256xf32>
    %188 = arith.divf %186, %187 : vector<8x256xf32>
    %189 = vector.extract_strided_slice %176 {offsets = [0, 512], sizes = [8, 256], strides = [1, 1]} : vector<8x1024xf32> to vector<8x256xf32>
    %190 = math.tanh %189 : vector<8x256xf32>
    %191 = vector.extract_strided_slice %176 {offsets = [0, 768], sizes = [8, 256], strides = [1, 1]} : vector<8x1024xf32> to vector<8x256xf32>
    %192 = arith.negf %191 : vector<8x256xf32>
    %193 = math.exp %192 : vector<8x256xf32>
    %cst_46 = arith.constant 1.000000e+00 : f32
    %194 = vector.broadcast %cst_46 : f32 to vector<8x256xf32>
    %195 = arith.addf %194, %193 : vector<8x256xf32>
    %196 = arith.divf %194, %195 : vector<8x256xf32>
    %197 = arith.mulf %188, %165 : vector<8x256xf32>
    %198 = arith.mulf %182, %190 : vector<8x256xf32>
    %199 = arith.addf %197, %198 : vector<8x256xf32>
    %200 = math.tanh %199 : vector<8x256xf32>
    %201 = arith.mulf %196, %200 : vector<8x256xf32>
    %202 = arith.index_cast %c5_i32 : i32 to index
    %c0_47 = arith.constant 0 : index
    %c0_48 = arith.constant 0 : index
    %203 = vector.load %arg8[%202, %c0_47, %c0_48] : memref<8x8x256xf32, #tpu.memory_space<vmem>>, vector<1x8x256xf32>
    %204 = vector.shape_cast %203 : vector<1x8x256xf32> to vector<8x256xf32>
    %205 = vector.shape_cast %201 : vector<8x256xf32> to vector<1x8x256xf32>
    tpu.vector_store %arg8[%202, %c0_47, %c0_48], %205 {strides = array<i32>} : memref<8x8x256xf32, #tpu.memory_space<vmem>>, vector<1x8x256xf32>,
    %c6_i32 = arith.constant 6 : i32
    %206 = arith.index_cast %c6_i32 : i32 to index
    %c0_49 = arith.constant 0 : index
    %c0_50 = arith.constant 0 : index
    %207 = vector.load %arg0[%206, %c0_49, %c0_50] : memref<8x8x1024xf32, #tpu.memory_space<vmem>>, vector<1x8x1024xf32>
    %208 = vector.shape_cast %207 : vector<1x8x1024xf32> to vector<8x1024xf32>
    %cst_51 = arith.constant dense<0.000000e+00> : vector<8x1024xf32>
    %209 = tpu.matmul %201, %0, %cst_51 {dimension_numbers = #tpu.dot_dimension_numbers<[1], [0], [0], [1], [0, 0, 1, 1], [], []>} : vector<8x256xf32>, vector<256x1024xf32>, vector<8x1024xf32> -> vector<8x1024xf32>
    %210 = arith.addf %208, %209 : vector<8x1024xf32>
    %211 = vector.extract_strided_slice %210 {offsets = [0, 0], sizes = [8, 256], strides = [1, 1]} : vector<8x1024xf32> to vector<8x256xf32>
    %212 = arith.negf %211 : vector<8x256xf32>
    %213 = math.exp %212 : vector<8x256xf32>
    %cst_52 = arith.constant 1.000000e+00 : f32
    %214 = vector.broadcast %cst_52 : f32 to vector<8x256xf32>
    %215 = arith.addf %214, %213 : vector<8x256xf32>
    %216 = arith.divf %214, %215 : vector<8x256xf32>
    %217 = vector.extract_strided_slice %210 {offsets = [0, 256], sizes = [8, 256], strides = [1, 1]} : vector<8x1024xf32> to vector<8x256xf32>
    %218 = arith.negf %217 : vector<8x256xf32>
    %219 = math.exp %218 : vector<8x256xf32>
    %cst_53 = arith.constant 1.000000e+00 : f32
    %220 = vector.broadcast %cst_53 : f32 to vector<8x256xf32>
    %221 = arith.addf %220, %219 : vector<8x256xf32>
    %222 = arith.divf %220, %221 : vector<8x256xf32>
    %223 = vector.extract_strided_slice %210 {offsets = [0, 512], sizes = [8, 256], strides = [1, 1]} : vector<8x1024xf32> to vector<8x256xf32>
    %224 = math.tanh %223 : vector<8x256xf32>
    %225 = vector.extract_strided_slice %210 {offsets = [0, 768], sizes = [8, 256], strides = [1, 1]} : vector<8x1024xf32> to vector<8x256xf32>
    %226 = arith.negf %225 : vector<8x256xf32>
    %227 = math.exp %226 : vector<8x256xf32>
    %cst_54 = arith.constant 1.000000e+00 : f32
    %228 = vector.broadcast %cst_54 : f32 to vector<8x256xf32>
    %229 = arith.addf %228, %227 : vector<8x256xf32>
    %230 = arith.divf %228, %229 : vector<8x256xf32>
    %231 = arith.mulf %222, %199 : vector<8x256xf32>
    %232 = arith.mulf %216, %224 : vector<8x256xf32>
    %233 = arith.addf %231, %232 : vector<8x256xf32>
    %234 = math.tanh %233 : vector<8x256xf32>
    %235 = arith.mulf %230, %234 : vector<8x256xf32>
    %236 = arith.index_cast %c6_i32 : i32 to index
    %c0_55 = arith.constant 0 : index
    %c0_56 = arith.constant 0 : index
    %237 = vector.load %arg8[%236, %c0_55, %c0_56] : memref<8x8x256xf32, #tpu.memory_space<vmem>>, vector<1x8x256xf32>
    %238 = vector.shape_cast %237 : vector<1x8x256xf32> to vector<8x256xf32>
    %239 = vector.shape_cast %235 : vector<8x256xf32> to vector<1x8x256xf32>
    tpu.vector_store %arg8[%236, %c0_55, %c0_56], %239 {strides = array<i32>} : memref<8x8x256xf32, #tpu.memory_space<vmem>>, vector<1x8x256xf32>,
    %c7_i32 = arith.constant 7 : i32
    %240 = arith.index_cast %c7_i32 : i32 to index
    %c0_57 = arith.constant 0 : index
    %c0_58 = arith.constant 0 : index
    %241 = vector.load %arg0[%240, %c0_57, %c0_58] : memref<8x8x1024xf32, #tpu.memory_space<vmem>>, vector<1x8x1024xf32>
    %242 = vector.shape_cast %241 : vector<1x8x1024xf32> to vector<8x1024xf32>
    %cst_59 = arith.constant dense<0.000000e+00> : vector<8x1024xf32>
    %243 = tpu.matmul %235, %0, %cst_59 {dimension_numbers = #tpu.dot_dimension_numbers<[1], [0], [0], [1], [0, 0, 1, 1], [], []>} : vector<8x256xf32>, vector<256x1024xf32>, vector<8x1024xf32> -> vector<8x1024xf32>
    %244 = arith.addf %242, %243 : vector<8x1024xf32>
    %245 = vector.extract_strided_slice %244 {offsets = [0, 0], sizes = [8, 256], strides = [1, 1]} : vector<8x1024xf32> to vector<8x256xf32>
    %246 = arith.negf %245 : vector<8x256xf32>
    %247 = math.exp %246 : vector<8x256xf32>
    %cst_60 = arith.constant 1.000000e+00 : f32
    %248 = vector.broadcast %cst_60 : f32 to vector<8x256xf32>
    %249 = arith.addf %248, %247 : vector<8x256xf32>
    %250 = arith.divf %248, %249 : vector<8x256xf32>
    %251 = vector.extract_strided_slice %244 {offsets = [0, 256], sizes = [8, 256], strides = [1, 1]} : vector<8x1024xf32> to vector<8x256xf32>
    %252 = arith.negf %251 : vector<8x256xf32>
    %253 = math.exp %252 : vector<8x256xf32>
    %cst_61 = arith.constant 1.000000e+00 : f32
    %254 = vector.broadcast %cst_61 : f32 to vector<8x256xf32>
    %255 = arith.addf %254, %253 : vector<8x256xf32>
    %256 = arith.divf %254, %255 : vector<8x256xf32>
    %257 = vector.extract_strided_slice %244 {offsets = [0, 512], sizes = [8, 256], strides = [1, 1]} : vector<8x1024xf32> to vector<8x256xf32>
    %258 = math.tanh %257 : vector<8x256xf32>
    %259 = vector.extract_strided_slice %244 {offsets = [0, 768], sizes = [8, 256], strides = [1, 1]} : vector<8x1024xf32> to vector<8x256xf32>
    %260 = arith.negf %259 : vector<8x256xf32>
    %261 = math.exp %260 : vector<8x256xf32>
    %cst_62 = arith.constant 1.000000e+00 : f32
    %262 = vector.broadcast %cst_62 : f32 to vector<8x256xf32>
    %263 = arith.addf %262, %261 : vector<8x256xf32>
    %264 = arith.divf %262, %263 : vector<8x256xf32>
    %265 = arith.mulf %256, %233 : vector<8x256xf32>
    %266 = arith.mulf %250, %258 : vector<8x256xf32>
    %267 = arith.addf %265, %266 : vector<8x256xf32>
    %268 = math.tanh %267 : vector<8x256xf32>
    %269 = arith.mulf %264, %268 : vector<8x256xf32>
    %270 = arith.index_cast %c7_i32 : i32 to index
    %c0_63 = arith.constant 0 : index
    %c0_64 = arith.constant 0 : index
    %271 = vector.load %arg8[%270, %c0_63, %c0_64] : memref<8x8x256xf32, #tpu.memory_space<vmem>>, vector<1x8x256xf32>
    %272 = vector.shape_cast %271 : vector<1x8x256xf32> to vector<8x256xf32>
    %273 = vector.shape_cast %269 : vector<8x256xf32> to vector<1x8x256xf32>
    tpu.vector_store %arg8[%270, %c0_63, %c0_64], %273 {strides = array<i32>} : memref<8x8x256xf32, #tpu.memory_space<vmem>>, vector<1x8x256xf32>,
    %c8_i32 = arith.constant 8 : i32
    %c0_65 = arith.constant 0 : index
    %c0_66 = arith.constant 0 : index
    %c0_67 = arith.constant 0 : index
    %274 = vector.load %arg8[%c0_65, %c0_66, %c0_67] : memref<8x8x256xf32, #tpu.memory_space<vmem>>, vector<8x8x256xf32>
    %275 = vector.shape_cast %274 : vector<8x8x256xf32> to vector<64x256xf32>
    %c0_68 = arith.constant 0 : index
    %c0_69 = arith.constant 0 : index
    %276 = vector.load %arg2[%c0_68, %c0_69] : memref<256x1024xf32, #tpu.memory_space<vmem>>, vector<256x1024xf32>
    %cst_70 = arith.constant dense<0.000000e+00> : vector<64x1024xf32>
    %277 = tpu.matmul %275, %276, %cst_70 {dimension_numbers = #tpu.dot_dimension_numbers<[1], [0], [0], [1], [0, 0, 1, 1], [], []>} : vector<64x256xf32>, vector<256x1024xf32>, vector<64x1024xf32> -> vector<64x1024xf32>
    %c0_71 = arith.constant 0 : index
    %c0_72 = arith.constant 0 : index
    %278 = vector.load %arg4[%c0_71, %c0_72] : memref<1x1024xf32, #tpu.memory_space<vmem>>, vector<1x1024xf32>
    %279 = vector.broadcast %278 : vector<1x1024xf32> to vector<64x1024xf32>
    %280 = arith.addf %277, %279 : vector<64x1024xf32>
    %281 = vector.shape_cast %280 : vector<64x1024xf32> to vector<8x8x1024xf32>
    %c0_73 = arith.constant 0 : index
    %c0_74 = arith.constant 0 : index
    %c0_75 = arith.constant 0 : index
    %282 = vector.load %arg9[%c0_73, %c0_74, %c0_75] : memref<8x8x1024xf32, #tpu.memory_space<vmem>>, vector<8x8x1024xf32>
    tpu.vector_store %arg9[%c0_73, %c0_74, %c0_75], %281 {strides = array<i32>} : memref<8x8x1024xf32, #tpu.memory_space<vmem>>, vector<8x8x1024xf32>,
    %c0_76 = arith.constant 0 : index
    %c0_77 = arith.constant 0 : index
    %283 = vector.load %arg3[%c0_76, %c0_77] : memref<256x1024xf32, #tpu.memory_space<vmem>>, vector<256x1024xf32>
    %cst_78 = arith.constant 0.000000e+00 : f32
    %284 = vector.broadcast %cst_78 : f32 to vector<8x256xf32>
    %c0_i32_79 = arith.constant 0 : i32
    %285 = arith.index_cast %c0_i32_79 : i32 to index
    %c0_80 = arith.constant 0 : index
    %c0_81 = arith.constant 0 : index
    %286 = vector.load %arg9[%285, %c0_80, %c0_81] : memref<8x8x1024xf32, #tpu.memory_space<vmem>>, vector<1x8x1024xf32>
    %287 = vector.shape_cast %286 : vector<1x8x1024xf32> to vector<8x1024xf32>
    %cst_82 = arith.constant dense<0.000000e+00> : vector<8x1024xf32>
    %288 = tpu.matmul %284, %283, %cst_82 {dimension_numbers = #tpu.dot_dimension_numbers<[1], [0], [0], [1], [0, 0, 1, 1], [], []>} : vector<8x256xf32>, vector<256x1024xf32>, vector<8x1024xf32> -> vector<8x1024xf32>
    %289 = arith.addf %287, %288 : vector<8x1024xf32>
    %290 = vector.extract_strided_slice %289 {offsets = [0, 0], sizes = [8, 256], strides = [1, 1]} : vector<8x1024xf32> to vector<8x256xf32>
    %291 = arith.negf %290 : vector<8x256xf32>
    %292 = math.exp %291 : vector<8x256xf32>
    %cst_83 = arith.constant 1.000000e+00 : f32
    %293 = vector.broadcast %cst_83 : f32 to vector<8x256xf32>
    %294 = arith.addf %293, %292 : vector<8x256xf32>
    %295 = arith.divf %293, %294 : vector<8x256xf32>
    %296 = vector.extract_strided_slice %289 {offsets = [0, 256], sizes = [8, 256], strides = [1, 1]} : vector<8x1024xf32> to vector<8x256xf32>
    %297 = arith.negf %296 : vector<8x256xf32>
    %298 = math.exp %297 : vector<8x256xf32>
    %cst_84 = arith.constant 1.000000e+00 : f32
    %299 = vector.broadcast %cst_84 : f32 to vector<8x256xf32>
    %300 = arith.addf %299, %298 : vector<8x256xf32>
    %301 = arith.divf %299, %300 : vector<8x256xf32>
    %302 = vector.extract_strided_slice %289 {offsets = [0, 512], sizes = [8, 256], strides = [1, 1]} : vector<8x1024xf32> to vector<8x256xf32>
    %303 = math.tanh %302 : vector<8x256xf32>
    %304 = vector.extract_strided_slice %289 {offsets = [0, 768], sizes = [8, 256], strides = [1, 1]} : vector<8x1024xf32> to vector<8x256xf32>
    %305 = arith.negf %304 : vector<8x256xf32>
    %306 = math.exp %305 : vector<8x256xf32>
    %cst_85 = arith.constant 1.000000e+00 : f32
    %307 = vector.broadcast %cst_85 : f32 to vector<8x256xf32>
    %308 = arith.addf %307, %306 : vector<8x256xf32>
    %309 = arith.divf %307, %308 : vector<8x256xf32>
    %310 = arith.mulf %301, %284 : vector<8x256xf32>
    %311 = arith.mulf %295, %303 : vector<8x256xf32>
    %312 = arith.addf %310, %311 : vector<8x256xf32>
    %313 = math.tanh %312 : vector<8x256xf32>
    %314 = arith.mulf %309, %313 : vector<8x256xf32>
    %315 = arith.index_cast %c0_i32_79 : i32 to index
    %c0_86 = arith.constant 0 : index
    %c0_87 = arith.constant 0 : index
    %316 = vector.load %arg8[%315, %c0_86, %c0_87] : memref<8x8x256xf32, #tpu.memory_space<vmem>>, vector<1x8x256xf32>
    %317 = vector.shape_cast %316 : vector<1x8x256xf32> to vector<8x256xf32>
    %318 = vector.shape_cast %314 : vector<8x256xf32> to vector<1x8x256xf32>
    tpu.vector_store %arg8[%315, %c0_86, %c0_87], %318 {strides = array<i32>} : memref<8x8x256xf32, #tpu.memory_space<vmem>>, vector<1x8x256xf32>,
    %c1_i32_88 = arith.constant 1 : i32
    %319 = arith.index_cast %c1_i32_88 : i32 to index
    %c0_89 = arith.constant 0 : index
    %c0_90 = arith.constant 0 : index
    %320 = vector.load %arg9[%319, %c0_89, %c0_90] : memref<8x8x1024xf32, #tpu.memory_space<vmem>>, vector<1x8x1024xf32>
    %321 = vector.shape_cast %320 : vector<1x8x1024xf32> to vector<8x1024xf32>
    %cst_91 = arith.constant dense<0.000000e+00> : vector<8x1024xf32>
    %322 = tpu.matmul %314, %283, %cst_91 {dimension_numbers = #tpu.dot_dimension_numbers<[1], [0], [0], [1], [0, 0, 1, 1], [], []>} : vector<8x256xf32>, vector<256x1024xf32>, vector<8x1024xf32> -> vector<8x1024xf32>
    %323 = arith.addf %321, %322 : vector<8x1024xf32>
    %324 = vector.extract_strided_slice %323 {offsets = [0, 0], sizes = [8, 256], strides = [1, 1]} : vector<8x1024xf32> to vector<8x256xf32>
    %325 = arith.negf %324 : vector<8x256xf32>
    %326 = math.exp %325 : vector<8x256xf32>
    %cst_92 = arith.constant 1.000000e+00 : f32
    %327 = vector.broadcast %cst_92 : f32 to vector<8x256xf32>
    %328 = arith.addf %327, %326 : vector<8x256xf32>
    %329 = arith.divf %327, %328 : vector<8x256xf32>
    %330 = vector.extract_strided_slice %323 {offsets = [0, 256], sizes = [8, 256], strides = [1, 1]} : vector<8x1024xf32> to vector<8x256xf32>
    %331 = arith.negf %330 : vector<8x256xf32>
    %332 = math.exp %331 : vector<8x256xf32>
    %cst_93 = arith.constant 1.000000e+00 : f32
    %333 = vector.broadcast %cst_93 : f32 to vector<8x256xf32>
    %334 = arith.addf %333, %332 : vector<8x256xf32>
    %335 = arith.divf %333, %334 : vector<8x256xf32>
    %336 = vector.extract_strided_slice %323 {offsets = [0, 512], sizes = [8, 256], strides = [1, 1]} : vector<8x1024xf32> to vector<8x256xf32>
    %337 = math.tanh %336 : vector<8x256xf32>
    %338 = vector.extract_strided_slice %323 {offsets = [0, 768], sizes = [8, 256], strides = [1, 1]} : vector<8x1024xf32> to vector<8x256xf32>
    %339 = arith.negf %338 : vector<8x256xf32>
    %340 = math.exp %339 : vector<8x256xf32>
    %cst_94 = arith.constant 1.000000e+00 : f32
    %341 = vector.broadcast %cst_94 : f32 to vector<8x256xf32>
    %342 = arith.addf %341, %340 : vector<8x256xf32>
    %343 = arith.divf %341, %342 : vector<8x256xf32>
    %344 = arith.mulf %335, %312 : vector<8x256xf32>
    %345 = arith.mulf %329, %337 : vector<8x256xf32>
    %346 = arith.addf %344, %345 : vector<8x256xf32>
    %347 = math.tanh %346 : vector<8x256xf32>
    %348 = arith.mulf %343, %347 : vector<8x256xf32>
    %349 = arith.index_cast %c1_i32_88 : i32 to index
    %c0_95 = arith.constant 0 : index
    %c0_96 = arith.constant 0 : index
    %350 = vector.load %arg8[%349, %c0_95, %c0_96] : memref<8x8x256xf32, #tpu.memory_space<vmem>>, vector<1x8x256xf32>
    %351 = vector.shape_cast %350 : vector<1x8x256xf32> to vector<8x256xf32>
    %352 = vector.shape_cast %348 : vector<8x256xf32> to vector<1x8x256xf32>
    tpu.vector_store %arg8[%349, %c0_95, %c0_96], %352 {strides = array<i32>} : memref<8x8x256xf32, #tpu.memory_space<vmem>>, vector<1x8x256xf32>,
    %c2_i32_97 = arith.constant 2 : i32
    %353 = arith.index_cast %c2_i32_97 : i32 to index
    %c0_98 = arith.constant 0 : index
    %c0_99 = arith.constant 0 : index
    %354 = vector.load %arg9[%353, %c0_98, %c0_99] : memref<8x8x1024xf32, #tpu.memory_space<vmem>>, vector<1x8x1024xf32>
    %355 = vector.shape_cast %354 : vector<1x8x1024xf32> to vector<8x1024xf32>
    %cst_100 = arith.constant dense<0.000000e+00> : vector<8x1024xf32>
    %356 = tpu.matmul %348, %283, %cst_100 {dimension_numbers = #tpu.dot_dimension_numbers<[1], [0], [0], [1], [0, 0, 1, 1], [], []>} : vector<8x256xf32>, vector<256x1024xf32>, vector<8x1024xf32> -> vector<8x1024xf32>
    %357 = arith.addf %355, %356 : vector<8x1024xf32>
    %358 = vector.extract_strided_slice %357 {offsets = [0, 0], sizes = [8, 256], strides = [1, 1]} : vector<8x1024xf32> to vector<8x256xf32>
    %359 = arith.negf %358 : vector<8x256xf32>
    %360 = math.exp %359 : vector<8x256xf32>
    %cst_101 = arith.constant 1.000000e+00 : f32
    %361 = vector.broadcast %cst_101 : f32 to vector<8x256xf32>
    %362 = arith.addf %361, %360 : vector<8x256xf32>
    %363 = arith.divf %361, %362 : vector<8x256xf32>
    %364 = vector.extract_strided_slice %357 {offsets = [0, 256], sizes = [8, 256], strides = [1, 1]} : vector<8x1024xf32> to vector<8x256xf32>
    %365 = arith.negf %364 : vector<8x256xf32>
    %366 = math.exp %365 : vector<8x256xf32>
    %cst_102 = arith.constant 1.000000e+00 : f32
    %367 = vector.broadcast %cst_102 : f32 to vector<8x256xf32>
    %368 = arith.addf %367, %366 : vector<8x256xf32>
    %369 = arith.divf %367, %368 : vector<8x256xf32>
    %370 = vector.extract_strided_slice %357 {offsets = [0, 512], sizes = [8, 256], strides = [1, 1]} : vector<8x1024xf32> to vector<8x256xf32>
    %371 = math.tanh %370 : vector<8x256xf32>
    %372 = vector.extract_strided_slice %357 {offsets = [0, 768], sizes = [8, 256], strides = [1, 1]} : vector<8x1024xf32> to vector<8x256xf32>
    %373 = arith.negf %372 : vector<8x256xf32>
    %374 = math.exp %373 : vector<8x256xf32>
    %cst_103 = arith.constant 1.000000e+00 : f32
    %375 = vector.broadcast %cst_103 : f32 to vector<8x256xf32>
    %376 = arith.addf %375, %374 : vector<8x256xf32>
    %377 = arith.divf %375, %376 : vector<8x256xf32>
    %378 = arith.mulf %369, %346 : vector<8x256xf32>
    %379 = arith.mulf %363, %371 : vector<8x256xf32>
    %380 = arith.addf %378, %379 : vector<8x256xf32>
    %381 = math.tanh %380 : vector<8x256xf32>
    %382 = arith.mulf %377, %381 : vector<8x256xf32>
    %383 = arith.index_cast %c2_i32_97 : i32 to index
    %c0_104 = arith.constant 0 : index
    %c0_105 = arith.constant 0 : index
    %384 = vector.load %arg8[%383, %c0_104, %c0_105] : memref<8x8x256xf32, #tpu.memory_space<vmem>>, vector<1x8x256xf32>
    %385 = vector.shape_cast %384 : vector<1x8x256xf32> to vector<8x256xf32>
    %386 = vector.shape_cast %382 : vector<8x256xf32> to vector<1x8x256xf32>
    tpu.vector_store %arg8[%383, %c0_104, %c0_105], %386 {strides = array<i32>} : memref<8x8x256xf32, #tpu.memory_space<vmem>>, vector<1x8x256xf32>,
    %c3_i32_106 = arith.constant 3 : i32
    %387 = arith.index_cast %c3_i32_106 : i32 to index
    %c0_107 = arith.constant 0 : index
    %c0_108 = arith.constant 0 : index
    %388 = vector.load %arg9[%387, %c0_107, %c0_108] : memref<8x8x1024xf32, #tpu.memory_space<vmem>>, vector<1x8x1024xf32>
    %389 = vector.shape_cast %388 : vector<1x8x1024xf32> to vector<8x1024xf32>
    %cst_109 = arith.constant dense<0.000000e+00> : vector<8x1024xf32>
    %390 = tpu.matmul %382, %283, %cst_109 {dimension_numbers = #tpu.dot_dimension_numbers<[1], [0], [0], [1], [0, 0, 1, 1], [], []>} : vector<8x256xf32>, vector<256x1024xf32>, vector<8x1024xf32> -> vector<8x1024xf32>
    %391 = arith.addf %389, %390 : vector<8x1024xf32>
    %392 = vector.extract_strided_slice %391 {offsets = [0, 0], sizes = [8, 256], strides = [1, 1]} : vector<8x1024xf32> to vector<8x256xf32>
    %393 = arith.negf %392 : vector<8x256xf32>
    %394 = math.exp %393 : vector<8x256xf32>
    %cst_110 = arith.constant 1.000000e+00 : f32
    %395 = vector.broadcast %cst_110 : f32 to vector<8x256xf32>
    %396 = arith.addf %395, %394 : vector<8x256xf32>
    %397 = arith.divf %395, %396 : vector<8x256xf32>
    %398 = vector.extract_strided_slice %391 {offsets = [0, 256], sizes = [8, 256], strides = [1, 1]} : vector<8x1024xf32> to vector<8x256xf32>
    %399 = arith.negf %398 : vector<8x256xf32>
    %400 = math.exp %399 : vector<8x256xf32>
    %cst_111 = arith.constant 1.000000e+00 : f32
    %401 = vector.broadcast %cst_111 : f32 to vector<8x256xf32>
    %402 = arith.addf %401, %400 : vector<8x256xf32>
    %403 = arith.divf %401, %402 : vector<8x256xf32>
    %404 = vector.extract_strided_slice %391 {offsets = [0, 512], sizes = [8, 256], strides = [1, 1]} : vector<8x1024xf32> to vector<8x256xf32>
    %405 = math.tanh %404 : vector<8x256xf32>
    %406 = vector.extract_strided_slice %391 {offsets = [0, 768], sizes = [8, 256], strides = [1, 1]} : vector<8x1024xf32> to vector<8x256xf32>
    %407 = arith.negf %406 : vector<8x256xf32>
    %408 = math.exp %407 : vector<8x256xf32>
    %cst_112 = arith.constant 1.000000e+00 : f32
    %409 = vector.broadcast %cst_112 : f32 to vector<8x256xf32>
    %410 = arith.addf %409, %408 : vector<8x256xf32>
    %411 = arith.divf %409, %410 : vector<8x256xf32>
    %412 = arith.mulf %403, %380 : vector<8x256xf32>
    %413 = arith.mulf %397, %405 : vector<8x256xf32>
    %414 = arith.addf %412, %413 : vector<8x256xf32>
    %415 = math.tanh %414 : vector<8x256xf32>
    %416 = arith.mulf %411, %415 : vector<8x256xf32>
    %417 = arith.index_cast %c3_i32_106 : i32 to index
    %c0_113 = arith.constant 0 : index
    %c0_114 = arith.constant 0 : index
    %418 = vector.load %arg8[%417, %c0_113, %c0_114] : memref<8x8x256xf32, #tpu.memory_space<vmem>>, vector<1x8x256xf32>
    %419 = vector.shape_cast %418 : vector<1x8x256xf32> to vector<8x256xf32>
    %420 = vector.shape_cast %416 : vector<8x256xf32> to vector<1x8x256xf32>
    tpu.vector_store %arg8[%417, %c0_113, %c0_114], %420 {strides = array<i32>} : memref<8x8x256xf32, #tpu.memory_space<vmem>>, vector<1x8x256xf32>,
    %c4_i32_115 = arith.constant 4 : i32
    %421 = arith.index_cast %c4_i32_115 : i32 to index
    %c0_116 = arith.constant 0 : index
    %c0_117 = arith.constant 0 : index
    %422 = vector.load %arg9[%421, %c0_116, %c0_117] : memref<8x8x1024xf32, #tpu.memory_space<vmem>>, vector<1x8x1024xf32>
    %423 = vector.shape_cast %422 : vector<1x8x1024xf32> to vector<8x1024xf32>
    %cst_118 = arith.constant dense<0.000000e+00> : vector<8x1024xf32>
    %424 = tpu.matmul %416, %283, %cst_118 {dimension_numbers = #tpu.dot_dimension_numbers<[1], [0], [0], [1], [0, 0, 1, 1], [], []>} : vector<8x256xf32>, vector<256x1024xf32>, vector<8x1024xf32> -> vector<8x1024xf32>
    %425 = arith.addf %423, %424 : vector<8x1024xf32>
    %426 = vector.extract_strided_slice %425 {offsets = [0, 0], sizes = [8, 256], strides = [1, 1]} : vector<8x1024xf32> to vector<8x256xf32>
    %427 = arith.negf %426 : vector<8x256xf32>
    %428 = math.exp %427 : vector<8x256xf32>
    %cst_119 = arith.constant 1.000000e+00 : f32
    %429 = vector.broadcast %cst_119 : f32 to vector<8x256xf32>
    %430 = arith.addf %429, %428 : vector<8x256xf32>
    %431 = arith.divf %429, %430 : vector<8x256xf32>
    %432 = vector.extract_strided_slice %425 {offsets = [0, 256], sizes = [8, 256], strides = [1, 1]} : vector<8x1024xf32> to vector<8x256xf32>
    %433 = arith.negf %432 : vector<8x256xf32>
    %434 = math.exp %433 : vector<8x256xf32>
    %cst_120 = arith.constant 1.000000e+00 : f32
    %435 = vector.broadcast %cst_120 : f32 to vector<8x256xf32>
    %436 = arith.addf %435, %434 : vector<8x256xf32>
    %437 = arith.divf %435, %436 : vector<8x256xf32>
    %438 = vector.extract_strided_slice %425 {offsets = [0, 512], sizes = [8, 256], strides = [1, 1]} : vector<8x1024xf32> to vector<8x256xf32>
    %439 = math.tanh %438 : vector<8x256xf32>
    %440 = vector.extract_strided_slice %425 {offsets = [0, 768], sizes = [8, 256], strides = [1, 1]} : vector<8x1024xf32> to vector<8x256xf32>
    %441 = arith.negf %440 : vector<8x256xf32>
    %442 = math.exp %441 : vector<8x256xf32>
    %cst_121 = arith.constant 1.000000e+00 : f32
    %443 = vector.broadcast %cst_121 : f32 to vector<8x256xf32>
    %444 = arith.addf %443, %442 : vector<8x256xf32>
    %445 = arith.divf %443, %444 : vector<8x256xf32>
    %446 = arith.mulf %437, %414 : vector<8x256xf32>
    %447 = arith.mulf %431, %439 : vector<8x256xf32>
    %448 = arith.addf %446, %447 : vector<8x256xf32>
    %449 = math.tanh %448 : vector<8x256xf32>
    %450 = arith.mulf %445, %449 : vector<8x256xf32>
    %451 = arith.index_cast %c4_i32_115 : i32 to index
    %c0_122 = arith.constant 0 : index
    %c0_123 = arith.constant 0 : index
    %452 = vector.load %arg8[%451, %c0_122, %c0_123] : memref<8x8x256xf32, #tpu.memory_space<vmem>>, vector<1x8x256xf32>
    %453 = vector.shape_cast %452 : vector<1x8x256xf32> to vector<8x256xf32>
    %454 = vector.shape_cast %450 : vector<8x256xf32> to vector<1x8x256xf32>
    tpu.vector_store %arg8[%451, %c0_122, %c0_123], %454 {strides = array<i32>} : memref<8x8x256xf32, #tpu.memory_space<vmem>>, vector<1x8x256xf32>,
    %c5_i32_124 = arith.constant 5 : i32
    %455 = arith.index_cast %c5_i32_124 : i32 to index
    %c0_125 = arith.constant 0 : index
    %c0_126 = arith.constant 0 : index
    %456 = vector.load %arg9[%455, %c0_125, %c0_126] : memref<8x8x1024xf32, #tpu.memory_space<vmem>>, vector<1x8x1024xf32>
    %457 = vector.shape_cast %456 : vector<1x8x1024xf32> to vector<8x1024xf32>
    %cst_127 = arith.constant dense<0.000000e+00> : vector<8x1024xf32>
    %458 = tpu.matmul %450, %283, %cst_127 {dimension_numbers = #tpu.dot_dimension_numbers<[1], [0], [0], [1], [0, 0, 1, 1], [], []>} : vector<8x256xf32>, vector<256x1024xf32>, vector<8x1024xf32> -> vector<8x1024xf32>
    %459 = arith.addf %457, %458 : vector<8x1024xf32>
    %460 = vector.extract_strided_slice %459 {offsets = [0, 0], sizes = [8, 256], strides = [1, 1]} : vector<8x1024xf32> to vector<8x256xf32>
    %461 = arith.negf %460 : vector<8x256xf32>
    %462 = math.exp %461 : vector<8x256xf32>
    %cst_128 = arith.constant 1.000000e+00 : f32
    %463 = vector.broadcast %cst_128 : f32 to vector<8x256xf32>
    %464 = arith.addf %463, %462 : vector<8x256xf32>
    %465 = arith.divf %463, %464 : vector<8x256xf32>
    %466 = vector.extract_strided_slice %459 {offsets = [0, 256], sizes = [8, 256], strides = [1, 1]} : vector<8x1024xf32> to vector<8x256xf32>
    %467 = arith.negf %466 : vector<8x256xf32>
    %468 = math.exp %467 : vector<8x256xf32>
    %cst_129 = arith.constant 1.000000e+00 : f32
    %469 = vector.broadcast %cst_129 : f32 to vector<8x256xf32>
    %470 = arith.addf %469, %468 : vector<8x256xf32>
    %471 = arith.divf %469, %470 : vector<8x256xf32>
    %472 = vector.extract_strided_slice %459 {offsets = [0, 512], sizes = [8, 256], strides = [1, 1]} : vector<8x1024xf32> to vector<8x256xf32>
    %473 = math.tanh %472 : vector<8x256xf32>
    %474 = vector.extract_strided_slice %459 {offsets = [0, 768], sizes = [8, 256], strides = [1, 1]} : vector<8x1024xf32> to vector<8x256xf32>
    %475 = arith.negf %474 : vector<8x256xf32>
    %476 = math.exp %475 : vector<8x256xf32>
    %cst_130 = arith.constant 1.000000e+00 : f32
    %477 = vector.broadcast %cst_130 : f32 to vector<8x256xf32>
    %478 = arith.addf %477, %476 : vector<8x256xf32>
    %479 = arith.divf %477, %478 : vector<8x256xf32>
    %480 = arith.mulf %471, %448 : vector<8x256xf32>
    %481 = arith.mulf %465, %473 : vector<8x256xf32>
    %482 = arith.addf %480, %481 : vector<8x256xf32>
    %483 = math.tanh %482 : vector<8x256xf32>
    %484 = arith.mulf %479, %483 : vector<8x256xf32>
    %485 = arith.index_cast %c5_i32_124 : i32 to index
    %c0_131 = arith.constant 0 : index
    %c0_132 = arith.constant 0 : index
    %486 = vector.load %arg8[%485, %c0_131, %c0_132] : memref<8x8x256xf32, #tpu.memory_space<vmem>>, vector<1x8x256xf32>
    %487 = vector.shape_cast %486 : vector<1x8x256xf32> to vector<8x256xf32>
    %488 = vector.shape_cast %484 : vector<8x256xf32> to vector<1x8x256xf32>
    tpu.vector_store %arg8[%485, %c0_131, %c0_132], %488 {strides = array<i32>} : memref<8x8x256xf32, #tpu.memory_space<vmem>>, vector<1x8x256xf32>,
    %c6_i32_133 = arith.constant 6 : i32
    %489 = arith.index_cast %c6_i32_133 : i32 to index
    %c0_134 = arith.constant 0 : index
    %c0_135 = arith.constant 0 : index
    %490 = vector.load %arg9[%489, %c0_134, %c0_135] : memref<8x8x1024xf32, #tpu.memory_space<vmem>>, vector<1x8x1024xf32>
    %491 = vector.shape_cast %490 : vector<1x8x1024xf32> to vector<8x1024xf32>
    %cst_136 = arith.constant dense<0.000000e+00> : vector<8x1024xf32>
    %492 = tpu.matmul %484, %283, %cst_136 {dimension_numbers = #tpu.dot_dimension_numbers<[1], [0], [0], [1], [0, 0, 1, 1], [], []>} : vector<8x256xf32>, vector<256x1024xf32>, vector<8x1024xf32> -> vector<8x1024xf32>
    %493 = arith.addf %491, %492 : vector<8x1024xf32>
    %494 = vector.extract_strided_slice %493 {offsets = [0, 0], sizes = [8, 256], strides = [1, 1]} : vector<8x1024xf32> to vector<8x256xf32>
    %495 = arith.negf %494 : vector<8x256xf32>
    %496 = math.exp %495 : vector<8x256xf32>
    %cst_137 = arith.constant 1.000000e+00 : f32
    %497 = vector.broadcast %cst_137 : f32 to vector<8x256xf32>
    %498 = arith.addf %497, %496 : vector<8x256xf32>
    %499 = arith.divf %497, %498 : vector<8x256xf32>
    %500 = vector.extract_strided_slice %493 {offsets = [0, 256], sizes = [8, 256], strides = [1, 1]} : vector<8x1024xf32> to vector<8x256xf32>
    %501 = arith.negf %500 : vector<8x256xf32>
    %502 = math.exp %501 : vector<8x256xf32>
    %cst_138 = arith.constant 1.000000e+00 : f32
    %503 = vector.broadcast %cst_138 : f32 to vector<8x256xf32>
    %504 = arith.addf %503, %502 : vector<8x256xf32>
    %505 = arith.divf %503, %504 : vector<8x256xf32>
    %506 = vector.extract_strided_slice %493 {offsets = [0, 512], sizes = [8, 256], strides = [1, 1]} : vector<8x1024xf32> to vector<8x256xf32>
    %507 = math.tanh %506 : vector<8x256xf32>
    %508 = vector.extract_strided_slice %493 {offsets = [0, 768], sizes = [8, 256], strides = [1, 1]} : vector<8x1024xf32> to vector<8x256xf32>
    %509 = arith.negf %508 : vector<8x256xf32>
    %510 = math.exp %509 : vector<8x256xf32>
    %cst_139 = arith.constant 1.000000e+00 : f32
    %511 = vector.broadcast %cst_139 : f32 to vector<8x256xf32>
    %512 = arith.addf %511, %510 : vector<8x256xf32>
    %513 = arith.divf %511, %512 : vector<8x256xf32>
    %514 = arith.mulf %505, %482 : vector<8x256xf32>
    %515 = arith.mulf %499, %507 : vector<8x256xf32>
    %516 = arith.addf %514, %515 : vector<8x256xf32>
    %517 = math.tanh %516 : vector<8x256xf32>
    %518 = arith.mulf %513, %517 : vector<8x256xf32>
    %519 = arith.index_cast %c6_i32_133 : i32 to index
    %c0_140 = arith.constant 0 : index
    %c0_141 = arith.constant 0 : index
    %520 = vector.load %arg8[%519, %c0_140, %c0_141] : memref<8x8x256xf32, #tpu.memory_space<vmem>>, vector<1x8x256xf32>
    %521 = vector.shape_cast %520 : vector<1x8x256xf32> to vector<8x256xf32>
    %522 = vector.shape_cast %518 : vector<8x256xf32> to vector<1x8x256xf32>
    tpu.vector_store %arg8[%519, %c0_140, %c0_141], %522 {strides = array<i32>} : memref<8x8x256xf32, #tpu.memory_space<vmem>>, vector<1x8x256xf32>,
    %c7_i32_142 = arith.constant 7 : i32
    %523 = arith.index_cast %c7_i32_142 : i32 to index
    %c0_143 = arith.constant 0 : index
    %c0_144 = arith.constant 0 : index
    %524 = vector.load %arg9[%523, %c0_143, %c0_144] : memref<8x8x1024xf32, #tpu.memory_space<vmem>>, vector<1x8x1024xf32>
    %525 = vector.shape_cast %524 : vector<1x8x1024xf32> to vector<8x1024xf32>
    %cst_145 = arith.constant dense<0.000000e+00> : vector<8x1024xf32>
    %526 = tpu.matmul %518, %283, %cst_145 {dimension_numbers = #tpu.dot_dimension_numbers<[1], [0], [0], [1], [0, 0, 1, 1], [], []>} : vector<8x256xf32>, vector<256x1024xf32>, vector<8x1024xf32> -> vector<8x1024xf32>
    %527 = arith.addf %525, %526 : vector<8x1024xf32>
    %528 = vector.extract_strided_slice %527 {offsets = [0, 0], sizes = [8, 256], strides = [1, 1]} : vector<8x1024xf32> to vector<8x256xf32>
    %529 = arith.negf %528 : vector<8x256xf32>
    %530 = math.exp %529 : vector<8x256xf32>
    %cst_146 = arith.constant 1.000000e+00 : f32
    %531 = vector.broadcast %cst_146 : f32 to vector<8x256xf32>
    %532 = arith.addf %531, %530 : vector<8x256xf32>
    %533 = arith.divf %531, %532 : vector<8x256xf32>
    %534 = vector.extract_strided_slice %527 {offsets = [0, 256], sizes = [8, 256], strides = [1, 1]} : vector<8x1024xf32> to vector<8x256xf32>
    %535 = arith.negf %534 : vector<8x256xf32>
    %536 = math.exp %535 : vector<8x256xf32>
    %cst_147 = arith.constant 1.000000e+00 : f32
    %537 = vector.broadcast %cst_147 : f32 to vector<8x256xf32>
    %538 = arith.addf %537, %536 : vector<8x256xf32>
    %539 = arith.divf %537, %538 : vector<8x256xf32>
    %540 = vector.extract_strided_slice %527 {offsets = [0, 512], sizes = [8, 256], strides = [1, 1]} : vector<8x1024xf32> to vector<8x256xf32>
    %541 = math.tanh %540 : vector<8x256xf32>
    %542 = vector.extract_strided_slice %527 {offsets = [0, 768], sizes = [8, 256], strides = [1, 1]} : vector<8x1024xf32> to vector<8x256xf32>
    %543 = arith.negf %542 : vector<8x256xf32>
    %544 = math.exp %543 : vector<8x256xf32>
    %cst_148 = arith.constant 1.000000e+00 : f32
    %545 = vector.broadcast %cst_148 : f32 to vector<8x256xf32>
    %546 = arith.addf %545, %544 : vector<8x256xf32>
    %547 = arith.divf %545, %546 : vector<8x256xf32>
    %548 = arith.mulf %539, %516 : vector<8x256xf32>
    %549 = arith.mulf %533, %541 : vector<8x256xf32>
    %550 = arith.addf %548, %549 : vector<8x256xf32>
    %551 = math.tanh %550 : vector<8x256xf32>
    %552 = arith.mulf %547, %551 : vector<8x256xf32>
    %553 = arith.index_cast %c7_i32_142 : i32 to index
    %c0_149 = arith.constant 0 : index
    %c0_150 = arith.constant 0 : index
    %554 = vector.load %arg8[%553, %c0_149, %c0_150] : memref<8x8x256xf32, #tpu.memory_space<vmem>>, vector<1x8x256xf32>
    %555 = vector.shape_cast %554 : vector<1x8x256xf32> to vector<8x256xf32>
    %556 = vector.shape_cast %552 : vector<8x256xf32> to vector<1x8x256xf32>
    tpu.vector_store %arg8[%553, %c0_149, %c0_150], %556 {strides = array<i32>} : memref<8x8x256xf32, #tpu.memory_space<vmem>>, vector<1x8x256xf32>,
    %c8_i32_151 = arith.constant 8 : i32
    %c0_152 = arith.constant 0 : index
    %c0_153 = arith.constant 0 : index
    %c0_154 = arith.constant 0 : index
    %557 = vector.load %arg8[%c0_152, %c0_153, %c0_154] : memref<8x8x256xf32, #tpu.memory_space<vmem>>, vector<8x8x256xf32>
    %558 = vector.shape_cast %557 : vector<8x8x256xf32> to vector<64x256xf32>
    %c0_155 = arith.constant 0 : index
    %c0_156 = arith.constant 0 : index
    %559 = vector.load %arg5[%c0_155, %c0_156] : memref<256x128xf32, #tpu.memory_space<vmem>>, vector<256x128xf32>
    %cst_157 = arith.constant dense<0.000000e+00> : vector<64x128xf32>
    %560 = tpu.matmul %558, %559, %cst_157 {dimension_numbers = #tpu.dot_dimension_numbers<[1], [0], [0], [1], [0, 0, 1, 1], [], []>} : vector<64x256xf32>, vector<256x128xf32>, vector<64x128xf32> -> vector<64x128xf32>
    %c0_158 = arith.constant 0 : index
    %c0_159 = arith.constant 0 : index
    %561 = vector.load %arg6[%c0_158, %c0_159] : memref<1x128xf32, #tpu.memory_space<vmem>>, vector<1x128xf32>
    %562 = vector.broadcast %561 : vector<1x128xf32> to vector<64x128xf32>
    %563 = arith.addf %560, %562 : vector<64x128xf32>
    %c0_160 = arith.constant 0 : index
    %c0_161 = arith.constant 0 : index
    %564 = vector.load %arg7[%c0_160, %c0_161] : memref<64x128xf32, #tpu.memory_space<vmem>>, vector<64x128xf32>
    tpu.vector_store %arg7[%c0_160, %c0_161], %563 {strides = array<i32>} : memref<64x128xf32, #tpu.memory_space<vmem>>, vector<64x128xf32>,
    return
  }
}

</mosaic_0001>

<llo_original>
// kernel: tpu_custom_call.1
$region0: #{tpu_custom_call.1}
  #allocation0 [shape = 'u32[]', space=smem, size = 0x4, offset = 0x4, fixed_abs, tag = 'smem constant byte address 0x4 - core index']
  #allocation1 [shape = 'u32[144,128]{1,0:T(1,128)}', space=vmem, size = 0x12000, scoped, tag = 'internal scratch']
  #allocation2 [shape = 'f32[8,8,256]{2,1,0:T(8,128)}', space=vmem, size = 0x10000, scoped, tag = 'scratch operand']
  #allocation3 [shape = 'f32[8,8,1024]{2,1,0:T(8,128)}', space=vmem, size = 0x40000, scoped, tag = 'scratch operand']
  %s0 = inlined_call_operand.hbm [shape: f32[8,8,1024], index: 0, kind: input, shape index: {}]
  %s1 = inlined_call_operand.hbm [shape: f32[256,1024], index: 1, kind: input, shape index: {}]
  %s2 = inlined_call_operand.hbm [shape: f32[256,1024], index: 2, kind: input, shape index: {}]
  %s3 = inlined_call_operand.hbm [shape: f32[256,1024], index: 3, kind: input, shape index: {}]
  %s4 = inlined_call_operand.hbm [shape: f32[1,1024], index: 4, kind: input, shape index: {}]
  %s5 = inlined_call_operand.hbm [shape: f32[256,128], index: 5, kind: input, shape index: {}]
  %s6 = inlined_call_operand.vmem [shape: f32[1,128], index: 6, kind: input, shape index: {}]
  %s7 = inlined_call_operand.hbm [shape: f32[64,128], index: 7, kind: output, shape index: {}]
  %s8 = sld [smem:[#allocation0]]
  $region62: #{tpu_custom_call.1} parent=0
    _
  %s10 = ssub.s32 1, %s8
  %s11 = scalar_select 0, %s10, %s8
  $region1: #{tpu_custom_call.1} parent=0
    #allocation4 [shape = 'u8[262144]{0}', space=vmem, size = 0x40000, scoped, tag = 'input window, operand 0, single buffered']
    #allocation5 [shape = 's32[1]{0}', space=sflag, size = 0x4, scoped, tag = 'scoped memory for tpu_custom_call.1']
    #allocation6 [shape = 's32[1]{0}', space=sflag, size = 0x4, scoped, tag = 'scoped memory for tpu_custom_call.1']
    #allocation7 [shape = 'u8[1048576]{0}', space=vmem, size = 0x100000, scoped, tag = 'input window, operand 1, single buffered']
    #allocation8 [shape = 's32[1]{0}', space=sflag, size = 0x4, scoped, tag = 'scoped memory for tpu_custom_call.1']
    #allocation9 [shape = 'u8[1048576]{0}', space=vmem, size = 0x100000, scoped, tag = 'input window, operand 2, single buffered']
    #allocation10 [shape = 'u8[1048576]{0}', space=vmem, size = 0x100000, scoped, tag = 'input window, operand 3, single buffered']
    #allocation11 [shape = 's32[1]{0}', space=sflag, size = 0x4, scoped, tag = 'scoped memory for tpu_custom_call.1']
    #allocation12 [shape = 'u8[4096]{0}', space=vmem, size = 0x1000, scoped, tag = 'input window, operand 4, single buffered']
    #allocation13 [shape = 'u8[131072]{0}', space=vmem, size = 0x20000, scoped, tag = 'input window, operand 5, single buffered']
    #allocation14 [shape = 's32[1]{0}', space=sflag, size = 0x4, scoped, tag = 'scoped memory for tpu_custom_call.1']
    #allocation15 [shape = 'u8[32768]{0}', space=vmem, size = 0x8000, scoped, tag = 'output window, operand 0, single buffered']
    %12 = vsyncpa [#allocation5], 0
    %13 = vsyncpa [#allocation8], 0
    %14 = vsyncpa [#allocation11], 0
    %15 = vsyncpa [#allocation14], 0
    %16 = vsyncpa [#allocation6], 0
    // Predicated region
    $region2: #{tpu_custom_call.1} parent=1 // pred_check
      _
    $region3: #{tpu_custom_call.1} parent=1 // pred_check_branch
      %18 = sbr.rel (0) target = $region5
    $region4: #{tpu_custom_call.1} parent=1 // pred_region
      %s20 = ssub.s32 8192, 8192
      %21 = vsyncadd [#allocation5], %s20
      %s22 = sshll.u32 [#allocation4], 4
      %s23 = int_to_ptr.vmem [resolvable:$true] %s22
      %28 = dma.hbm_to_vmem [thread:$0]  %s0, 8192, %s23, [#allocation5], 1024, 1024, 64
    $region5: #{tpu_custom_call.1} parent=1 // pred_fallthru
      _
    // Predicated region
    $region6: #{tpu_custom_call.1} parent=1 // pred_check
      _
    $region7: #{tpu_custom_call.1} parent=1 // pred_check_branch
      %30 = sbr.rel (0) target = $region9
    $region8: #{tpu_custom_call.1} parent=1 // pred_region
      %s32 = ssub.s32 32768, 32768
      %33 = vsyncadd [#allocation8], %s32
      %s34 = sshll.u32 [#allocation7], 4
      %s35 = int_to_ptr.vmem [resolvable:$true] %s34
      %40 = dma.hbm_to_vmem [thread:$0]  %s1, 32768, %s35, [#allocation8], 1024, 1024, 64
    $region9: #{tpu_custom_call.1} parent=1 // pred_fallthru
      _
    // Predicated region
    $region10: #{tpu_custom_call.1} parent=1 // pred_check
      _
    $region11: #{tpu_custom_call.1} parent=1 // pred_check_branch
      %42 = sbr.rel (0) target = $region13
    $region12: #{tpu_custom_call.1} parent=1 // pred_region
      %s44 = ssub.s32 32768, 32768
      %45 = vsyncadd [#allocation8], %s44
      %s46 = sshll.u32 [#allocation9], 4
      %s47 = int_to_ptr.vmem [resolvable:$true] %s46
      %52 = dma.hbm_to_vmem [thread:$0]  %s2, 32768, %s47, [#allocation8], 1024, 1024, 64
    $region13: #{tpu_custom_call.1} parent=1 // pred_fallthru
      _
    // Predicated region
    $region14: #{tpu_custom_call.1} parent=1 // pred_check
      _
    $region15: #{tpu_custom_call.1} parent=1 // pred_check_branch
      %54 = sbr.rel (0) target = $region17
    $region16: #{tpu_custom_call.1} parent=1 // pred_region
      %s56 = ssub.s32 32768, 32768
      %57 = vsyncadd [#allocation11], %s56
      %s58 = sshll.u32 [#allocation10], 4
      %s59 = int_to_ptr.vmem [resolvable:$true] %s58
      %64 = dma.hbm_to_vmem [thread:$0]  %s3, 32768, %s59, [#allocation11], 1024, 1024, 64
    $region17: #{tpu_custom_call.1} parent=1 // pred_fallthru
      _
    // Predicated region
    $region18: #{tpu_custom_call.1} parent=1 // pred_check
      _
    $region19: #{tpu_custom_call.1} parent=1 // pred_check_branch
      %66 = sbr.rel (0) target = $region21
    $region20: #{tpu_custom_call.1} parent=1 // pred_region
      %s68 = ssub.s32 128, 128
      %69 = vsyncadd [#allocation11], %s68
      %s71 = sshll.u32 [#allocation12], 4
      %s72 = int_to_ptr.vmem [resolvable:$true] %s71
      %74 = dma.hbm_to_vmem [thread:$0]  %s4, 128, %s72, [#allocation11]
    $region21: #{tpu_custom_call.1} parent=1 // pred_fallthru
      _
    // Predicated region
    $region22: #{tpu_custom_call.1} parent=1 // pred_check
      _
    $region23: #{tpu_custom_call.1} parent=1 // pred_check_branch
      %76 = sbr.rel (0) target = $region25
    $region24: #{tpu_custom_call.1} parent=1 // pred_region
      %s78 = ssub.s32 4096, 4096
      %79 = vsyncadd [#allocation14], %s78
      %s80 = sshll.u32 [#allocation13], 4
      %s81 = int_to_ptr.vmem [resolvable:$true] %s80
      %86 = dma.hbm_to_vmem [thread:$0]  %s5, 4096, %s81, [#allocation14], 128, 128, 8
    $region25: #{tpu_custom_call.1} parent=1 // pred_fallthru
      _
    // Predicated region
    $region26: #{tpu_custom_call.1} parent=1 // pred_check
      _
    $region27: #{tpu_custom_call.1} parent=1 // pred_check_branch
      %88 = sbr.rel (0) target = $region29
    $region28: #{tpu_custom_call.1} parent=1 // pred_region
      _
    $region29: #{tpu_custom_call.1} parent=1 // pred_fallthru
      _
    // Predicated region
    $region30: #{tpu_custom_call.1} parent=1 // pred_check
      _
    $region31: #{tpu_custom_call.1} parent=1 // pred_check_branch
      %90 = sbr.rel (0) target = $region33
    $region32: #{tpu_custom_call.1} parent=1 // pred_region
      %91 = dma.done [#allocation5], 8192
    $region33: #{tpu_custom_call.1} parent=1 // pred_fallthru
      _
    // Predicated region
    $region34: #{tpu_custom_call.1} parent=1 // pred_check
      _
    $region35: #{tpu_custom_call.1} parent=1 // pred_check_branch
      %93 = sbr.rel (0) target = $region37
    $region36: #{tpu_custom_call.1} parent=1 // pred_region
      %94 = dma.done [#allocation8], 32768
    $region37: #{tpu_custom_call.1} parent=1 // pred_fallthru
      _
    // Predicated region
    $region38: #{tpu_custom_call.1} parent=1 // pred_check
      _
    $region39: #{tpu_custom_call.1} parent=1 // pred_check_branch
      %96 = sbr.rel (0) target = $region41
    $region40: #{tpu_custom_call.1} parent=1 // pred_region
      %97 = dma.done [#allocation8], 32768
    $region41: #{tpu_custom_call.1} parent=1 // pred_fallthru
      _
    // Predicated region
    $region42: #{tpu_custom_call.1} parent=1 // pred_check
      _
    $region43: #{tpu_custom_call.1} parent=1 // pred_check_branch
      %99 = sbr.rel (0) target = $region45
    $region44: #{tpu_custom_call.1} parent=1 // pred_region
      %100 = dma.done [#allocation11], 32768
    $region45: #{tpu_custom_call.1} parent=1 // pred_fallthru
      _
    // Predicated region
    $region46: #{tpu_custom_call.1} parent=1 // pred_check
      _
    $region47: #{tpu_custom_call.1} parent=1 // pred_check_branch
      %102 = sbr.rel (0) target = $region49
    $region48: #{tpu_custom_call.1} parent=1 // pred_region
      %103 = dma.done [#allocation11], 128
    $region49: #{tpu_custom_call.1} parent=1 // pred_fallthru
      _
    // Predicated region
    $region50: #{tpu_custom_call.1} parent=1 // pred_check
      _
    $region51: #{tpu_custom_call.1} parent=1 // pred_check_branch
      %105 = sbr.rel (0) target = $region53
    $region52: #{tpu_custom_call.1} parent=1 // pred_region
      %106 = dma.done [#allocation14], 4096
    $region53: #{tpu_custom_call.1} parent=1 // pred_fallthru
      _
    %v107 = vld [vmem:[#allocation7] sm:$0xff]
    %v108 = vld [vmem:[#allocation7 + $0x8] sm:$0xff]
    %v109 = vld [vmem:[#allocation7 + $0x10] sm:$0xff]
    %v110 = vld [vmem:[#allocation7 + $0x18] sm:$0xff]
    %v111 = vld [vmem:[#allocation7 + $0x20] sm:$0xff]
    %v112 = vld [vmem:[#allocation7 + $0x28] sm:$0xff]
    %v113 = vld [vmem:[#allocation7 + $0x30] sm:$0xff]
    %v114 = vld [vmem:[#allocation7 + $0x38] sm:$0xff]
    %v115 = vld [vmem:[#allocation7 + $0x40] sm:$0xff]
    %v116 = vld [vmem:[#allocation7 + $0x48] sm:$0xff]
    %v117 = vld [vmem:[#allocation7 + $0x50] sm:$0xff]
    %v118 = vld [vmem:[#allocation7 + $0x58] sm:$0xff]
    %v119 = vld [vmem:[#allocation7 + $0x60] sm:$0xff]
    %v120 = vld [vmem:[#allocation7 + $0x68] sm:$0xff]
    %v121 = vld [vmem:[#allocation7 + $0x70] sm:$0xff]
    %v122 = vld [vmem:[#allocation7 + $0x78] sm:$0xff]
    %v123 = vld [vmem:[#allocation7 + $0x80] sm:$0xff]
    %v124 = vld [vmem:[#allocation7 + $0x88] sm:$0xff]
    %v125 = vld [vmem:[#allocation7 + $0x90] sm:$0xff]
    %v126 = vld [vmem:[#allocation7 + $0x98] sm:$0xff]
    %v127 = vld [vmem:[#allocation7 + $0xa0] sm:$0xff]
    %v128 = vld [vmem:[#allocation7 + $0xa8] sm:$0xff]
    %v129 = vld [vmem:[#allocation7 + $0xb0] sm:$0xff]
    %v130 = vld [vmem:[#allocation7 + $0xb8] sm:$0xff]
    %v131 = vld [vmem:[#allocation7 + $0xc0] sm:$0xff]
    %v132 = vld [vmem:[#allocation7 + $0xc8] sm:$0xff]
    %v133 = vld [vmem:[#allocation7 + $0xd0] sm:$0xff]
    %v134 = vld [vmem:[#allocation7 + $0xd8] sm:$0xff]
    %v135 = vld [vmem:[#allocation7 + $0xe0] sm:$0xff]
    %v136 = vld [vmem:[#allocation7 + $0xe8] sm:$0xff]
    %v137 = vld [vmem:[#allocation7 + $0xf0] sm:$0xff]
    %v138 = vld [vmem:[#allocation7 + $0xf8] sm:$0xff]
    %v139 = vld [vmem:[#allocation7 + $0x100] sm:$0xff]
    %v140 = vld [vmem:[#allocation7 + $0x108] sm:$0xff]
    %v141 = vld [vmem:[#allocation7 + $0x110] sm:$0xff]
    %v142 = vld [vmem:[#allocation7 + $0x118] sm:$0xff]
    %v143 = vld [vmem:[#allocation7 + $0x120] sm:$0xff]
    %v144 = vld [vmem:[#allocation7 + $0x128] sm:$0xff]
    %v145 = vld [vmem:[#allocation7 + $0x130] sm:$0xff]
    %v146 = vld [vmem:[#allocation7 + $0x138] sm:$0xff]
    %v147 = vld [vmem:[#allocation7 + $0x140] sm:$0xff]
    %v148 = vld [vmem:[#allocation7 + $0x148] sm:$0xff]
    %v149 = vld [vmem:[#allocation7 + $0x150] sm:$0xff]
    %v150 = vld [vmem:[#allocation7 + $0x158] sm:$0xff]
    %v151 = vld [vmem:[#allocation7 + $0x160] sm:$0xff]
    %v152 = vld [vmem:[#allocation7 + $0x168] sm:$0xff]
    %v153 = vld [vmem:[#allocation7 + $0x170] sm:$0xff]
    %v154 = vld [vmem:[#allocation7 + $0x178] sm:$0xff]
    %v155 = vld [vmem:[#allocation7 + $0x180] sm:$0xff]
    %v156 = vld [vmem:[#allocation7 + $0x188] sm:$0xff]
    %v157 = vld [vmem:[#allocation7 + $0x190] sm:$0xff]
    %v158 = vld [vmem:[#allocation7 + $0x198] sm:$0xff]
    %v159 = vld [vmem:[#allocation7 + $0x1a0] sm:$0xff]
    %v160 = vld [vmem:[#allocation7 + $0x1a8] sm:$0xff]
    %v161 = vld [vmem:[#allocation7 + $0x1b0] sm:$0xff]
    %v162 = vld [vmem:[#allocation7 + $0x1b8] sm:$0xff]
    %v163 = vld [vmem:[#allocation7 + $0x1c0] sm:$0xff]
    %v164 = vld [vmem:[#allocation7 + $0x1c8] sm:$0xff]
    %v165 = vld [vmem:[#allocation7 + $0x1d0] sm:$0xff]
    %v166 = vld [vmem:[#allocation7 + $0x1d8] sm:$0xff]
    %v167 = vld [vmem:[#allocation7 + $0x1e0] sm:$0xff]
    %v168 = vld [vmem:[#allocation7 + $0x1e8] sm:$0xff]
    %v169 = vld [vmem:[#allocation7 + $0x1f0] sm:$0xff]
    %v170 = vld [vmem:[#allocation7 + $0x1f8] sm:$0xff]
    %v171 = vld [vmem:[#allocation7 + $0x200] sm:$0xff]
    %v172 = vld [vmem:[#allocation7 + $0x208] sm:$0xff]
    %v173 = vld [vmem:[#allocation7 + $0x210] sm:$0xff]
    %v174 = vld [vmem:[#allocation7 + $0x218] sm:$0xff]
    %v175 = vld [vmem:[#allocation7 + $0x220] sm:$0xff]
    %v176 = vld [vmem:[#allocation7 + $0x228] sm:$0xff]
    %v177 = vld [vmem:[#allocation7 + $0x230] sm:$0xff]
    %v178 = vld [vmem:[#allocation7 + $0x238] sm:$0xff]
    %v179 = vld [vmem:[#allocation7 + $0x240] sm:$0xff]
    %v180 = vld [vmem:[#allocation7 + $0x248] sm:$0xff]
    %v181 = vld [vmem:[#allocation7 + $0x250] sm:$0xff]
    %v182 = vld [vmem:[#allocation7 + $0x258] sm:$0xff]
    %v183 = vld [vmem:[#allocation7 + $0x260] sm:$0xff]
    %v184 = vld [vmem:[#allocation7 + $0x268] sm:$0xff]
    %v185 = vld [vmem:[#allocation7 + $0x270] sm:$0xff]
    %v186 = vld [vmem:[#allocation7 + $0x278] sm:$0xff]
    %v187 = vld [vmem:[#allocation7 + $0x280] sm:$0xff]
    %v188 = vld [vmem:[#allocation7 + $0x288] sm:$0xff]
    %v189 = vld [vmem:[#allocation7 + $0x290] sm:$0xff]
    %v190 = vld [vmem:[#allocation7 + $0x298] sm:$0xff]
    %v191 = vld [vmem:[#allocation7 + $0x2a0] sm:$0xff]
    %v192 = vld [vmem:[#allocation7 + $0x2a8] sm:$0xff]
    %v193 = vld [vmem:[#allocation7 + $0x2b0] sm:$0xff]
    %v194 = vld [vmem:[#allocation7 + $0x2b8] sm:$0xff]
    %v195 = vld [vmem:[#allocation7 + $0x2c0] sm:$0xff]
    %v196 = vld [vmem:[#allocation7 + $0x2c8] sm:$0xff]
    %v197 = vld [vmem:[#allocation7 + $0x2d0] sm:$0xff]
    %v198 = vld [vmem:[#allocation7 + $0x2d8] sm:$0xff]
    %v199 = vld [vmem:[#allocation7 + $0x2e0] sm:$0xff]
    %v200 = vld [vmem:[#allocation7 + $0x2e8] sm:$0xff]
    %v201 = vld [vmem:[#allocation7 + $0x2f0] sm:$0xff]
    %v202 = vld [vmem:[#allocation7 + $0x2f8] sm:$0xff]
    %v203 = vld [vmem:[#allocation7 + $0x300] sm:$0xff]
    %v204 = vld [vmem:[#allocation7 + $0x308] sm:$0xff]
    %v205 = vld [vmem:[#allocation7 + $0x310] sm:$0xff]
    %v206 = vld [vmem:[#allocation7 + $0x318] sm:$0xff]
    %v207 = vld [vmem:[#allocation7 + $0x320] sm:$0xff]
    %v208 = vld [vmem:[#allocation7 + $0x328] sm:$0xff]
    %v209 = vld [vmem:[#allocation7 + $0x330] sm:$0xff]
    %v210 = vld [vmem:[#allocation7 + $0x338] sm:$0xff]
    %v211 = vld [vmem:[#allocation7 + $0x340] sm:$0xff]
    %v212 = vld [vmem:[#allocation7 + $0x348] sm:$0xff]
    %v213 = vld [vmem:[#allocation7 + $0x350] sm:$0xff]
    %v214 = vld [vmem:[#allocation7 + $0x358] sm:$0xff]
    %v215 = vld [vmem:[#allocation7 + $0x360] sm:$0xff]
    %v216 = vld [vmem:[#allocation7 + $0x368] sm:$0xff]
    %v217 = vld [vmem:[#allocation7 + $0x370] sm:$0xff]
    %v218 = vld [vmem:[#allocation7 + $0x378] sm:$0xff]
    %v219 = vld [vmem:[#allocation7 + $0x380] sm:$0xff]
    %v220 = vld [vmem:[#allocation7 + $0x388] sm:$0xff]
    %v221 = vld [vmem:[#allocation7 + $0x390] sm:$0xff]
    %v222 = vld [vmem:[#allocation7 + $0x398] sm:$0xff]
    %v223 = vld [vmem:[#allocation7 + $0x3a0] sm:$0xff]
    %v224 = vld [vmem:[#allocation7 + $0x3a8] sm:$0xff]
    %v225 = vld [vmem:[#allocation7 + $0x3b0] sm:$0xff]
    %v226 = vld [vmem:[#allocation7 + $0x3b8] sm:$0xff]
    %v227 = vld [vmem:[#allocation7 + $0x3c0] sm:$0xff]
    %v228 = vld [vmem:[#allocation7 + $0x3c8] sm:$0xff]
    %v229 = vld [vmem:[#allocation7 + $0x3d0] sm:$0xff]
    %v230 = vld [vmem:[#allocation7 + $0x3d8] sm:$0xff]
    %v231 = vld [vmem:[#allocation7 + $0x3e0] sm:$0xff]
    %v232 = vld [vmem:[#allocation7 + $0x3e8] sm:$0xff]
    %v233 = vld [vmem:[#allocation7 + $0x3f0] sm:$0xff]
    %v234 = vld [vmem:[#allocation7 + $0x3f8] sm:$0xff]
    %v235 = vld [vmem:[#allocation7 + $0x400] sm:$0xff]
    %v236 = vld [vmem:[#allocation7 + $0x408] sm:$0xff]
    %v237 = vld [vmem:[#allocation7 + $0x410] sm:$0xff]
    %v238 = vld [vmem:[#allocation7 + $0x418] sm:$0xff]
    %v239 = vld [vmem:[#allocation7 + $0x420] sm:$0xff]
    %v240 = vld [vmem:[#allocation7 + $0x428] sm:$0xff]
    %v241 = vld [vmem:[#allocation7 + $0x430] sm:$0xff]
    %v242 = vld [vmem:[#allocation7 + $0x438] sm:$0xff]
    %v243 = vld [vmem:[#allocation7 + $0x440] sm:$0xff]
    %v244 = vld [vmem:[#allocation7 + $0x448] sm:$0xff]
    %v245 = vld [vmem:[#allocation7 + $0x450] sm:$0xff]
    %v246 = vld [vmem:[#allocation7 + $0x458] sm:$0xff]
    %v247 = vld [vmem:[#allocation7 + $0x460] sm:$0xff]
    %v248 = vld [vmem:[#allocation7 + $0x468] sm:$0xff]
    %v249 = vld [vmem:[#allocation7 + $0x470] sm:$0xff]
    %v250 = vld [vmem:[#allocation7 + $0x478] sm:$0xff]
    %v251 = vld [vmem:[#allocation7 + $0x480] sm:$0xff]
    %v252 = vld [vmem:[#allocation7 + $0x488] sm:$0xff]
    %v253 = vld [vmem:[#allocation7 + $0x490] sm:$0xff]
    %v254 = vld [vmem:[#allocation7 + $0x498] sm:$0xff]
    %v255 = vld [vmem:[#allocation7 + $0x4a0] sm:$0xff]
    %v256 = vld [vmem:[#allocation7 + $0x4a8] sm:$0xff]
    %v257 = vld [vmem:[#allocation7 + $0x4b0] sm:$0xff]
    %v258 = vld [vmem:[#allocation7 + $0x4b8] sm:$0xff]
    %v259 = vld [vmem:[#allocation7 + $0x4c0] sm:$0xff]
    %v260 = vld [vmem:[#allocation7 + $0x4c8] sm:$0xff]
    %v261 = vld [vmem:[#allocation7 + $0x4d0] sm:$0xff]
    %v262 = vld [vmem:[#allocation7 + $0x4d8] sm:$0xff]
    %v263 = vld [vmem:[#allocation7 + $0x4e0] sm:$0xff]
    %v264 = vld [vmem:[#allocation7 + $0x4e8] sm:$0xff]
    %v265 = vld [vmem:[#allocation7 + $0x4f0] sm:$0xff]
    %v266 = vld [vmem:[#allocation7 + $0x4f8] sm:$0xff]
    %v267 = vld [vmem:[#allocation7 + $0x500] sm:$0xff]
    %v268 = vld [vmem:[#allocation7 + $0x508] sm:$0xff]
    %v269 = vld [vmem:[#allocation7 + $0x510] sm:$0xff]
    %v270 = vld [vmem:[#allocation7 + $0x518] sm:$0xff]
    %v271 = vld [vmem:[#allocation7 + $0x520] sm:$0xff]
    %v272 = vld [vmem:[#allocation7 + $0x528] sm:$0xff]
    %v273 = vld [vmem:[#allocation7 + $0x530] sm:$0xff]
    %v274 = vld [vmem:[#allocation7 + $0x538] sm:$0xff]
    %v275 = vld [vmem:[#allocation7 + $0x540] sm:$0xff]
    %v276 = vld [vmem:[#allocation7 + $0x548] sm:$0xff]
    %v277 = vld [vmem:[#allocation7 + $0x550] sm:$0xff]
    %v278 = vld [vmem:[#allocation7 + $0x558] sm:$0xff]
    %v279 = vld [vmem:[#allocation7 + $0x560] sm:$0xff]
    %v280 = vld [vmem:[#allocation7 + $0x568] sm:$0xff]
    %v281 = vld [vmem:[#allocation7 + $0x570] sm:$0xff]
    %v282 = vld [vmem:[#allocation7 + $0x578] sm:$0xff]
    %v283 = vld [vmem:[#allocation7 + $0x580] sm:$0xff]
    %v284 = vld [vmem:[#allocation7 + $0x588] sm:$0xff]
    %v285 = vld [vmem:[#allocation7 + $0x590] sm:$0xff]
    %v286 = vld [vmem:[#allocation7 + $0x598] sm:$0xff]
    %v287 = vld [vmem:[#allocation7 + $0x5a0] sm:$0xff]
    %v288 = vld [vmem:[#allocation7 + $0x5a8] sm:$0xff]
    %v289 = vld [vmem:[#allocation7 + $0x5b0] sm:$0xff]
    %v290 = vld [vmem:[#allocation7 + $0x5b8] sm:$0xff]
    %v291 = vld [vmem:[#allocation7 + $0x5c0] sm:$0xff]
    %v292 = vld [vmem:[#allocation7 + $0x5c8] sm:$0xff]
    %v293 = vld [vmem:[#allocation7 + $0x5d0] sm:$0xff]
    %v294 = vld [vmem:[#allocation7 + $0x5d8] sm:$0xff]
    %v295 = vld [vmem:[#allocation7 + $0x5e0] sm:$0xff]
    %v296 = vld [vmem:[#allocation7 + $0x5e8] sm:$0xff]
    %v297 = vld [vmem:[#allocation7 + $0x5f0] sm:$0xff]
    %v298 = vld [vmem:[#allocation7 + $0x5f8] sm:$0xff]
    %v299 = vld [vmem:[#allocation7 + $0x600] sm:$0xff]
    %v300 = vld [vmem:[#allocation7 + $0x608] sm:$0xff]
    %v301 = vld [vmem:[#allocation7 + $0x610] sm:$0xff]
    %v302 = vld [vmem:[#allocation7 + $0x618] sm:$0xff]
    %v303 = vld [vmem:[#allocation7 + $0x620] sm:$0xff]
    %v304 = vld [vmem:[#allocation7 + $0x628] sm:$0xff]
    %v305 = vld [vmem:[#allocation7 + $0x630] sm:$0xff]
    %v306 = vld [vmem:[#allocation7 + $0x638] sm:$0xff]
    %v307 = vld [vmem:[#allocation7 + $0x640] sm:$0xff]
    %v308 = vld [vmem:[#allocation7 + $0x648] sm:$0xff]
    %v309 = vld [vmem:[#allocation7 + $0x650] sm:$0xff]
    %v310 = vld [vmem:[#allocation7 + $0x658] sm:$0xff]
    %v311 = vld [vmem:[#allocation7 + $0x660] sm:$0xff]
    %v312 = vld [vmem:[#allocation7 + $0x668] sm:$0xff]
    %v313 = vld [vmem:[#allocation7 + $0x670] sm:$0xff]
    %v314 = vld [vmem:[#allocation7 + $0x678] sm:$0xff]
    %v315 = vld [vmem:[#allocation7 + $0x680] sm:$0xff]
    %v316 = vld [vmem:[#allocation7 + $0x688] sm:$0xff]
    %v317 = vld [vmem:[#allocation7 + $0x690] sm:$0xff]
    %v318 = vld [vmem:[#allocation7 + $0x698] sm:$0xff]
    %v319 = vld [vmem:[#allocation7 + $0x6a0] sm:$0xff]
    %v320 = vld [vmem:[#allocation7 + $0x6a8] sm:$0xff]
    %v321 = vld [vmem:[#allocation7 + $0x6b0] sm:$0xff]
    %v322 = vld [vmem:[#allocation7 + $0x6b8] sm:$0xff]
    %v323 = vld [vmem:[#allocation7 + $0x6c0] sm:$0xff]
    %v324 = vld [vmem:[#allocation7 + $0x6c8] sm:$0xff]
    %v325 = vld [vmem:[#allocation7 + $0x6d0] sm:$0xff]
    %v326 = vld [vmem:[#allocation7 + $0x6d8] sm:$0xff]
    %v327 = vld [vmem:[#allocation7 + $0x6e0] sm:$0xff]
    %v328 = vld [vmem:[#allocation7 + $0x6e8] sm:$0xff]
    %v329 = vld [vmem:[#allocation7 + $0x6f0] sm:$0xff]
    %v330 = vld [vmem:[#allocation7 + $0x6f8] sm:$0xff]
    %v331 = vld [vmem:[#allocation7 + $0x700] sm:$0xff]
    %v332 = vld [vmem:[#allocation7 + $0x708] sm:$0xff]
    %v333 = vld [vmem:[#allocation7 + $0x710] sm:$0xff]
    %v334 = vld [vmem:[#allocation7 + $0x718] sm:$0xff]
    %v335 = vld [vmem:[#allocation7 + $0x720] sm:$0xff]
    %v336 = vld [vmem:[#allocation7 + $0x728] sm:$0xff]
    %v337 = vld [vmem:[#allocation7 + $0x730] sm:$0xff]
    %v338 = vld [vmem:[#allocation7 + $0x738] sm:$0xff]
    %v339 = vld [vmem:[#allocation7 + $0x740] sm:$0xff]
    %v340 = vld [vmem:[#allocation7 + $0x748] sm:$0xff]
    %v341 = vld [vmem:[#allocation7 + $0x750] sm:$0xff]
    %v342 = vld [vmem:[#allocation7 + $0x758] sm:$0xff]
    %v343 = vld [vmem:[#allocation7 + $0x760] sm:$0xff]
    %v344 = vld [vmem:[#allocation7 + $0x768] sm:$0xff]
    %v345 = vld [vmem:[#allocation7 + $0x770] sm:$0xff]
    %v346 = vld [vmem:[#allocation7 + $0x778] sm:$0xff]
    %v347 = vld [vmem:[#allocation7 + $0x780] sm:$0xff]
    %v348 = vld [vmem:[#allocation7 + $0x788] sm:$0xff]
    %v349 = vld [vmem:[#allocation7 + $0x790] sm:$0xff]
    %v350 = vld [vmem:[#allocation7 + $0x798] sm:$0xff]
    %v351 = vld [vmem:[#allocation7 + $0x7a0] sm:$0xff]
    %v352 = vld [vmem:[#allocation7 + $0x7a8] sm:$0xff]
    %v353 = vld [vmem:[#allocation7 + $0x7b0] sm:$0xff]
    %v354 = vld [vmem:[#allocation7 + $0x7b8] sm:$0xff]
    %v355 = vld [vmem:[#allocation7 + $0x7c0] sm:$0xff]
    %v356 = vld [vmem:[#allocation7 + $0x7c8] sm:$0xff]
    %v357 = vld [vmem:[#allocation7 + $0x7d0] sm:$0xff]
    %v358 = vld [vmem:[#allocation7 + $0x7d8] sm:$0xff]
    %v359 = vld [vmem:[#allocation7 + $0x7e0] sm:$0xff]
    %v360 = vld [vmem:[#allocation7 + $0x7e8] sm:$0xff]
    %v361 = vld [vmem:[#allocation7 + $0x7f0] sm:$0xff]
    %v362 = vld [vmem:[#allocation7 + $0x7f8] sm:$0xff]
    %v363 = vld [vmem:[#allocation4] sm:$0xff]
    %v364 = vld [vmem:[#allocation4 + $0x8] sm:$0xff]
    %v365 = vld [vmem:[#allocation4 + $0x10] sm:$0xff]
    %v366 = vld [vmem:[#allocation4 + $0x18] sm:$0xff]
    %v367 = vld [vmem:[#allocation4 + $0x20] sm:$0xff]
    %v368 = vld [vmem:[#allocation4 + $0x28] sm:$0xff]
    %v369 = vld [vmem:[#allocation4 + $0x30] sm:$0xff]
    %v370 = vld [vmem:[#allocation4 + $0x38] sm:$0xff]
    %371 = vmatprep.subr.mxu0 %v228
    %372 = vmatpush1.msra.mxu0 %v227
    %373 = vmatprep.subr.mxu0 %v220
    %374 = vmatpush1.msra.mxu0 %v219
    %375 = vmatprep.subr.mxu0 %v212
    %376 = vmatpush1.msra.mxu0 %v211
    %377 = vmatprep.subr.mxu0 %v204
    %378 = vmatpush1.msra.mxu0 %v203
    %379 = vmatprep.subr.mxu0 %v196
    %380 = vmatpush1.msra.mxu0 %v195
    %381 = vmatprep.subr.mxu0 %v188
    %382 = vmatpush1.msra.mxu0 %v187
    %383 = vmatprep.subr.mxu0 %v180
    %384 = vmatpush1.msra.mxu0 %v179
    %385 = vmatprep.subr.mxu0 %v172
    %386 = vmatpush1.msra.mxu0 %v171
    %387 = vmatprep.subr.mxu0 %v164
    %388 = vmatpush1.msra.mxu0 %v163
    %389 = vmatprep.subr.mxu0 %v156
    %390 = vmatpush1.msra.mxu0 %v155
    %391 = vmatprep.subr.mxu0 %v148
    %392 = vmatpush1.msra.mxu0 %v147
    %393 = vmatprep.subr.mxu0 %v140
    %394 = vmatpush1.msra.mxu0 %v139
    %395 = vmatprep.subr.mxu0 %v132
    %396 = vmatpush1.msra.mxu0 %v131
    %397 = vmatprep.subr.mxu0 %v124
    %398 = vmatpush1.msra.mxu0 %v123
    %399 = vmatprep.subr.mxu0 %v116
    %400 = vmatpush1.msra.mxu0 %v115
    %401 = vmatprep.subr.mxu0 %v108
    %402 = vmatpush1.msra.mxu0 %v107
    %403 = vmatprep.subr.mxu0 %v356
    %404 = vmatpush2.msra.mxu0 %v355
    %405 = vmatprep.subr.mxu0 %v348
    %406 = vmatpush2.msra.mxu0 %v347
    %407 = vmatprep.subr.mxu0 %v340
    %408 = vmatpush2.msra.mxu0 %v339
    %409 = vmatprep.subr.mxu0 %v332
    %410 = vmatpush2.msra.mxu0 %v331
    %411 = vmatprep.subr.mxu0 %v324
    %412 = vmatpush2.msra.mxu0 %v323
    %413 = vmatprep.subr.mxu0 %v316
    %414 = vmatpush2.msra.mxu0 %v315
    %415 = vmatprep.subr.mxu0 %v308
    %416 = vmatpush2.msra.mxu0 %v307
    %417 = vmatprep.subr.mxu0 %v300
    %418 = vmatpush2.msra.mxu0 %v299
    %419 = vmatprep.subr.mxu0 %v292
    %420 = vmatpush2.msra.mxu0 %v291
    %421 = vmatprep.subr.mxu0 %v284
    %422 = vmatpush2.msra.mxu0 %v283
    %423 = vmatprep.subr.mxu0 %v276
    %424 = vmatpush2.msra.mxu0 %v275
    %425 = vmatprep.subr.mxu0 %v268
    %426 = vmatpush2.msra.mxu0 %v267
    %427 = vmatprep.subr.mxu0 %v260
    %428 = vmatpush2.msra.mxu0 %v259
    %429 = vmatprep.subr.mxu0 %v252
    %430 = vmatpush2.msra.mxu0 %v251
    %431 = vmatprep.subr.mxu0 %v244
    %432 = vmatpush2.msra.mxu0 %v243
    %433 = vmatprep.subr.mxu0 %v236
    %434 = vmatpush2.msra.mxu0 %v235
    %435 = vmatprep.mubr.f32.mxu0 0.0
    %436 = vmatmul.mubr.f32.gmra.mxu0 0.0
    %v437 = vpop.f32.mrf.mxu0
    %v438 = vadd.f32 0.0, %v437
    %v439 = vpop.f32.mrf.mxu0
    %v440 = vadd.f32 0.0, %v439
    %441 = vdwg.mxu0
    %442 = vmatprep.subr.mxu0 %v230
    %443 = vmatpush1.msra.mxu0 %v229
    %444 = vmatprep.subr.mxu0 %v222
    %445 = vmatpush1.msra.mxu0 %v221
    %446 = vmatprep.subr.mxu0 %v214
    %447 = vmatpush1.msra.mxu0 %v213
    %448 = vmatprep.subr.mxu0 %v206
    %449 = vmatpush1.msra.mxu0 %v205
    %450 = vmatprep.subr.mxu0 %v198
    %451 = vmatpush1.msra.mxu0 %v197
    %452 = vmatprep.subr.mxu0 %v190
    %453 = vmatpush1.msra.mxu0 %v189
    %454 = vmatprep.subr.mxu0 %v182
    %455 = vmatpush1.msra.mxu0 %v181
    %456 = vmatprep.subr.mxu0 %v174
    %457 = vmatpush1.msra.mxu0 %v173
    %458 = vmatprep.subr.mxu0 %v166
    %459 = vmatpush1.msra.mxu0 %v165
    %460 = vmatprep.subr.mxu0 %v158
    %461 = vmatpush1.msra.mxu0 %v157
    %462 = vmatprep.subr.mxu0 %v150
    %463 = vmatpush1.msra.mxu0 %v149
    %464 = vmatprep.subr.mxu0 %v142
    %465 = vmatpush1.msra.mxu0 %v141
    %466 = vmatprep.subr.mxu0 %v134
    %467 = vmatpush1.msra.mxu0 %v133
    %468 = vmatprep.subr.mxu0 %v126
    %469 = vmatpush1.msra.mxu0 %v125
    %470 = vmatprep.subr.mxu0 %v118
    %471 = vmatpush1.msra.mxu0 %v117
    %472 = vmatprep.subr.mxu0 %v110
    %473 = vmatpush1.msra.mxu0 %v109
    %474 = vmatprep.subr.mxu0 %v358
    %475 = vmatpush2.msra.mxu0 %v357
    %476 = vmatprep.subr.mxu0 %v350
    %477 = vmatpush2.msra.mxu0 %v349
    %478 = vmatprep.subr.mxu0 %v342
    %479 = vmatpush2.msra.mxu0 %v341
    %480 = vmatprep.subr.mxu0 %v334
    %481 = vmatpush2.msra.mxu0 %v333
    %482 = vmatprep.subr.mxu0 %v326
    %483 = vmatpush2.msra.mxu0 %v325
    %484 = vmatprep.subr.mxu0 %v318
    %485 = vmatpush2.msra.mxu0 %v317
    %486 = vmatprep.subr.mxu0 %v310
    %487 = vmatpush2.msra.mxu0 %v309
    %488 = vmatprep.subr.mxu0 %v302
    %489 = vmatpush2.msra.mxu0 %v301
    %490 = vmatprep.subr.mxu0 %v294
    %491 = vmatpush2.msra.mxu0 %v293
    %492 = vmatprep.subr.mxu0 %v286
    %493 = vmatpush2.msra.mxu0 %v285
    %494 = vmatprep.subr.mxu0 %v278
    %495 = vmatpush2.msra.mxu0 %v277
    %496 = vmatprep.subr.mxu0 %v270
    %497 = vmatpush2.msra.mxu0 %v269
    %498 = vmatprep.subr.mxu0 %v262
    %499 = vmatpush2.msra.mxu0 %v261
    %500 = vmatprep.subr.mxu0 %v254
    %501 = vmatpush2.msra.mxu0 %v253
    %502 = vmatprep.subr.mxu0 %v246
    %503 = vmatpush2.msra.mxu0 %v245
    %504 = vmatprep.subr.mxu0 %v238
    %505 = vmatpush2.msra.mxu0 %v237
    %506 = vmatprep.mubr.f32.mxu0 0.0
    %507 = vmatmul.mubr.f32.gmra.mxu0 0.0
    %v508 = vpop.f32.mrf.mxu0
    %v509 = vadd.f32 0.0, %v508
    %v510 = vpop.f32.mrf.mxu0
    %v511 = vadd.f32 0.0, %v510
    %512 = vdwg.mxu0
    %513 = vmatprep.subr.mxu0 %v232
    %514 = vmatpush1.msra.mxu0 %v231
    %515 = vmatprep.subr.mxu0 %v224
    %516 = vmatpush1.msra.mxu0 %v223
    %517 = vmatprep.subr.mxu0 %v216
    %518 = vmatpush1.msra.mxu0 %v215
    %519 = vmatprep.subr.mxu0 %v208
    %520 = vmatpush1.msra.mxu0 %v207
    %521 = vmatprep.subr.mxu0 %v200
    %522 = vmatpush1.msra.mxu0 %v199
    %523 = vmatprep.subr.mxu0 %v192
    %524 = vmatpush1.msra.mxu0 %v191
    %525 = vmatprep.subr.mxu0 %v184
    %526 = vmatpush1.msra.mxu0 %v183
    %527 = vmatprep.subr.mxu0 %v176
    %528 = vmatpush1.msra.mxu0 %v175
    %529 = vmatprep.subr.mxu0 %v168
    %530 = vmatpush1.msra.mxu0 %v167
    %531 = vmatprep.subr.mxu0 %v160
    %532 = vmatpush1.msra.mxu0 %v159
    %533 = vmatprep.subr.mxu0 %v152
    %534 = vmatpush1.msra.mxu0 %v151
    %535 = vmatprep.subr.mxu0 %v144
    %536 = vmatpush1.msra.mxu0 %v143
    %537 = vmatprep.subr.mxu0 %v136
    %538 = vmatpush1.msra.mxu0 %v135
    %539 = vmatprep.subr.mxu0 %v128
    %540 = vmatpush1.msra.mxu0 %v127
    %541 = vmatprep.subr.mxu0 %v120
    %542 = vmatpush1.msra.mxu0 %v119
    %543 = vmatprep.subr.mxu0 %v112
    %544 = vmatpush1.msra.mxu0 %v111
    %545 = vmatprep.subr.mxu0 %v360
    %546 = vmatpush2.msra.mxu0 %v359
    %547 = vmatprep.subr.mxu0 %v352
    %548 = vmatpush2.msra.mxu0 %v351
    %549 = vmatprep.subr.mxu0 %v344
    %550 = vmatpush2.msra.mxu0 %v343
    %551 = vmatprep.subr.mxu0 %v336
    %552 = vmatpush2.msra.mxu0 %v335
    %553 = vmatprep.subr.mxu0 %v328
    %554 = vmatpush2.msra.mxu0 %v327
    %555 = vmatprep.subr.mxu0 %v320
    %556 = vmatpush2.msra.mxu0 %v319
    %557 = vmatprep.subr.mxu0 %v312
    %558 = vmatpush2.msra.mxu0 %v311
    %559 = vmatprep.subr.mxu0 %v304
    %560 = vmatpush2.msra.mxu0 %v303
    %561 = vmatprep.subr.mxu0 %v296
    %562 = vmatpush2.msra.mxu0 %v295
    %563 = vmatprep.subr.mxu0 %v288
    %564 = vmatpush2.msra.mxu0 %v287
    %565 = vmatprep.subr.mxu0 %v280
    %566 = vmatpush2.msra.mxu0 %v279
    %567 = vmatprep.subr.mxu0 %v272
    %568 = vmatpush2.msra.mxu0 %v271
    %569 = vmatprep.subr.mxu0 %v264
    %570 = vmatpush2.msra.mxu0 %v263
    %571 = vmatprep.subr.mxu0 %v256
    %572 = vmatpush2.msra.mxu0 %v255
    %573 = vmatprep.subr.mxu0 %v248
    %574 = vmatpush2.msra.mxu0 %v247
    %575 = vmatprep.subr.mxu0 %v240
    %576 = vmatpush2.msra.mxu0 %v239
    %577 = vmatprep.mubr.f32.mxu0 0.0
    %578 = vmatmul.mubr.f32.gmra.mxu0 0.0
    %v579 = vpop.f32.mrf.mxu0
    %v580 = vadd.f32 0.0, %v579
    %v581 = vpop.f32.mrf.mxu0
    %v582 = vadd.f32 0.0, %v581
    %583 = vdwg.mxu0
    %584 = vmatprep.subr.mxu0 %v234
    %585 = vmatpush1.msra.mxu0 %v233
    %586 = vmatprep.subr.mxu0 %v226
    %587 = vmatpush1.msra.mxu0 %v225
    %588 = vmatprep.subr.mxu0 %v218
    %589 = vmatpush1.msra.mxu0 %v217
    %590 = vmatprep.subr.mxu0 %v210
    %591 = vmatpush1.msra.mxu0 %v209
    %592 = vmatprep.subr.mxu0 %v202
    %593 = vmatpush1.msra.mxu0 %v201
    %594 = vmatprep.subr.mxu0 %v194
    %595 = vmatpush1.msra.mxu0 %v193
    %596 = vmatprep.subr.mxu0 %v186
    %597 = vmatpush1.msra.mxu0 %v185
    %598 = vmatprep.subr.mxu0 %v178
    %599 = vmatpush1.msra.mxu0 %v177
    %600 = vmatprep.subr.mxu0 %v170
    %601 = vmatpush1.msra.mxu0 %v169
    %602 = vmatprep.subr.mxu0 %v162
    %603 = vmatpush1.msra.mxu0 %v161
    %604 = vmatprep.subr.mxu0 %v154
    %605 = vmatpush1.msra.mxu0 %v153
    %606 = vmatprep.subr.mxu0 %v146
    %607 = vmatpush1.msra.mxu0 %v145
    %608 = vmatprep.subr.mxu0 %v138
    %609 = vmatpush1.msra.mxu0 %v137
    %610 = vmatprep.subr.mxu0 %v130
    %611 = vmatpush1.msra.mxu0 %v129
    %612 = vmatprep.subr.mxu0 %v122
    %613 = vmatpush1.msra.mxu0 %v121
    %614 = vmatprep.subr.mxu0 %v114
    %615 = vmatpush1.msra.mxu0 %v113
    %616 = vmatprep.subr.mxu0 %v362
    %617 = vmatpush2.msra.mxu0 %v361
    %618 = vmatprep.subr.mxu0 %v354
    %619 = vmatpush2.msra.mxu0 %v353
    %620 = vmatprep.subr.mxu0 %v346
    %621 = vmatpush2.msra.mxu0 %v345
    %622 = vmatprep.subr.mxu0 %v338
    %623 = vmatpush2.msra.mxu0 %v337
    %624 = vmatprep.subr.mxu0 %v330
    %625 = vmatpush2.msra.mxu0 %v329
    %626 = vmatprep.subr.mxu0 %v322
    %627 = vmatpush2.msra.mxu0 %v321
    %628 = vmatprep.subr.mxu0 %v314
    %629 = vmatpush2.msra.mxu0 %v313
    %630 = vmatprep.subr.mxu0 %v306
    %631 = vmatpush2.msra.mxu0 %v305
    %632 = vmatprep.subr.mxu0 %v298
    %633 = vmatpush2.msra.mxu0 %v297
    %634 = vmatprep.subr.mxu0 %v290
    %635 = vmatpush2.msra.mxu0 %v289
    %636 = vmatprep.subr.mxu0 %v282
    %637 = vmatpush2.msra.mxu0 %v281
    %638 = vmatprep.subr.mxu0 %v274
    %639 = vmatpush2.msra.mxu0 %v273
    %640 = vmatprep.subr.mxu0 %v266
    %641 = vmatpush2.msra.mxu0 %v265
    %642 = vmatprep.subr.mxu0 %v258
    %643 = vmatpush2.msra.mxu0 %v257
    %644 = vmatprep.subr.mxu0 %v250
    %645 = vmatpush2.msra.mxu0 %v249
    %646 = vmatprep.subr.mxu0 %v242
    %647 = vmatpush2.msra.mxu0 %v241
    %648 = vmatprep.mubr.f32.mxu0 0.0
    %649 = vmatmul.mubr.f32.gmra.mxu0 0.0
    %v650 = vpop.f32.mrf.mxu0
    %v651 = vadd.f32 0.0, %v650
    %v652 = vpop.f32.mrf.mxu0
    %v653 = vadd.f32 0.0, %v652
    %654 = vdwg.mxu0
    %v655 = vadd.f32 %v363, %v438
    %v656 = vadd.f32 %v364, %v440
    %v657 = vadd.f32 %v365, %v509
    %v658 = vadd.f32 %v366, %v511
    %v659 = vadd.f32 %v367, %v580
    %v660 = vadd.f32 %v368, %v582
    %v661 = vadd.f32 %v369, %v651
    %v662 = vadd.f32 %v370, %v653
    %v663 = vxor.u32 %v655, 2147483648
    %v664 = vxor.u32 %v656, 2147483648
    %v665 = vmul.f32 %v663, 1.442695
    %v666 = vpow.pop %v665
    %v667 = vmul.f32 %v664, 1.442695
    %v668 = vpow.pop %v667
    %v669 = vadd.f32 %v666, 1.0
    %v670 = vadd.f32 %v668, 1.0
    %v671 = vrcp.pop %v669
    %v672 = vmul.f32 1.0, %v671
    %v673 = vrcp.pop %v670
    %v674 = vmul.f32 1.0, %v673
    %v675 = vxor.u32 %v657, 2147483648
    %v676 = vxor.u32 %v658, 2147483648
    %v677 = vmul.f32 %v675, 1.442695
    %v678 = vpow.pop %v677
    %v679 = vmul.f32 %v676, 1.442695
    %v680 = vpow.pop %v679
    %v681 = vadd.f32 %v678, 1.0
    %v682 = vadd.f32 %v680, 1.0
    %v683 = vrcp.pop %v681
    %v684 = vmul.f32 1.0, %v683
    %v685 = vrcp.pop %v682
    %v686 = vmul.f32 1.0, %v685
    %v687 = vtanh.pop %v659
    %v688 = vtanh.pop %v660
    %v689 = vxor.u32 %v661, 2147483648
    %v690 = vxor.u32 %v662, 2147483648
    %v691 = vmul.f32 %v689, 1.442695
    %v692 = vpow.pop %v691
    %v693 = vmul.f32 %v690, 1.442695
    %v694 = vpow.pop %v693
    %v695 = vadd.f32 %v692, 1.0
    %v696 = vadd.f32 %v694, 1.0
    %v697 = vrcp.pop %v695
    %v698 = vmul.f32 1.0, %v697
    %v699 = vrcp.pop %v696
    %v700 = vmul.f32 1.0, %v699
    %v701 = vmul.f32 %v684, 0.0
    %v702 = vmul.f32 %v686, 0.0
    %v703 = vmul.f32 %v672, %v687
    %v704 = vmul.f32 %v674, %v688
    %v705 = vadd.f32 %v701, %v703
    %v706 = vadd.f32 %v702, %v704
    %v707 = vtanh.pop %v705
    %v708 = vtanh.pop %v706
    %v709 = vmul.f32 %v698, %v707
    %v710 = vmul.f32 %v700, %v708
    %711 = vst [vmem:[#allocation2] sm:$0xff] %v709
    %712 = vst [vmem:[#allocation2 + $0x8] sm:$0xff] %v710
    %s713 = scalar_lea.vmem [#allocation4], 64
    %v714 = vld [vmem:[%s713] sm:$0xff]
    %v715 = vld [vmem:[%s713 + $0x8] sm:$0xff]
    %v716 = vld [vmem:[%s713 + $0x10] sm:$0xff]
    %v717 = vld [vmem:[%s713 + $0x18] sm:$0xff]
    %v718 = vld [vmem:[%s713 + $0x20] sm:$0xff]
    %v719 = vld [vmem:[%s713 + $0x28] sm:$0xff]
    %v720 = vld [vmem:[%s713 + $0x30] sm:$0xff]
    %v721 = vld [vmem:[%s713 + $0x38] sm:$0xff]
    %722 = vmatprep.subr.mxu0 %v228
    %723 = vmatpush1.msra.mxu0 %v227
    %724 = vmatprep.subr.mxu0 %v220
    %725 = vmatpush1.msra.mxu0 %v219
    %726 = vmatprep.subr.mxu0 %v212
    %727 = vmatpush1.msra.mxu0 %v211
    %728 = vmatprep.subr.mxu0 %v204
    %729 = vmatpush1.msra.mxu0 %v203
    %730 = vmatprep.subr.mxu0 %v196
    %731 = vmatpush1.msra.mxu0 %v195
    %732 = vmatprep.subr.mxu0 %v188
    %733 = vmatpush1.msra.mxu0 %v187
    %734 = vmatprep.subr.mxu0 %v180
    %735 = vmatpush1.msra.mxu0 %v179
    %736 = vmatprep.subr.mxu0 %v172
    %737 = vmatpush1.msra.mxu0 %v171
    %738 = vmatprep.subr.mxu0 %v164
    %739 = vmatpush1.msra.mxu0 %v163
    %740 = vmatprep.subr.mxu0 %v156
    %741 = vmatpush1.msra.mxu0 %v155
    %742 = vmatprep.subr.mxu0 %v148
    %743 = vmatpush1.msra.mxu0 %v147
    %744 = vmatprep.subr.mxu0 %v140
    %745 = vmatpush1.msra.mxu0 %v139
    %746 = vmatprep.subr.mxu0 %v132
    %747 = vmatpush1.msra.mxu0 %v131
    %748 = vmatprep.subr.mxu0 %v124
    %749 = vmatpush1.msra.mxu0 %v123
    %750 = vmatprep.subr.mxu0 %v116
    %751 = vmatpush1.msra.mxu0 %v115
    %752 = vmatprep.subr.mxu0 %v108
    %753 = vmatpush1.msra.mxu0 %v107
    %754 = vmatprep.subr.mxu0 %v356
    %755 = vmatpush2.msra.mxu0 %v355
    %756 = vmatprep.subr.mxu0 %v348
    %757 = vmatpush2.msra.mxu0 %v347
    %758 = vmatprep.subr.mxu0 %v340
    %759 = vmatpush2.msra.mxu0 %v339
    %760 = vmatprep.subr.mxu0 %v332
    %761 = vmatpush2.msra.mxu0 %v331
    %762 = vmatprep.subr.mxu0 %v324
    %763 = vmatpush2.msra.mxu0 %v323
    %764 = vmatprep.subr.mxu0 %v316
    %765 = vmatpush2.msra.mxu0 %v315
    %766 = vmatprep.subr.mxu0 %v308
    %767 = vmatpush2.msra.mxu0 %v307
    %768 = vmatprep.subr.mxu0 %v300
    %769 = vmatpush2.msra.mxu0 %v299
    %770 = vmatprep.subr.mxu0 %v292
    %771 = vmatpush2.msra.mxu0 %v291
    %772 = vmatprep.subr.mxu0 %v284
    %773 = vmatpush2.msra.mxu0 %v283
    %774 = vmatprep.subr.mxu0 %v276
    %775 = vmatpush2.msra.mxu0 %v275
    %776 = vmatprep.subr.mxu0 %v268
    %777 = vmatpush2.msra.mxu0 %v267
    %778 = vmatprep.subr.mxu0 %v260
    %779 = vmatpush2.msra.mxu0 %v259
    %780 = vmatprep.subr.mxu0 %v252
    %781 = vmatpush2.msra.mxu0 %v251
    %782 = vmatprep.subr.mxu0 %v244
    %783 = vmatpush2.msra.mxu0 %v243
    %784 = vmatprep.subr.mxu0 %v236
    %785 = vmatpush2.msra.mxu0 %v235
    %786 = vmatprep.mubr.f32.mxu0 %v710
    %787 = vmatmul.mubr.f32.gmra.mxu0 %v709
    %v788 = vpop.f32.mrf.mxu0
    %v789 = vadd.f32 0.0, %v788
    %v790 = vpop.f32.mrf.mxu0
    %v791 = vadd.f32 0.0, %v790
    %792 = vdwg.mxu0
    %793 = vmatprep.subr.mxu0 %v230
    %794 = vmatpush1.msra.mxu0 %v229
    %795 = vmatprep.subr.mxu0 %v222
    %796 = vmatpush1.msra.mxu0 %v221
    %797 = vmatprep.subr.mxu0 %v214
    %798 = vmatpush1.msra.mxu0 %v213
    %799 = vmatprep.subr.mxu0 %v206
    %800 = vmatpush1.msra.mxu0 %v205
    %801 = vmatprep.subr.mxu0 %v198
    %802 = vmatpush1.msra.mxu0 %v197
    %803 = vmatprep.subr.mxu0 %v190
    %804 = vmatpush1.msra.mxu0 %v189
    %805 = vmatprep.subr.mxu0 %v182
    %806 = vmatpush1.msra.mxu0 %v181
    %807 = vmatprep.subr.mxu0 %v174
    %808 = vmatpush1.msra.mxu0 %v173
    %809 = vmatprep.subr.mxu0 %v166
    %810 = vmatpush1.msra.mxu0 %v165
    %811 = vmatprep.subr.mxu0 %v158
    %812 = vmatpush1.msra.mxu0 %v157
    %813 = vmatprep.subr.mxu0 %v150
    %814 = vmatpush1.msra.mxu0 %v149
    %815 = vmatprep.subr.mxu0 %v142
    %816 = vmatpush1.msra.mxu0 %v141
    %817 = vmatprep.subr.mxu0 %v134
    %818 = vmatpush1.msra.mxu0 %v133
    %819 = vmatprep.subr.mxu0 %v126
    %820 = vmatpush1.msra.mxu0 %v125
    %821 = vmatprep.subr.mxu0 %v118
    %822 = vmatpush1.msra.mxu0 %v117
    %823 = vmatprep.subr.mxu0 %v110
    %824 = vmatpush1.msra.mxu0 %v109
    %825 = vmatprep.subr.mxu0 %v358
    %826 = vmatpush2.msra.mxu0 %v357
    %827 = vmatprep.subr.mxu0 %v350
    %828 = vmatpush2.msra.mxu0 %v349
    %829 = vmatprep.subr.mxu0 %v342
    %830 = vmatpush2.msra.mxu0 %v341
    %831 = vmatprep.subr.mxu0 %v334
    %832 = vmatpush2.msra.mxu0 %v333
    %833 = vmatprep.subr.mxu0 %v326
    %834 = vmatpush2.msra.mxu0 %v325
    %835 = vmatprep.subr.mxu0 %v318
    %836 = vmatpush2.msra.mxu0 %v317
    %837 = vmatprep.subr.mxu0 %v310
    %838 = vmatpush2.msra.mxu0 %v309
    %839 = vmatprep.subr.mxu0 %v302
    %840 = vmatpush2.msra.mxu0 %v301
    %841 = vmatprep.subr.mxu0 %v294
    %842 = vmatpush2.msra.mxu0 %v293
    %843 = vmatprep.subr.mxu0 %v286
    %844 = vmatpush2.msra.mxu0 %v285
    %845 = vmatprep.subr.mxu0 %v278
    %846 = vmatpush2.msra.mxu0 %v277
    %847 = vmatprep.subr.mxu0 %v270
    %848 = vmatpush2.msra.mxu0 %v269
    %849 = vmatprep.subr.mxu0 %v262
    %850 = vmatpush2.msra.mxu0 %v261
    %851 = vmatprep.subr.mxu0 %v254
    %852 = vmatpush2.msra.mxu0 %v253
    %853 = vmatprep.subr.mxu0 %v246
    %854 = vmatpush2.msra.mxu0 %v245
    %855 = vmatprep.subr.mxu0 %v238
    %856 = vmatpush2.msra.mxu0 %v237
    %857 = vmatprep.mubr.f32.mxu0 %v710
    %858 = vmatmul.mubr.f32.gmra.mxu0 %v709
    %v859 = vpop.f32.mrf.mxu0
    %v860 = vadd.f32 0.0, %v859
    %v861 = vpop.f32.mrf.mxu0
    %v862 = vadd.f32 0.0, %v861
    %863 = vdwg.mxu0
    %864 = vmatprep.subr.mxu0 %v232
    %865 = vmatpush1.msra.mxu0 %v231
    %866 = vmatprep.subr.mxu0 %v224
    %867 = vmatpush1.msra.mxu0 %v223
    %868 = vmatprep.subr.mxu0 %v216
    %869 = vmatpush1.msra.mxu0 %v215
    %870 = vmatprep.subr.mxu0 %v208
    %871 = vmatpush1.msra.mxu0 %v207
    %872 = vmatprep.subr.mxu0 %v200
    %873 = vmatpush1.msra.mxu0 %v199
    %874 = vmatprep.subr.mxu0 %v192
    %875 = vmatpush1.msra.mxu0 %v191
    %876 = vmatprep.subr.mxu0 %v184
    %877 = vmatpush1.msra.mxu0 %v183
    %878 = vmatprep.subr.mxu0 %v176
    %879 = vmatpush1.msra.mxu0 %v175
    %880 = vmatprep.subr.mxu0 %v168
    %881 = vmatpush1.msra.mxu0 %v167
    %882 = vmatprep.subr.mxu0 %v160
    %883 = vmatpush1.msra.mxu0 %v159
    %884 = vmatprep.subr.mxu0 %v152
    %885 = vmatpush1.msra.mxu0 %v151
    %886 = vmatprep.subr.mxu0 %v144
    %887 = vmatpush1.msra.mxu0 %v143
    %888 = vmatprep.subr.mxu0 %v136
    %889 = vmatpush1.msra.mxu0 %v135
    %890 = vmatprep.subr.mxu0 %v128
    %891 = vmatpush1.msra.mxu0 %v127
    %892 = vmatprep.subr.mxu0 %v120
    %893 = vmatpush1.msra.mxu0 %v119
    %894 = vmatprep.subr.mxu0 %v112
    %895 = vmatpush1.msra.mxu0 %v111
    %896 = vmatprep.subr.mxu0 %v360
    %897 = vmatpush2.msra.mxu0 %v359
    %898 = vmatprep.subr.mxu0 %v352
    %899 = vmatpush2.msra.mxu0 %v351
    %900 = vmatprep.subr.mxu0 %v344
    %901 = vmatpush2.msra.mxu0 %v343
    %902 = vmatprep.subr.mxu0 %v336
    %903 = vmatpush2.msra.mxu0 %v335
    %904 = vmatprep.subr.mxu0 %v328
    %905 = vmatpush2.msra.mxu0 %v327
    %906 = vmatprep.subr.mxu0 %v320
    %907 = vmatpush2.msra.mxu0 %v319
    %908 = vmatprep.subr.mxu0 %v312
    %909 = vmatpush2.msra.mxu0 %v311
    %910 = vmatprep.subr.mxu0 %v304
    %911 = vmatpush2.msra.mxu0 %v303
    %912 = vmatprep.subr.mxu0 %v296
    %913 = vmatpush2.msra.mxu0 %v295
    %914 = vmatprep.subr.mxu0 %v288
    %915 = vmatpush2.msra.mxu0 %v287
    %916 = vmatprep.subr.mxu0 %v280
    %917 = vmatpush2.msra.mxu0 %v279
    %918 = vmatprep.subr.mxu0 %v272
    %919 = vmatpush2.msra.mxu0 %v271
    %920 = vmatprep.subr.mxu0 %v264
    %921 = vmatpush2.msra.mxu0 %v263
    %922 = vmatprep.subr.mxu0 %v256
    %923 = vmatpush2.msra.mxu0 %v255
    %924 = vmatprep.subr.mxu0 %v248
    %925 = vmatpush2.msra.mxu0 %v247
    %926 = vmatprep.subr.mxu0 %v240
    %927 = vmatpush2.msra.mxu0 %v239
    %928 = vmatprep.mubr.f32.mxu0 %v710
    %929 = vmatmul.mubr.f32.gmra.mxu0 %v709
    %v930 = vpop.f32.mrf.mxu0
    %v931 = vadd.f32 0.0, %v930
    %v932 = vpop.f32.mrf.mxu0
    %v933 = vadd.f32 0.0, %v932
    %934 = vdwg.mxu0
    %935 = vmatprep.subr.mxu0 %v234
    %936 = vmatpush1.msra.mxu0 %v233
    %937 = vmatprep.subr.mxu0 %v226
    %938 = vmatpush1.msra.mxu0 %v225
    %939 = vmatprep.subr.mxu0 %v218
    %940 = vmatpush1.msra.mxu0 %v217
    %941 = vmatprep.subr.mxu0 %v210
    %942 = vmatpush1.msra.mxu0 %v209
    %943 = vmatprep.subr.mxu0 %v202
    %944 = vmatpush1.msra.mxu0 %v201
    %945 = vmatprep.subr.mxu0 %v194
    %946 = vmatpush1.msra.mxu0 %v193
    %947 = vmatprep.subr.mxu0 %v186
    %948 = vmatpush1.msra.mxu0 %v185
    %949 = vmatprep.subr.mxu0 %v178
    %950 = vmatpush1.msra.mxu0 %v177
    %951 = vmatprep.subr.mxu0 %v170
    %952 = vmatpush1.msra.mxu0 %v169
    %953 = vmatprep.subr.mxu0 %v162
    %954 = vmatpush1.msra.mxu0 %v161
    %955 = vmatprep.subr.mxu0 %v154
    %956 = vmatpush1.msra.mxu0 %v153
    %957 = vmatprep.subr.mxu0 %v146
    %958 = vmatpush1.msra.mxu0 %v145
    %959 = vmatprep.subr.mxu0 %v138
    %960 = vmatpush1.msra.mxu0 %v137
    %961 = vmatprep.subr.mxu0 %v130
    %962 = vmatpush1.msra.mxu0 %v129
    %963 = vmatprep.subr.mxu0 %v122
    %964 = vmatpush1.msra.mxu0 %v121
    %965 = vmatprep.subr.mxu0 %v114
    %966 = vmatpush1.msra.mxu0 %v113
    %967 = vmatprep.subr.mxu0 %v362
    %968 = vmatpush2.msra.mxu0 %v361
    %969 = vmatprep.subr.mxu0 %v354
    %970 = vmatpush2.msra.mxu0 %v353
    %971 = vmatprep.subr.mxu0 %v346
    %972 = vmatpush2.msra.mxu0 %v345
    %973 = vmatprep.subr.mxu0 %v338
    %974 = vmatpush2.msra.mxu0 %v337
    %975 = vmatprep.subr.mxu0 %v330
    %976 = vmatpush2.msra.mxu0 %v329
    %977 = vmatprep.subr.mxu0 %v322
    %978 = vmatpush2.msra.mxu0 %v321
    %979 = vmatprep.subr.mxu0 %v314
    %980 = vmatpush2.msra.mxu0 %v313
    %981 = vmatprep.subr.mxu0 %v306
    %982 = vmatpush2.msra.mxu0 %v305
    %983 = vmatprep.subr.mxu0 %v298
    %984 = vmatpush2.msra.mxu0 %v297
    %985 = vmatprep.subr.mxu0 %v290
    %986 = vmatpush2.msra.mxu0 %v289
    %987 = vmatprep.subr.mxu0 %v282
    %988 = vmatpush2.msra.mxu0 %v281
    %989 = vmatprep.subr.mxu0 %v274
    %990 = vmatpush2.msra.mxu0 %v273
    %991 = vmatprep.subr.mxu0 %v266
    %992 = vmatpush2.msra.mxu0 %v265
    %993 = vmatprep.subr.mxu0 %v258
    %994 = vmatpush2.msra.mxu0 %v257
    %995 = vmatprep.subr.mxu0 %v250
    %996 = vmatpush2.msra.mxu0 %v249
    %997 = vmatprep.subr.mxu0 %v242
    %998 = vmatpush2.msra.mxu0 %v241
    %999 = vmatprep.mubr.f32.mxu0 %v710
    %1000 = vmatmul.mubr.f32.gmra.mxu0 %v709
    %v1001 = vpop.f32.mrf.mxu0
    %v1002 = vadd.f32 0.0, %v1001
    %v1003 = vpop.f32.mrf.mxu0
    %v1004 = vadd.f32 0.0, %v1003
    %1005 = vdwg.mxu0
    %v1006 = vadd.f32 %v714, %v789
    %v1007 = vadd.f32 %v715, %v791
    %v1008 = vadd.f32 %v716, %v860
    %v1009 = vadd.f32 %v717, %v862
    %v1010 = vadd.f32 %v718, %v931
    %v1011 = vadd.f32 %v719, %v933
    %v1012 = vadd.f32 %v720, %v1002
    %v1013 = vadd.f32 %v721, %v1004
    %v1014 = vxor.u32 %v1006, 2147483648
    %v1015 = vxor.u32 %v1007, 2147483648
    %v1016 = vmul.f32 %v1014, 1.442695
    %v1017 = vpow.pop %v1016
    %v1018 = vmul.f32 %v1015, 1.442695
    %v1019 = vpow.pop %v1018
    %v1020 = vadd.f32 %v1017, 1.0
    %v1021 = vadd.f32 %v1019, 1.0
    %v1022 = vrcp.pop %v1020
    %v1023 = vmul.f32 1.0, %v1022
    %v1024 = vrcp.pop %v1021
    %v1025 = vmul.f32 1.0, %v1024
    %v1026 = vxor.u32 %v1008, 2147483648
    %v1027 = vxor.u32 %v1009, 2147483648
    %v1028 = vmul.f32 %v1026, 1.442695
    %v1029 = vpow.pop %v1028
    %v1030 = vmul.f32 %v1027, 1.442695
    %v1031 = vpow.pop %v1030
    %v1032 = vadd.f32 %v1029, 1.0
    %v1033 = vadd.f32 %v1031, 1.0
    %v1034 = vrcp.pop %v1032
    %v1035 = vmul.f32 1.0, %v1034
    %v1036 = vrcp.pop %v1033
    %v1037 = vmul.f32 1.0, %v1036
    %v1038 = vtanh.pop %v1010
    %v1039 = vtanh.pop %v1011
    %v1040 = vxor.u32 %v1012, 2147483648
    %v1041 = vxor.u32 %v1013, 2147483648
    %v1042 = vmul.f32 %v1040, 1.442695
    %v1043 = vpow.pop %v1042
    %v1044 = vmul.f32 %v1041, 1.442695
    %v1045 = vpow.pop %v1044
    %v1046 = vadd.f32 %v1043, 1.0
    %v1047 = vadd.f32 %v1045, 1.0
    %v1048 = vrcp.pop %v1046
    %v1049 = vmul.f32 1.0, %v1048
    %v1050 = vrcp.pop %v1047
    %v1051 = vmul.f32 1.0, %v1050
    %v1052 = vmul.f32 %v1035, %v705
    %v1053 = vmul.f32 %v1037, %v706
    %v1054 = vmul.f32 %v1023, %v1038
    %v1055 = vmul.f32 %v1025, %v1039
    %v1056 = vadd.f32 %v1052, %v1054
    %v1057 = vadd.f32 %v1053, %v1055
    %v1058 = vtanh.pop %v1056
    %v1059 = vtanh.pop %v1057
    %v1060 = vmul.f32 %v1049, %v1058
    %v1061 = vmul.f32 %v1051, %v1059
    %s1062 = scalar_lea.vmem [#allocation2], 16
    %1063 = vst [vmem:[%s1062] sm:$0xff] %v1060
    %1064 = vst [vmem:[%s1062 + $0x8] sm:$0xff] %v1061
    %s1065 = scalar_lea.vmem [#allocation4], 128
    %v1066 = vld [vmem:[%s1065] sm:$0xff]
    %v1067 = vld [vmem:[%s1065 + $0x8] sm:$0xff]
    %v1068 = vld [vmem:[%s1065 + $0x10] sm:$0xff]
    %v1069 = vld [vmem:[%s1065 + $0x18] sm:$0xff]
    %v1070 = vld [vmem:[%s1065 + $0x20] sm:$0xff]
    %v1071 = vld [vmem:[%s1065 + $0x28] sm:$0xff]
    %v1072 = vld [vmem:[%s1065 + $0x30] sm:$0xff]
    %v1073 = vld [vmem:[%s1065 + $0x38] sm:$0xff]
    %1074 = vmatprep.subr.mxu0 %v228
    %1075 = vmatpush1.msra.mxu0 %v227
    %1076 = vmatprep.subr.mxu0 %v220
    %1077 = vmatpush1.msra.mxu0 %v219
    %1078 = vmatprep.subr.mxu0 %v212
    %1079 = vmatpush1.msra.mxu0 %v211
    %1080 = vmatprep.subr.mxu0 %v204
    %1081 = vmatpush1.msra.mxu0 %v203
    %1082 = vmatprep.subr.mxu0 %v196
    %1083 = vmatpush1.msra.mxu0 %v195
    %1084 = vmatprep.subr.mxu0 %v188
    %1085 = vmatpush1.msra.mxu0 %v187
    %1086 = vmatprep.subr.mxu0 %v180
    %1087 = vmatpush1.msra.mxu0 %v179
    %1088 = vmatprep.subr.mxu0 %v172
    %1089 = vmatpush1.msra.mxu0 %v171
    %1090 = vmatprep.subr.mxu0 %v164
    %1091 = vmatpush1.msra.mxu0 %v163
    %1092 = vmatprep.subr.mxu0 %v156
    %1093 = vmatpush1.msra.mxu0 %v155
    %1094 = vmatprep.subr.mxu0 %v148
    %1095 = vmatpush1.msra.mxu0 %v147
    %1096 = vmatprep.subr.mxu0 %v140
    %1097 = vmatpush1.msra.mxu0 %v139
    %1098 = vmatprep.subr.mxu0 %v132
    %1099 = vmatpush1.msra.mxu0 %v131
    %1100 = vmatprep.subr.mxu0 %v124
    %1101 = vmatpush1.msra.mxu0 %v123
    %1102 = vmatprep.subr.mxu0 %v116
    %1103 = vmatpush1.msra.mxu0 %v115
    %1104 = vmatprep.subr.mxu0 %v108
    %1105 = vmatpush1.msra.mxu0 %v107
    %1106 = vmatprep.subr.mxu0 %v356
    %1107 = vmatpush2.msra.mxu0 %v355
    %1108 = vmatprep.subr.mxu0 %v348
    %1109 = vmatpush2.msra.mxu0 %v347
    %1110 = vmatprep.subr.mxu0 %v340
    %1111 = vmatpush2.msra.mxu0 %v339
    %1112 = vmatprep.subr.mxu0 %v332
    %1113 = vmatpush2.msra.mxu0 %v331
    %1114 = vmatprep.subr.mxu0 %v324
    %1115 = vmatpush2.msra.mxu0 %v323
    %1116 = vmatprep.subr.mxu0 %v316
    %1117 = vmatpush2.msra.mxu0 %v315
    %1118 = vmatprep.subr.mxu0 %v308
    %1119 = vmatpush2.msra.mxu0 %v307
    %1120 = vmatprep.subr.mxu0 %v300
    %1121 = vmatpush2.msra.mxu0 %v299
    %1122 = vmatprep.subr.mxu0 %v292
    %1123 = vmatpush2.msra.mxu0 %v291
    %1124 = vmatprep.subr.mxu0 %v284
    %1125 = vmatpush2.msra.mxu0 %v283
    %1126 = vmatprep.subr.mxu0 %v276
    %1127 = vmatpush2.msra.mxu0 %v275
    %1128 = vmatprep.subr.mxu0 %v268
    %1129 = vmatpush2.msra.mxu0 %v267
    %1130 = vmatprep.subr.mxu0 %v260
    %1131 = vmatpush2.msra.mxu0 %v259
    %1132 = vmatprep.subr.mxu0 %v252
    %1133 = vmatpush2.msra.mxu0 %v251
    %1134 = vmatprep.subr.mxu0 %v244
    %1135 = vmatpush2.msra.mxu0 %v243
    %1136 = vmatprep.subr.mxu0 %v236
    %1137 = vmatpush2.msra.mxu0 %v235
    %1138 = vmatprep.mubr.f32.mxu0 %v1061
    %1139 = vmatmul.mubr.f32.gmra.mxu0 %v1060
    %v1140 = vpop.f32.mrf.mxu0
    %v1141 = vadd.f32 0.0, %v1140
    %v1142 = vpop.f32.mrf.mxu0
    %v1143 = vadd.f32 0.0, %v1142
    %1144 = vdwg.mxu0
    %1145 = vmatprep.subr.mxu0 %v230
    %1146 = vmatpush1.msra.mxu0 %v229
    %1147 = vmatprep.subr.mxu0 %v222
    %1148 = vmatpush1.msra.mxu0 %v221
    %1149 = vmatprep.subr.mxu0 %v214
    %1150 = vmatpush1.msra.mxu0 %v213
    %1151 = vmatprep.subr.mxu0 %v206
    %1152 = vmatpush1.msra.mxu0 %v205
    %1153 = vmatprep.subr.mxu0 %v198
    %1154 = vmatpush1.msra.mxu0 %v197
    %1155 = vmatprep.subr.mxu0 %v190
    %1156 = vmatpush1.msra.mxu0 %v189
    %1157 = vmatprep.subr.mxu0 %v182
    %1158 = vmatpush1.msra.mxu0 %v181
    %1159 = vmatprep.subr.mxu0 %v174
    %1160 = vmatpush1.msra.mxu0 %v173
    %1161 = vmatprep.subr.mxu0 %v166
    %1162 = vmatpush1.msra.mxu0 %v165
    %1163 = vmatprep.subr.mxu0 %v158
    %1164 = vmatpush1.msra.mxu0 %v157
    %1165 = vmatprep.subr.mxu0 %v150
    %1166 = vmatpush1.msra.mxu0 %v149
    %1167 = vmatprep.subr.mxu0 %v142
    %1168 = vmatpush1.msra.mxu0 %v141
    %1169 = vmatprep.subr.mxu0 %v134
    %1170 = vmatpush1.msra.mxu0 %v133
    %1171 = vmatprep.subr.mxu0 %v126
    %1172 = vmatpush1.msra.mxu0 %v125
    %1173 = vmatprep.subr.mxu0 %v118
    %1174 = vmatpush1.msra.mxu0 %v117
    %1175 = vmatprep.subr.mxu0 %v110
    %1176 = vmatpush1.msra.mxu0 %v109
    %1177 = vmatprep.subr.mxu0 %v358
    %1178 = vmatpush2.msra.mxu0 %v357
    %1179 = vmatprep.subr.mxu0 %v350
    %1180 = vmatpush2.msra.mxu0 %v349
    %1181 = vmatprep.subr.mxu0 %v342
    %1182 = vmatpush2.msra.mxu0 %v341
    %1183 = vmatprep.subr.mxu0 %v334
    %1184 = vmatpush2.msra.mxu0 %v333
    %1185 = vmatprep.subr.mxu0 %v326
    %1186 = vmatpush2.msra.mxu0 %v325
    %1187 = vmatprep.subr.mxu0 %v318
    %1188 = vmatpush2.msra.mxu0 %v317
    %1189 = vmatprep.subr.mxu0 %v310
    %1190 = vmatpush2.msra.mxu0 %v309
    %1191 = vmatprep.subr.mxu0 %v302
    %1192 = vmatpush2.msra.mxu0 %v301
    %1193 = vmatprep.subr.mxu0 %v294
    %1194 = vmatpush2.msra.mxu0 %v293
    %1195 = vmatprep.subr.mxu0 %v286
    %1196 = vmatpush2.msra.mxu0 %v285
    %1197 = vmatprep.subr.mxu0 %v278
    %1198 = vmatpush2.msra.mxu0 %v277
    %1199 = vmatprep.subr.mxu0 %v270
    %1200 = vmatpush2.msra.mxu0 %v269
    %1201 = vmatprep.subr.mxu0 %v262
    %1202 = vmatpush2.msra.mxu0 %v261
    %1203 = vmatprep.subr.mxu0 %v254
    %1204 = vmatpush2.msra.mxu0 %v253
    %1205 = vmatprep.subr.mxu0 %v246
    %1206 = vmatpush2.msra.mxu0 %v245
    %1207 = vmatprep.subr.mxu0 %v238
    %1208 = vmatpush2.msra.mxu0 %v237
    %1209 = vmatprep.mubr.f32.mxu0 %v1061
    %1210 = vmatmul.mubr.f32.gmra.mxu0 %v1060
    %v1211 = vpop.f32.mrf.mxu0
    %v1212 = vadd.f32 0.0, %v1211
    %v1213 = vpop.f32.mrf.mxu0
    %v1214 = vadd.f32 0.0, %v1213
    %1215 = vdwg.mxu0
    %1216 = vmatprep.subr.mxu0 %v232
    %1217 = vmatpush1.msra.mxu0 %v231
    %1218 = vmatprep.subr.mxu0 %v224
    %1219 = vmatpush1.msra.mxu0 %v223
    %1220 = vmatprep.subr.mxu0 %v216
    %1221 = vmatpush1.msra.mxu0 %v215
    %1222 = vmatprep.subr.mxu0 %v208
    %1223 = vmatpush1.msra.mxu0 %v207
    %1224 = vmatprep.subr.mxu0 %v200
    %1225 = vmatpush1.msra.mxu0 %v199
    %1226 = vmatprep.subr.mxu0 %v192
    %1227 = vmatpush1.msra.mxu0 %v191
    %1228 = vmatprep.subr.mxu0 %v184
    %1229 = vmatpush1.msra.mxu0 %v183
    %1230 = vmatprep.subr.mxu0 %v176
    %1231 = vmatpush1.msra.mxu0 %v175
    %1232 = vmatprep.subr.mxu0 %v168
    %1233 = vmatpush1.msra.mxu0 %v167
    %1234 = vmatprep.subr.mxu0 %v160
    %1235 = vmatpush1.msra.mxu0 %v159
    %1236 = vmatprep.subr.mxu0 %v152
    %1237 = vmatpush1.msra.mxu0 %v151
    %1238 = vmatprep.subr.mxu0 %v144
    %1239 = vmatpush1.msra.mxu0 %v143
    %1240 = vmatprep.subr.mxu0 %v136
    %1241 = vmatpush1.msra.mxu0 %v135
    %1242 = vmatprep.subr.mxu0 %v128
    %1243 = vmatpush1.msra.mxu0 %v127
    %1244 = vmatprep.subr.mxu0 %v120
    %1245 = vmatpush1.msra.mxu0 %v119
    %1246 = vmatprep.subr.mxu0 %v112
    %1247 = vmatpush1.msra.mxu0 %v111
    %1248 = vmatprep.subr.mxu0 %v360
    %1249 = vmatpush2.msra.mxu0 %v359
    %1250 = vmatprep.subr.mxu0 %v352
    %1251 = vmatpush2.msra.mxu0 %v351
    %1252 = vmatprep.subr.mxu0 %v344
    %1253 = vmatpush2.msra.mxu0 %v343
    %1254 = vmatprep.subr.mxu0 %v336
    %1255 = vmatpush2.msra.mxu0 %v335
    %1256 = vmatprep.subr.mxu0 %v328
    %1257 = vmatpush2.msra.mxu0 %v327
    %1258 = vmatprep.subr.mxu0 %v320
    %1259 = vmatpush2.msra.mxu0 %v319
    %1260 = vmatprep.subr.mxu0 %v312
    %1261 = vmatpush2.msra.mxu0 %v311
    %1262 = vmatprep.subr.mxu0 %v304
    %1263 = vmatpush2.msra.mxu0 %v303
    %1264 = vmatprep.subr.mxu0 %v296
    %1265 = vmatpush2.msra.mxu0 %v295
    %1266 = vmatprep.subr.mxu0 %v288
    %1267 = vmatpush2.msra.mxu0 %v287
    %1268 = vmatprep.subr.mxu0 %v280
    %1269 = vmatpush2.msra.mxu0 %v279
    %1270 = vmatprep.subr.mxu0 %v272
    %1271 = vmatpush2.msra.mxu0 %v271
    %1272 = vmatprep.subr.mxu0 %v264
    %1273 = vmatpush2.msra.mxu0 %v263
    %1274 = vmatprep.subr.mxu0 %v256
    %1275 = vmatpush2.msra.mxu0 %v255
    %1276 = vmatprep.subr.mxu0 %v248
    %1277 = vmatpush2.msra.mxu0 %v247
    %1278 = vmatprep.subr.mxu0 %v240
    %1279 = vmatpush2.msra.mxu0 %v239
    %1280 = vmatprep.mubr.f32.mxu0 %v1061
    %1281 = vmatmul.mubr.f32.gmra.mxu0 %v1060
    %v1282 = vpop.f32.mrf.mxu0
    %v1283 = vadd.f32 0.0, %v1282
    %v1284 = vpop.f32.mrf.mxu0
    %v1285 = vadd.f32 0.0, %v1284
    %1286 = vdwg.mxu0
    %1287 = vmatprep.subr.mxu0 %v234
    %1288 = vmatpush1.msra.mxu0 %v233
    %1289 = vmatprep.subr.mxu0 %v226
    %1290 = vmatpush1.msra.mxu0 %v225
    %1291 = vmatprep.subr.mxu0 %v218
    %1292 = vmatpush1.msra.mxu0 %v217
    %1293 = vmatprep.subr.mxu0 %v210
    %1294 = vmatpush1.msra.mxu0 %v209
    %1295 = vmatprep.subr.mxu0 %v202
    %1296 = vmatpush1.msra.mxu0 %v201
    %1297 = vmatprep.subr.mxu0 %v194
    %1298 = vmatpush1.msra.mxu0 %v193
    %1299 = vmatprep.subr.mxu0 %v186
    %1300 = vmatpush1.msra.mxu0 %v185
    %1301 = vmatprep.subr.mxu0 %v178
    %1302 = vmatpush1.msra.mxu0 %v177
    %1303 = vmatprep.subr.mxu0 %v170
    %1304 = vmatpush1.msra.mxu0 %v169
    %1305 = vmatprep.subr.mxu0 %v162
    %1306 = vmatpush1.msra.mxu0 %v161
    %1307 = vmatprep.subr.mxu0 %v154
    %1308 = vmatpush1.msra.mxu0 %v153
    %1309 = vmatprep.subr.mxu0 %v146
    %1310 = vmatpush1.msra.mxu0 %v145
    %1311 = vmatprep.subr.mxu0 %v138
    %1312 = vmatpush1.msra.mxu0 %v137
    %1313 = vmatprep.subr.mxu0 %v130
    %1314 = vmatpush1.msra.mxu0 %v129
    %1315 = vmatprep.subr.mxu0 %v122
    %1316 = vmatpush1.msra.mxu0 %v121
    %1317 = vmatprep.subr.mxu0 %v114
    %1318 = vmatpush1.msra.mxu0 %v113
    %1319 = vmatprep.subr.mxu0 %v362
    %1320 = vmatpush2.msra.mxu0 %v361
    %1321 = vmatprep.subr.mxu0 %v354
    %1322 = vmatpush2.msra.mxu0 %v353
    %1323 = vmatprep.subr.mxu0 %v346
    %1324 = vmatpush2.msra.mxu0 %v345
    %1325 = vmatprep.subr.mxu0 %v338
    %1326 = vmatpush2.msra.mxu0 %v337
    %1327 = vmatprep.subr.mxu0 %v330
    %1328 = vmatpush2.msra.mxu0 %v329
    %1329 = vmatprep.subr.mxu0 %v322
    %1330 = vmatpush2.msra.mxu0 %v321
    %1331 = vmatprep.subr.mxu0 %v314
    %1332 = vmatpush2.msra.mxu0 %v313
    %1333 = vmatprep.subr.mxu0 %v306
    %1334 = vmatpush2.msra.mxu0 %v305
    %1335 = vmatprep.subr.mxu0 %v298
    %1336 = vmatpush2.msra.mxu0 %v297
    %1337 = vmatprep.subr.mxu0 %v290
    %1338 = vmatpush2.msra.mxu0 %v289
    %1339 = vmatprep.subr.mxu0 %v282
    %1340 = vmatpush2.msra.mxu0 %v281
    %1341 = vmatprep.subr.mxu0 %v274
    %1342 = vmatpush2.msra.mxu0 %v273
    %1343 = vmatprep.subr.mxu0 %v266
    %1344 = vmatpush2.msra.mxu0 %v265
    %1345 = vmatprep.subr.mxu0 %v258
    %1346 = vmatpush2.msra.mxu0 %v257
    %1347 = vmatprep.subr.mxu0 %v250
    %1348 = vmatpush2.msra.mxu0 %v249
    %1349 = vmatprep.subr.mxu0 %v242
    %1350 = vmatpush2.msra.mxu0 %v241
    %1351 = vmatprep.mubr.f32.mxu0 %v1061
    %1352 = vmatmul.mubr.f32.gmra.mxu0 %v1060
    %v1353 = vpop.f32.mrf.mxu0
    %v1354 = vadd.f32 0.0, %v1353
    %v1355 = vpop.f32.mrf.mxu0
    %v1356 = vadd.f32 0.0, %v1355
    %1357 = vdwg.mxu0
    %v1358 = vadd.f32 %v1066, %v1141
    %v1359 = vadd.f32 %v1067, %v1143
    %v1360 = vadd.f32 %v1068, %v1212
    %v1361 = vadd.f32 %v1069, %v1214
    %v1362 = vadd.f32 %v1070, %v1283
    %v1363 = vadd.f32 %v1071, %v1285
    %v1364 = vadd.f32 %v1072, %v1354
    %v1365 = vadd.f32 %v1073, %v1356
    %v1366 = vxor.u32 %v1358, 2147483648
    %v1367 = vxor.u32 %v1359, 2147483648
    %v1368 = vmul.f32 %v1366, 1.442695
    %v1369 = vpow.pop %v1368
    %v1370 = vmul.f32 %v1367, 1.442695
    %v1371 = vpow.pop %v1370
    %v1372 = vadd.f32 %v1369, 1.0
    %v1373 = vadd.f32 %v1371, 1.0
    %v1374 = vrcp.pop %v1372
    %v1375 = vmul.f32 1.0, %v1374
    %v1376 = vrcp.pop %v1373
    %v1377 = vmul.f32 1.0, %v1376
    %v1378 = vxor.u32 %v1360, 2147483648
    %v1379 = vxor.u32 %v1361, 2147483648
    %v1380 = vmul.f32 %v1378, 1.442695
    %v1381 = vpow.pop %v1380
    %v1382 = vmul.f32 %v1379, 1.442695
    %v1383 = vpow.pop %v1382
    %v1384 = vadd.f32 %v1381, 1.0
    %v1385 = vadd.f32 %v1383, 1.0
    %v1386 = vrcp.pop %v1384
    %v1387 = vmul.f32 1.0, %v1386
    %v1388 = vrcp.pop %v1385
    %v1389 = vmul.f32 1.0, %v1388
    %v1390 = vtanh.pop %v1362
    %v1391 = vtanh.pop %v1363
    %v1392 = vxor.u32 %v1364, 2147483648
    %v1393 = vxor.u32 %v1365, 2147483648
    %v1394 = vmul.f32 %v1392, 1.442695
    %v1395 = vpow.pop %v1394
    %v1396 = vmul.f32 %v1393, 1.442695
    %v1397 = vpow.pop %v1396
    %v1398 = vadd.f32 %v1395, 1.0
    %v1399 = vadd.f32 %v1397, 1.0
    %v1400 = vrcp.pop %v1398
    %v1401 = vmul.f32 1.0, %v1400
    %v1402 = vrcp.pop %v1399
    %v1403 = vmul.f32 1.0, %v1402
    %v1404 = vmul.f32 %v1387, %v1056
    %v1405 = vmul.f32 %v1389, %v1057
    %v1406 = vmul.f32 %v1375, %v1390
    %v1407 = vmul.f32 %v1377, %v1391
    %v1408 = vadd.f32 %v1404, %v1406
    %v1409 = vadd.f32 %v1405, %v1407
    %v1410 = vtanh.pop %v1408
    %v1411 = vtanh.pop %v1409
    %v1412 = vmul.f32 %v1401, %v1410
    %v1413 = vmul.f32 %v1403, %v1411
    %s1414 = scalar_lea.vmem [#allocation2], 32
    %1415 = vst [vmem:[%s1414] sm:$0xff] %v1412
    %1416 = vst [vmem:[%s1414 + $0x8] sm:$0xff] %v1413
    %s1417 = scalar_lea.vmem [#allocation4], 192
    %v1418 = vld [vmem:[%s1417] sm:$0xff]
    %v1419 = vld [vmem:[%s1417 + $0x8] sm:$0xff]
    %v1420 = vld [vmem:[%s1417 + $0x10] sm:$0xff]
    %v1421 = vld [vmem:[%s1417 + $0x18] sm:$0xff]
    %v1422 = vld [vmem:[%s1417 + $0x20] sm:$0xff]
    %v1423 = vld [vmem:[%s1417 + $0x28] sm:$0xff]
    %v1424 = vld [vmem:[%s1417 + $0x30] sm:$0xff]
    %v1425 = vld [vmem:[%s1417 + $0x38] sm:$0xff]
    %1426 = vmatprep.subr.mxu0 %v228
    %1427 = vmatpush1.msra.mxu0 %v227
    %1428 = vmatprep.subr.mxu0 %v220
    %1429 = vmatpush1.msra.mxu0 %v219
    %1430 = vmatprep.subr.mxu0 %v212
    %1431 = vmatpush1.msra.mxu0 %v211
    %1432 = vmatprep.subr.mxu0 %v204
    %1433 = vmatpush1.msra.mxu0 %v203
    %1434 = vmatprep.subr.mxu0 %v196
    %1435 = vmatpush1.msra.mxu0 %v195
    %1436 = vmatprep.subr.mxu0 %v188
    %1437 = vmatpush1.msra.mxu0 %v187
    %1438 = vmatprep.subr.mxu0 %v180
    %1439 = vmatpush1.msra.mxu0 %v179
    %1440 = vmatprep.subr.mxu0 %v172
    %1441 = vmatpush1.msra.mxu0 %v171
    %1442 = vmatprep.subr.mxu0 %v164
    %1443 = vmatpush1.msra.mxu0 %v163
    %1444 = vmatprep.subr.mxu0 %v156
    %1445 = vmatpush1.msra.mxu0 %v155
    %1446 = vmatprep.subr.mxu0 %v148
    %1447 = vmatpush1.msra.mxu0 %v147
    %1448 = vmatprep.subr.mxu0 %v140
    %1449 = vmatpush1.msra.mxu0 %v139
    %1450 = vmatprep.subr.mxu0 %v132
    %1451 = vmatpush1.msra.mxu0 %v131
    %1452 = vmatprep.subr.mxu0 %v124
    %1453 = vmatpush1.msra.mxu0 %v123
    %1454 = vmatprep.subr.mxu0 %v116
    %1455 = vmatpush1.msra.mxu0 %v115
    %1456 = vmatprep.subr.mxu0 %v108
    %1457 = vmatpush1.msra.mxu0 %v107
    %1458 = vmatprep.subr.mxu0 %v356
    %1459 = vmatpush2.msra.mxu0 %v355
    %1460 = vmatprep.subr.mxu0 %v348
    %1461 = vmatpush2.msra.mxu0 %v347
    %1462 = vmatprep.subr.mxu0 %v340
    %1463 = vmatpush2.msra.mxu0 %v339
    %1464 = vmatprep.subr.mxu0 %v332
    %1465 = vmatpush2.msra.mxu0 %v331
    %1466 = vmatprep.subr.mxu0 %v324
    %1467 = vmatpush2.msra.mxu0 %v323
    %1468 = vmatprep.subr.mxu0 %v316
    %1469 = vmatpush2.msra.mxu0 %v315
    %1470 = vmatprep.subr.mxu0 %v308
    %1471 = vmatpush2.msra.mxu0 %v307
    %1472 = vmatprep.subr.mxu0 %v300
    %1473 = vmatpush2.msra.mxu0 %v299
    %1474 = vmatprep.subr.mxu0 %v292
    %1475 = vmatpush2.msra.mxu0 %v291
    %1476 = vmatprep.subr.mxu0 %v284
    %1477 = vmatpush2.msra.mxu0 %v283
    %1478 = vmatprep.subr.mxu0 %v276
    %1479 = vmatpush2.msra.mxu0 %v275
    %1480 = vmatprep.subr.mxu0 %v268
    %1481 = vmatpush2.msra.mxu0 %v267
    %1482 = vmatprep.subr.mxu0 %v260
    %1483 = vmatpush2.msra.mxu0 %v259
    %1484 = vmatprep.subr.mxu0 %v252
    %1485 = vmatpush2.msra.mxu0 %v251
    %1486 = vmatprep.subr.mxu0 %v244
    %1487 = vmatpush2.msra.mxu0 %v243
    %1488 = vmatprep.subr.mxu0 %v236
    %1489 = vmatpush2.msra.mxu0 %v235
    %1490 = vmatprep.mubr.f32.mxu0 %v1413
    %1491 = vmatmul.mubr.f32.gmra.mxu0 %v1412
    %v1492 = vpop.f32.mrf.mxu0
    %v1493 = vadd.f32 0.0, %v1492
    %v1494 = vpop.f32.mrf.mxu0
    %v1495 = vadd.f32 0.0, %v1494
    %1496 = vdwg.mxu0
    %1497 = vmatprep.subr.mxu0 %v230
    %1498 = vmatpush1.msra.mxu0 %v229
    %1499 = vmatprep.subr.mxu0 %v222
    %1500 = vmatpush1.msra.mxu0 %v221
    %1501 = vmatprep.subr.mxu0 %v214
    %1502 = vmatpush1.msra.mxu0 %v213
    %1503 = vmatprep.subr.mxu0 %v206
    %1504 = vmatpush1.msra.mxu0 %v205
    %1505 = vmatprep.subr.mxu0 %v198
    %1506 = vmatpush1.msra.mxu0 %v197
    %1507 = vmatprep.subr.mxu0 %v190
    %1508 = vmatpush1.msra.mxu0 %v189
    %1509 = vmatprep.subr.mxu0 %v182
    %1510 = vmatpush1.msra.mxu0 %v181
    %1511 = vmatprep.subr.mxu0 %v174
    %1512 = vmatpush1.msra.mxu0 %v173
    %1513 = vmatprep.subr.mxu0 %v166
    %1514 = vmatpush1.msra.mxu0 %v165
    %1515 = vmatprep.subr.mxu0 %v158
    %1516 = vmatpush1.msra.mxu0 %v157
    %1517 = vmatprep.subr.mxu0 %v150
    %1518 = vmatpush1.msra.mxu0 %v149
    %1519 = vmatprep.subr.mxu0 %v142
    %1520 = vmatpush1.msra.mxu0 %v141
    %1521 = vmatprep.subr.mxu0 %v134
    %1522 = vmatpush1.msra.mxu0 %v133
    %1523 = vmatprep.subr.mxu0 %v126
    %1524 = vmatpush1.msra.mxu0 %v125
    %1525 = vmatprep.subr.mxu0 %v118
    %1526 = vmatpush1.msra.mxu0 %v117
    %1527 = vmatprep.subr.mxu0 %v110
    %1528 = vmatpush1.msra.mxu0 %v109
    %1529 = vmatprep.subr.mxu0 %v358
    %1530 = vmatpush2.msra.mxu0 %v357
    %1531 = vmatprep.subr.mxu0 %v350
    %1532 = vmatpush2.msra.mxu0 %v349
    %1533 = vmatprep.subr.mxu0 %v342
    %1534 = vmatpush2.msra.mxu0 %v341
    %1535 = vmatprep.subr.mxu0 %v334
    %1536 = vmatpush2.msra.mxu0 %v333
    %1537 = vmatprep.subr.mxu0 %v326
    %1538 = vmatpush2.msra.mxu0 %v325
    %1539 = vmatprep.subr.mxu0 %v318
    %1540 = vmatpush2.msra.mxu0 %v317
    %1541 = vmatprep.subr.mxu0 %v310
    %1542 = vmatpush2.msra.mxu0 %v309
    %1543 = vmatprep.subr.mxu0 %v302
    %1544 = vmatpush2.msra.mxu0 %v301
    %1545 = vmatprep.subr.mxu0 %v294
    %1546 = vmatpush2.msra.mxu0 %v293
    %1547 = vmatprep.subr.mxu0 %v286
    %1548 = vmatpush2.msra.mxu0 %v285
    %1549 = vmatprep.subr.mxu0 %v278
    %1550 = vmatpush2.msra.mxu0 %v277
    %1551 = vmatprep.subr.mxu0 %v270
    %1552 = vmatpush2.msra.mxu0 %v269
    %1553 = vmatprep.subr.mxu0 %v262
    %1554 = vmatpush2.msra.mxu0 %v261
    %1555 = vmatprep.subr.mxu0 %v254
    %1556 = vmatpush2.msra.mxu0 %v253
    %1557 = vmatprep.subr.mxu0 %v246
    %1558 = vmatpush2.msra.mxu0 %v245
    %1559 = vmatprep.subr.mxu0 %v238
    %1560 = vmatpush2.msra.mxu0 %v237
    %1561 = vmatprep.mubr.f32.mxu0 %v1413
    %1562 = vmatmul.mubr.f32.gmra.mxu0 %v1412
    %v1563 = vpop.f32.mrf.mxu0
    %v1564 = vadd.f32 0.0, %v1563
    %v1565 = vpop.f32.mrf.mxu0
    %v1566 = vadd.f32 0.0, %v1565
    %1567 = vdwg.mxu0
    %1568 = vmatprep.subr.mxu0 %v232
    %1569 = vmatpush1.msra.mxu0 %v231
    %1570 = vmatprep.subr.mxu0 %v224
    %1571 = vmatpush1.msra.mxu0 %v223
    %1572 = vmatprep.subr.mxu0 %v216
    %1573 = vmatpush1.msra.mxu0 %v215
    %1574 = vmatprep.subr.mxu0 %v208
    %1575 = vmatpush1.msra.mxu0 %v207
    %1576 = vmatprep.subr.mxu0 %v200
    %1577 = vmatpush1.msra.mxu0 %v199
    %1578 = vmatprep.subr.mxu0 %v192
    %1579 = vmatpush1.msra.mxu0 %v191
    %1580 = vmatprep.subr.mxu0 %v184
    %1581 = vmatpush1.msra.mxu0 %v183
    %1582 = vmatprep.subr.mxu0 %v176
    %1583 = vmatpush1.msra.mxu0 %v175
    %1584 = vmatprep.subr.mxu0 %v168
    %1585 = vmatpush1.msra.mxu0 %v167
    %1586 = vmatprep.subr.mxu0 %v160
    %1587 = vmatpush1.msra.mxu0 %v159
    %1588 = vmatprep.subr.mxu0 %v152
    %1589 = vmatpush1.msra.mxu0 %v151
    %1590 = vmatprep.subr.mxu0 %v144
    %1591 = vmatpush1.msra.mxu0 %v143
    %1592 = vmatprep.subr.mxu0 %v136
    %1593 = vmatpush1.msra.mxu0 %v135
    %1594 = vmatprep.subr.mxu0 %v128
    %1595 = vmatpush1.msra.mxu0 %v127
    %1596 = vmatprep.subr.mxu0 %v120
    %1597 = vmatpush1.msra.mxu0 %v119
    %1598 = vmatprep.subr.mxu0 %v112
    %1599 = vmatpush1.msra.mxu0 %v111
    %1600 = vmatprep.subr.mxu0 %v360
    %1601 = vmatpush2.msra.mxu0 %v359
    %1602 = vmatprep.subr.mxu0 %v352
    %1603 = vmatpush2.msra.mxu0 %v351
    %1604 = vmatprep.subr.mxu0 %v344
    %1605 = vmatpush2.msra.mxu0 %v343
    %1606 = vmatprep.subr.mxu0 %v336
    %1607 = vmatpush2.msra.mxu0 %v335
    %1608 = vmatprep.subr.mxu0 %v328
    %1609 = vmatpush2.msra.mxu0 %v327
    %1610 = vmatprep.subr.mxu0 %v320
    %1611 = vmatpush2.msra.mxu0 %v319
    %1612 = vmatprep.subr.mxu0 %v312
    %1613 = vmatpush2.msra.mxu0 %v311
    %1614 = vmatprep.subr.mxu0 %v304
    %1615 = vmatpush2.msra.mxu0 %v303
    %1616 = vmatprep.subr.mxu0 %v296
    %1617 = vmatpush2.msra.mxu0 %v295
    %1618 = vmatprep.subr.mxu0 %v288
    %1619 = vmatpush2.msra.mxu0 %v287
    %1620 = vmatprep.subr.mxu0 %v280
    %1621 = vmatpush2.msra.mxu0 %v279
    %1622 = vmatprep.subr.mxu0 %v272
    %1623 = vmatpush2.msra.mxu0 %v271
    %1624 = vmatprep.subr.mxu0 %v264
    %1625 = vmatpush2.msra.mxu0 %v263
    %1626 = vmatprep.subr.mxu0 %v256
    %1627 = vmatpush2.msra.mxu0 %v255
    %1628 = vmatprep.subr.mxu0 %v248
    %1629 = vmatpush2.msra.mxu0 %v247
    %1630 = vmatprep.subr.mxu0 %v240
    %1631 = vmatpush2.msra.mxu0 %v239
    %1632 = vmatprep.mubr.f32.mxu0 %v1413
    %1633 = vmatmul.mubr.f32.gmra.mxu0 %v1412
    %v1634 = vpop.f32.mrf.mxu0
    %v1635 = vadd.f32 0.0, %v1634
    %v1636 = vpop.f32.mrf.mxu0
    %v1637 = vadd.f32 0.0, %v1636
    %1638 = vdwg.mxu0
    %1639 = vmatprep.subr.mxu0 %v234
    %1640 = vmatpush1.msra.mxu0 %v233
    %1641 = vmatprep.subr.mxu0 %v226
    %1642 = vmatpush1.msra.mxu0 %v225
    %1643 = vmatprep.subr.mxu0 %v218
    %1644 = vmatpush1.msra.mxu0 %v217
    %1645 = vmatprep.subr.mxu0 %v210
    %1646 = vmatpush1.msra.mxu0 %v209
    %1647 = vmatprep.subr.mxu0 %v202
    %1648 = vmatpush1.msra.mxu0 %v201
    %1649 = vmatprep.subr.mxu0 %v194
    %1650 = vmatpush1.msra.mxu0 %v193
    %1651 = vmatprep.subr.mxu0 %v186
    %1652 = vmatpush1.msra.mxu0 %v185
    %1653 = vmatprep.subr.mxu0 %v178
    %1654 = vmatpush1.msra.mxu0 %v177
    %1655 = vmatprep.subr.mxu0 %v170
    %1656 = vmatpush1.msra.mxu0 %v169
    %1657 = vmatprep.subr.mxu0 %v162
    %1658 = vmatpush1.msra.mxu0 %v161
    %1659 = vmatprep.subr.mxu0 %v154
    %1660 = vmatpush1.msra.mxu0 %v153
    %1661 = vmatprep.subr.mxu0 %v146
    %1662 = vmatpush1.msra.mxu0 %v145
    %1663 = vmatprep.subr.mxu0 %v138
    %1664 = vmatpush1.msra.mxu0 %v137
    %1665 = vmatprep.subr.mxu0 %v130
    %1666 = vmatpush1.msra.mxu0 %v129
    %1667 = vmatprep.subr.mxu0 %v122
    %1668 = vmatpush1.msra.mxu0 %v121
    %1669 = vmatprep.subr.mxu0 %v114
    %1670 = vmatpush1.msra.mxu0 %v113
    %1671 = vmatprep.subr.mxu0 %v362
    %1672 = vmatpush2.msra.mxu0 %v361
    %1673 = vmatprep.subr.mxu0 %v354
    %1674 = vmatpush2.msra.mxu0 %v353
    %1675 = vmatprep.subr.mxu0 %v346
    %1676 = vmatpush2.msra.mxu0 %v345
    %1677 = vmatprep.subr.mxu0 %v338
    %1678 = vmatpush2.msra.mxu0 %v337
    %1679 = vmatprep.subr.mxu0 %v330
    %1680 = vmatpush2.msra.mxu0 %v329
    %1681 = vmatprep.subr.mxu0 %v322
    %1682 = vmatpush2.msra.mxu0 %v321
    %1683 = vmatprep.subr.mxu0 %v314
    %1684 = vmatpush2.msra.mxu0 %v313
    %1685 = vmatprep.subr.mxu0 %v306
    %1686 = vmatpush2.msra.mxu0 %v305
    %1687 = vmatprep.subr.mxu0 %v298
    %1688 = vmatpush2.msra.mxu0 %v297
    %1689 = vmatprep.subr.mxu0 %v290
    %1690 = vmatpush2.msra.mxu0 %v289
    %1691 = vmatprep.subr.mxu0 %v282
    %1692 = vmatpush2.msra.mxu0 %v281
    %1693 = vmatprep.subr.mxu0 %v274
    %1694 = vmatpush2.msra.mxu0 %v273
    %1695 = vmatprep.subr.mxu0 %v266
    %1696 = vmatpush2.msra.mxu0 %v265
    %1697 = vmatprep.subr.mxu0 %v258
    %1698 = vmatpush2.msra.mxu0 %v257
    %1699 = vmatprep.subr.mxu0 %v250
    %1700 = vmatpush2.msra.mxu0 %v249
    %1701 = vmatprep.subr.mxu0 %v242
    %1702 = vmatpush2.msra.mxu0 %v241
    %1703 = vmatprep.mubr.f32.mxu0 %v1413
    %1704 = vmatmul.mubr.f32.gmra.mxu0 %v1412
    %v1705 = vpop.f32.mrf.mxu0
    %v1706 = vadd.f32 0.0, %v1705
    %v1707 = vpop.f32.mrf.mxu0
    %v1708 = vadd.f32 0.0, %v1707
    %1709 = vdwg.mxu0
    %v1710 = vadd.f32 %v1418, %v1493
    %v1711 = vadd.f32 %v1419, %v1495
    %v1712 = vadd.f32 %v1420, %v1564
    %v1713 = vadd.f32 %v1421, %v1566
    %v1714 = vadd.f32 %v1422, %v1635
    %v1715 = vadd.f32 %v1423, %v1637
    %v1716 = vadd.f32 %v1424, %v1706
    %v1717 = vadd.f32 %v1425, %v1708
    %v1718 = vxor.u32 %v1710, 2147483648
    %v1719 = vxor.u32 %v1711, 2147483648
    %v1720 = vmul.f32 %v1718, 1.442695
    %v1721 = vpow.pop %v1720
    %v1722 = vmul.f32 %v1719, 1.442695
    %v1723 = vpow.pop %v1722
    %v1724 = vadd.f32 %v1721, 1.0
    %v1725 = vadd.f32 %v1723, 1.0
    %v1726 = vrcp.pop %v1724
    %v1727 = vmul.f32 1.0, %v1726
    %v1728 = vrcp.pop %v1725
    %v1729 = vmul.f32 1.0, %v1728
    %v1730 = vxor.u32 %v1712, 2147483648
    %v1731 = vxor.u32 %v1713, 2147483648
    %v1732 = vmul.f32 %v1730, 1.442695
    %v1733 = vpow.pop %v1732
    %v1734 = vmul.f32 %v1731, 1.442695
    %v1735 = vpow.pop %v1734
    %v1736 = vadd.f32 %v1733, 1.0
    %v1737 = vadd.f32 %v1735, 1.0
    %v1738 = vrcp.pop %v1736
    %v1739 = vmul.f32 1.0, %v1738
    %v1740 = vrcp.pop %v1737
    %v1741 = vmul.f32 1.0, %v1740
    %v1742 = vtanh.pop %v1714
    %v1743 = vtanh.pop %v1715
    %v1744 = vxor.u32 %v1716, 2147483648
    %v1745 = vxor.u32 %v1717, 2147483648
    %v1746 = vmul.f32 %v1744, 1.442695
    %v1747 = vpow.pop %v1746
    %v1748 = vmul.f32 %v1745, 1.442695
    %v1749 = vpow.pop %v1748
    %v1750 = vadd.f32 %v1747, 1.0
    %v1751 = vadd.f32 %v1749, 1.0
    %v1752 = vrcp.pop %v1750
    %v1753 = vmul.f32 1.0, %v1752
    %v1754 = vrcp.pop %v1751
    %v1755 = vmul.f32 1.0, %v1754
    %v1756 = vmul.f32 %v1739, %v1408
    %v1757 = vmul.f32 %v1741, %v1409
    %v1758 = vmul.f32 %v1727, %v1742
    %v1759 = vmul.f32 %v1729, %v1743
    %v1760 = vadd.f32 %v1756, %v1758
    %v1761 = vadd.f32 %v1757, %v1759
    %v1762 = vtanh.pop %v1760
    %v1763 = vtanh.pop %v1761
    %v1764 = vmul.f32 %v1753, %v1762
    %v1765 = vmul.f32 %v1755, %v1763
    %s1766 = scalar_lea.vmem [#allocation2], 48
    %1767 = vst [vmem:[%s1766] sm:$0xff] %v1764
    %1768 = vst [vmem:[%s1766 + $0x8] sm:$0xff] %v1765
    %s1769 = scalar_lea.vmem [#allocation4], 256
    %v1770 = vld [vmem:[%s1769] sm:$0xff]
    %v1771 = vld [vmem:[%s1769 + $0x8] sm:$0xff]
    %v1772 = vld [vmem:[%s1769 + $0x10] sm:$0xff]
    %v1773 = vld [vmem:[%s1769 + $0x18] sm:$0xff]
    %v1774 = vld [vmem:[%s1769 + $0x20] sm:$0xff]
    %v1775 = vld [vmem:[%s1769 + $0x28] sm:$0xff]
    %v1776 = vld [vmem:[%s1769 + $0x30] sm:$0xff]
    %v1777 = vld [vmem:[%s1769 + $0x38] sm:$0xff]
    %1778 = vmatprep.subr.mxu0 %v228
    %1779 = vmatpush1.msra.mxu0 %v227
    %1780 = vmatprep.subr.mxu0 %v220
    %1781 = vmatpush1.msra.mxu0 %v219
    %1782 = vmatprep.subr.mxu0 %v212
    %1783 = vmatpush1.msra.mxu0 %v211
    %1784 = vmatprep.subr.mxu0 %v204
    %1785 = vmatpush1.msra.mxu0 %v203
    %1786 = vmatprep.subr.mxu0 %v196
    %1787 = vmatpush1.msra.mxu0 %v195
    %1788 = vmatprep.subr.mxu0 %v188
    %1789 = vmatpush1.msra.mxu0 %v187
    %1790 = vmatprep.subr.mxu0 %v180
    %1791 = vmatpush1.msra.mxu0 %v179
    %1792 = vmatprep.subr.mxu0 %v172
    %1793 = vmatpush1.msra.mxu0 %v171
    %1794 = vmatprep.subr.mxu0 %v164
    %1795 = vmatpush1.msra.mxu0 %v163
    %1796 = vmatprep.subr.mxu0 %v156
    %1797 = vmatpush1.msra.mxu0 %v155
    %1798 = vmatprep.subr.mxu0 %v148
    %1799 = vmatpush1.msra.mxu0 %v147
    %1800 = vmatprep.subr.mxu0 %v140
    %1801 = vmatpush1.msra.mxu0 %v139
    %1802 = vmatprep.subr.mxu0 %v132
    %1803 = vmatpush1.msra.mxu0 %v131
    %1804 = vmatprep.subr.mxu0 %v124
    %1805 = vmatpush1.msra.mxu0 %v123
    %1806 = vmatprep.subr.mxu0 %v116
    %1807 = vmatpush1.msra.mxu0 %v115
    %1808 = vmatprep.subr.mxu0 %v108
    %1809 = vmatpush1.msra.mxu0 %v107
    %1810 = vmatprep.subr.mxu0 %v356
    %1811 = vmatpush2.msra.mxu0 %v355
    %1812 = vmatprep.subr.mxu0 %v348
    %1813 = vmatpush2.msra.mxu0 %v347
    %1814 = vmatprep.subr.mxu0 %v340
    %1815 = vmatpush2.msra.mxu0 %v339
    %1816 = vmatprep.subr.mxu0 %v332
    %1817 = vmatpush2.msra.mxu0 %v331
    %1818 = vmatprep.subr.mxu0 %v324
    %1819 = vmatpush2.msra.mxu0 %v323
    %1820 = vmatprep.subr.mxu0 %v316
    %1821 = vmatpush2.msra.mxu0 %v315
    %1822 = vmatprep.subr.mxu0 %v308
    %1823 = vmatpush2.msra.mxu0 %v307
    %1824 = vmatprep.subr.mxu0 %v300
    %1825 = vmatpush2.msra.mxu0 %v299
    %1826 = vmatprep.subr.mxu0 %v292
    %1827 = vmatpush2.msra.mxu0 %v291
    %1828 = vmatprep.subr.mxu0 %v284
    %1829 = vmatpush2.msra.mxu0 %v283
    %1830 = vmatprep.subr.mxu0 %v276
    %1831 = vmatpush2.msra.mxu0 %v275
    %1832 = vmatprep.subr.mxu0 %v268
    %1833 = vmatpush2.msra.mxu0 %v267
    %1834 = vmatprep.subr.mxu0 %v260
    %1835 = vmatpush2.msra.mxu0 %v259
    %1836 = vmatprep.subr.mxu0 %v252
    %1837 = vmatpush2.msra.mxu0 %v251
    %1838 = vmatprep.subr.mxu0 %v244
    %1839 = vmatpush2.msra.mxu0 %v243
    %1840 = vmatprep.subr.mxu0 %v236
    %1841 = vmatpush2.msra.mxu0 %v235
    %1842 = vmatprep.mubr.f32.mxu0 %v1765
    %1843 = vmatmul.mubr.f32.gmra.mxu0 %v1764
    %v1844 = vpop.f32.mrf.mxu0
    %v1845 = vadd.f32 0.0, %v1844
    %v1846 = vpop.f32.mrf.mxu0
    %v1847 = vadd.f32 0.0, %v1846
    %1848 = vdwg.mxu0
    %1849 = vmatprep.subr.mxu0 %v230
    %1850 = vmatpush1.msra.mxu0 %v229
    %1851 = vmatprep.subr.mxu0 %v222
    %1852 = vmatpush1.msra.mxu0 %v221
    %1853 = vmatprep.subr.mxu0 %v214
    %1854 = vmatpush1.msra.mxu0 %v213
    %1855 = vmatprep.subr.mxu0 %v206
    %1856 = vmatpush1.msra.mxu0 %v205
    %1857 = vmatprep.subr.mxu0 %v198
    %1858 = vmatpush1.msra.mxu0 %v197
    %1859 = vmatprep.subr.mxu0 %v190
    %1860 = vmatpush1.msra.mxu0 %v189
    %1861 = vmatprep.subr.mxu0 %v182
    %1862 = vmatpush1.msra.mxu0 %v181
    %1863 = vmatprep.subr.mxu0 %v174
    %1864 = vmatpush1.msra.mxu0 %v173
    %1865 = vmatprep.subr.mxu0 %v166
    %1866 = vmatpush1.msra.mxu0 %v165
    %1867 = vmatprep.subr.mxu0 %v158
    %1868 = vmatpush1.msra.mxu0 %v157
    %1869 = vmatprep.subr.mxu0 %v150
    %1870 = vmatpush1.msra.mxu0 %v149
    %1871 = vmatprep.subr.mxu0 %v142
    %1872 = vmatpush1.msra.mxu0 %v141
    %1873 = vmatprep.subr.mxu0 %v134
    %1874 = vmatpush1.msra.mxu0 %v133
    %1875 = vmatprep.subr.mxu0 %v126
    %1876 = vmatpush1.msra.mxu0 %v125
    %1877 = vmatprep.subr.mxu0 %v118
    %1878 = vmatpush1.msra.mxu0 %v117
    %1879 = vmatprep.subr.mxu0 %v110
    %1880 = vmatpush1.msra.mxu0 %v109
    %1881 = vmatprep.subr.mxu0 %v358
    %1882 = vmatpush2.msra.mxu0 %v357
    %1883 = vmatprep.subr.mxu0 %v350
    %1884 = vmatpush2.msra.mxu0 %v349
    %1885 = vmatprep.subr.mxu0 %v342
    %1886 = vmatpush2.msra.mxu0 %v341
    %1887 = vmatprep.subr.mxu0 %v334
    %1888 = vmatpush2.msra.mxu0 %v333
    %1889 = vmatprep.subr.mxu0 %v326
    %1890 = vmatpush2.msra.mxu0 %v325
    %1891 = vmatprep.subr.mxu0 %v318
    %1892 = vmatpush2.msra.mxu0 %v317
    %1893 = vmatprep.subr.mxu0 %v310
    %1894 = vmatpush2.msra.mxu0 %v309
    %1895 = vmatprep.subr.mxu0 %v302
    %1896 = vmatpush2.msra.mxu0 %v301
    %1897 = vmatprep.subr.mxu0 %v294
    %1898 = vmatpush2.msra.mxu0 %v293
    %1899 = vmatprep.subr.mxu0 %v286
    %1900 = vmatpush2.msra.mxu0 %v285
    %1901 = vmatprep.subr.mxu0 %v278
    %1902 = vmatpush2.msra.mxu0 %v277
    %1903 = vmatprep.subr.mxu0 %v270
    %1904 = vmatpush2.msra.mxu0 %v269
    %1905 = vmatprep.subr.mxu0 %v262
    %1906 = vmatpush2.msra.mxu0 %v261
    %1907 = vmatprep.subr.mxu0 %v254
    %1908 = vmatpush2.msra.mxu0 %v253
    %1909 = vmatprep.subr.mxu0 %v246
    %1910 = vmatpush2.msra.mxu0 %v245
    %1911 = vmatprep.subr.mxu0 %v238
    %1912 = vmatpush2.msra.mxu0 %v237
    %1913 = vmatprep.mubr.f32.mxu0 %v1765
    %1914 = vmatmul.mubr.f32.gmra.mxu0 %v1764
    %v1915 = vpop.f32.mrf.mxu0
    %v1916 = vadd.f32 0.0, %v1915
    %v1917 = vpop.f32.mrf.mxu0
    %v1918 = vadd.f32 0.0, %v1917
    %1919 = vdwg.mxu0
    %1920 = vmatprep.subr.mxu0 %v232
    %1921 = vmatpush1.msra.mxu0 %v231
    %1922 = vmatprep.subr.mxu0 %v224
    %1923 = vmatpush1.msra.mxu0 %v223
    %1924 = vmatprep.subr.mxu0 %v216
    %1925 = vmatpush1.msra.mxu0 %v215
    %1926 = vmatprep.subr.mxu0 %v208
    %1927 = vmatpush1.msra.mxu0 %v207
    %1928 = vmatprep.subr.mxu0 %v200
    %1929 = vmatpush1.msra.mxu0 %v199
    %1930 = vmatprep.subr.mxu0 %v192
    %1931 = vmatpush1.msra.mxu0 %v191
    %1932 = vmatprep.subr.mxu0 %v184
    %1933 = vmatpush1.msra.mxu0 %v183
    %1934 = vmatprep.subr.mxu0 %v176
    %1935 = vmatpush1.msra.mxu0 %v175
    %1936 = vmatprep.subr.mxu0 %v168
    %1937 = vmatpush1.msra.mxu0 %v167
    %1938 = vmatprep.subr.mxu0 %v160
    %1939 = vmatpush1.msra.mxu0 %v159
    %1940 = vmatprep.subr.mxu0 %v152
    %1941 = vmatpush1.msra.mxu0 %v151
    %1942 = vmatprep.subr.mxu0 %v144
    %1943 = vmatpush1.msra.mxu0 %v143
    %1944 = vmatprep.subr.mxu0 %v136
    %1945 = vmatpush1.msra.mxu0 %v135
    %1946 = vmatprep.subr.mxu0 %v128
    %1947 = vmatpush1.msra.mxu0 %v127
    %1948 = vmatprep.subr.mxu0 %v120
    %1949 = vmatpush1.msra.mxu0 %v119
    %1950 = vmatprep.subr.mxu0 %v112
    %1951 = vmatpush1.msra.mxu0 %v111
    %1952 = vmatprep.subr.mxu0 %v360
    %1953 = vmatpush2.msra.mxu0 %v359
    %1954 = vmatprep.subr.mxu0 %v352
    %1955 = vmatpush2.msra.mxu0 %v351
    %1956 = vmatprep.subr.mxu0 %v344
    %1957 = vmatpush2.msra.mxu0 %v343
    %1958 = vmatprep.subr.mxu0 %v336
    %1959 = vmatpush2.msra.mxu0 %v335
    %1960 = vmatprep.subr.mxu0 %v328
    %1961 = vmatpush2.msra.mxu0 %v327
    %1962 = vmatprep.subr.mxu0 %v320
    %1963 = vmatpush2.msra.mxu0 %v319
    %1964 = vmatprep.subr.mxu0 %v312
    %1965 = vmatpush2.msra.mxu0 %v311
    %1966 = vmatprep.subr.mxu0 %v304
    %1967 = vmatpush2.msra.mxu0 %v303
    %1968 = vmatprep.subr.mxu0 %v296
    %1969 = vmatpush2.msra.mxu0 %v295
    %1970 = vmatprep.subr.mxu0 %v288
    %1971 = vmatpush2.msra.mxu0 %v287
    %1972 = vmatprep.subr.mxu0 %v280
    %1973 = vmatpush2.msra.mxu0 %v279
    %1974 = vmatprep.subr.mxu0 %v272
    %1975 = vmatpush2.msra.mxu0 %v271
    %1976 = vmatprep.subr.mxu0 %v264
    %1977 = vmatpush2.msra.mxu0 %v263
    %1978 = vmatprep.subr.mxu0 %v256
    %1979 = vmatpush2.msra.mxu0 %v255
    %1980 = vmatprep.subr.mxu0 %v248
    %1981 = vmatpush2.msra.mxu0 %v247
    %1982 = vmatprep.subr.mxu0 %v240
    %1983 = vmatpush2.msra.mxu0 %v239
    %1984 = vmatprep.mubr.f32.mxu0 %v1765
    %1985 = vmatmul.mubr.f32.gmra.mxu0 %v1764
    %v1986 = vpop.f32.mrf.mxu0
    %v1987 = vadd.f32 0.0, %v1986
    %v1988 = vpop.f32.mrf.mxu0
    %v1989 = vadd.f32 0.0, %v1988
    %1990 = vdwg.mxu0
    %1991 = vmatprep.subr.mxu0 %v234
    %1992 = vmatpush1.msra.mxu0 %v233
    %1993 = vmatprep.subr.mxu0 %v226
    %1994 = vmatpush1.msra.mxu0 %v225
    %1995 = vmatprep.subr.mxu0 %v218
    %1996 = vmatpush1.msra.mxu0 %v217
    %1997 = vmatprep.subr.mxu0 %v210
    %1998 = vmatpush1.msra.mxu0 %v209
    %1999 = vmatprep.subr.mxu0 %v202
    %2000 = vmatpush1.msra.mxu0 %v201
    %2001 = vmatprep.subr.mxu0 %v194
    %2002 = vmatpush1.msra.mxu0 %v193
    %2003 = vmatprep.subr.mxu0 %v186
    %2004 = vmatpush1.msra.mxu0 %v185
    %2005 = vmatprep.subr.mxu0 %v178
    %2006 = vmatpush1.msra.mxu0 %v177
    %2007 = vmatprep.subr.mxu0 %v170
    %2008 = vmatpush1.msra.mxu0 %v169
    %2009 = vmatprep.subr.mxu0 %v162
    %2010 = vmatpush1.msra.mxu0 %v161
    %2011 = vmatprep.subr.mxu0 %v154
    %2012 = vmatpush1.msra.mxu0 %v153
    %2013 = vmatprep.subr.mxu0 %v146
    %2014 = vmatpush1.msra.mxu0 %v145
    %2015 = vmatprep.subr.mxu0 %v138
    %2016 = vmatpush1.msra.mxu0 %v137
    %2017 = vmatprep.subr.mxu0 %v130
    %2018 = vmatpush1.msra.mxu0 %v129
    %2019 = vmatprep.subr.mxu0 %v122
    %2020 = vmatpush1.msra.mxu0 %v121
    %2021 = vmatprep.subr.mxu0 %v114
    %2022 = vmatpush1.msra.mxu0 %v113
    %2023 = vmatprep.subr.mxu0 %v362
    %2024 = vmatpush2.msra.mxu0 %v361
    %2025 = vmatprep.subr.mxu0 %v354
    %2026 = vmatpush2.msra.mxu0 %v353
    %2027 = vmatprep.subr.mxu0 %v346
    %2028 = vmatpush2.msra.mxu0 %v345
    %2029 = vmatprep.subr.mxu0 %v338
    %2030 = vmatpush2.msra.mxu0 %v337
    %2031 = vmatprep.subr.mxu0 %v330
    %2032 = vmatpush2.msra.mxu0 %v329
    %2033 = vmatprep.subr.mxu0 %v322
    %2034 = vmatpush2.msra.mxu0 %v321
    %2035 = vmatprep.subr.mxu0 %v314
    %2036 = vmatpush2.msra.mxu0 %v313
    %2037 = vmatprep.subr.mxu0 %v306
    %2038 = vmatpush2.msra.mxu0 %v305
    %2039 = vmatprep.subr.mxu0 %v298
    %2040 = vmatpush2.msra.mxu0 %v297
    %2041 = vmatprep.subr.mxu0 %v290
    %2042 = vmatpush2.msra.mxu0 %v289
    %2043 = vmatprep.subr.mxu0 %v282
    %2044 = vmatpush2.msra.mxu0 %v281
    %2045 = vmatprep.subr.mxu0 %v274
    %2046 = vmatpush2.msra.mxu0 %v273
    %2047 = vmatprep.subr.mxu0 %v266
    %2048 = vmatpush2.msra.mxu0 %v265
    %2049 = vmatprep.subr.mxu0 %v258
    %2050 = vmatpush2.msra.mxu0 %v257
    %2051 = vmatprep.subr.mxu0 %v250
    %2052 = vmatpush2.msra.mxu0 %v249
    %2053 = vmatprep.subr.mxu0 %v242
    %2054 = vmatpush2.msra.mxu0 %v241
    %2055 = vmatprep.mubr.f32.mxu0 %v1765
    %2056 = vmatmul.mubr.f32.gmra.mxu0 %v1764
    %v2057 = vpop.f32.mrf.mxu0
    %v2058 = vadd.f32 0.0, %v2057
    %v2059 = vpop.f32.mrf.mxu0
    %v2060 = vadd.f32 0.0, %v2059
    %2061 = vdwg.mxu0
    %v2062 = vadd.f32 %v1770, %v1845
    %v2063 = vadd.f32 %v1771, %v1847
    %v2064 = vadd.f32 %v1772, %v1916
    %v2065 = vadd.f32 %v1773, %v1918
    %v2066 = vadd.f32 %v1774, %v1987
    %v2067 = vadd.f32 %v1775, %v1989
    %v2068 = vadd.f32 %v1776, %v2058
    %v2069 = vadd.f32 %v1777, %v2060
    %v2070 = vxor.u32 %v2062, 2147483648
    %v2071 = vxor.u32 %v2063, 2147483648
    %v2072 = vmul.f32 %v2070, 1.442695
    %v2073 = vpow.pop %v2072
    %v2074 = vmul.f32 %v2071, 1.442695
    %v2075 = vpow.pop %v2074
    %v2076 = vadd.f32 %v2073, 1.0
    %v2077 = vadd.f32 %v2075, 1.0
    %v2078 = vrcp.pop %v2076
    %v2079 = vmul.f32 1.0, %v2078
    %v2080 = vrcp.pop %v2077
    %v2081 = vmul.f32 1.0, %v2080
    %v2082 = vxor.u32 %v2064, 2147483648
    %v2083 = vxor.u32 %v2065, 2147483648
    %v2084 = vmul.f32 %v2082, 1.442695
    %v2085 = vpow.pop %v2084
    %v2086 = vmul.f32 %v2083, 1.442695
    %v2087 = vpow.pop %v2086
    %v2088 = vadd.f32 %v2085, 1.0
    %v2089 = vadd.f32 %v2087, 1.0
    %v2090 = vrcp.pop %v2088
    %v2091 = vmul.f32 1.0, %v2090
    %v2092 = vrcp.pop %v2089
    %v2093 = vmul.f32 1.0, %v2092
    %v2094 = vtanh.pop %v2066
    %v2095 = vtanh.pop %v2067
    %v2096 = vxor.u32 %v2068, 2147483648
    %v2097 = vxor.u32 %v2069, 2147483648
    %v2098 = vmul.f32 %v2096, 1.442695
    %v2099 = vpow.pop %v2098
    %v2100 = vmul.f32 %v2097, 1.442695
    %v2101 = vpow.pop %v2100
    %v2102 = vadd.f32 %v2099, 1.0
    %v2103 = vadd.f32 %v2101, 1.0
    %v2104 = vrcp.pop %v2102
    %v2105 = vmul.f32 1.0, %v2104
    %v2106 = vrcp.pop %v2103
    %v2107 = vmul.f32 1.0, %v2106
    %v2108 = vmul.f32 %v2091, %v1760
    %v2109 = vmul.f32 %v2093, %v1761
    %v2110 = vmul.f32 %v2079, %v2094
    %v2111 = vmul.f32 %v2081, %v2095
    %v2112 = vadd.f32 %v2108, %v2110
    %v2113 = vadd.f32 %v2109, %v2111
    %v2114 = vtanh.pop %v2112
    %v2115 = vtanh.pop %v2113
    %v2116 = vmul.f32 %v2105, %v2114
    %v2117 = vmul.f32 %v2107, %v2115
    %s2118 = scalar_lea.vmem [#allocation2], 64
    %2119 = vst [vmem:[%s2118] sm:$0xff] %v2116
    %2120 = vst [vmem:[%s2118 + $0x8] sm:$0xff] %v2117
    %s2121 = scalar_lea.vmem [#allocation4], 320
    %v2122 = vld [vmem:[%s2121] sm:$0xff]
    %v2123 = vld [vmem:[%s2121 + $0x8] sm:$0xff]
    %v2124 = vld [vmem:[%s2121 + $0x10] sm:$0xff]
    %v2125 = vld [vmem:[%s2121 + $0x18] sm:$0xff]
    %v2126 = vld [vmem:[%s2121 + $0x20] sm:$0xff]
    %v2127 = vld [vmem:[%s2121 + $0x28] sm:$0xff]
    %v2128 = vld [vmem:[%s2121 + $0x30] sm:$0xff]
    %v2129 = vld [vmem:[%s2121 + $0x38] sm:$0xff]
    %2130 = vmatprep.subr.mxu0 %v228
    %2131 = vmatpush1.msra.mxu0 %v227
    %2132 = vmatprep.subr.mxu0 %v220
    %2133 = vmatpush1.msra.mxu0 %v219
    %2134 = vmatprep.subr.mxu0 %v212
    %2135 = vmatpush1.msra.mxu0 %v211
    %2136 = vmatprep.subr.mxu0 %v204
    %2137 = vmatpush1.msra.mxu0 %v203
    %2138 = vmatprep.subr.mxu0 %v196
    %2139 = vmatpush1.msra.mxu0 %v195
    %2140 = vmatprep.subr.mxu0 %v188
    %2141 = vmatpush1.msra.mxu0 %v187
    %2142 = vmatprep.subr.mxu0 %v180
    %2143 = vmatpush1.msra.mxu0 %v179
    %2144 = vmatprep.subr.mxu0 %v172
    %2145 = vmatpush1.msra.mxu0 %v171
    %2146 = vmatprep.subr.mxu0 %v164
    %2147 = vmatpush1.msra.mxu0 %v163
    %2148 = vmatprep.subr.mxu0 %v156
    %2149 = vmatpush1.msra.mxu0 %v155
    %2150 = vmatprep.subr.mxu0 %v148
    %2151 = vmatpush1.msra.mxu0 %v147
    %2152 = vmatprep.subr.mxu0 %v140
    %2153 = vmatpush1.msra.mxu0 %v139
    %2154 = vmatprep.subr.mxu0 %v132
    %2155 = vmatpush1.msra.mxu0 %v131
    %2156 = vmatprep.subr.mxu0 %v124
    %2157 = vmatpush1.msra.mxu0 %v123
    %2158 = vmatprep.subr.mxu0 %v116
    %2159 = vmatpush1.msra.mxu0 %v115
    %2160 = vmatprep.subr.mxu0 %v108
    %2161 = vmatpush1.msra.mxu0 %v107
    %2162 = vmatprep.subr.mxu0 %v356
    %2163 = vmatpush2.msra.mxu0 %v355
    %2164 = vmatprep.subr.mxu0 %v348
    %2165 = vmatpush2.msra.mxu0 %v347
    %2166 = vmatprep.subr.mxu0 %v340
    %2167 = vmatpush2.msra.mxu0 %v339
    %2168 = vmatprep.subr.mxu0 %v332
    %2169 = vmatpush2.msra.mxu0 %v331
    %2170 = vmatprep.subr.mxu0 %v324
    %2171 = vmatpush2.msra.mxu0 %v323
    %2172 = vmatprep.subr.mxu0 %v316
    %2173 = vmatpush2.msra.mxu0 %v315
    %2174 = vmatprep.subr.mxu0 %v308
    %2175 = vmatpush2.msra.mxu0 %v307
    %2176 = vmatprep.subr.mxu0 %v300
    %2177 = vmatpush2.msra.mxu0 %v299
    %2178 = vmatprep.subr.mxu0 %v292
    %2179 = vmatpush2.msra.mxu0 %v291
    %2180 = vmatprep.subr.mxu0 %v284
    %2181 = vmatpush2.msra.mxu0 %v283
    %2182 = vmatprep.subr.mxu0 %v276
    %2183 = vmatpush2.msra.mxu0 %v275
    %2184 = vmatprep.subr.mxu0 %v268
    %2185 = vmatpush2.msra.mxu0 %v267
    %2186 = vmatprep.subr.mxu0 %v260
    %2187 = vmatpush2.msra.mxu0 %v259
    %2188 = vmatprep.subr.mxu0 %v252
    %2189 = vmatpush2.msra.mxu0 %v251
    %2190 = vmatprep.subr.mxu0 %v244
    %2191 = vmatpush2.msra.mxu0 %v243
    %2192 = vmatprep.subr.mxu0 %v236
    %2193 = vmatpush2.msra.mxu0 %v235
    %2194 = vmatprep.mubr.f32.mxu0 %v2117
    %2195 = vmatmul.mubr.f32.gmra.mxu0 %v2116
    %v2196 = vpop.f32.mrf.mxu0
    %v2197 = vadd.f32 0.0, %v2196
    %v2198 = vpop.f32.mrf.mxu0
    %v2199 = vadd.f32 0.0, %v2198
    %2200 = vdwg.mxu0
    %2201 = vmatprep.subr.mxu0 %v230
    %2202 = vmatpush1.msra.mxu0 %v229
    %2203 = vmatprep.subr.mxu0 %v222
    %2204 = vmatpush1.msra.mxu0 %v221
    %2205 = vmatprep.subr.mxu0 %v214
    %2206 = vmatpush1.msra.mxu0 %v213
    %2207 = vmatprep.subr.mxu0 %v206
    %2208 = vmatpush1.msra.mxu0 %v205
    %2209 = vmatprep.subr.mxu0 %v198
    %2210 = vmatpush1.msra.mxu0 %v197
    %2211 = vmatprep.subr.mxu0 %v190
    %2212 = vmatpush1.msra.mxu0 %v189
    %2213 = vmatprep.subr.mxu0 %v182
    %2214 = vmatpush1.msra.mxu0 %v181
    %2215 = vmatprep.subr.mxu0 %v174
    %2216 = vmatpush1.msra.mxu0 %v173
    %2217 = vmatprep.subr.mxu0 %v166
    %2218 = vmatpush1.msra.mxu0 %v165
    %2219 = vmatprep.subr.mxu0 %v158
    %2220 = vmatpush1.msra.mxu0 %v157
    %2221 = vmatprep.subr.mxu0 %v150
    %2222 = vmatpush1.msra.mxu0 %v149
    %2223 = vmatprep.subr.mxu0 %v142
    %2224 = vmatpush1.msra.mxu0 %v141
    %2225 = vmatprep.subr.mxu0 %v134
    %2226 = vmatpush1.msra.mxu0 %v133
    %2227 = vmatprep.subr.mxu0 %v126
    %2228 = vmatpush1.msra.mxu0 %v125
    %2229 = vmatprep.subr.mxu0 %v118
    %2230 = vmatpush1.msra.mxu0 %v117
    %2231 = vmatprep.subr.mxu0 %v110
    %2232 = vmatpush1.msra.mxu0 %v109
    %2233 = vmatprep.subr.mxu0 %v358
    %2234 = vmatpush2.msra.mxu0 %v357
    %2235 = vmatprep.subr.mxu0 %v350
    %2236 = vmatpush2.msra.mxu0 %v349
    %2237 = vmatprep.subr.mxu0 %v342
    %2238 = vmatpush2.msra.mxu0 %v341
    %2239 = vmatprep.subr.mxu0 %v334
    %2240 = vmatpush2.msra.mxu0 %v333
    %2241 = vmatprep.subr.mxu0 %v326
    %2242 = vmatpush2.msra.mxu0 %v325
    %2243 = vmatprep.subr.mxu0 %v318
    %2244 = vmatpush2.msra.mxu0 %v317
    %2245 = vmatprep.subr.mxu0 %v310
    %2246 = vmatpush2.msra.mxu0 %v309
    %2247 = vmatprep.subr.mxu0 %v302
    %2248 = vmatpush2.msra.mxu0 %v301
    %2249 = vmatprep.subr.mxu0 %v294
    %2250 = vmatpush2.msra.mxu0 %v293
    %2251 = vmatprep.subr.mxu0 %v286
    %2252 = vmatpush2.msra.mxu0 %v285
    %2253 = vmatprep.subr.mxu0 %v278
    %2254 = vmatpush2.msra.mxu0 %v277
    %2255 = vmatprep.subr.mxu0 %v270
    %2256 = vmatpush2.msra.mxu0 %v269
    %2257 = vmatprep.subr.mxu0 %v262
    %2258 = vmatpush2.msra.mxu0 %v261
    %2259 = vmatprep.subr.mxu0 %v254
    %2260 = vmatpush2.msra.mxu0 %v253
    %2261 = vmatprep.subr.mxu0 %v246
    %2262 = vmatpush2.msra.mxu0 %v245
    %2263 = vmatprep.subr.mxu0 %v238
    %2264 = vmatpush2.msra.mxu0 %v237
    %2265 = vmatprep.mubr.f32.mxu0 %v2117
    %2266 = vmatmul.mubr.f32.gmra.mxu0 %v2116
    %v2267 = vpop.f32.mrf.mxu0
    %v2268 = vadd.f32 0.0, %v2267
    %v2269 = vpop.f32.mrf.mxu0
    %v2270 = vadd.f32 0.0, %v2269
    %2271 = vdwg.mxu0
    %2272 = vmatprep.subr.mxu0 %v232
    %2273 = vmatpush1.msra.mxu0 %v231
    %2274 = vmatprep.subr.mxu0 %v224
    %2275 = vmatpush1.msra.mxu0 %v223
    %2276 = vmatprep.subr.mxu0 %v216
    %2277 = vmatpush1.msra.mxu0 %v215
    %2278 = vmatprep.subr.mxu0 %v208
    %2279 = vmatpush1.msra.mxu0 %v207
    %2280 = vmatprep.subr.mxu0 %v200
    %2281 = vmatpush1.msra.mxu0 %v199
    %2282 = vmatprep.subr.mxu0 %v192
    %2283 = vmatpush1.msra.mxu0 %v191
    %2284 = vmatprep.subr.mxu0 %v184
    %2285 = vmatpush1.msra.mxu0 %v183
    %2286 = vmatprep.subr.mxu0 %v176
    %2287 = vmatpush1.msra.mxu0 %v175
    %2288 = vmatprep.subr.mxu0 %v168
    %2289 = vmatpush1.msra.mxu0 %v167
    %2290 = vmatprep.subr.mxu0 %v160
    %2291 = vmatpush1.msra.mxu0 %v159
    %2292 = vmatprep.subr.mxu0 %v152
    %2293 = vmatpush1.msra.mxu0 %v151
    %2294 = vmatprep.subr.mxu0 %v144
    %2295 = vmatpush1.msra.mxu0 %v143
    %2296 = vmatprep.subr.mxu0 %v136
    %2297 = vmatpush1.msra.mxu0 %v135
    %2298 = vmatprep.subr.mxu0 %v128
    %2299 = vmatpush1.msra.mxu0 %v127
    %2300 = vmatprep.subr.mxu0 %v120
    %2301 = vmatpush1.msra.mxu0 %v119
    %2302 = vmatprep.subr.mxu0 %v112
    %2303 = vmatpush1.msra.mxu0 %v111
    %2304 = vmatprep.subr.mxu0 %v360
    %2305 = vmatpush2.msra.mxu0 %v359
    %2306 = vmatprep.subr.mxu0 %v352
    %2307 = vmatpush2.msra.mxu0 %v351
    %2308 = vmatprep.subr.mxu0 %v344
    %2309 = vmatpush2.msra.mxu0 %v343
    %2310 = vmatprep.subr.mxu0 %v336
    %2311 = vmatpush2.msra.mxu0 %v335
    %2312 = vmatprep.subr.mxu0 %v328
    %2313 = vmatpush2.msra.mxu0 %v327
    %2314 = vmatprep.subr.mxu0 %v320
    %2315 = vmatpush2.msra.mxu0 %v319
    %2316 = vmatprep.subr.mxu0 %v312
    %2317 = vmatpush2.msra.mxu0 %v311
    %2318 = vmatprep.subr.mxu0 %v304
    %2319 = vmatpush2.msra.mxu0 %v303
    %2320 = vmatprep.subr.mxu0 %v296
    %2321 = vmatpush2.msra.mxu0 %v295
    %2322 = vmatprep.subr.mxu0 %v288
    %2323 = vmatpush2.msra.mxu0 %v287
    %2324 = vmatprep.subr.mxu0 %v280
    %2325 = vmatpush2.msra.mxu0 %v279
    %2326 = vmatprep.subr.mxu0 %v272
    %2327 = vmatpush2.msra.mxu0 %v271
    %2328 = vmatprep.subr.mxu0 %v264
    %2329 = vmatpush2.msra.mxu0 %v263
    %2330 = vmatprep.subr.mxu0 %v256
    %2331 = vmatpush2.msra.mxu0 %v255
    %2332 = vmatprep.subr.mxu0 %v248
    %2333 = vmatpush2.msra.mxu0 %v247
    %2334 = vmatprep.subr.mxu0 %v240
    %2335 = vmatpush2.msra.mxu0 %v239
    %2336 = vmatprep.mubr.f32.mxu0 %v2117
    %2337 = vmatmul.mubr.f32.gmra.mxu0 %v2116
    %v2338 = vpop.f32.mrf.mxu0
    %v2339 = vadd.f32 0.0, %v2338
    %v2340 = vpop.f32.mrf.mxu0
    %v2341 = vadd.f32 0.0, %v2340
    %2342 = vdwg.mxu0
    %2343 = vmatprep.subr.mxu0 %v234
    %2344 = vmatpush1.msra.mxu0 %v233
    %2345 = vmatprep.subr.mxu0 %v226
    %2346 = vmatpush1.msra.mxu0 %v225
    %2347 = vmatprep.subr.mxu0 %v218
    %2348 = vmatpush1.msra.mxu0 %v217
    %2349 = vmatprep.subr.mxu0 %v210
    %2350 = vmatpush1.msra.mxu0 %v209
    %2351 = vmatprep.subr.mxu0 %v202
    %2352 = vmatpush1.msra.mxu0 %v201
    %2353 = vmatprep.subr.mxu0 %v194
    %2354 = vmatpush1.msra.mxu0 %v193
    %2355 = vmatprep.subr.mxu0 %v186
    %2356 = vmatpush1.msra.mxu0 %v185
    %2357 = vmatprep.subr.mxu0 %v178
    %2358 = vmatpush1.msra.mxu0 %v177
    %2359 = vmatprep.subr.mxu0 %v170
    %2360 = vmatpush1.msra.mxu0 %v169
    %2361 = vmatprep.subr.mxu0 %v162
    %2362 = vmatpush1.msra.mxu0 %v161
    %2363 = vmatprep.subr.mxu0 %v154
    %2364 = vmatpush1.msra.mxu0 %v153
    %2365 = vmatprep.subr.mxu0 %v146
    %2366 = vmatpush1.msra.mxu0 %v145
    %2367 = vmatprep.subr.mxu0 %v138
    %2368 = vmatpush1.msra.mxu0 %v137
    %2369 = vmatprep.subr.mxu0 %v130
    %2370 = vmatpush1.msra.mxu0 %v129
    %2371 = vmatprep.subr.mxu0 %v122
    %2372 = vmatpush1.msra.mxu0 %v121
    %2373 = vmatprep.subr.mxu0 %v114
    %2374 = vmatpush1.msra.mxu0 %v113
    %2375 = vmatprep.subr.mxu0 %v362
    %2376 = vmatpush2.msra.mxu0 %v361
    %2377 = vmatprep.subr.mxu0 %v354
    %2378 = vmatpush2.msra.mxu0 %v353
    %2379 = vmatprep.subr.mxu0 %v346
    %2380 = vmatpush2.msra.mxu0 %v345
    %2381 = vmatprep.subr.mxu0 %v338
    %2382 = vmatpush2.msra.mxu0 %v337
    %2383 = vmatprep.subr.mxu0 %v330
    %2384 = vmatpush2.msra.mxu0 %v329
    %2385 = vmatprep.subr.mxu0 %v322
    %2386 = vmatpush2.msra.mxu0 %v321
    %2387 = vmatprep.subr.mxu0 %v314
    %2388 = vmatpush2.msra.mxu0 %v313
    %2389 = vmatprep.subr.mxu0 %v306
    %2390 = vmatpush2.msra.mxu0 %v305
    %2391 = vmatprep.subr.mxu0 %v298
    %2392 = vmatpush2.msra.mxu0 %v297
    %2393 = vmatprep.subr.mxu0 %v290
    %2394 = vmatpush2.msra.mxu0 %v289
    %2395 = vmatprep.subr.mxu0 %v282
    %2396 = vmatpush2.msra.mxu0 %v281
    %2397 = vmatprep.subr.mxu0 %v274
    %2398 = vmatpush2.msra.mxu0 %v273
    %2399 = vmatprep.subr.mxu0 %v266
    %2400 = vmatpush2.msra.mxu0 %v265
    %2401 = vmatprep.subr.mxu0 %v258
    %2402 = vmatpush2.msra.mxu0 %v257
    %2403 = vmatprep.subr.mxu0 %v250
    %2404 = vmatpush2.msra.mxu0 %v249
    %2405 = vmatprep.subr.mxu0 %v242
    %2406 = vmatpush2.msra.mxu0 %v241
    %2407 = vmatprep.mubr.f32.mxu0 %v2117
    %2408 = vmatmul.mubr.f32.gmra.mxu0 %v2116
    %v2409 = vpop.f32.mrf.mxu0
    %v2410 = vadd.f32 0.0, %v2409
    %v2411 = vpop.f32.mrf.mxu0
    %v2412 = vadd.f32 0.0, %v2411
    %2413 = vdwg.mxu0
    %v2414 = vadd.f32 %v2122, %v2197
    %v2415 = vadd.f32 %v2123, %v2199
    %v2416 = vadd.f32 %v2124, %v2268
    %v2417 = vadd.f32 %v2125, %v2270
    %v2418 = vadd.f32 %v2126, %v2339
    %v2419 = vadd.f32 %v2127, %v2341
    %v2420 = vadd.f32 %v2128, %v2410
    %v2421 = vadd.f32 %v2129, %v2412
    %v2422 = vxor.u32 %v2414, 2147483648
    %v2423 = vxor.u32 %v2415, 2147483648
    %v2424 = vmul.f32 %v2422, 1.442695
    %v2425 = vpow.pop %v2424
    %v2426 = vmul.f32 %v2423, 1.442695
    %v2427 = vpow.pop %v2426
    %v2428 = vadd.f32 %v2425, 1.0
    %v2429 = vadd.f32 %v2427, 1.0
    %v2430 = vrcp.pop %v2428
    %v2431 = vmul.f32 1.0, %v2430
    %v2432 = vrcp.pop %v2429
    %v2433 = vmul.f32 1.0, %v2432
    %v2434 = vxor.u32 %v2416, 2147483648
    %v2435 = vxor.u32 %v2417, 2147483648
    %v2436 = vmul.f32 %v2434, 1.442695
    %v2437 = vpow.pop %v2436
    %v2438 = vmul.f32 %v2435, 1.442695
    %v2439 = vpow.pop %v2438
    %v2440 = vadd.f32 %v2437, 1.0
    %v2441 = vadd.f32 %v2439, 1.0
    %v2442 = vrcp.pop %v2440
    %v2443 = vmul.f32 1.0, %v2442
    %v2444 = vrcp.pop %v2441
    %v2445 = vmul.f32 1.0, %v2444
    %v2446 = vtanh.pop %v2418
    %v2447 = vtanh.pop %v2419
    %v2448 = vxor.u32 %v2420, 2147483648
    %v2449 = vxor.u32 %v2421, 2147483648
    %v2450 = vmul.f32 %v2448, 1.442695
    %v2451 = vpow.pop %v2450
    %v2452 = vmul.f32 %v2449, 1.442695
    %v2453 = vpow.pop %v2452
    %v2454 = vadd.f32 %v2451, 1.0
    %v2455 = vadd.f32 %v2453, 1.0
    %v2456 = vrcp.pop %v2454
    %v2457 = vmul.f32 1.0, %v2456
    %v2458 = vrcp.pop %v2455
    %v2459 = vmul.f32 1.0, %v2458
    %v2460 = vmul.f32 %v2443, %v2112
    %v2461 = vmul.f32 %v2445, %v2113
    %v2462 = vmul.f32 %v2431, %v2446
    %v2463 = vmul.f32 %v2433, %v2447
    %v2464 = vadd.f32 %v2460, %v2462
    %v2465 = vadd.f32 %v2461, %v2463
    %v2466 = vtanh.pop %v2464
    %v2467 = vtanh.pop %v2465
    %v2468 = vmul.f32 %v2457, %v2466
    %v2469 = vmul.f32 %v2459, %v2467
    %s2470 = scalar_lea.vmem [#allocation2], 80
    %2471 = vst [vmem:[%s2470] sm:$0xff] %v2468
    %2472 = vst [vmem:[%s2470 + $0x8] sm:$0xff] %v2469
    %s2473 = scalar_lea.vmem [#allocation4], 384
    %v2474 = vld [vmem:[%s2473] sm:$0xff]
    %v2475 = vld [vmem:[%s2473 + $0x8] sm:$0xff]
    %v2476 = vld [vmem:[%s2473 + $0x10] sm:$0xff]
    %v2477 = vld [vmem:[%s2473 + $0x18] sm:$0xff]
    %v2478 = vld [vmem:[%s2473 + $0x20] sm:$0xff]
    %v2479 = vld [vmem:[%s2473 + $0x28] sm:$0xff]
    %v2480 = vld [vmem:[%s2473 + $0x30] sm:$0xff]
    %v2481 = vld [vmem:[%s2473 + $0x38] sm:$0xff]
    %2482 = vmatprep.subr.mxu0 %v228
    %2483 = vmatpush1.msra.mxu0 %v227
    %2484 = vmatprep.subr.mxu0 %v220
    %2485 = vmatpush1.msra.mxu0 %v219
    %2486 = vmatprep.subr.mxu0 %v212
    %2487 = vmatpush1.msra.mxu0 %v211
    %2488 = vmatprep.subr.mxu0 %v204
    %2489 = vmatpush1.msra.mxu0 %v203
    %2490 = vmatprep.subr.mxu0 %v196
    %2491 = vmatpush1.msra.mxu0 %v195
    %2492 = vmatprep.subr.mxu0 %v188
    %2493 = vmatpush1.msra.mxu0 %v187
    %2494 = vmatprep.subr.mxu0 %v180
    %2495 = vmatpush1.msra.mxu0 %v179
    %2496 = vmatprep.subr.mxu0 %v172
    %2497 = vmatpush1.msra.mxu0 %v171
    %2498 = vmatprep.subr.mxu0 %v164
    %2499 = vmatpush1.msra.mxu0 %v163
    %2500 = vmatprep.subr.mxu0 %v156
    %2501 = vmatpush1.msra.mxu0 %v155
    %2502 = vmatprep.subr.mxu0 %v148
    %2503 = vmatpush1.msra.mxu0 %v147
    %2504 = vmatprep.subr.mxu0 %v140
    %2505 = vmatpush1.msra.mxu0 %v139
    %2506 = vmatprep.subr.mxu0 %v132
    %2507 = vmatpush1.msra.mxu0 %v131
    %2508 = vmatprep.subr.mxu0 %v124
    %2509 = vmatpush1.msra.mxu0 %v123
    %2510 = vmatprep.subr.mxu0 %v116
    %2511 = vmatpush1.msra.mxu0 %v115
    %2512 = vmatprep.subr.mxu0 %v108
    %2513 = vmatpush1.msra.mxu0 %v107
    %2514 = vmatprep.subr.mxu0 %v356
    %2515 = vmatpush2.msra.mxu0 %v355
    %2516 = vmatprep.subr.mxu0 %v348
    %2517 = vmatpush2.msra.mxu0 %v347
    %2518 = vmatprep.subr.mxu0 %v340
    %2519 = vmatpush2.msra.mxu0 %v339
    %2520 = vmatprep.subr.mxu0 %v332
    %2521 = vmatpush2.msra.mxu0 %v331
    %2522 = vmatprep.subr.mxu0 %v324
    %2523 = vmatpush2.msra.mxu0 %v323
    %2524 = vmatprep.subr.mxu0 %v316
    %2525 = vmatpush2.msra.mxu0 %v315
    %2526 = vmatprep.subr.mxu0 %v308
    %2527 = vmatpush2.msra.mxu0 %v307
    %2528 = vmatprep.subr.mxu0 %v300
    %2529 = vmatpush2.msra.mxu0 %v299
    %2530 = vmatprep.subr.mxu0 %v292
    %2531 = vmatpush2.msra.mxu0 %v291
    %2532 = vmatprep.subr.mxu0 %v284
    %2533 = vmatpush2.msra.mxu0 %v283
    %2534 = vmatprep.subr.mxu0 %v276
    %2535 = vmatpush2.msra.mxu0 %v275
    %2536 = vmatprep.subr.mxu0 %v268
    %2537 = vmatpush2.msra.mxu0 %v267
    %2538 = vmatprep.subr.mxu0 %v260
    %2539 = vmatpush2.msra.mxu0 %v259
    %2540 = vmatprep.subr.mxu0 %v252
    %2541 = vmatpush2.msra.mxu0 %v251
    %2542 = vmatprep.subr.mxu0 %v244
    %2543 = vmatpush2.msra.mxu0 %v243
    %2544 = vmatprep.subr.mxu0 %v236
    %2545 = vmatpush2.msra.mxu0 %v235
    %2546 = vmatprep.mubr.f32.mxu0 %v2469
    %2547 = vmatmul.mubr.f32.gmra.mxu0 %v2468
    %v2548 = vpop.f32.mrf.mxu0
    %v2549 = vadd.f32 0.0, %v2548
    %v2550 = vpop.f32.mrf.mxu0
    %v2551 = vadd.f32 0.0, %v2550
    %2552 = vdwg.mxu0
    %2553 = vmatprep.subr.mxu0 %v230
    %2554 = vmatpush1.msra.mxu0 %v229
    %2555 = vmatprep.subr.mxu0 %v222
    %2556 = vmatpush1.msra.mxu0 %v221
    %2557 = vmatprep.subr.mxu0 %v214
    %2558 = vmatpush1.msra.mxu0 %v213
    %2559 = vmatprep.subr.mxu0 %v206
    %2560 = vmatpush1.msra.mxu0 %v205
    %2561 = vmatprep.subr.mxu0 %v198
    %2562 = vmatpush1.msra.mxu0 %v197
    %2563 = vmatprep.subr.mxu0 %v190
    %2564 = vmatpush1.msra.mxu0 %v189
    %2565 = vmatprep.subr.mxu0 %v182
    %2566 = vmatpush1.msra.mxu0 %v181
    %2567 = vmatprep.subr.mxu0 %v174
    %2568 = vmatpush1.msra.mxu0 %v173
    %2569 = vmatprep.subr.mxu0 %v166
    %2570 = vmatpush1.msra.mxu0 %v165
    %2571 = vmatprep.subr.mxu0 %v158
    %2572 = vmatpush1.msra.mxu0 %v157
    %2573 = vmatprep.subr.mxu0 %v150
    %2574 = vmatpush1.msra.mxu0 %v149
    %2575 = vmatprep.subr.mxu0 %v142
    %2576 = vmatpush1.msra.mxu0 %v141
    %2577 = vmatprep.subr.mxu0 %v134
    %2578 = vmatpush1.msra.mxu0 %v133
    %2579 = vmatprep.subr.mxu0 %v126
    %2580 = vmatpush1.msra.mxu0 %v125
    %2581 = vmatprep.subr.mxu0 %v118
    %2582 = vmatpush1.msra.mxu0 %v117
    %2583 = vmatprep.subr.mxu0 %v110
    %2584 = vmatpush1.msra.mxu0 %v109
    %2585 = vmatprep.subr.mxu0 %v358
    %2586 = vmatpush2.msra.mxu0 %v357
    %2587 = vmatprep.subr.mxu0 %v350
    %2588 = vmatpush2.msra.mxu0 %v349
    %2589 = vmatprep.subr.mxu0 %v342
    %2590 = vmatpush2.msra.mxu0 %v341
    %2591 = vmatprep.subr.mxu0 %v334
    %2592 = vmatpush2.msra.mxu0 %v333
    %2593 = vmatprep.subr.mxu0 %v326
    %2594 = vmatpush2.msra.mxu0 %v325
    %2595 = vmatprep.subr.mxu0 %v318
    %2596 = vmatpush2.msra.mxu0 %v317
    %2597 = vmatprep.subr.mxu0 %v310
    %2598 = vmatpush2.msra.mxu0 %v309
    %2599 = vmatprep.subr.mxu0 %v302
    %2600 = vmatpush2.msra.mxu0 %v301
    %2601 = vmatprep.subr.mxu0 %v294
    %2602 = vmatpush2.msra.mxu0 %v293
    %2603 = vmatprep.subr.mxu0 %v286
    %2604 = vmatpush2.msra.mxu0 %v285
    %2605 = vmatprep.subr.mxu0 %v278
    %2606 = vmatpush2.msra.mxu0 %v277
    %2607 = vmatprep.subr.mxu0 %v270
    %2608 = vmatpush2.msra.mxu0 %v269
    %2609 = vmatprep.subr.mxu0 %v262
    %2610 = vmatpush2.msra.mxu0 %v261
    %2611 = vmatprep.subr.mxu0 %v254
    %2612 = vmatpush2.msra.mxu0 %v253
    %2613 = vmatprep.subr.mxu0 %v246
    %2614 = vmatpush2.msra.mxu0 %v245
    %2615 = vmatprep.subr.mxu0 %v238
    %2616 = vmatpush2.msra.mxu0 %v237
    %2617 = vmatprep.mubr.f32.mxu0 %v2469
    %2618 = vmatmul.mubr.f32.gmra.mxu0 %v2468
    %v2619 = vpop.f32.mrf.mxu0
    %v2620 = vadd.f32 0.0, %v2619
    %v2621 = vpop.f32.mrf.mxu0
    %v2622 = vadd.f32 0.0, %v2621
    %2623 = vdwg.mxu0
    %2624 = vmatprep.subr.mxu0 %v232
    %2625 = vmatpush1.msra.mxu0 %v231
    %2626 = vmatprep.subr.mxu0 %v224
    %2627 = vmatpush1.msra.mxu0 %v223
    %2628 = vmatprep.subr.mxu0 %v216
    %2629 = vmatpush1.msra.mxu0 %v215
    %2630 = vmatprep.subr.mxu0 %v208
    %2631 = vmatpush1.msra.mxu0 %v207
    %2632 = vmatprep.subr.mxu0 %v200
    %2633 = vmatpush1.msra.mxu0 %v199
    %2634 = vmatprep.subr.mxu0 %v192
    %2635 = vmatpush1.msra.mxu0 %v191
    %2636 = vmatprep.subr.mxu0 %v184
    %2637 = vmatpush1.msra.mxu0 %v183
    %2638 = vmatprep.subr.mxu0 %v176
    %2639 = vmatpush1.msra.mxu0 %v175
    %2640 = vmatprep.subr.mxu0 %v168
    %2641 = vmatpush1.msra.mxu0 %v167
    %2642 = vmatprep.subr.mxu0 %v160
    %2643 = vmatpush1.msra.mxu0 %v159
    %2644 = vmatprep.subr.mxu0 %v152
    %2645 = vmatpush1.msra.mxu0 %v151
    %2646 = vmatprep.subr.mxu0 %v144
    %2647 = vmatpush1.msra.mxu0 %v143
    %2648 = vmatprep.subr.mxu0 %v136
    %2649 = vmatpush1.msra.mxu0 %v135
    %2650 = vmatprep.subr.mxu0 %v128
    %2651 = vmatpush1.msra.mxu0 %v127
    %2652 = vmatprep.subr.mxu0 %v120
    %2653 = vmatpush1.msra.mxu0 %v119
    %2654 = vmatprep.subr.mxu0 %v112
    %2655 = vmatpush1.msra.mxu0 %v111
    %2656 = vmatprep.subr.mxu0 %v360
    %2657 = vmatpush2.msra.mxu0 %v359
    %2658 = vmatprep.subr.mxu0 %v352
    %2659 = vmatpush2.msra.mxu0 %v351
    %2660 = vmatprep.subr.mxu0 %v344
    %2661 = vmatpush2.msra.mxu0 %v343
    %2662 = vmatprep.subr.mxu0 %v336
    %2663 = vmatpush2.msra.mxu0 %v335
    %2664 = vmatprep.subr.mxu0 %v328
    %2665 = vmatpush2.msra.mxu0 %v327
    %2666 = vmatprep.subr.mxu0 %v320
    %2667 = vmatpush2.msra.mxu0 %v319
    %2668 = vmatprep.subr.mxu0 %v312
    %2669 = vmatpush2.msra.mxu0 %v311
    %2670 = vmatprep.subr.mxu0 %v304
    %2671 = vmatpush2.msra.mxu0 %v303
    %2672 = vmatprep.subr.mxu0 %v296
    %2673 = vmatpush2.msra.mxu0 %v295
    %2674 = vmatprep.subr.mxu0 %v288
    %2675 = vmatpush2.msra.mxu0 %v287
    %2676 = vmatprep.subr.mxu0 %v280
    %2677 = vmatpush2.msra.mxu0 %v279
    %2678 = vmatprep.subr.mxu0 %v272
    %2679 = vmatpush2.msra.mxu0 %v271
    %2680 = vmatprep.subr.mxu0 %v264
    %2681 = vmatpush2.msra.mxu0 %v263
    %2682 = vmatprep.subr.mxu0 %v256
    %2683 = vmatpush2.msra.mxu0 %v255
    %2684 = vmatprep.subr.mxu0 %v248
    %2685 = vmatpush2.msra.mxu0 %v247
    %2686 = vmatprep.subr.mxu0 %v240
    %2687 = vmatpush2.msra.mxu0 %v239
    %2688 = vmatprep.mubr.f32.mxu0 %v2469
    %2689 = vmatmul.mubr.f32.gmra.mxu0 %v2468
    %v2690 = vpop.f32.mrf.mxu0
    %v2691 = vadd.f32 0.0, %v2690
    %v2692 = vpop.f32.mrf.mxu0
    %v2693 = vadd.f32 0.0, %v2692
    %2694 = vdwg.mxu0
    %2695 = vmatprep.subr.mxu0 %v234
    %2696 = vmatpush1.msra.mxu0 %v233
    %2697 = vmatprep.subr.mxu0 %v226
    %2698 = vmatpush1.msra.mxu0 %v225
    %2699 = vmatprep.subr.mxu0 %v218
    %2700 = vmatpush1.msra.mxu0 %v217
    %2701 = vmatprep.subr.mxu0 %v210
    %2702 = vmatpush1.msra.mxu0 %v209
    %2703 = vmatprep.subr.mxu0 %v202
    %2704 = vmatpush1.msra.mxu0 %v201
    %2705 = vmatprep.subr.mxu0 %v194
    %2706 = vmatpush1.msra.mxu0 %v193
    %2707 = vmatprep.subr.mxu0 %v186
    %2708 = vmatpush1.msra.mxu0 %v185
    %2709 = vmatprep.subr.mxu0 %v178
    %2710 = vmatpush1.msra.mxu0 %v177
    %2711 = vmatprep.subr.mxu0 %v170
    %2712 = vmatpush1.msra.mxu0 %v169
    %2713 = vmatprep.subr.mxu0 %v162
    %2714 = vmatpush1.msra.mxu0 %v161
    %2715 = vmatprep.subr.mxu0 %v154
    %2716 = vmatpush1.msra.mxu0 %v153
    %2717 = vmatprep.subr.mxu0 %v146
    %2718 = vmatpush1.msra.mxu0 %v145
    %2719 = vmatprep.subr.mxu0 %v138
    %2720 = vmatpush1.msra.mxu0 %v137
    %2721 = vmatprep.subr.mxu0 %v130
    %2722 = vmatpush1.msra.mxu0 %v129
    %2723 = vmatprep.subr.mxu0 %v122
    %2724 = vmatpush1.msra.mxu0 %v121
    %2725 = vmatprep.subr.mxu0 %v114
    %2726 = vmatpush1.msra.mxu0 %v113
    %2727 = vmatprep.subr.mxu0 %v362
    %2728 = vmatpush2.msra.mxu0 %v361
    %2729 = vmatprep.subr.mxu0 %v354
    %2730 = vmatpush2.msra.mxu0 %v353
    %2731 = vmatprep.subr.mxu0 %v346
    %2732 = vmatpush2.msra.mxu0 %v345
    %2733 = vmatprep.subr.mxu0 %v338
    %2734 = vmatpush2.msra.mxu0 %v337
    %2735 = vmatprep.subr.mxu0 %v330
    %2736 = vmatpush2.msra.mxu0 %v329
    %2737 = vmatprep.subr.mxu0 %v322
    %2738 = vmatpush2.msra.mxu0 %v321
    %2739 = vmatprep.subr.mxu0 %v314
    %2740 = vmatpush2.msra.mxu0 %v313
    %2741 = vmatprep.subr.mxu0 %v306
    %2742 = vmatpush2.msra.mxu0 %v305
    %2743 = vmatprep.subr.mxu0 %v298
    %2744 = vmatpush2.msra.mxu0 %v297
    %2745 = vmatprep.subr.mxu0 %v290
    %2746 = vmatpush2.msra.mxu0 %v289
    %2747 = vmatprep.subr.mxu0 %v282
    %2748 = vmatpush2.msra.mxu0 %v281
    %2749 = vmatprep.subr.mxu0 %v274
    %2750 = vmatpush2.msra.mxu0 %v273
    %2751 = vmatprep.subr.mxu0 %v266
    %2752 = vmatpush2.msra.mxu0 %v265
    %2753 = vmatprep.subr.mxu0 %v258
    %2754 = vmatpush2.msra.mxu0 %v257
    %2755 = vmatprep.subr.mxu0 %v250
    %2756 = vmatpush2.msra.mxu0 %v249
    %2757 = vmatprep.subr.mxu0 %v242
    %2758 = vmatpush2.msra.mxu0 %v241
    %2759 = vmatprep.mubr.f32.mxu0 %v2469
    %2760 = vmatmul.mubr.f32.gmra.mxu0 %v2468
    %v2761 = vpop.f32.mrf.mxu0
    %v2762 = vadd.f32 0.0, %v2761
    %v2763 = vpop.f32.mrf.mxu0
    %v2764 = vadd.f32 0.0, %v2763
    %2765 = vdwg.mxu0
    %v2766 = vadd.f32 %v2474, %v2549
    %v2767 = vadd.f32 %v2475, %v2551
    %v2768 = vadd.f32 %v2476, %v2620
    %v2769 = vadd.f32 %v2477, %v2622
    %v2770 = vadd.f32 %v2478, %v2691
    %v2771 = vadd.f32 %v2479, %v2693
    %v2772 = vadd.f32 %v2480, %v2762
    %v2773 = vadd.f32 %v2481, %v2764
    %v2774 = vxor.u32 %v2766, 2147483648
    %v2775 = vxor.u32 %v2767, 2147483648
    %v2776 = vmul.f32 %v2774, 1.442695
    %v2777 = vpow.pop %v2776
    %v2778 = vmul.f32 %v2775, 1.442695
    %v2779 = vpow.pop %v2778
    %v2780 = vadd.f32 %v2777, 1.0
    %v2781 = vadd.f32 %v2779, 1.0
    %v2782 = vrcp.pop %v2780
    %v2783 = vmul.f32 1.0, %v2782
    %v2784 = vrcp.pop %v2781
    %v2785 = vmul.f32 1.0, %v2784
    %v2786 = vxor.u32 %v2768, 2147483648
    %v2787 = vxor.u32 %v2769, 2147483648
    %v2788 = vmul.f32 %v2786, 1.442695
    %v2789 = vpow.pop %v2788
    %v2790 = vmul.f32 %v2787, 1.442695
    %v2791 = vpow.pop %v2790
    %v2792 = vadd.f32 %v2789, 1.0
    %v2793 = vadd.f32 %v2791, 1.0
    %v2794 = vrcp.pop %v2792
    %v2795 = vmul.f32 1.0, %v2794
    %v2796 = vrcp.pop %v2793
    %v2797 = vmul.f32 1.0, %v2796
    %v2798 = vtanh.pop %v2770
    %v2799 = vtanh.pop %v2771
    %v2800 = vxor.u32 %v2772, 2147483648
    %v2801 = vxor.u32 %v2773, 2147483648
    %v2802 = vmul.f32 %v2800, 1.442695
    %v2803 = vpow.pop %v2802
    %v2804 = vmul.f32 %v2801, 1.442695
    %v2805 = vpow.pop %v2804
    %v2806 = vadd.f32 %v2803, 1.0
    %v2807 = vadd.f32 %v2805, 1.0
    %v2808 = vrcp.pop %v2806
    %v2809 = vmul.f32 1.0, %v2808
    %v2810 = vrcp.pop %v2807
    %v2811 = vmul.f32 1.0, %v2810
    %v2812 = vmul.f32 %v2795, %v2464
    %v2813 = vmul.f32 %v2797, %v2465
    %v2814 = vmul.f32 %v2783, %v2798
    %v2815 = vmul.f32 %v2785, %v2799
    %v2816 = vadd.f32 %v2812, %v2814
    %v2817 = vadd.f32 %v2813, %v2815
    %v2818 = vtanh.pop %v2816
    %v2819 = vtanh.pop %v2817
    %v2820 = vmul.f32 %v2809, %v2818
    %v2821 = vmul.f32 %v2811, %v2819
    %s2822 = scalar_lea.vmem [#allocation2], 96
    %2823 = vst [vmem:[%s2822] sm:$0xff] %v2820
    %2824 = vst [vmem:[%s2822 + $0x8] sm:$0xff] %v2821
    %s2825 = scalar_lea.vmem [#allocation4], 448
    %v2826 = vld [vmem:[%s2825] sm:$0xff]
    %v2827 = vld [vmem:[%s2825 + $0x8] sm:$0xff]
    %v2828 = vld [vmem:[%s2825 + $0x10] sm:$0xff]
    %v2829 = vld [vmem:[%s2825 + $0x18] sm:$0xff]
    %v2830 = vld [vmem:[%s2825 + $0x20] sm:$0xff]
    %v2831 = vld [vmem:[%s2825 + $0x28] sm:$0xff]
    %v2832 = vld [vmem:[%s2825 + $0x30] sm:$0xff]
    %v2833 = vld [vmem:[%s2825 + $0x38] sm:$0xff]
    %2834 = vmatprep.subr.mxu0 %v228
    %2835 = vmatpush1.msra.mxu0 %v227
    %2836 = vmatprep.subr.mxu0 %v220
    %2837 = vmatpush1.msra.mxu0 %v219
    %2838 = vmatprep.subr.mxu0 %v212
    %2839 = vmatpush1.msra.mxu0 %v211
    %2840 = vmatprep.subr.mxu0 %v204
    %2841 = vmatpush1.msra.mxu0 %v203
    %2842 = vmatprep.subr.mxu0 %v196
    %2843 = vmatpush1.msra.mxu0 %v195
    %2844 = vmatprep.subr.mxu0 %v188
    %2845 = vmatpush1.msra.mxu0 %v187
    %2846 = vmatprep.subr.mxu0 %v180
    %2847 = vmatpush1.msra.mxu0 %v179
    %2848 = vmatprep.subr.mxu0 %v172
    %2849 = vmatpush1.msra.mxu0 %v171
    %2850 = vmatprep.subr.mxu0 %v164
    %2851 = vmatpush1.msra.mxu0 %v163
    %2852 = vmatprep.subr.mxu0 %v156
    %2853 = vmatpush1.msra.mxu0 %v155
    %2854 = vmatprep.subr.mxu0 %v148
    %2855 = vmatpush1.msra.mxu0 %v147
    %2856 = vmatprep.subr.mxu0 %v140
    %2857 = vmatpush1.msra.mxu0 %v139
    %2858 = vmatprep.subr.mxu0 %v132
    %2859 = vmatpush1.msra.mxu0 %v131
    %2860 = vmatprep.subr.mxu0 %v124
    %2861 = vmatpush1.msra.mxu0 %v123
    %2862 = vmatprep.subr.mxu0 %v116
    %2863 = vmatpush1.msra.mxu0 %v115
    %2864 = vmatprep.subr.mxu0 %v108
    %2865 = vmatpush1.msra.mxu0 %v107
    %2866 = vmatprep.subr.mxu0 %v356
    %2867 = vmatpush2.msra.mxu0 %v355
    %2868 = vmatprep.subr.mxu0 %v348
    %2869 = vmatpush2.msra.mxu0 %v347
    %2870 = vmatprep.subr.mxu0 %v340
    %2871 = vmatpush2.msra.mxu0 %v339
    %2872 = vmatprep.subr.mxu0 %v332
    %2873 = vmatpush2.msra.mxu0 %v331
    %2874 = vmatprep.subr.mxu0 %v324
    %2875 = vmatpush2.msra.mxu0 %v323
    %2876 = vmatprep.subr.mxu0 %v316
    %2877 = vmatpush2.msra.mxu0 %v315
    %2878 = vmatprep.subr.mxu0 %v308
    %2879 = vmatpush2.msra.mxu0 %v307
    %2880 = vmatprep.subr.mxu0 %v300
    %2881 = vmatpush2.msra.mxu0 %v299
    %2882 = vmatprep.subr.mxu0 %v292
    %2883 = vmatpush2.msra.mxu0 %v291
    %2884 = vmatprep.subr.mxu0 %v284
    %2885 = vmatpush2.msra.mxu0 %v283
    %2886 = vmatprep.subr.mxu0 %v276
    %2887 = vmatpush2.msra.mxu0 %v275
    %2888 = vmatprep.subr.mxu0 %v268
    %2889 = vmatpush2.msra.mxu0 %v267
    %2890 = vmatprep.subr.mxu0 %v260
    %2891 = vmatpush2.msra.mxu0 %v259
    %2892 = vmatprep.subr.mxu0 %v252
    %2893 = vmatpush2.msra.mxu0 %v251
    %2894 = vmatprep.subr.mxu0 %v244
    %2895 = vmatpush2.msra.mxu0 %v243
    %2896 = vmatprep.subr.mxu0 %v236
    %2897 = vmatpush2.msra.mxu0 %v235
    %2898 = vmatprep.mubr.f32.mxu0 %v2821
    %2899 = vmatmul.mubr.f32.gmra.mxu0 %v2820
    %v2900 = vpop.f32.mrf.mxu0
    %v2901 = vadd.f32 0.0, %v2900
    %v2902 = vpop.f32.mrf.mxu0
    %v2903 = vadd.f32 0.0, %v2902
    %2904 = vdwg.mxu0
    %2905 = vmatprep.subr.mxu0 %v230
    %2906 = vmatpush1.msra.mxu0 %v229
    %2907 = vmatprep.subr.mxu0 %v222
    %2908 = vmatpush1.msra.mxu0 %v221
    %2909 = vmatprep.subr.mxu0 %v214
    %2910 = vmatpush1.msra.mxu0 %v213
    %2911 = vmatprep.subr.mxu0 %v206
    %2912 = vmatpush1.msra.mxu0 %v205
    %2913 = vmatprep.subr.mxu0 %v198
    %2914 = vmatpush1.msra.mxu0 %v197
    %2915 = vmatprep.subr.mxu0 %v190
    %2916 = vmatpush1.msra.mxu0 %v189
    %2917 = vmatprep.subr.mxu0 %v182
    %2918 = vmatpush1.msra.mxu0 %v181
    %2919 = vmatprep.subr.mxu0 %v174
    %2920 = vmatpush1.msra.mxu0 %v173
    %2921 = vmatprep.subr.mxu0 %v166
    %2922 = vmatpush1.msra.mxu0 %v165
    %2923 = vmatprep.subr.mxu0 %v158
    %2924 = vmatpush1.msra.mxu0 %v157
    %2925 = vmatprep.subr.mxu0 %v150
    %2926 = vmatpush1.msra.mxu0 %v149
    %2927 = vmatprep.subr.mxu0 %v142
    %2928 = vmatpush1.msra.mxu0 %v141
    %2929 = vmatprep.subr.mxu0 %v134
    %2930 = vmatpush1.msra.mxu0 %v133
    %2931 = vmatprep.subr.mxu0 %v126
    %2932 = vmatpush1.msra.mxu0 %v125
    %2933 = vmatprep.subr.mxu0 %v118
    %2934 = vmatpush1.msra.mxu0 %v117
    %2935 = vmatprep.subr.mxu0 %v110
    %2936 = vmatpush1.msra.mxu0 %v109
    %2937 = vmatprep.subr.mxu0 %v358
    %2938 = vmatpush2.msra.mxu0 %v357
    %2939 = vmatprep.subr.mxu0 %v350
    %2940 = vmatpush2.msra.mxu0 %v349
    %2941 = vmatprep.subr.mxu0 %v342
    %2942 = vmatpush2.msra.mxu0 %v341
    %2943 = vmatprep.subr.mxu0 %v334
    %2944 = vmatpush2.msra.mxu0 %v333
    %2945 = vmatprep.subr.mxu0 %v326
    %2946 = vmatpush2.msra.mxu0 %v325
    %2947 = vmatprep.subr.mxu0 %v318
    %2948 = vmatpush2.msra.mxu0 %v317
    %2949 = vmatprep.subr.mxu0 %v310
    %2950 = vmatpush2.msra.mxu0 %v309
    %2951 = vmatprep.subr.mxu0 %v302
    %2952 = vmatpush2.msra.mxu0 %v301
    %2953 = vmatprep.subr.mxu0 %v294
    %2954 = vmatpush2.msra.mxu0 %v293
    %2955 = vmatprep.subr.mxu0 %v286
    %2956 = vmatpush2.msra.mxu0 %v285
    %2957 = vmatprep.subr.mxu0 %v278
    %2958 = vmatpush2.msra.mxu0 %v277
    %2959 = vmatprep.subr.mxu0 %v270
    %2960 = vmatpush2.msra.mxu0 %v269
    %2961 = vmatprep.subr.mxu0 %v262
    %2962 = vmatpush2.msra.mxu0 %v261
    %2963 = vmatprep.subr.mxu0 %v254
    %2964 = vmatpush2.msra.mxu0 %v253
    %2965 = vmatprep.subr.mxu0 %v246
    %2966 = vmatpush2.msra.mxu0 %v245
    %2967 = vmatprep.subr.mxu0 %v238
    %2968 = vmatpush2.msra.mxu0 %v237
    %2969 = vmatprep.mubr.f32.mxu0 %v2821
    %2970 = vmatmul.mubr.f32.gmra.mxu0 %v2820
    %v2971 = vpop.f32.mrf.mxu0
    %v2972 = vadd.f32 0.0, %v2971
    %v2973 = vpop.f32.mrf.mxu0
    %v2974 = vadd.f32 0.0, %v2973
    %2975 = vdwg.mxu0
    %2976 = vmatprep.subr.mxu0 %v232
    %2977 = vmatpush1.msra.mxu0 %v231
    %2978 = vmatprep.subr.mxu0 %v224
    %2979 = vmatpush1.msra.mxu0 %v223
    %2980 = vmatprep.subr.mxu0 %v216
    %2981 = vmatpush1.msra.mxu0 %v215
    %2982 = vmatprep.subr.mxu0 %v208
    %2983 = vmatpush1.msra.mxu0 %v207
    %2984 = vmatprep.subr.mxu0 %v200
    %2985 = vmatpush1.msra.mxu0 %v199
    %2986 = vmatprep.subr.mxu0 %v192
    %2987 = vmatpush1.msra.mxu0 %v191
    %2988 = vmatprep.subr.mxu0 %v184
    %2989 = vmatpush1.msra.mxu0 %v183
    %2990 = vmatprep.subr.mxu0 %v176
    %2991 = vmatpush1.msra.mxu0 %v175
    %2992 = vmatprep.subr.mxu0 %v168
    %2993 = vmatpush1.msra.mxu0 %v167
    %2994 = vmatprep.subr.mxu0 %v160
    %2995 = vmatpush1.msra.mxu0 %v159
    %2996 = vmatprep.subr.mxu0 %v152
    %2997 = vmatpush1.msra.mxu0 %v151
    %2998 = vmatprep.subr.mxu0 %v144
    %2999 = vmatpush1.msra.mxu0 %v143
    %3000 = vmatprep.subr.mxu0 %v136
    %3001 = vmatpush1.msra.mxu0 %v135
    %3002 = vmatprep.subr.mxu0 %v128
    %3003 = vmatpush1.msra.mxu0 %v127
    %3004 = vmatprep.subr.mxu0 %v120
    %3005 = vmatpush1.msra.mxu0 %v119
    %3006 = vmatprep.subr.mxu0 %v112
    %3007 = vmatpush1.msra.mxu0 %v111
    %3008 = vmatprep.subr.mxu0 %v360
    %3009 = vmatpush2.msra.mxu0 %v359
    %3010 = vmatprep.subr.mxu0 %v352
    %3011 = vmatpush2.msra.mxu0 %v351
    %3012 = vmatprep.subr.mxu0 %v344
    %3013 = vmatpush2.msra.mxu0 %v343
    %3014 = vmatprep.subr.mxu0 %v336
    %3015 = vmatpush2.msra.mxu0 %v335
    %3016 = vmatprep.subr.mxu0 %v328
    %3017 = vmatpush2.msra.mxu0 %v327
    %3018 = vmatprep.subr.mxu0 %v320
    %3019 = vmatpush2.msra.mxu0 %v319
    %3020 = vmatprep.subr.mxu0 %v312
    %3021 = vmatpush2.msra.mxu0 %v311
    %3022 = vmatprep.subr.mxu0 %v304
    %3023 = vmatpush2.msra.mxu0 %v303
    %3024 = vmatprep.subr.mxu0 %v296
    %3025 = vmatpush2.msra.mxu0 %v295
    %3026 = vmatprep.subr.mxu0 %v288
    %3027 = vmatpush2.msra.mxu0 %v287
    %3028 = vmatprep.subr.mxu0 %v280
    %3029 = vmatpush2.msra.mxu0 %v279
    %3030 = vmatprep.subr.mxu0 %v272
    %3031 = vmatpush2.msra.mxu0 %v271
    %3032 = vmatprep.subr.mxu0 %v264
    %3033 = vmatpush2.msra.mxu0 %v263
    %3034 = vmatprep.subr.mxu0 %v256
    %3035 = vmatpush2.msra.mxu0 %v255
    %3036 = vmatprep.subr.mxu0 %v248
    %3037 = vmatpush2.msra.mxu0 %v247
    %3038 = vmatprep.subr.mxu0 %v240
    %3039 = vmatpush2.msra.mxu0 %v239
    %3040 = vmatprep.mubr.f32.mxu0 %v2821
    %3041 = vmatmul.mubr.f32.gmra.mxu0 %v2820
    %v3042 = vpop.f32.mrf.mxu0
    %v3043 = vadd.f32 0.0, %v3042
    %v3044 = vpop.f32.mrf.mxu0
    %v3045 = vadd.f32 0.0, %v3044
    %3046 = vdwg.mxu0
    %3047 = vmatprep.subr.mxu0 %v234
    %3048 = vmatpush1.msra.mxu0 %v233
    %3049 = vmatprep.subr.mxu0 %v226
    %3050 = vmatpush1.msra.mxu0 %v225
    %3051 = vmatprep.subr.mxu0 %v218
    %3052 = vmatpush1.msra.mxu0 %v217
    %3053 = vmatprep.subr.mxu0 %v210
    %3054 = vmatpush1.msra.mxu0 %v209
    %3055 = vmatprep.subr.mxu0 %v202
    %3056 = vmatpush1.msra.mxu0 %v201
    %3057 = vmatprep.subr.mxu0 %v194
    %3058 = vmatpush1.msra.mxu0 %v193
    %3059 = vmatprep.subr.mxu0 %v186
    %3060 = vmatpush1.msra.mxu0 %v185
    %3061 = vmatprep.subr.mxu0 %v178
    %3062 = vmatpush1.msra.mxu0 %v177
    %3063 = vmatprep.subr.mxu0 %v170
    %3064 = vmatpush1.msra.mxu0 %v169
    %3065 = vmatprep.subr.mxu0 %v162
    %3066 = vmatpush1.msra.mxu0 %v161
    %3067 = vmatprep.subr.mxu0 %v154
    %3068 = vmatpush1.msra.mxu0 %v153
    %3069 = vmatprep.subr.mxu0 %v146
    %3070 = vmatpush1.msra.mxu0 %v145
    %3071 = vmatprep.subr.mxu0 %v138
    %3072 = vmatpush1.msra.mxu0 %v137
    %3073 = vmatprep.subr.mxu0 %v130
    %3074 = vmatpush1.msra.mxu0 %v129
    %3075 = vmatprep.subr.mxu0 %v122
    %3076 = vmatpush1.msra.mxu0 %v121
    %3077 = vmatprep.subr.mxu0 %v114
    %3078 = vmatpush1.msra.mxu0 %v113
    %3079 = vmatprep.subr.mxu0 %v362
    %3080 = vmatpush2.msra.mxu0 %v361
    %3081 = vmatprep.subr.mxu0 %v354
    %3082 = vmatpush2.msra.mxu0 %v353
    %3083 = vmatprep.subr.mxu0 %v346
    %3084 = vmatpush2.msra.mxu0 %v345
    %3085 = vmatprep.subr.mxu0 %v338
    %3086 = vmatpush2.msra.mxu0 %v337
    %3087 = vmatprep.subr.mxu0 %v330
    %3088 = vmatpush2.msra.mxu0 %v329
    %3089 = vmatprep.subr.mxu0 %v322
    %3090 = vmatpush2.msra.mxu0 %v321
    %3091 = vmatprep.subr.mxu0 %v314
    %3092 = vmatpush2.msra.mxu0 %v313
    %3093 = vmatprep.subr.mxu0 %v306
    %3094 = vmatpush2.msra.mxu0 %v305
    %3095 = vmatprep.subr.mxu0 %v298
    %3096 = vmatpush2.msra.mxu0 %v297
    %3097 = vmatprep.subr.mxu0 %v290
    %3098 = vmatpush2.msra.mxu0 %v289
    %3099 = vmatprep.subr.mxu0 %v282
    %3100 = vmatpush2.msra.mxu0 %v281
    %3101 = vmatprep.subr.mxu0 %v274
    %3102 = vmatpush2.msra.mxu0 %v273
    %3103 = vmatprep.subr.mxu0 %v266
    %3104 = vmatpush2.msra.mxu0 %v265
    %3105 = vmatprep.subr.mxu0 %v258
    %3106 = vmatpush2.msra.mxu0 %v257
    %3107 = vmatprep.subr.mxu0 %v250
    %3108 = vmatpush2.msra.mxu0 %v249
    %3109 = vmatprep.subr.mxu0 %v242
    %3110 = vmatpush2.msra.mxu0 %v241
    %3111 = vmatprep.mubr.f32.mxu0 %v2821
    %3112 = vmatmul.mubr.f32.gmra.mxu0 %v2820
    %v3113 = vpop.f32.mrf.mxu0
    %v3114 = vadd.f32 0.0, %v3113
    %v3115 = vpop.f32.mrf.mxu0
    %v3116 = vadd.f32 0.0, %v3115
    %3117 = vdwg.mxu0
    %v3118 = vadd.f32 %v2826, %v2901
    %v3119 = vadd.f32 %v2827, %v2903
    %v3120 = vadd.f32 %v2828, %v2972
    %v3121 = vadd.f32 %v2829, %v2974
    %v3122 = vadd.f32 %v2830, %v3043
    %v3123 = vadd.f32 %v2831, %v3045
    %v3124 = vadd.f32 %v2832, %v3114
    %v3125 = vadd.f32 %v2833, %v3116
    %v3126 = vxor.u32 %v3118, 2147483648
    %v3127 = vxor.u32 %v3119, 2147483648
    %v3128 = vmul.f32 %v3126, 1.442695
    %v3129 = vpow.pop %v3128
    %v3130 = vmul.f32 %v3127, 1.442695
    %v3131 = vpow.pop %v3130
    %v3132 = vadd.f32 %v3129, 1.0
    %v3133 = vadd.f32 %v3131, 1.0
    %v3134 = vrcp.pop %v3132
    %v3135 = vmul.f32 1.0, %v3134
    %v3136 = vrcp.pop %v3133
    %v3137 = vmul.f32 1.0, %v3136
    %v3138 = vxor.u32 %v3120, 2147483648
    %v3139 = vxor.u32 %v3121, 2147483648
    %v3140 = vmul.f32 %v3138, 1.442695
    %v3141 = vpow.pop %v3140
    %v3142 = vmul.f32 %v3139, 1.442695
    %v3143 = vpow.pop %v3142
    %v3144 = vadd.f32 %v3141, 1.0
    %v3145 = vadd.f32 %v3143, 1.0
    %v3146 = vrcp.pop %v3144
    %v3147 = vmul.f32 1.0, %v3146
    %v3148 = vrcp.pop %v3145
    %v3149 = vmul.f32 1.0, %v3148
    %v3150 = vtanh.pop %v3122
    %v3151 = vtanh.pop %v3123
    %v3152 = vxor.u32 %v3124, 2147483648
    %v3153 = vxor.u32 %v3125, 2147483648
    %v3154 = vmul.f32 %v3152, 1.442695
    %v3155 = vpow.pop %v3154
    %v3156 = vmul.f32 %v3153, 1.442695
    %v3157 = vpow.pop %v3156
    %v3158 = vadd.f32 %v3155, 1.0
    %v3159 = vadd.f32 %v3157, 1.0
    %v3160 = vrcp.pop %v3158
    %v3161 = vmul.f32 1.0, %v3160
    %v3162 = vrcp.pop %v3159
    %v3163 = vmul.f32 1.0, %v3162
    %v3164 = vmul.f32 %v3147, %v2816
    %v3165 = vmul.f32 %v3149, %v2817
    %v3166 = vmul.f32 %v3135, %v3150
    %v3167 = vmul.f32 %v3137, %v3151
    %v3168 = vadd.f32 %v3164, %v3166
    %v3169 = vadd.f32 %v3165, %v3167
    %v3170 = vtanh.pop %v3168
    %v3171 = vtanh.pop %v3169
    %v3172 = vmul.f32 %v3161, %v3170
    %v3173 = vmul.f32 %v3163, %v3171
    %s3174 = scalar_lea.vmem [#allocation2], 112
    %3175 = vst [vmem:[%s3174] sm:$0xff] %v3172
    %3176 = vst [vmem:[%s3174 + $0x8] sm:$0xff] %v3173
    %v3177 = vld [vmem:[#allocation2] sm:$0xff]
    %v3178 = vld [vmem:[#allocation2 + $0x8] sm:$0xff]
    %v3179 = vld [vmem:[#allocation2 + $0x10] sm:$0xff]
    %v3180 = vld [vmem:[#allocation2 + $0x18] sm:$0xff]
    %v3181 = vld [vmem:[#allocation2 + $0x20] sm:$0xff]
    %v3182 = vld [vmem:[#allocation2 + $0x28] sm:$0xff]
    %v3183 = vld [vmem:[#allocation2 + $0x30] sm:$0xff]
    %v3184 = vld [vmem:[#allocation2 + $0x38] sm:$0xff]
    %v3185 = vld [vmem:[#allocation2 + $0x40] sm:$0xff]
    %v3186 = vld [vmem:[#allocation2 + $0x48] sm:$0xff]
    %v3187 = vld [vmem:[#allocation2 + $0x50] sm:$0xff]
    %v3188 = vld [vmem:[#allocation2 + $0x58] sm:$0xff]
    %v3189 = vld [vmem:[#allocation2 + $0x60] sm:$0xff]
    %v3190 = vld [vmem:[#allocation2 + $0x68] sm:$0xff]
    %v3191 = vld [vmem:[#allocation2 + $0x70] sm:$0xff]
    %v3192 = vld [vmem:[#allocation2 + $0x78] sm:$0xff]
    %v3193 = vld [vmem:[#allocation9] sm:$0xff]
    %v3194 = vld [vmem:[#allocation9 + $0x8] sm:$0xff]
    %v3195 = vld [vmem:[#allocation9 + $0x10] sm:$0xff]
    %v3196 = vld [vmem:[#allocation9 + $0x18] sm:$0xff]
    %v3197 = vld [vmem:[#allocation9 + $0x20] sm:$0xff]
    %v3198 = vld [vmem:[#allocation9 + $0x28] sm:$0xff]
    %v3199 = vld [vmem:[#allocation9 + $0x30] sm:$0xff]
    %v3200 = vld [vmem:[#allocation9 + $0x38] sm:$0xff]
    %v3201 = vld [vmem:[#allocation9 + $0x40] sm:$0xff]
    %v3202 = vld [vmem:[#allocation9 + $0x48] sm:$0xff]
    %v3203 = vld [vmem:[#allocation9 + $0x50] sm:$0xff]
    %v3204 = vld [vmem:[#allocation9 + $0x58] sm:$0xff]
    %v3205 = vld [vmem:[#allocation9 + $0x60] sm:$0xff]
    %v3206 = vld [vmem:[#allocation9 + $0x68] sm:$0xff]
    %v3207 = vld [vmem:[#allocation9 + $0x70] sm:$0xff]
    %v3208 = vld [vmem:[#allocation9 + $0x78] sm:$0xff]
    %v3209 = vld [vmem:[#allocation9 + $0x80] sm:$0xff]
    %v3210 = vld [vmem:[#allocation9 + $0x88] sm:$0xff]
    %v3211 = vld [vmem:[#allocation9 + $0x90] sm:$0xff]
    %v3212 = vld [vmem:[#allocation9 + $0x98] sm:$0xff]
    %v3213 = vld [vmem:[#allocation9 + $0xa0] sm:$0xff]
    %v3214 = vld [vmem:[#allocation9 + $0xa8] sm:$0xff]
    %v3215 = vld [vmem:[#allocation9 + $0xb0] sm:$0xff]
    %v3216 = vld [vmem:[#allocation9 + $0xb8] sm:$0xff]
    %v3217 = vld [vmem:[#allocation9 + $0xc0] sm:$0xff]
    %v3218 = vld [vmem:[#allocation9 + $0xc8] sm:$0xff]
    %v3219 = vld [vmem:[#allocation9 + $0xd0] sm:$0xff]
    %v3220 = vld [vmem:[#allocation9 + $0xd8] sm:$0xff]
    %v3221 = vld [vmem:[#allocation9 + $0xe0] sm:$0xff]
    %v3222 = vld [vmem:[#allocation9 + $0xe8] sm:$0xff]
    %v3223 = vld [vmem:[#allocation9 + $0xf0] sm:$0xff]
    %v3224 = vld [vmem:[#allocation9 + $0xf8] sm:$0xff]
    %v3225 = vld [vmem:[#allocation9 + $0x100] sm:$0xff]
    %v3226 = vld [vmem:[#allocation9 + $0x108] sm:$0xff]
    %v3227 = vld [vmem:[#allocation9 + $0x110] sm:$0xff]
    %v3228 = vld [vmem:[#allocation9 + $0x118] sm:$0xff]
    %v3229 = vld [vmem:[#allocation9 + $0x120] sm:$0xff]
    %v3230 = vld [vmem:[#allocation9 + $0x128] sm:$0xff]
    %v3231 = vld [vmem:[#allocation9 + $0x130] sm:$0xff]
    %v3232 = vld [vmem:[#allocation9 + $0x138] sm:$0xff]
    %v3233 = vld [vmem:[#allocation9 + $0x140] sm:$0xff]
    %v3234 = vld [vmem:[#allocation9 + $0x148] sm:$0xff]
    %v3235 = vld [vmem:[#allocation9 + $0x150] sm:$0xff]
    %v3236 = vld [vmem:[#allocation9 + $0x158] sm:$0xff]
    %v3237 = vld [vmem:[#allocation9 + $0x160] sm:$0xff]
    %v3238 = vld [vmem:[#allocation9 + $0x168] sm:$0xff]
    %v3239 = vld [vmem:[#allocation9 + $0x170] sm:$0xff]
    %v3240 = vld [vmem:[#allocation9 + $0x178] sm:$0xff]
    %v3241 = vld [vmem:[#allocation9 + $0x180] sm:$0xff]
    %v3242 = vld [vmem:[#allocation9 + $0x188] sm:$0xff]
    %v3243 = vld [vmem:[#allocation9 + $0x190] sm:$0xff]
    %v3244 = vld [vmem:[#allocation9 + $0x198] sm:$0xff]
    %v3245 = vld [vmem:[#allocation9 + $0x1a0] sm:$0xff]
    %v3246 = vld [vmem:[#allocation9 + $0x1a8] sm:$0xff]
    %v3247 = vld [vmem:[#allocation9 + $0x1b0] sm:$0xff]
    %v3248 = vld [vmem:[#allocation9 + $0x1b8] sm:$0xff]
    %v3249 = vld [vmem:[#allocation9 + $0x1c0] sm:$0xff]
    %v3250 = vld [vmem:[#allocation9 + $0x1c8] sm:$0xff]
    %v3251 = vld [vmem:[#allocation9 + $0x1d0] sm:$0xff]
    %v3252 = vld [vmem:[#allocation9 + $0x1d8] sm:$0xff]
    %v3253 = vld [vmem:[#allocation9 + $0x1e0] sm:$0xff]
    %v3254 = vld [vmem:[#allocation9 + $0x1e8] sm:$0xff]
    %v3255 = vld [vmem:[#allocation9 + $0x1f0] sm:$0xff]
    %v3256 = vld [vmem:[#allocation9 + $0x1f8] sm:$0xff]
    %v3257 = vld [vmem:[#allocation9 + $0x200] sm:$0xff]
    %v3258 = vld [vmem:[#allocation9 + $0x208] sm:$0xff]
    %v3259 = vld [vmem:[#allocation9 + $0x210] sm:$0xff]
    %v3260 = vld [vmem:[#allocation9 + $0x218] sm:$0xff]
    %v3261 = vld [vmem:[#allocation9 + $0x220] sm:$0xff]
    %v3262 = vld [vmem:[#allocation9 + $0x228] sm:$0xff]
    %v3263 = vld [vmem:[#allocation9 + $0x230] sm:$0xff]
    %v3264 = vld [vmem:[#allocation9 + $0x238] sm:$0xff]
    %v3265 = vld [vmem:[#allocation9 + $0x240] sm:$0xff]
    %v3266 = vld [vmem:[#allocation9 + $0x248] sm:$0xff]
    %v3267 = vld [vmem:[#allocation9 + $0x250] sm:$0xff]
    %v3268 = vld [vmem:[#allocation9 + $0x258] sm:$0xff]
    %v3269 = vld [vmem:[#allocation9 + $0x260] sm:$0xff]
    %v3270 = vld [vmem:[#allocation9 + $0x268] sm:$0xff]
    %v3271 = vld [vmem:[#allocation9 + $0x270] sm:$0xff]
    %v3272 = vld [vmem:[#allocation9 + $0x278] sm:$0xff]
    %v3273 = vld [vmem:[#allocation9 + $0x280] sm:$0xff]
    %v3274 = vld [vmem:[#allocation9 + $0x288] sm:$0xff]
    %v3275 = vld [vmem:[#allocation9 + $0x290] sm:$0xff]
    %v3276 = vld [vmem:[#allocation9 + $0x298] sm:$0xff]
    %v3277 = vld [vmem:[#allocation9 + $0x2a0] sm:$0xff]
    %v3278 = vld [vmem:[#allocation9 + $0x2a8] sm:$0xff]
    %v3279 = vld [vmem:[#allocation9 + $0x2b0] sm:$0xff]
    %v3280 = vld [vmem:[#allocation9 + $0x2b8] sm:$0xff]
    %v3281 = vld [vmem:[#allocation9 + $0x2c0] sm:$0xff]
    %v3282 = vld [vmem:[#allocation9 + $0x2c8] sm:$0xff]
    %v3283 = vld [vmem:[#allocation9 + $0x2d0] sm:$0xff]
    %v3284 = vld [vmem:[#allocation9 + $0x2d8] sm:$0xff]
    %v3285 = vld [vmem:[#allocation9 + $0x2e0] sm:$0xff]
    %v3286 = vld [vmem:[#allocation9 + $0x2e8] sm:$0xff]
    %v3287 = vld [vmem:[#allocation9 + $0x2f0] sm:$0xff]
    %v3288 = vld [vmem:[#allocation9 + $0x2f8] sm:$0xff]
    %v3289 = vld [vmem:[#allocation9 + $0x300] sm:$0xff]
    %v3290 = vld [vmem:[#allocation9 + $0x308] sm:$0xff]
    %v3291 = vld [vmem:[#allocation9 + $0x310] sm:$0xff]
    %v3292 = vld [vmem:[#allocation9 + $0x318] sm:$0xff]
    %v3293 = vld [vmem:[#allocation9 + $0x320] sm:$0xff]
    %v3294 = vld [vmem:[#allocation9 + $0x328] sm:$0xff]
    %v3295 = vld [vmem:[#allocation9 + $0x330] sm:$0xff]
    %v3296 = vld [vmem:[#allocation9 + $0x338] sm:$0xff]
    %v3297 = vld [vmem:[#allocation9 + $0x340] sm:$0xff]
    %v3298 = vld [vmem:[#allocation9 + $0x348] sm:$0xff]
    %v3299 = vld [vmem:[#allocation9 + $0x350] sm:$0xff]
    %v3300 = vld [vmem:[#allocation9 + $0x358] sm:$0xff]
    %v3301 = vld [vmem:[#allocation9 + $0x360] sm:$0xff]
    %v3302 = vld [vmem:[#allocation9 + $0x368] sm:$0xff]
    %v3303 = vld [vmem:[#allocation9 + $0x370] sm:$0xff]
    %v3304 = vld [vmem:[#allocation9 + $0x378] sm:$0xff]
    %v3305 = vld [vmem:[#allocation9 + $0x380] sm:$0xff]
    %v3306 = vld [vmem:[#allocation9 + $0x388] sm:$0xff]
    %v3307 = vld [vmem:[#allocation9 + $0x390] sm:$0xff]
    %v3308 = vld [vmem:[#allocation9 + $0x398] sm:$0xff]
    %v3309 = vld [vmem:[#allocation9 + $0x3a0] sm:$0xff]
    %v3310 = vld [vmem:[#allocation9 + $0x3a8] sm:$0xff]
    %v3311 = vld [vmem:[#allocation9 + $0x3b0] sm:$0xff]
    %v3312 = vld [vmem:[#allocation9 + $0x3b8] sm:$0xff]
    %v3313 = vld [vmem:[#allocation9 + $0x3c0] sm:$0xff]
    %v3314 = vld [vmem:[#allocation9 + $0x3c8] sm:$0xff]
    %v3315 = vld [vmem:[#allocation9 + $0x3d0] sm:$0xff]
    %v3316 = vld [vmem:[#allocation9 + $0x3d8] sm:$0xff]
    %v3317 = vld [vmem:[#allocation9 + $0x3e0] sm:$0xff]
    %v3318 = vld [vmem:[#allocation9 + $0x3e8] sm:$0xff]
    %v3319 = vld [vmem:[#allocation9 + $0x3f0] sm:$0xff]
    %v3320 = vld [vmem:[#allocation9 + $0x3f8] sm:$0xff]
    %v3321 = vld [vmem:[#allocation9 + $0x400] sm:$0xff]
    %v3322 = vld [vmem:[#allocation9 + $0x408] sm:$0xff]
    %v3323 = vld [vmem:[#allocation9 + $0x410] sm:$0xff]
    %v3324 = vld [vmem:[#allocation9 + $0x418] sm:$0xff]
    %v3325 = vld [vmem:[#allocation9 + $0x420] sm:$0xff]
    %v3326 = vld [vmem:[#allocation9 + $0x428] sm:$0xff]
    %v3327 = vld [vmem:[#allocation9 + $0x430] sm:$0xff]
    %v3328 = vld [vmem:[#allocation9 + $0x438] sm:$0xff]
    %v3329 = vld [vmem:[#allocation9 + $0x440] sm:$0xff]
    %v3330 = vld [vmem:[#allocation9 + $0x448] sm:$0xff]
    %v3331 = vld [vmem:[#allocation9 + $0x450] sm:$0xff]
    %v3332 = vld [vmem:[#allocation9 + $0x458] sm:$0xff]
    %v3333 = vld [vmem:[#allocation9 + $0x460] sm:$0xff]
    %v3334 = vld [vmem:[#allocation9 + $0x468] sm:$0xff]
    %v3335 = vld [vmem:[#allocation9 + $0x470] sm:$0xff]
    %v3336 = vld [vmem:[#allocation9 + $0x478] sm:$0xff]
    %v3337 = vld [vmem:[#allocation9 + $0x480] sm:$0xff]
    %v3338 = vld [vmem:[#allocation9 + $0x488] sm:$0xff]
    %v3339 = vld [vmem:[#allocation9 + $0x490] sm:$0xff]
    %v3340 = vld [vmem:[#allocation9 + $0x498] sm:$0xff]
    %v3341 = vld [vmem:[#allocation9 + $0x4a0] sm:$0xff]
    %v3342 = vld [vmem:[#allocation9 + $0x4a8] sm:$0xff]
    %v3343 = vld [vmem:[#allocation9 + $0x4b0] sm:$0xff]
    %v3344 = vld [vmem:[#allocation9 + $0x4b8] sm:$0xff]
    %v3345 = vld [vmem:[#allocation9 + $0x4c0] sm:$0xff]
    %v3346 = vld [vmem:[#allocation9 + $0x4c8] sm:$0xff]
    %v3347 = vld [vmem:[#allocation9 + $0x4d0] sm:$0xff]
    %v3348 = vld [vmem:[#allocation9 + $0x4d8] sm:$0xff]
    %v3349 = vld [vmem:[#allocation9 + $0x4e0] sm:$0xff]
    %v3350 = vld [vmem:[#allocation9 + $0x4e8] sm:$0xff]
    %v3351 = vld [vmem:[#allocation9 + $0x4f0] sm:$0xff]
    %v3352 = vld [vmem:[#allocation9 + $0x4f8] sm:$0xff]
    %v3353 = vld [vmem:[#allocation9 + $0x500] sm:$0xff]
    %v3354 = vld [vmem:[#allocation9 + $0x508] sm:$0xff]
    %v3355 = vld [vmem:[#allocation9 + $0x510] sm:$0xff]
    %v3356 = vld [vmem:[#allocation9 + $0x518] sm:$0xff]
    %v3357 = vld [vmem:[#allocation9 + $0x520] sm:$0xff]
    %v3358 = vld [vmem:[#allocation9 + $0x528] sm:$0xff]
    %v3359 = vld [vmem:[#allocation9 + $0x530] sm:$0xff]
    %v3360 = vld [vmem:[#allocation9 + $0x538] sm:$0xff]
    %v3361 = vld [vmem:[#allocation9 + $0x540] sm:$0xff]
    %v3362 = vld [vmem:[#allocation9 + $0x548] sm:$0xff]
    %v3363 = vld [vmem:[#allocation9 + $0x550] sm:$0xff]
    %v3364 = vld [vmem:[#allocation9 + $0x558] sm:$0xff]
    %v3365 = vld [vmem:[#allocation9 + $0x560] sm:$0xff]
    %v3366 = vld [vmem:[#allocation9 + $0x568] sm:$0xff]
    %v3367 = vld [vmem:[#allocation9 + $0x570] sm:$0xff]
    %v3368 = vld [vmem:[#allocation9 + $0x578] sm:$0xff]
    %v3369 = vld [vmem:[#allocation9 + $0x580] sm:$0xff]
    %v3370 = vld [vmem:[#allocation9 + $0x588] sm:$0xff]
    %v3371 = vld [vmem:[#allocation9 + $0x590] sm:$0xff]
    %v3372 = vld [vmem:[#allocation9 + $0x598] sm:$0xff]
    %v3373 = vld [vmem:[#allocation9 + $0x5a0] sm:$0xff]
    %v3374 = vld [vmem:[#allocation9 + $0x5a8] sm:$0xff]
    %v3375 = vld [vmem:[#allocation9 + $0x5b0] sm:$0xff]
    %v3376 = vld [vmem:[#allocation9 + $0x5b8] sm:$0xff]
    %v3377 = vld [vmem:[#allocation9 + $0x5c0] sm:$0xff]
    %v3378 = vld [vmem:[#allocation9 + $0x5c8] sm:$0xff]
    %v3379 = vld [vmem:[#allocation9 + $0x5d0] sm:$0xff]
    %v3380 = vld [vmem:[#allocation9 + $0x5d8] sm:$0xff]
    %v3381 = vld [vmem:[#allocation9 + $0x5e0] sm:$0xff]
    %v3382 = vld [vmem:[#allocation9 + $0x5e8] sm:$0xff]
    %v3383 = vld [vmem:[#allocation9 + $0x5f0] sm:$0xff]
    %v3384 = vld [vmem:[#allocation9 + $0x5f8] sm:$0xff]
    %v3385 = vld [vmem:[#allocation9 + $0x600] sm:$0xff]
    %v3386 = vld [vmem:[#allocation9 + $0x608] sm:$0xff]
    %v3387 = vld [vmem:[#allocation9 + $0x610] sm:$0xff]
    %v3388 = vld [vmem:[#allocation9 + $0x618] sm:$0xff]
    %v3389 = vld [vmem:[#allocation9 + $0x620] sm:$0xff]
    %v3390 = vld [vmem:[#allocation9 + $0x628] sm:$0xff]
    %v3391 = vld [vmem:[#allocation9 + $0x630] sm:$0xff]
    %v3392 = vld [vmem:[#allocation9 + $0x638] sm:$0xff]
    %v3393 = vld [vmem:[#allocation9 + $0x640] sm:$0xff]
    %v3394 = vld [vmem:[#allocation9 + $0x648] sm:$0xff]
    %v3395 = vld [vmem:[#allocation9 + $0x650] sm:$0xff]
    %v3396 = vld [vmem:[#allocation9 + $0x658] sm:$0xff]
    %v3397 = vld [vmem:[#allocation9 + $0x660] sm:$0xff]
    %v3398 = vld [vmem:[#allocation9 + $0x668] sm:$0xff]
    %v3399 = vld [vmem:[#allocation9 + $0x670] sm:$0xff]
    %v3400 = vld [vmem:[#allocation9 + $0x678] sm:$0xff]
    %v3401 = vld [vmem:[#allocation9 + $0x680] sm:$0xff]
    %v3402 = vld [vmem:[#allocation9 + $0x688] sm:$0xff]
    %v3403 = vld [vmem:[#allocation9 + $0x690] sm:$0xff]
    %v3404 = vld [vmem:[#allocation9 + $0x698] sm:$0xff]
    %v3405 = vld [vmem:[#allocation9 + $0x6a0] sm:$0xff]
    %v3406 = vld [vmem:[#allocation9 + $0x6a8] sm:$0xff]
    %v3407 = vld [vmem:[#allocation9 + $0x6b0] sm:$0xff]
    %v3408 = vld [vmem:[#allocation9 + $0x6b8] sm:$0xff]
    %v3409 = vld [vmem:[#allocation9 + $0x6c0] sm:$0xff]
    %v3410 = vld [vmem:[#allocation9 + $0x6c8] sm:$0xff]
    %v3411 = vld [vmem:[#allocation9 + $0x6d0] sm:$0xff]
    %v3412 = vld [vmem:[#allocation9 + $0x6d8] sm:$0xff]
    %v3413 = vld [vmem:[#allocation9 + $0x6e0] sm:$0xff]
    %v3414 = vld [vmem:[#allocation9 + $0x6e8] sm:$0xff]
    %v3415 = vld [vmem:[#allocation9 + $0x6f0] sm:$0xff]
    %v3416 = vld [vmem:[#allocation9 + $0x6f8] sm:$0xff]
    %v3417 = vld [vmem:[#allocation9 + $0x700] sm:$0xff]
    %v3418 = vld [vmem:[#allocation9 + $0x708] sm:$0xff]
    %v3419 = vld [vmem:[#allocation9 + $0x710] sm:$0xff]
    %v3420 = vld [vmem:[#allocation9 + $0x718] sm:$0xff]
    %v3421 = vld [vmem:[#allocation9 + $0x720] sm:$0xff]
    %v3422 = vld [vmem:[#allocation9 + $0x728] sm:$0xff]
    %v3423 = vld [vmem:[#allocation9 + $0x730] sm:$0xff]
    %v3424 = vld [vmem:[#allocation9 + $0x738] sm:$0xff]
    %v3425 = vld [vmem:[#allocation9 + $0x740] sm:$0xff]
    %v3426 = vld [vmem:[#allocation9 + $0x748] sm:$0xff]
    %v3427 = vld [vmem:[#allocation9 + $0x750] sm:$0xff]
    %v3428 = vld [vmem:[#allocation9 + $0x758] sm:$0xff]
    %v3429 = vld [vmem:[#allocation9 + $0x760] sm:$0xff]
    %v3430 = vld [vmem:[#allocation9 + $0x768] sm:$0xff]
    %v3431 = vld [vmem:[#allocation9 + $0x770] sm:$0xff]
    %v3432 = vld [vmem:[#allocation9 + $0x778] sm:$0xff]
    %v3433 = vld [vmem:[#allocation9 + $0x780] sm:$0xff]
    %v3434 = vld [vmem:[#allocation9 + $0x788] sm:$0xff]
    %v3435 = vld [vmem:[#allocation9 + $0x790] sm:$0xff]
    %v3436 = vld [vmem:[#allocation9 + $0x798] sm:$0xff]
    %v3437 = vld [vmem:[#allocation9 + $0x7a0] sm:$0xff]
    %v3438 = vld [vmem:[#allocation9 + $0x7a8] sm:$0xff]
    %v3439 = vld [vmem:[#allocation9 + $0x7b0] sm:$0xff]
    %v3440 = vld [vmem:[#allocation9 + $0x7b8] sm:$0xff]
    %v3441 = vld [vmem:[#allocation9 + $0x7c0] sm:$0xff]
    %v3442 = vld [vmem:[#allocation9 + $0x7c8] sm:$0xff]
    %v3443 = vld [vmem:[#allocation9 + $0x7d0] sm:$0xff]
    %v3444 = vld [vmem:[#allocation9 + $0x7d8] sm:$0xff]
    %v3445 = vld [vmem:[#allocation9 + $0x7e0] sm:$0xff]
    %v3446 = vld [vmem:[#allocation9 + $0x7e8] sm:$0xff]
    %v3447 = vld [vmem:[#allocation9 + $0x7f0] sm:$0xff]
    %v3448 = vld [vmem:[#allocation9 + $0x7f8] sm:$0xff]
    %v3449 = vld [vmem:[#allocation12] sm:$0xff]
    %v3451 = vlaneseq
    %v3452 = vshrl.u32 %v3451, 7
    %v3453 = vsub.s32 0, %v3452
    %v3454 = vrot.slane %v3449, %v3453
    %v3455 = vlaneseq
    %v3456 = vshrl.u32 %v3455, 7
    %v3457 = vsub.s32 1, %v3456
    %v3458 = vrot.slane %v3449, %v3457
    %v3459 = vlaneseq
    %v3460 = vshrl.u32 %v3459, 7
    %v3461 = vsub.s32 2, %v3460
    %v3462 = vrot.slane %v3449, %v3461
    %v3463 = vlaneseq
    %v3464 = vshrl.u32 %v3463, 7
    %v3465 = vsub.s32 3, %v3464
    %v3466 = vrot.slane %v3449, %v3465
    %v3467 = vlaneseq
    %v3468 = vshrl.u32 %v3467, 7
    %v3469 = vsub.s32 4, %v3468
    %v3470 = vrot.slane %v3449, %v3469
    %v3471 = vlaneseq
    %v3472 = vshrl.u32 %v3471, 7
    %v3473 = vsub.s32 5, %v3472
    %v3474 = vrot.slane %v3449, %v3473
    %v3475 = vlaneseq
    %v3476 = vshrl.u32 %v3475, 7
    %v3477 = vsub.s32 6, %v3476
    %v3478 = vrot.slane %v3449, %v3477
    %v3479 = vlaneseq
    %v3480 = vshrl.u32 %v3479, 7
    %v3481 = vsub.s32 7, %v3480
    %v3482 = vrot.slane %v3449, %v3481
    %3491 = vmatprep.subr.mxu0 %v3314
    %3492 = vmatpush1.msra.mxu0 %v3313
    %3493 = vmatprep.subr.mxu0 %v3306
    %3494 = vmatpush1.msra.mxu0 %v3305
    %3495 = vmatprep.subr.mxu0 %v3298
    %3496 = vmatpush1.msra.mxu0 %v3297
    %3497 = vmatprep.subr.mxu0 %v3290
    %3498 = vmatpush1.msra.mxu0 %v3289
    %3499 = vmatprep.subr.mxu0 %v3282
    %3500 = vmatpush1.msra.mxu0 %v3281
    %3501 = vmatprep.subr.mxu0 %v3274
    %3502 = vmatpush1.msra.mxu0 %v3273
    %3503 = vmatprep.subr.mxu0 %v3266
    %3504 = vmatpush1.msra.mxu0 %v3265
    %3505 = vmatprep.subr.mxu0 %v3258
    %3506 = vmatpush1.msra.mxu0 %v3257
    %3507 = vmatprep.subr.mxu0 %v3250
    %3508 = vmatpush1.msra.mxu0 %v3249
    %3509 = vmatprep.subr.mxu0 %v3242
    %3510 = vmatpush1.msra.mxu0 %v3241
    %3511 = vmatprep.subr.mxu0 %v3234
    %3512 = vmatpush1.msra.mxu0 %v3233
    %3513 = vmatprep.subr.mxu0 %v3226
    %3514 = vmatpush1.msra.mxu0 %v3225
    %3515 = vmatprep.subr.mxu0 %v3218
    %3516 = vmatpush1.msra.mxu0 %v3217
    %3517 = vmatprep.subr.mxu0 %v3210
    %3518 = vmatpush1.msra.mxu0 %v3209
    %3519 = vmatprep.subr.mxu0 %v3202
    %3520 = vmatpush1.msra.mxu0 %v3201
    %3521 = vmatprep.subr.mxu0 %v3194
    %3522 = vmatpush1.msra.mxu0 %v3193
    %3523 = vmatprep.subr.mxu0 %v3442
    %3524 = vmatpush2.msra.mxu0 %v3441
    %3525 = vmatprep.subr.mxu0 %v3434
    %3526 = vmatpush2.msra.mxu0 %v3433
    %3527 = vmatprep.subr.mxu0 %v3426
    %3528 = vmatpush2.msra.mxu0 %v3425
    %3529 = vmatprep.subr.mxu0 %v3418
    %3530 = vmatpush2.msra.mxu0 %v3417
    %3531 = vmatprep.subr.mxu0 %v3410
    %3532 = vmatpush2.msra.mxu0 %v3409
    %3533 = vmatprep.subr.mxu0 %v3402
    %3534 = vmatpush2.msra.mxu0 %v3401
    %3535 = vmatprep.subr.mxu0 %v3394
    %3536 = vmatpush2.msra.mxu0 %v3393
    %3537 = vmatprep.subr.mxu0 %v3386
    %3538 = vmatpush2.msra.mxu0 %v3385
    %3539 = vmatprep.subr.mxu0 %v3378
    %3540 = vmatpush2.msra.mxu0 %v3377
    %3541 = vmatprep.subr.mxu0 %v3370
    %3542 = vmatpush2.msra.mxu0 %v3369
    %3543 = vmatprep.subr.mxu0 %v3362
    %3544 = vmatpush2.msra.mxu0 %v3361
    %3545 = vmatprep.subr.mxu0 %v3354
    %3546 = vmatpush2.msra.mxu0 %v3353
    %3547 = vmatprep.subr.mxu0 %v3346
    %3548 = vmatpush2.msra.mxu0 %v3345
    %3549 = vmatprep.subr.mxu0 %v3338
    %3550 = vmatpush2.msra.mxu0 %v3337
    %3551 = vmatprep.subr.mxu0 %v3330
    %3552 = vmatpush2.msra.mxu0 %v3329
    %3553 = vmatprep.subr.mxu0 %v3322
    %3554 = vmatpush2.msra.mxu0 %v3321
    %3555 = vmatprep.mubr.f32.mxu0 %v3178
    %3556 = vmatmul.mubr.f32.gmra.mxu0 %v3177
    %v3557 = vpop.f32.mrf.mxu0
    %v3558 = vadd.f32 %v3454, %v3557
    %v3559 = vpop.f32.mrf.mxu0
    %v3560 = vadd.f32 %v3458, %v3559
    %3561 = vmatprep.mubr.f32.mxu0 %v3180
    %3562 = vmatmul.mubr.f32.gmra.mxu0 %v3179
    %v3563 = vpop.f32.mrf.mxu0
    %v3564 = vadd.f32 %v3454, %v3563
    %v3565 = vpop.f32.mrf.mxu0
    %v3566 = vadd.f32 %v3458, %v3565
    %3567 = vmatprep.mubr.f32.mxu0 %v3182
    %3568 = vmatmul.mubr.f32.gmra.mxu0 %v3181
    %v3569 = vpop.f32.mrf.mxu0
    %v3570 = vadd.f32 %v3454, %v3569
    %v3571 = vpop.f32.mrf.mxu0
    %v3572 = vadd.f32 %v3458, %v3571
    %3573 = vmatprep.mubr.f32.mxu0 %v3184
    %3574 = vmatmul.mubr.f32.gmra.mxu0 %v3183
    %v3575 = vpop.f32.mrf.mxu0
    %v3576 = vadd.f32 %v3454, %v3575
    %v3577 = vpop.f32.mrf.mxu0
    %v3578 = vadd.f32 %v3458, %v3577
    %3579 = vmatprep.mubr.f32.mxu0 %v3186
    %3580 = vmatmul.mubr.f32.gmra.mxu0 %v3185
    %v3581 = vpop.f32.mrf.mxu0
    %v3582 = vadd.f32 %v3454, %v3581
    %v3583 = vpop.f32.mrf.mxu0
    %v3584 = vadd.f32 %v3458, %v3583
    %3585 = vmatprep.mubr.f32.mxu0 %v3188
    %3586 = vmatmul.mubr.f32.gmra.mxu0 %v3187
    %v3587 = vpop.f32.mrf.mxu0
    %v3588 = vadd.f32 %v3454, %v3587
    %v3589 = vpop.f32.mrf.mxu0
    %v3590 = vadd.f32 %v3458, %v3589
    %3591 = vmatprep.mubr.f32.mxu0 %v3190
    %3592 = vmatmul.mubr.f32.gmra.mxu0 %v3189
    %v3593 = vpop.f32.mrf.mxu0
    %v3594 = vadd.f32 %v3454, %v3593
    %v3595 = vpop.f32.mrf.mxu0
    %v3596 = vadd.f32 %v3458, %v3595
    %3597 = vmatprep.mubr.f32.mxu0 %v3192
    %3598 = vmatmul.mubr.f32.gmra.mxu0 %v3191
    %v3599 = vpop.f32.mrf.mxu0
    %v3600 = vadd.f32 %v3454, %v3599
    %v3601 = vpop.f32.mrf.mxu0
    %v3602 = vadd.f32 %v3458, %v3601
    %3603 = vdwg.mxu0
    %3604 = vmatprep.subr.mxu0 %v3316
    %3605 = vmatpush1.msra.mxu0 %v3315
    %3606 = vmatprep.subr.mxu0 %v3308
    %3607 = vmatpush1.msra.mxu0 %v3307
    %3608 = vmatprep.subr.mxu0 %v3300
    %3609 = vmatpush1.msra.mxu0 %v3299
    %3610 = vmatprep.subr.mxu0 %v3292
    %3611 = vmatpush1.msra.mxu0 %v3291
    %3612 = vmatprep.subr.mxu0 %v3284
    %3613 = vmatpush1.msra.mxu0 %v3283
    %3614 = vmatprep.subr.mxu0 %v3276
    %3615 = vmatpush1.msra.mxu0 %v3275
    %3616 = vmatprep.subr.mxu0 %v3268
    %3617 = vmatpush1.msra.mxu0 %v3267
    %3618 = vmatprep.subr.mxu0 %v3260
    %3619 = vmatpush1.msra.mxu0 %v3259
    %3620 = vmatprep.subr.mxu0 %v3252
    %3621 = vmatpush1.msra.mxu0 %v3251
    %3622 = vmatprep.subr.mxu0 %v3244
    %3623 = vmatpush1.msra.mxu0 %v3243
    %3624 = vmatprep.subr.mxu0 %v3236
    %3625 = vmatpush1.msra.mxu0 %v3235
    %3626 = vmatprep.subr.mxu0 %v3228
    %3627 = vmatpush1.msra.mxu0 %v3227
    %3628 = vmatprep.subr.mxu0 %v3220
    %3629 = vmatpush1.msra.mxu0 %v3219
    %3630 = vmatprep.subr.mxu0 %v3212
    %3631 = vmatpush1.msra.mxu0 %v3211
    %3632 = vmatprep.subr.mxu0 %v3204
    %3633 = vmatpush1.msra.mxu0 %v3203
    %3634 = vmatprep.subr.mxu0 %v3196
    %3635 = vmatpush1.msra.mxu0 %v3195
    %3636 = vmatprep.subr.mxu0 %v3444
    %3637 = vmatpush2.msra.mxu0 %v3443
    %3638 = vmatprep.subr.mxu0 %v3436
    %3639 = vmatpush2.msra.mxu0 %v3435
    %3640 = vmatprep.subr.mxu0 %v3428
    %3641 = vmatpush2.msra.mxu0 %v3427
    %3642 = vmatprep.subr.mxu0 %v3420
    %3643 = vmatpush2.msra.mxu0 %v3419
    %3644 = vmatprep.subr.mxu0 %v3412
    %3645 = vmatpush2.msra.mxu0 %v3411
    %3646 = vmatprep.subr.mxu0 %v3404
    %3647 = vmatpush2.msra.mxu0 %v3403
    %3648 = vmatprep.subr.mxu0 %v3396
    %3649 = vmatpush2.msra.mxu0 %v3395
    %3650 = vmatprep.subr.mxu0 %v3388
    %3651 = vmatpush2.msra.mxu0 %v3387
    %3652 = vmatprep.subr.mxu0 %v3380
    %3653 = vmatpush2.msra.mxu0 %v3379
    %3654 = vmatprep.subr.mxu0 %v3372
    %3655 = vmatpush2.msra.mxu0 %v3371
    %3656 = vmatprep.subr.mxu0 %v3364
    %3657 = vmatpush2.msra.mxu0 %v3363
    %3658 = vmatprep.subr.mxu0 %v3356
    %3659 = vmatpush2.msra.mxu0 %v3355
    %3660 = vmatprep.subr.mxu0 %v3348
    %3661 = vmatpush2.msra.mxu0 %v3347
    %3662 = vmatprep.subr.mxu0 %v3340
    %3663 = vmatpush2.msra.mxu0 %v3339
    %3664 = vmatprep.subr.mxu0 %v3332
    %3665 = vmatpush2.msra.mxu0 %v3331
    %3666 = vmatprep.subr.mxu0 %v3324
    %3667 = vmatpush2.msra.mxu0 %v3323
    %3668 = vmatprep.mubr.f32.mxu0 %v3178
    %3669 = vmatmul.mubr.f32.gmra.mxu0 %v3177
    %v3670 = vpop.f32.mrf.mxu0
    %v3671 = vadd.f32 %v3462, %v3670
    %v3672 = vpop.f32.mrf.mxu0
    %v3673 = vadd.f32 %v3466, %v3672
    %3674 = vmatprep.mubr.f32.mxu0 %v3180
    %3675 = vmatmul.mubr.f32.gmra.mxu0 %v3179
    %v3676 = vpop.f32.mrf.mxu0
    %v3677 = vadd.f32 %v3462, %v3676
    %v3678 = vpop.f32.mrf.mxu0
    %v3679 = vadd.f32 %v3466, %v3678
    %3680 = vmatprep.mubr.f32.mxu0 %v3182
    %3681 = vmatmul.mubr.f32.gmra.mxu0 %v3181
    %v3682 = vpop.f32.mrf.mxu0
    %v3683 = vadd.f32 %v3462, %v3682
    %v3684 = vpop.f32.mrf.mxu0
    %v3685 = vadd.f32 %v3466, %v3684
    %3686 = vmatprep.mubr.f32.mxu0 %v3184
    %3687 = vmatmul.mubr.f32.gmra.mxu0 %v3183
    %v3688 = vpop.f32.mrf.mxu0
    %v3689 = vadd.f32 %v3462, %v3688
    %v3690 = vpop.f32.mrf.mxu0
    %v3691 = vadd.f32 %v3466, %v3690
    %3692 = vmatprep.mubr.f32.mxu0 %v3186
    %3693 = vmatmul.mubr.f32.gmra.mxu0 %v3185
    %v3694 = vpop.f32.mrf.mxu0
    %v3695 = vadd.f32 %v3462, %v3694
    %v3696 = vpop.f32.mrf.mxu0
    %v3697 = vadd.f32 %v3466, %v3696
    %3698 = vmatprep.mubr.f32.mxu0 %v3188
    %3699 = vmatmul.mubr.f32.gmra.mxu0 %v3187
    %v3700 = vpop.f32.mrf.mxu0
    %v3701 = vadd.f32 %v3462, %v3700
    %v3702 = vpop.f32.mrf.mxu0
    %v3703 = vadd.f32 %v3466, %v3702
    %3704 = vmatprep.mubr.f32.mxu0 %v3190
    %3705 = vmatmul.mubr.f32.gmra.mxu0 %v3189
    %v3706 = vpop.f32.mrf.mxu0
    %v3707 = vadd.f32 %v3462, %v3706
    %v3708 = vpop.f32.mrf.mxu0
    %v3709 = vadd.f32 %v3466, %v3708
    %3710 = vmatprep.mubr.f32.mxu0 %v3192
    %3711 = vmatmul.mubr.f32.gmra.mxu0 %v3191
    %v3712 = vpop.f32.mrf.mxu0
    %v3713 = vadd.f32 %v3462, %v3712
    %v3714 = vpop.f32.mrf.mxu0
    %v3715 = vadd.f32 %v3466, %v3714
    %3716 = vdwg.mxu0
    %3717 = vmatprep.subr.mxu0 %v3318
    %3718 = vmatpush1.msra.mxu0 %v3317
    %3719 = vmatprep.subr.mxu0 %v3310
    %3720 = vmatpush1.msra.mxu0 %v3309
    %3721 = vmatprep.subr.mxu0 %v3302
    %3722 = vmatpush1.msra.mxu0 %v3301
    %3723 = vmatprep.subr.mxu0 %v3294
    %3724 = vmatpush1.msra.mxu0 %v3293
    %3725 = vmatprep.subr.mxu0 %v3286
    %3726 = vmatpush1.msra.mxu0 %v3285
    %3727 = vmatprep.subr.mxu0 %v3278
    %3728 = vmatpush1.msra.mxu0 %v3277
    %3729 = vmatprep.subr.mxu0 %v3270
    %3730 = vmatpush1.msra.mxu0 %v3269
    %3731 = vmatprep.subr.mxu0 %v3262
    %3732 = vmatpush1.msra.mxu0 %v3261
    %3733 = vmatprep.subr.mxu0 %v3254
    %3734 = vmatpush1.msra.mxu0 %v3253
    %3735 = vmatprep.subr.mxu0 %v3246
    %3736 = vmatpush1.msra.mxu0 %v3245
    %3737 = vmatprep.subr.mxu0 %v3238
    %3738 = vmatpush1.msra.mxu0 %v3237
    %3739 = vmatprep.subr.mxu0 %v3230
    %3740 = vmatpush1.msra.mxu0 %v3229
    %3741 = vmatprep.subr.mxu0 %v3222
    %3742 = vmatpush1.msra.mxu0 %v3221
    %3743 = vmatprep.subr.mxu0 %v3214
    %3744 = vmatpush1.msra.mxu0 %v3213
    %3745 = vmatprep.subr.mxu0 %v3206
    %3746 = vmatpush1.msra.mxu0 %v3205
    %3747 = vmatprep.subr.mxu0 %v3198
    %3748 = vmatpush1.msra.mxu0 %v3197
    %3749 = vmatprep.subr.mxu0 %v3446
    %3750 = vmatpush2.msra.mxu0 %v3445
    %3751 = vmatprep.subr.mxu0 %v3438
    %3752 = vmatpush2.msra.mxu0 %v3437
    %3753 = vmatprep.subr.mxu0 %v3430
    %3754 = vmatpush2.msra.mxu0 %v3429
    %3755 = vmatprep.subr.mxu0 %v3422
    %3756 = vmatpush2.msra.mxu0 %v3421
    %3757 = vmatprep.subr.mxu0 %v3414
    %3758 = vmatpush2.msra.mxu0 %v3413
    %3759 = vmatprep.subr.mxu0 %v3406
    %3760 = vmatpush2.msra.mxu0 %v3405
    %3761 = vmatprep.subr.mxu0 %v3398
    %3762 = vmatpush2.msra.mxu0 %v3397
    %3763 = vmatprep.subr.mxu0 %v3390
    %3764 = vmatpush2.msra.mxu0 %v3389
    %3765 = vmatprep.subr.mxu0 %v3382
    %3766 = vmatpush2.msra.mxu0 %v3381
    %3767 = vmatprep.subr.mxu0 %v3374
    %3768 = vmatpush2.msra.mxu0 %v3373
    %3769 = vmatprep.subr.mxu0 %v3366
    %3770 = vmatpush2.msra.mxu0 %v3365
    %3771 = vmatprep.subr.mxu0 %v3358
    %3772 = vmatpush2.msra.mxu0 %v3357
    %3773 = vmatprep.subr.mxu0 %v3350
    %3774 = vmatpush2.msra.mxu0 %v3349
    %3775 = vmatprep.subr.mxu0 %v3342
    %3776 = vmatpush2.msra.mxu0 %v3341
    %3777 = vmatprep.subr.mxu0 %v3334
    %3778 = vmatpush2.msra.mxu0 %v3333
    %3779 = vmatprep.subr.mxu0 %v3326
    %3780 = vmatpush2.msra.mxu0 %v3325
    %3781 = vmatprep.mubr.f32.mxu0 %v3178
    %3782 = vmatmul.mubr.f32.gmra.mxu0 %v3177
    %v3783 = vpop.f32.mrf.mxu0
    %v3784 = vadd.f32 %v3470, %v3783
    %v3785 = vpop.f32.mrf.mxu0
    %v3786 = vadd.f32 %v3474, %v3785
    %3787 = vmatprep.mubr.f32.mxu0 %v3180
    %3788 = vmatmul.mubr.f32.gmra.mxu0 %v3179
    %v3789 = vpop.f32.mrf.mxu0
    %v3790 = vadd.f32 %v3470, %v3789
    %v3791 = vpop.f32.mrf.mxu0
    %v3792 = vadd.f32 %v3474, %v3791
    %3793 = vmatprep.mubr.f32.mxu0 %v3182
    %3794 = vmatmul.mubr.f32.gmra.mxu0 %v3181
    %v3795 = vpop.f32.mrf.mxu0
    %v3796 = vadd.f32 %v3470, %v3795
    %v3797 = vpop.f32.mrf.mxu0
    %v3798 = vadd.f32 %v3474, %v3797
    %3799 = vmatprep.mubr.f32.mxu0 %v3184
    %3800 = vmatmul.mubr.f32.gmra.mxu0 %v3183
    %v3801 = vpop.f32.mrf.mxu0
    %v3802 = vadd.f32 %v3470, %v3801
    %v3803 = vpop.f32.mrf.mxu0
    %v3804 = vadd.f32 %v3474, %v3803
    %3805 = vmatprep.mubr.f32.mxu0 %v3186
    %3806 = vmatmul.mubr.f32.gmra.mxu0 %v3185
    %v3807 = vpop.f32.mrf.mxu0
    %v3808 = vadd.f32 %v3470, %v3807
    %v3809 = vpop.f32.mrf.mxu0
    %v3810 = vadd.f32 %v3474, %v3809
    %3811 = vmatprep.mubr.f32.mxu0 %v3188
    %3812 = vmatmul.mubr.f32.gmra.mxu0 %v3187
    %v3813 = vpop.f32.mrf.mxu0
    %v3814 = vadd.f32 %v3470, %v3813
    %v3815 = vpop.f32.mrf.mxu0
    %v3816 = vadd.f32 %v3474, %v3815
    %3817 = vmatprep.mubr.f32.mxu0 %v3190
    %3818 = vmatmul.mubr.f32.gmra.mxu0 %v3189
    %v3819 = vpop.f32.mrf.mxu0
    %v3820 = vadd.f32 %v3470, %v3819
    %v3821 = vpop.f32.mrf.mxu0
    %v3822 = vadd.f32 %v3474, %v3821
    %3823 = vmatprep.mubr.f32.mxu0 %v3192
    %3824 = vmatmul.mubr.f32.gmra.mxu0 %v3191
    %v3825 = vpop.f32.mrf.mxu0
    %v3826 = vadd.f32 %v3470, %v3825
    %v3827 = vpop.f32.mrf.mxu0
    %v3828 = vadd.f32 %v3474, %v3827
    %3829 = vdwg.mxu0
    %3830 = vmatprep.subr.mxu0 %v3320
    %3831 = vmatpush1.msra.mxu0 %v3319
    %3832 = vmatprep.subr.mxu0 %v3312
    %3833 = vmatpush1.msra.mxu0 %v3311
    %3834 = vmatprep.subr.mxu0 %v3304
    %3835 = vmatpush1.msra.mxu0 %v3303
    %3836 = vmatprep.subr.mxu0 %v3296
    %3837 = vmatpush1.msra.mxu0 %v3295
    %3838 = vmatprep.subr.mxu0 %v3288
    %3839 = vmatpush1.msra.mxu0 %v3287
    %3840 = vmatprep.subr.mxu0 %v3280
    %3841 = vmatpush1.msra.mxu0 %v3279
    %3842 = vmatprep.subr.mxu0 %v3272
    %3843 = vmatpush1.msra.mxu0 %v3271
    %3844 = vmatprep.subr.mxu0 %v3264
    %3845 = vmatpush1.msra.mxu0 %v3263
    %3846 = vmatprep.subr.mxu0 %v3256
    %3847 = vmatpush1.msra.mxu0 %v3255
    %3848 = vmatprep.subr.mxu0 %v3248
    %3849 = vmatpush1.msra.mxu0 %v3247
    %3850 = vmatprep.subr.mxu0 %v3240
    %3851 = vmatpush1.msra.mxu0 %v3239
    %3852 = vmatprep.subr.mxu0 %v3232
    %3853 = vmatpush1.msra.mxu0 %v3231
    %3854 = vmatprep.subr.mxu0 %v3224
    %3855 = vmatpush1.msra.mxu0 %v3223
    %3856 = vmatprep.subr.mxu0 %v3216
    %3857 = vmatpush1.msra.mxu0 %v3215
    %3858 = vmatprep.subr.mxu0 %v3208
    %3859 = vmatpush1.msra.mxu0 %v3207
    %3860 = vmatprep.subr.mxu0 %v3200
    %3861 = vmatpush1.msra.mxu0 %v3199
    %3862 = vmatprep.subr.mxu0 %v3448
    %3863 = vmatpush2.msra.mxu0 %v3447
    %3864 = vmatprep.subr.mxu0 %v3440
    %3865 = vmatpush2.msra.mxu0 %v3439
    %3866 = vmatprep.subr.mxu0 %v3432
    %3867 = vmatpush2.msra.mxu0 %v3431
    %3868 = vmatprep.subr.mxu0 %v3424
    %3869 = vmatpush2.msra.mxu0 %v3423
    %3870 = vmatprep.subr.mxu0 %v3416
    %3871 = vmatpush2.msra.mxu0 %v3415
    %3872 = vmatprep.subr.mxu0 %v3408
    %3873 = vmatpush2.msra.mxu0 %v3407
    %3874 = vmatprep.subr.mxu0 %v3400
    %3875 = vmatpush2.msra.mxu0 %v3399
    %3876 = vmatprep.subr.mxu0 %v3392
    %3877 = vmatpush2.msra.mxu0 %v3391
    %3878 = vmatprep.subr.mxu0 %v3384
    %3879 = vmatpush2.msra.mxu0 %v3383
    %3880 = vmatprep.subr.mxu0 %v3376
    %3881 = vmatpush2.msra.mxu0 %v3375
    %3882 = vmatprep.subr.mxu0 %v3368
    %3883 = vmatpush2.msra.mxu0 %v3367
    %3884 = vmatprep.subr.mxu0 %v3360
    %3885 = vmatpush2.msra.mxu0 %v3359
    %3886 = vmatprep.subr.mxu0 %v3352
    %3887 = vmatpush2.msra.mxu0 %v3351
    %3888 = vmatprep.subr.mxu0 %v3344
    %3889 = vmatpush2.msra.mxu0 %v3343
    %3890 = vmatprep.subr.mxu0 %v3336
    %3891 = vmatpush2.msra.mxu0 %v3335
    %3892 = vmatprep.subr.mxu0 %v3328
    %3893 = vmatpush2.msra.mxu0 %v3327
    %3894 = vmatprep.mubr.f32.mxu0 %v3178
    %3895 = vmatmul.mubr.f32.gmra.mxu0 %v3177
    %v3896 = vpop.f32.mrf.mxu0
    %v3897 = vadd.f32 %v3478, %v3896
    %v3898 = vpop.f32.mrf.mxu0
    %v3899 = vadd.f32 %v3482, %v3898
    %3900 = vmatprep.mubr.f32.mxu0 %v3180
    %3901 = vmatmul.mubr.f32.gmra.mxu0 %v3179
    %v3902 = vpop.f32.mrf.mxu0
    %v3903 = vadd.f32 %v3478, %v3902
    %v3904 = vpop.f32.mrf.mxu0
    %v3905 = vadd.f32 %v3482, %v3904
    %3906 = vmatprep.mubr.f32.mxu0 %v3182
    %3907 = vmatmul.mubr.f32.gmra.mxu0 %v3181
    %v3908 = vpop.f32.mrf.mxu0
    %v3909 = vadd.f32 %v3478, %v3908
    %v3910 = vpop.f32.mrf.mxu0
    %v3911 = vadd.f32 %v3482, %v3910
    %3912 = vmatprep.mubr.f32.mxu0 %v3184
    %3913 = vmatmul.mubr.f32.gmra.mxu0 %v3183
    %v3914 = vpop.f32.mrf.mxu0
    %v3915 = vadd.f32 %v3478, %v3914
    %v3916 = vpop.f32.mrf.mxu0
    %v3917 = vadd.f32 %v3482, %v3916
    %3918 = vmatprep.mubr.f32.mxu0 %v3186
    %3919 = vmatmul.mubr.f32.gmra.mxu0 %v3185
    %v3920 = vpop.f32.mrf.mxu0
    %v3921 = vadd.f32 %v3478, %v3920
    %v3922 = vpop.f32.mrf.mxu0
    %v3923 = vadd.f32 %v3482, %v3922
    %3924 = vmatprep.mubr.f32.mxu0 %v3188
    %3925 = vmatmul.mubr.f32.gmra.mxu0 %v3187
    %v3926 = vpop.f32.mrf.mxu0
    %v3927 = vadd.f32 %v3478, %v3926
    %v3928 = vpop.f32.mrf.mxu0
    %v3929 = vadd.f32 %v3482, %v3928
    %3930 = vmatprep.mubr.f32.mxu0 %v3190
    %3931 = vmatmul.mubr.f32.gmra.mxu0 %v3189
    %v3932 = vpop.f32.mrf.mxu0
    %v3933 = vadd.f32 %v3478, %v3932
    %v3934 = vpop.f32.mrf.mxu0
    %v3935 = vadd.f32 %v3482, %v3934
    %3936 = vmatprep.mubr.f32.mxu0 %v3192
    %3937 = vmatmul.mubr.f32.gmra.mxu0 %v3191
    %v3938 = vpop.f32.mrf.mxu0
    %v3939 = vadd.f32 %v3478, %v3938
    %v3940 = vpop.f32.mrf.mxu0
    %v3941 = vadd.f32 %v3482, %v3940
    %3942 = vdwg.mxu0
    %3943 = vst [vmem:[#allocation3] sm:$0xff] %v3558
    %3944 = vst [vmem:[#allocation3 + $0x8] sm:$0xff] %v3560
    %3945 = vst [vmem:[#allocation3 + $0x10] sm:$0xff] %v3671
    %3946 = vst [vmem:[#allocation3 + $0x18] sm:$0xff] %v3673
    %3947 = vst [vmem:[#allocation3 + $0x20] sm:$0xff] %v3784
    %3948 = vst [vmem:[#allocation3 + $0x28] sm:$0xff] %v3786
    %3949 = vst [vmem:[#allocation3 + $0x30] sm:$0xff] %v3897
    %3950 = vst [vmem:[#allocation3 + $0x38] sm:$0xff] %v3899
    %3951 = vst [vmem:[#allocation3 + $0x40] sm:$0xff] %v3564
    %3952 = vst [vmem:[#allocation3 + $0x48] sm:$0xff] %v3566
    %3953 = vst [vmem:[#allocation3 + $0x50] sm:$0xff] %v3677
    %3954 = vst [vmem:[#allocation3 + $0x58] sm:$0xff] %v3679
    %3955 = vst [vmem:[#allocation3 + $0x60] sm:$0xff] %v3790
    %3956 = vst [vmem:[#allocation3 + $0x68] sm:$0xff] %v3792
    %3957 = vst [vmem:[#allocation3 + $0x70] sm:$0xff] %v3903
    %3958 = vst [vmem:[#allocation3 + $0x78] sm:$0xff] %v3905
    %3959 = vst [vmem:[#allocation3 + $0x80] sm:$0xff] %v3570
    %3960 = vst [vmem:[#allocation3 + $0x88] sm:$0xff] %v3572
    %3961 = vst [vmem:[#allocation3 + $0x90] sm:$0xff] %v3683
    %3962 = vst [vmem:[#allocation3 + $0x98] sm:$0xff] %v3685
    %3963 = vst [vmem:[#allocation3 + $0xa0] sm:$0xff] %v3796
    %3964 = vst [vmem:[#allocation3 + $0xa8] sm:$0xff] %v3798
    %3965 = vst [vmem:[#allocation3 + $0xb0] sm:$0xff] %v3909
    %3966 = vst [vmem:[#allocation3 + $0xb8] sm:$0xff] %v3911
    %3967 = vst [vmem:[#allocation3 + $0xc0] sm:$0xff] %v3576
    %3968 = vst [vmem:[#allocation3 + $0xc8] sm:$0xff] %v3578
    %3969 = vst [vmem:[#allocation3 + $0xd0] sm:$0xff] %v3689
    %3970 = vst [vmem:[#allocation3 + $0xd8] sm:$0xff] %v3691
    %3971 = vst [vmem:[#allocation3 + $0xe0] sm:$0xff] %v3802
    %3972 = vst [vmem:[#allocation3 + $0xe8] sm:$0xff] %v3804
    %3973 = vst [vmem:[#allocation3 + $0xf0] sm:$0xff] %v3915
    %3974 = vst [vmem:[#allocation3 + $0xf8] sm:$0xff] %v3917
    %3975 = vst [vmem:[#allocation3 + $0x100] sm:$0xff] %v3582
    %3976 = vst [vmem:[#allocation3 + $0x108] sm:$0xff] %v3584
    %3977 = vst [vmem:[#allocation3 + $0x110] sm:$0xff] %v3695
    %3978 = vst [vmem:[#allocation3 + $0x118] sm:$0xff] %v3697
    %3979 = vst [vmem:[#allocation3 + $0x120] sm:$0xff] %v3808
    %3980 = vst [vmem:[#allocation3 + $0x128] sm:$0xff] %v3810
    %3981 = vst [vmem:[#allocation3 + $0x130] sm:$0xff] %v3921
    %3982 = vst [vmem:[#allocation3 + $0x138] sm:$0xff] %v3923
    %3983 = vst [vmem:[#allocation3 + $0x140] sm:$0xff] %v3588
    %3984 = vst [vmem:[#allocation3 + $0x148] sm:$0xff] %v3590
    %3985 = vst [vmem:[#allocation3 + $0x150] sm:$0xff] %v3701
    %3986 = vst [vmem:[#allocation3 + $0x158] sm:$0xff] %v3703
    %3987 = vst [vmem:[#allocation3 + $0x160] sm:$0xff] %v3814
    %3988 = vst [vmem:[#allocation3 + $0x168] sm:$0xff] %v3816
    %3989 = vst [vmem:[#allocation3 + $0x170] sm:$0xff] %v3927
    %3990 = vst [vmem:[#allocation3 + $0x178] sm:$0xff] %v3929
    %3991 = vst [vmem:[#allocation3 + $0x180] sm:$0xff] %v3594
    %3992 = vst [vmem:[#allocation3 + $0x188] sm:$0xff] %v3596
    %3993 = vst [vmem:[#allocation3 + $0x190] sm:$0xff] %v3707
    %3994 = vst [vmem:[#allocation3 + $0x198] sm:$0xff] %v3709
    %3995 = vst [vmem:[#allocation3 + $0x1a0] sm:$0xff] %v3820
    %3996 = vst [vmem:[#allocation3 + $0x1a8] sm:$0xff] %v3822
    %3997 = vst [vmem:[#allocation3 + $0x1b0] sm:$0xff] %v3933
    %3998 = vst [vmem:[#allocation3 + $0x1b8] sm:$0xff] %v3935
    %3999 = vst [vmem:[#allocation3 + $0x1c0] sm:$0xff] %v3600
    %4000 = vst [vmem:[#allocation3 + $0x1c8] sm:$0xff] %v3602
    %4001 = vst [vmem:[#allocation3 + $0x1d0] sm:$0xff] %v3713
    %4002 = vst [vmem:[#allocation3 + $0x1d8] sm:$0xff] %v3715
    %4003 = vst [vmem:[#allocation3 + $0x1e0] sm:$0xff] %v3826
    %4004 = vst [vmem:[#allocation3 + $0x1e8] sm:$0xff] %v3828
    %4005 = vst [vmem:[#allocation3 + $0x1f0] sm:$0xff] %v3939
    %4006 = vst [vmem:[#allocation3 + $0x1f8] sm:$0xff] %v3941
    %v4007 = vld [vmem:[#allocation10] sm:$0xff]
    %v4008 = vld [vmem:[#allocation10 + $0x8] sm:$0xff]
    %v4009 = vld [vmem:[#allocation10 + $0x10] sm:$0xff]
    %v4010 = vld [vmem:[#allocation10 + $0x18] sm:$0xff]
    %v4011 = vld [vmem:[#allocation10 + $0x20] sm:$0xff]
    %v4012 = vld [vmem:[#allocation10 + $0x28] sm:$0xff]
    %v4013 = vld [vmem:[#allocation10 + $0x30] sm:$0xff]
    %v4014 = vld [vmem:[#allocation10 + $0x38] sm:$0xff]
    %v4015 = vld [vmem:[#allocation10 + $0x40] sm:$0xff]
    %v4016 = vld [vmem:[#allocation10 + $0x48] sm:$0xff]
    %v4017 = vld [vmem:[#allocation10 + $0x50] sm:$0xff]
    %v4018 = vld [vmem:[#allocation10 + $0x58] sm:$0xff]
    %v4019 = vld [vmem:[#allocation10 + $0x60] sm:$0xff]
    %v4020 = vld [vmem:[#allocation10 + $0x68] sm:$0xff]
    %v4021 = vld [vmem:[#allocation10 + $0x70] sm:$0xff]
    %v4022 = vld [vmem:[#allocation10 + $0x78] sm:$0xff]
    %v4023 = vld [vmem:[#allocation10 + $0x80] sm:$0xff]
    %v4024 = vld [vmem:[#allocation10 + $0x88] sm:$0xff]
    %v4025 = vld [vmem:[#allocation10 + $0x90] sm:$0xff]
    %v4026 = vld [vmem:[#allocation10 + $0x98] sm:$0xff]
    %v4027 = vld [vmem:[#allocation10 + $0xa0] sm:$0xff]
    %v4028 = vld [vmem:[#allocation10 + $0xa8] sm:$0xff]
    %v4029 = vld [vmem:[#allocation10 + $0xb0] sm:$0xff]
    %v4030 = vld [vmem:[#allocation10 + $0xb8] sm:$0xff]
    %v4031 = vld [vmem:[#allocation10 + $0xc0] sm:$0xff]
    %v4032 = vld [vmem:[#allocation10 + $0xc8] sm:$0xff]
    %v4033 = vld [vmem:[#allocation10 + $0xd0] sm:$0xff]
    %v4034 = vld [vmem:[#allocation10 + $0xd8] sm:$0xff]
    %v4035 = vld [vmem:[#allocation10 + $0xe0] sm:$0xff]
    %v4036 = vld [vmem:[#allocation10 + $0xe8] sm:$0xff]
    %v4037 = vld [vmem:[#allocation10 + $0xf0] sm:$0xff]
    %v4038 = vld [vmem:[#allocation10 + $0xf8] sm:$0xff]
    %v4039 = vld [vmem:[#allocation10 + $0x100] sm:$0xff]
    %v4040 = vld [vmem:[#allocation10 + $0x108] sm:$0xff]
    %v4041 = vld [vmem:[#allocation10 + $0x110] sm:$0xff]
    %v4042 = vld [vmem:[#allocation10 + $0x118] sm:$0xff]
    %v4043 = vld [vmem:[#allocation10 + $0x120] sm:$0xff]
    %v4044 = vld [vmem:[#allocation10 + $0x128] sm:$0xff]
    %v4045 = vld [vmem:[#allocation10 + $0x130] sm:$0xff]
    %v4046 = vld [vmem:[#allocation10 + $0x138] sm:$0xff]
    %v4047 = vld [vmem:[#allocation10 + $0x140] sm:$0xff]
    %v4048 = vld [vmem:[#allocation10 + $0x148] sm:$0xff]
    %v4049 = vld [vmem:[#allocation10 + $0x150] sm:$0xff]
    %v4050 = vld [vmem:[#allocation10 + $0x158] sm:$0xff]
    %v4051 = vld [vmem:[#allocation10 + $0x160] sm:$0xff]
    %v4052 = vld [vmem:[#allocation10 + $0x168] sm:$0xff]
    %v4053 = vld [vmem:[#allocation10 + $0x170] sm:$0xff]
    %v4054 = vld [vmem:[#allocation10 + $0x178] sm:$0xff]
    %v4055 = vld [vmem:[#allocation10 + $0x180] sm:$0xff]
    %v4056 = vld [vmem:[#allocation10 + $0x188] sm:$0xff]
    %v4057 = vld [vmem:[#allocation10 + $0x190] sm:$0xff]
    %v4058 = vld [vmem:[#allocation10 + $0x198] sm:$0xff]
    %v4059 = vld [vmem:[#allocation10 + $0x1a0] sm:$0xff]
    %v4060 = vld [vmem:[#allocation10 + $0x1a8] sm:$0xff]
    %v4061 = vld [vmem:[#allocation10 + $0x1b0] sm:$0xff]
    %v4062 = vld [vmem:[#allocation10 + $0x1b8] sm:$0xff]
    %v4063 = vld [vmem:[#allocation10 + $0x1c0] sm:$0xff]
    %v4064 = vld [vmem:[#allocation10 + $0x1c8] sm:$0xff]
    %v4065 = vld [vmem:[#allocation10 + $0x1d0] sm:$0xff]
    %v4066 = vld [vmem:[#allocation10 + $0x1d8] sm:$0xff]
    %v4067 = vld [vmem:[#allocation10 + $0x1e0] sm:$0xff]
    %v4068 = vld [vmem:[#allocation10 + $0x1e8] sm:$0xff]
    %v4069 = vld [vmem:[#allocation10 + $0x1f0] sm:$0xff]
    %v4070 = vld [vmem:[#allocation10 + $0x1f8] sm:$0xff]
    %v4071 = vld [vmem:[#allocation10 + $0x200] sm:$0xff]
    %v4072 = vld [vmem:[#allocation10 + $0x208] sm:$0xff]
    %v4073 = vld [vmem:[#allocation10 + $0x210] sm:$0xff]
    %v4074 = vld [vmem:[#allocation10 + $0x218] sm:$0xff]
    %v4075 = vld [vmem:[#allocation10 + $0x220] sm:$0xff]
    %v4076 = vld [vmem:[#allocation10 + $0x228] sm:$0xff]
    %v4077 = vld [vmem:[#allocation10 + $0x230] sm:$0xff]
    %v4078 = vld [vmem:[#allocation10 + $0x238] sm:$0xff]
    %v4079 = vld [vmem:[#allocation10 + $0x240] sm:$0xff]
    %v4080 = vld [vmem:[#allocation10 + $0x248] sm:$0xff]
    %v4081 = vld [vmem:[#allocation10 + $0x250] sm:$0xff]
    %v4082 = vld [vmem:[#allocation10 + $0x258] sm:$0xff]
    %v4083 = vld [vmem:[#allocation10 + $0x260] sm:$0xff]
    %v4084 = vld [vmem:[#allocation10 + $0x268] sm:$0xff]
    %v4085 = vld [vmem:[#allocation10 + $0x270] sm:$0xff]
    %v4086 = vld [vmem:[#allocation10 + $0x278] sm:$0xff]
    %v4087 = vld [vmem:[#allocation10 + $0x280] sm:$0xff]
    %v4088 = vld [vmem:[#allocation10 + $0x288] sm:$0xff]
    %v4089 = vld [vmem:[#allocation10 + $0x290] sm:$0xff]
    %v4090 = vld [vmem:[#allocation10 + $0x298] sm:$0xff]
    %v4091 = vld [vmem:[#allocation10 + $0x2a0] sm:$0xff]
    %v4092 = vld [vmem:[#allocation10 + $0x2a8] sm:$0xff]
    %v4093 = vld [vmem:[#allocation10 + $0x2b0] sm:$0xff]
    %v4094 = vld [vmem:[#allocation10 + $0x2b8] sm:$0xff]
    %v4095 = vld [vmem:[#allocation10 + $0x2c0] sm:$0xff]
    %v4096 = vld [vmem:[#allocation10 + $0x2c8] sm:$0xff]
    %v4097 = vld [vmem:[#allocation10 + $0x2d0] sm:$0xff]
    %v4098 = vld [vmem:[#allocation10 + $0x2d8] sm:$0xff]
    %v4099 = vld [vmem:[#allocation10 + $0x2e0] sm:$0xff]
    %v4100 = vld [vmem:[#allocation10 + $0x2e8] sm:$0xff]
    %v4101 = vld [vmem:[#allocation10 + $0x2f0] sm:$0xff]
    %v4102 = vld [vmem:[#allocation10 + $0x2f8] sm:$0xff]
    %v4103 = vld [vmem:[#allocation10 + $0x300] sm:$0xff]
    %v4104 = vld [vmem:[#allocation10 + $0x308] sm:$0xff]
    %v4105 = vld [vmem:[#allocation10 + $0x310] sm:$0xff]
    %v4106 = vld [vmem:[#allocation10 + $0x318] sm:$0xff]
    %v4107 = vld [vmem:[#allocation10 + $0x320] sm:$0xff]
    %v4108 = vld [vmem:[#allocation10 + $0x328] sm:$0xff]
    %v4109 = vld [vmem:[#allocation10 + $0x330] sm:$0xff]
    %v4110 = vld [vmem:[#allocation10 + $0x338] sm:$0xff]
    %v4111 = vld [vmem:[#allocation10 + $0x340] sm:$0xff]
    %v4112 = vld [vmem:[#allocation10 + $0x348] sm:$0xff]
    %v4113 = vld [vmem:[#allocation10 + $0x350] sm:$0xff]
    %v4114 = vld [vmem:[#allocation10 + $0x358] sm:$0xff]
    %v4115 = vld [vmem:[#allocation10 + $0x360] sm:$0xff]
    %v4116 = vld [vmem:[#allocation10 + $0x368] sm:$0xff]
    %v4117 = vld [vmem:[#allocation10 + $0x370] sm:$0xff]
    %v4118 = vld [vmem:[#allocation10 + $0x378] sm:$0xff]
    %v4119 = vld [vmem:[#allocation10 + $0x380] sm:$0xff]
    %v4120 = vld [vmem:[#allocation10 + $0x388] sm:$0xff]
    %v4121 = vld [vmem:[#allocation10 + $0x390] sm:$0xff]
    %v4122 = vld [vmem:[#allocation10 + $0x398] sm:$0xff]
    %v4123 = vld [vmem:[#allocation10 + $0x3a0] sm:$0xff]
    %v4124 = vld [vmem:[#allocation10 + $0x3a8] sm:$0xff]
    %v4125 = vld [vmem:[#allocation10 + $0x3b0] sm:$0xff]
    %v4126 = vld [vmem:[#allocation10 + $0x3b8] sm:$0xff]
    %v4127 = vld [vmem:[#allocation10 + $0x3c0] sm:$0xff]
    %v4128 = vld [vmem:[#allocation10 + $0x3c8] sm:$0xff]
    %v4129 = vld [vmem:[#allocation10 + $0x3d0] sm:$0xff]
    %v4130 = vld [vmem:[#allocation10 + $0x3d8] sm:$0xff]
    %v4131 = vld [vmem:[#allocation10 + $0x3e0] sm:$0xff]
    %v4132 = vld [vmem:[#allocation10 + $0x3e8] sm:$0xff]
    %v4133 = vld [vmem:[#allocation10 + $0x3f0] sm:$0xff]
    %v4134 = vld [vmem:[#allocation10 + $0x3f8] sm:$0xff]
    %v4135 = vld [vmem:[#allocation10 + $0x400] sm:$0xff]
    %v4136 = vld [vmem:[#allocation10 + $0x408] sm:$0xff]
    %v4137 = vld [vmem:[#allocation10 + $0x410] sm:$0xff]
    %v4138 = vld [vmem:[#allocation10 + $0x418] sm:$0xff]
    %v4139 = vld [vmem:[#allocation10 + $0x420] sm:$0xff]
    %v4140 = vld [vmem:[#allocation10 + $0x428] sm:$0xff]
    %v4141 = vld [vmem:[#allocation10 + $0x430] sm:$0xff]
    %v4142 = vld [vmem:[#allocation10 + $0x438] sm:$0xff]
    %v4143 = vld [vmem:[#allocation10 + $0x440] sm:$0xff]
    %v4144 = vld [vmem:[#allocation10 + $0x448] sm:$0xff]
    %v4145 = vld [vmem:[#allocation10 + $0x450] sm:$0xff]
    %v4146 = vld [vmem:[#allocation10 + $0x458] sm:$0xff]
    %v4147 = vld [vmem:[#allocation10 + $0x460] sm:$0xff]
    %v4148 = vld [vmem:[#allocation10 + $0x468] sm:$0xff]
    %v4149 = vld [vmem:[#allocation10 + $0x470] sm:$0xff]
    %v4150 = vld [vmem:[#allocation10 + $0x478] sm:$0xff]
    %v4151 = vld [vmem:[#allocation10 + $0x480] sm:$0xff]
    %v4152 = vld [vmem:[#allocation10 + $0x488] sm:$0xff]
    %v4153 = vld [vmem:[#allocation10 + $0x490] sm:$0xff]
    %v4154 = vld [vmem:[#allocation10 + $0x498] sm:$0xff]
    %v4155 = vld [vmem:[#allocation10 + $0x4a0] sm:$0xff]
    %v4156 = vld [vmem:[#allocation10 + $0x4a8] sm:$0xff]
    %v4157 = vld [vmem:[#allocation10 + $0x4b0] sm:$0xff]
    %v4158 = vld [vmem:[#allocation10 + $0x4b8] sm:$0xff]
    %v4159 = vld [vmem:[#allocation10 + $0x4c0] sm:$0xff]
    %v4160 = vld [vmem:[#allocation10 + $0x4c8] sm:$0xff]
    %v4161 = vld [vmem:[#allocation10 + $0x4d0] sm:$0xff]
    %v4162 = vld [vmem:[#allocation10 + $0x4d8] sm:$0xff]
    %v4163 = vld [vmem:[#allocation10 + $0x4e0] sm:$0xff]
    %v4164 = vld [vmem:[#allocation10 + $0x4e8] sm:$0xff]
    %v4165 = vld [vmem:[#allocation10 + $0x4f0] sm:$0xff]
    %v4166 = vld [vmem:[#allocation10 + $0x4f8] sm:$0xff]
    %v4167 = vld [vmem:[#allocation10 + $0x500] sm:$0xff]
    %v4168 = vld [vmem:[#allocation10 + $0x508] sm:$0xff]
    %v4169 = vld [vmem:[#allocation10 + $0x510] sm:$0xff]
    %v4170 = vld [vmem:[#allocation10 + $0x518] sm:$0xff]
    %v4171 = vld [vmem:[#allocation10 + $0x520] sm:$0xff]
    %v4172 = vld [vmem:[#allocation10 + $0x528] sm:$0xff]
    %v4173 = vld [vmem:[#allocation10 + $0x530] sm:$0xff]
    %v4174 = vld [vmem:[#allocation10 + $0x538] sm:$0xff]
    %v4175 = vld [vmem:[#allocation10 + $0x540] sm:$0xff]
    %v4176 = vld [vmem:[#allocation10 + $0x548] sm:$0xff]
    %v4177 = vld [vmem:[#allocation10 + $0x550] sm:$0xff]
    %v4178 = vld [vmem:[#allocation10 + $0x558] sm:$0xff]
    %v4179 = vld [vmem:[#allocation10 + $0x560] sm:$0xff]
    %v4180 = vld [vmem:[#allocation10 + $0x568] sm:$0xff]
    %v4181 = vld [vmem:[#allocation10 + $0x570] sm:$0xff]
    %v4182 = vld [vmem:[#allocation10 + $0x578] sm:$0xff]
    %v4183 = vld [vmem:[#allocation10 + $0x580] sm:$0xff]
    %v4184 = vld [vmem:[#allocation10 + $0x588] sm:$0xff]
    %v4185 = vld [vmem:[#allocation10 + $0x590] sm:$0xff]
    %v4186 = vld [vmem:[#allocation10 + $0x598] sm:$0xff]
    %v4187 = vld [vmem:[#allocation10 + $0x5a0] sm:$0xff]
    %v4188 = vld [vmem:[#allocation10 + $0x5a8] sm:$0xff]
    %v4189 = vld [vmem:[#allocation10 + $0x5b0] sm:$0xff]
    %v4190 = vld [vmem:[#allocation10 + $0x5b8] sm:$0xff]
    %v4191 = vld [vmem:[#allocation10 + $0x5c0] sm:$0xff]
    %v4192 = vld [vmem:[#allocation10 + $0x5c8] sm:$0xff]
    %v4193 = vld [vmem:[#allocation10 + $0x5d0] sm:$0xff]
    %v4194 = vld [vmem:[#allocation10 + $0x5d8] sm:$0xff]
    %v4195 = vld [vmem:[#allocation10 + $0x5e0] sm:$0xff]
    %v4196 = vld [vmem:[#allocation10 + $0x5e8] sm:$0xff]
    %v4197 = vld [vmem:[#allocation10 + $0x5f0] sm:$0xff]
    %v4198 = vld [vmem:[#allocation10 + $0x5f8] sm:$0xff]
    %v4199 = vld [vmem:[#allocation10 + $0x600] sm:$0xff]
    %v4200 = vld [vmem:[#allocation10 + $0x608] sm:$0xff]
    %v4201 = vld [vmem:[#allocation10 + $0x610] sm:$0xff]
    %v4202 = vld [vmem:[#allocation10 + $0x618] sm:$0xff]
    %v4203 = vld [vmem:[#allocation10 + $0x620] sm:$0xff]
    %v4204 = vld [vmem:[#allocation10 + $0x628] sm:$0xff]
    %v4205 = vld [vmem:[#allocation10 + $0x630] sm:$0xff]
    %v4206 = vld [vmem:[#allocation10 + $0x638] sm:$0xff]
    %v4207 = vld [vmem:[#allocation10 + $0x640] sm:$0xff]
    %v4208 = vld [vmem:[#allocation10 + $0x648] sm:$0xff]
    %v4209 = vld [vmem:[#allocation10 + $0x650] sm:$0xff]
    %v4210 = vld [vmem:[#allocation10 + $0x658] sm:$0xff]
    %v4211 = vld [vmem:[#allocation10 + $0x660] sm:$0xff]
    %v4212 = vld [vmem:[#allocation10 + $0x668] sm:$0xff]
    %v4213 = vld [vmem:[#allocation10 + $0x670] sm:$0xff]
    %v4214 = vld [vmem:[#allocation10 + $0x678] sm:$0xff]
    %v4215 = vld [vmem:[#allocation10 + $0x680] sm:$0xff]
    %v4216 = vld [vmem:[#allocation10 + $0x688] sm:$0xff]
    %v4217 = vld [vmem:[#allocation10 + $0x690] sm:$0xff]
    %v4218 = vld [vmem:[#allocation10 + $0x698] sm:$0xff]
    %v4219 = vld [vmem:[#allocation10 + $0x6a0] sm:$0xff]
    %v4220 = vld [vmem:[#allocation10 + $0x6a8] sm:$0xff]
    %v4221 = vld [vmem:[#allocation10 + $0x6b0] sm:$0xff]
    %v4222 = vld [vmem:[#allocation10 + $0x6b8] sm:$0xff]
    %v4223 = vld [vmem:[#allocation10 + $0x6c0] sm:$0xff]
    %v4224 = vld [vmem:[#allocation10 + $0x6c8] sm:$0xff]
    %v4225 = vld [vmem:[#allocation10 + $0x6d0] sm:$0xff]
    %v4226 = vld [vmem:[#allocation10 + $0x6d8] sm:$0xff]
    %v4227 = vld [vmem:[#allocation10 + $0x6e0] sm:$0xff]
    %v4228 = vld [vmem:[#allocation10 + $0x6e8] sm:$0xff]
    %v4229 = vld [vmem:[#allocation10 + $0x6f0] sm:$0xff]
    %v4230 = vld [vmem:[#allocation10 + $0x6f8] sm:$0xff]
    %v4231 = vld [vmem:[#allocation10 + $0x700] sm:$0xff]
    %v4232 = vld [vmem:[#allocation10 + $0x708] sm:$0xff]
    %v4233 = vld [vmem:[#allocation10 + $0x710] sm:$0xff]
    %v4234 = vld [vmem:[#allocation10 + $0x718] sm:$0xff]
    %v4235 = vld [vmem:[#allocation10 + $0x720] sm:$0xff]
    %v4236 = vld [vmem:[#allocation10 + $0x728] sm:$0xff]
    %v4237 = vld [vmem:[#allocation10 + $0x730] sm:$0xff]
    %v4238 = vld [vmem:[#allocation10 + $0x738] sm:$0xff]
    %v4239 = vld [vmem:[#allocation10 + $0x740] sm:$0xff]
    %v4240 = vld [vmem:[#allocation10 + $0x748] sm:$0xff]
    %v4241 = vld [vmem:[#allocation10 + $0x750] sm:$0xff]
    %v4242 = vld [vmem:[#allocation10 + $0x758] sm:$0xff]
    %v4243 = vld [vmem:[#allocation10 + $0x760] sm:$0xff]
    %v4244 = vld [vmem:[#allocation10 + $0x768] sm:$0xff]
    %v4245 = vld [vmem:[#allocation10 + $0x770] sm:$0xff]
    %v4246 = vld [vmem:[#allocation10 + $0x778] sm:$0xff]
    %v4247 = vld [vmem:[#allocation10 + $0x780] sm:$0xff]
    %v4248 = vld [vmem:[#allocation10 + $0x788] sm:$0xff]
    %v4249 = vld [vmem:[#allocation10 + $0x790] sm:$0xff]
    %v4250 = vld [vmem:[#allocation10 + $0x798] sm:$0xff]
    %v4251 = vld [vmem:[#allocation10 + $0x7a0] sm:$0xff]
    %v4252 = vld [vmem:[#allocation10 + $0x7a8] sm:$0xff]
    %v4253 = vld [vmem:[#allocation10 + $0x7b0] sm:$0xff]
    %v4254 = vld [vmem:[#allocation10 + $0x7b8] sm:$0xff]
    %v4255 = vld [vmem:[#allocation10 + $0x7c0] sm:$0xff]
    %v4256 = vld [vmem:[#allocation10 + $0x7c8] sm:$0xff]
    %v4257 = vld [vmem:[#allocation10 + $0x7d0] sm:$0xff]
    %v4258 = vld [vmem:[#allocation10 + $0x7d8] sm:$0xff]
    %v4259 = vld [vmem:[#allocation10 + $0x7e0] sm:$0xff]
    %v4260 = vld [vmem:[#allocation10 + $0x7e8] sm:$0xff]
    %v4261 = vld [vmem:[#allocation10 + $0x7f0] sm:$0xff]
    %v4262 = vld [vmem:[#allocation10 + $0x7f8] sm:$0xff]
    %v4263 = vld [vmem:[#allocation3] sm:$0xff]
    %v4264 = vld [vmem:[#allocation3 + $0x8] sm:$0xff]
    %v4265 = vld [vmem:[#allocation3 + $0x10] sm:$0xff]
    %v4266 = vld [vmem:[#allocation3 + $0x18] sm:$0xff]
    %v4267 = vld [vmem:[#allocation3 + $0x20] sm:$0xff]
    %v4268 = vld [vmem:[#allocation3 + $0x28] sm:$0xff]
    %v4269 = vld [vmem:[#allocation3 + $0x30] sm:$0xff]
    %v4270 = vld [vmem:[#allocation3 + $0x38] sm:$0xff]
    %4271 = vmatprep.subr.mxu0 %v4128
    %4272 = vmatpush1.msra.mxu0 %v4127
    %4273 = vmatprep.subr.mxu0 %v4120
    %4274 = vmatpush1.msra.mxu0 %v4119
    %4275 = vmatprep.subr.mxu0 %v4112
    %4276 = vmatpush1.msra.mxu0 %v4111
    %4277 = vmatprep.subr.mxu0 %v4104
    %4278 = vmatpush1.msra.mxu0 %v4103
    %4279 = vmatprep.subr.mxu0 %v4096
    %4280 = vmatpush1.msra.mxu0 %v4095
    %4281 = vmatprep.subr.mxu0 %v4088
    %4282 = vmatpush1.msra.mxu0 %v4087
    %4283 = vmatprep.subr.mxu0 %v4080
    %4284 = vmatpush1.msra.mxu0 %v4079
    %4285 = vmatprep.subr.mxu0 %v4072
    %4286 = vmatpush1.msra.mxu0 %v4071
    %4287 = vmatprep.subr.mxu0 %v4064
    %4288 = vmatpush1.msra.mxu0 %v4063
    %4289 = vmatprep.subr.mxu0 %v4056
    %4290 = vmatpush1.msra.mxu0 %v4055
    %4291 = vmatprep.subr.mxu0 %v4048
    %4292 = vmatpush1.msra.mxu0 %v4047
    %4293 = vmatprep.subr.mxu0 %v4040
    %4294 = vmatpush1.msra.mxu0 %v4039
    %4295 = vmatprep.subr.mxu0 %v4032
    %4296 = vmatpush1.msra.mxu0 %v4031
    %4297 = vmatprep.subr.mxu0 %v4024
    %4298 = vmatpush1.msra.mxu0 %v4023
    %4299 = vmatprep.subr.mxu0 %v4016
    %4300 = vmatpush1.msra.mxu0 %v4015
    %4301 = vmatprep.subr.mxu0 %v4008
    %4302 = vmatpush1.msra.mxu0 %v4007
    %4303 = vmatprep.subr.mxu0 %v4256
    %4304 = vmatpush2.msra.mxu0 %v4255
    %4305 = vmatprep.subr.mxu0 %v4248
    %4306 = vmatpush2.msra.mxu0 %v4247
    %4307 = vmatprep.subr.mxu0 %v4240
    %4308 = vmatpush2.msra.mxu0 %v4239
    %4309 = vmatprep.subr.mxu0 %v4232
    %4310 = vmatpush2.msra.mxu0 %v4231
    %4311 = vmatprep.subr.mxu0 %v4224
    %4312 = vmatpush2.msra.mxu0 %v4223
    %4313 = vmatprep.subr.mxu0 %v4216
    %4314 = vmatpush2.msra.mxu0 %v4215
    %4315 = vmatprep.subr.mxu0 %v4208
    %4316 = vmatpush2.msra.mxu0 %v4207
    %4317 = vmatprep.subr.mxu0 %v4200
    %4318 = vmatpush2.msra.mxu0 %v4199
    %4319 = vmatprep.subr.mxu0 %v4192
    %4320 = vmatpush2.msra.mxu0 %v4191
    %4321 = vmatprep.subr.mxu0 %v4184
    %4322 = vmatpush2.msra.mxu0 %v4183
    %4323 = vmatprep.subr.mxu0 %v4176
    %4324 = vmatpush2.msra.mxu0 %v4175
    %4325 = vmatprep.subr.mxu0 %v4168
    %4326 = vmatpush2.msra.mxu0 %v4167
    %4327 = vmatprep.subr.mxu0 %v4160
    %4328 = vmatpush2.msra.mxu0 %v4159
    %4329 = vmatprep.subr.mxu0 %v4152
    %4330 = vmatpush2.msra.mxu0 %v4151
    %4331 = vmatprep.subr.mxu0 %v4144
    %4332 = vmatpush2.msra.mxu0 %v4143
    %4333 = vmatprep.subr.mxu0 %v4136
    %4334 = vmatpush2.msra.mxu0 %v4135
    %4335 = vmatprep.mubr.f32.mxu0 0.0
    %4336 = vmatmul.mubr.f32.gmra.mxu0 0.0
    %v4337 = vpop.f32.mrf.mxu0
    %v4338 = vadd.f32 0.0, %v4337
    %v4339 = vpop.f32.mrf.mxu0
    %v4340 = vadd.f32 0.0, %v4339
    %4341 = vdwg.mxu0
    %4342 = vmatprep.subr.mxu0 %v4130
    %4343 = vmatpush1.msra.mxu0 %v4129
    %4344 = vmatprep.subr.mxu0 %v4122
    %4345 = vmatpush1.msra.mxu0 %v4121
    %4346 = vmatprep.subr.mxu0 %v4114
    %4347 = vmatpush1.msra.mxu0 %v4113
    %4348 = vmatprep.subr.mxu0 %v4106
    %4349 = vmatpush1.msra.mxu0 %v4105
    %4350 = vmatprep.subr.mxu0 %v4098
    %4351 = vmatpush1.msra.mxu0 %v4097
    %4352 = vmatprep.subr.mxu0 %v4090
    %4353 = vmatpush1.msra.mxu0 %v4089
    %4354 = vmatprep.subr.mxu0 %v4082
    %4355 = vmatpush1.msra.mxu0 %v4081
    %4356 = vmatprep.subr.mxu0 %v4074
    %4357 = vmatpush1.msra.mxu0 %v4073
    %4358 = vmatprep.subr.mxu0 %v4066
    %4359 = vmatpush1.msra.mxu0 %v4065
    %4360 = vmatprep.subr.mxu0 %v4058
    %4361 = vmatpush1.msra.mxu0 %v4057
    %4362 = vmatprep.subr.mxu0 %v4050
    %4363 = vmatpush1.msra.mxu0 %v4049
    %4364 = vmatprep.subr.mxu0 %v4042
    %4365 = vmatpush1.msra.mxu0 %v4041
    %4366 = vmatprep.subr.mxu0 %v4034
    %4367 = vmatpush1.msra.mxu0 %v4033
    %4368 = vmatprep.subr.mxu0 %v4026
    %4369 = vmatpush1.msra.mxu0 %v4025
    %4370 = vmatprep.subr.mxu0 %v4018
    %4371 = vmatpush1.msra.mxu0 %v4017
    %4372 = vmatprep.subr.mxu0 %v4010
    %4373 = vmatpush1.msra.mxu0 %v4009
    %4374 = vmatprep.subr.mxu0 %v4258
    %4375 = vmatpush2.msra.mxu0 %v4257
    %4376 = vmatprep.subr.mxu0 %v4250
    %4377 = vmatpush2.msra.mxu0 %v4249
    %4378 = vmatprep.subr.mxu0 %v4242
    %4379 = vmatpush2.msra.mxu0 %v4241
    %4380 = vmatprep.subr.mxu0 %v4234
    %4381 = vmatpush2.msra.mxu0 %v4233
    %4382 = vmatprep.subr.mxu0 %v4226
    %4383 = vmatpush2.msra.mxu0 %v4225
    %4384 = vmatprep.subr.mxu0 %v4218
    %4385 = vmatpush2.msra.mxu0 %v4217
    %4386 = vmatprep.subr.mxu0 %v4210
    %4387 = vmatpush2.msra.mxu0 %v4209
    %4388 = vmatprep.subr.mxu0 %v4202
    %4389 = vmatpush2.msra.mxu0 %v4201
    %4390 = vmatprep.subr.mxu0 %v4194
    %4391 = vmatpush2.msra.mxu0 %v4193
    %4392 = vmatprep.subr.mxu0 %v4186
    %4393 = vmatpush2.msra.mxu0 %v4185
    %4394 = vmatprep.subr.mxu0 %v4178
    %4395 = vmatpush2.msra.mxu0 %v4177
    %4396 = vmatprep.subr.mxu0 %v4170
    %4397 = vmatpush2.msra.mxu0 %v4169
    %4398 = vmatprep.subr.mxu0 %v4162
    %4399 = vmatpush2.msra.mxu0 %v4161
    %4400 = vmatprep.subr.mxu0 %v4154
    %4401 = vmatpush2.msra.mxu0 %v4153
    %4402 = vmatprep.subr.mxu0 %v4146
    %4403 = vmatpush2.msra.mxu0 %v4145
    %4404 = vmatprep.subr.mxu0 %v4138
    %4405 = vmatpush2.msra.mxu0 %v4137
    %4406 = vmatprep.mubr.f32.mxu0 0.0
    %4407 = vmatmul.mubr.f32.gmra.mxu0 0.0
    %v4408 = vpop.f32.mrf.mxu0
    %v4409 = vadd.f32 0.0, %v4408
    %v4410 = vpop.f32.mrf.mxu0
    %v4411 = vadd.f32 0.0, %v4410
    %4412 = vdwg.mxu0
    %4413 = vmatprep.subr.mxu0 %v4132
    %4414 = vmatpush1.msra.mxu0 %v4131
    %4415 = vmatprep.subr.mxu0 %v4124
    %4416 = vmatpush1.msra.mxu0 %v4123
    %4417 = vmatprep.subr.mxu0 %v4116
    %4418 = vmatpush1.msra.mxu0 %v4115
    %4419 = vmatprep.subr.mxu0 %v4108
    %4420 = vmatpush1.msra.mxu0 %v4107
    %4421 = vmatprep.subr.mxu0 %v4100
    %4422 = vmatpush1.msra.mxu0 %v4099
    %4423 = vmatprep.subr.mxu0 %v4092
    %4424 = vmatpush1.msra.mxu0 %v4091
    %4425 = vmatprep.subr.mxu0 %v4084
    %4426 = vmatpush1.msra.mxu0 %v4083
    %4427 = vmatprep.subr.mxu0 %v4076
    %4428 = vmatpush1.msra.mxu0 %v4075
    %4429 = vmatprep.subr.mxu0 %v4068
    %4430 = vmatpush1.msra.mxu0 %v4067
    %4431 = vmatprep.subr.mxu0 %v4060
    %4432 = vmatpush1.msra.mxu0 %v4059
    %4433 = vmatprep.subr.mxu0 %v4052
    %4434 = vmatpush1.msra.mxu0 %v4051
    %4435 = vmatprep.subr.mxu0 %v4044
    %4436 = vmatpush1.msra.mxu0 %v4043
    %4437 = vmatprep.subr.mxu0 %v4036
    %4438 = vmatpush1.msra.mxu0 %v4035
    %4439 = vmatprep.subr.mxu0 %v4028
    %4440 = vmatpush1.msra.mxu0 %v4027
    %4441 = vmatprep.subr.mxu0 %v4020
    %4442 = vmatpush1.msra.mxu0 %v4019
    %4443 = vmatprep.subr.mxu0 %v4012
    %4444 = vmatpush1.msra.mxu0 %v4011
    %4445 = vmatprep.subr.mxu0 %v4260
    %4446 = vmatpush2.msra.mxu0 %v4259
    %4447 = vmatprep.subr.mxu0 %v4252
    %4448 = vmatpush2.msra.mxu0 %v4251
    %4449 = vmatprep.subr.mxu0 %v4244
    %4450 = vmatpush2.msra.mxu0 %v4243
    %4451 = vmatprep.subr.mxu0 %v4236
    %4452 = vmatpush2.msra.mxu0 %v4235
    %4453 = vmatprep.subr.mxu0 %v4228
    %4454 = vmatpush2.msra.mxu0 %v4227
    %4455 = vmatprep.subr.mxu0 %v4220
    %4456 = vmatpush2.msra.mxu0 %v4219
    %4457 = vmatprep.subr.mxu0 %v4212
    %4458 = vmatpush2.msra.mxu0 %v4211
    %4459 = vmatprep.subr.mxu0 %v4204
    %4460 = vmatpush2.msra.mxu0 %v4203
    %4461 = vmatprep.subr.mxu0 %v4196
    %4462 = vmatpush2.msra.mxu0 %v4195
    %4463 = vmatprep.subr.mxu0 %v4188
    %4464 = vmatpush2.msra.mxu0 %v4187
    %4465 = vmatprep.subr.mxu0 %v4180
    %4466 = vmatpush2.msra.mxu0 %v4179
    %4467 = vmatprep.subr.mxu0 %v4172
    %4468 = vmatpush2.msra.mxu0 %v4171
    %4469 = vmatprep.subr.mxu0 %v4164
    %4470 = vmatpush2.msra.mxu0 %v4163
    %4471 = vmatprep.subr.mxu0 %v4156
    %4472 = vmatpush2.msra.mxu0 %v4155
    %4473 = vmatprep.subr.mxu0 %v4148
    %4474 = vmatpush2.msra.mxu0 %v4147
    %4475 = vmatprep.subr.mxu0 %v4140
    %4476 = vmatpush2.msra.mxu0 %v4139
    %4477 = vmatprep.mubr.f32.mxu0 0.0
    %4478 = vmatmul.mubr.f32.gmra.mxu0 0.0
    %v4479 = vpop.f32.mrf.mxu0
    %v4480 = vadd.f32 0.0, %v4479
    %v4481 = vpop.f32.mrf.mxu0
    %v4482 = vadd.f32 0.0, %v4481
    %4483 = vdwg.mxu0
    %4484 = vmatprep.subr.mxu0 %v4134
    %4485 = vmatpush1.msra.mxu0 %v4133
    %4486 = vmatprep.subr.mxu0 %v4126
    %4487 = vmatpush1.msra.mxu0 %v4125
    %4488 = vmatprep.subr.mxu0 %v4118
    %4489 = vmatpush1.msra.mxu0 %v4117
    %4490 = vmatprep.subr.mxu0 %v4110
    %4491 = vmatpush1.msra.mxu0 %v4109
    %4492 = vmatprep.subr.mxu0 %v4102
    %4493 = vmatpush1.msra.mxu0 %v4101
    %4494 = vmatprep.subr.mxu0 %v4094
    %4495 = vmatpush1.msra.mxu0 %v4093
    %4496 = vmatprep.subr.mxu0 %v4086
    %4497 = vmatpush1.msra.mxu0 %v4085
    %4498 = vmatprep.subr.mxu0 %v4078
    %4499 = vmatpush1.msra.mxu0 %v4077
    %4500 = vmatprep.subr.mxu0 %v4070
    %4501 = vmatpush1.msra.mxu0 %v4069
    %4502 = vmatprep.subr.mxu0 %v4062
    %4503 = vmatpush1.msra.mxu0 %v4061
    %4504 = vmatprep.subr.mxu0 %v4054
    %4505 = vmatpush1.msra.mxu0 %v4053
    %4506 = vmatprep.subr.mxu0 %v4046
    %4507 = vmatpush1.msra.mxu0 %v4045
    %4508 = vmatprep.subr.mxu0 %v4038
    %4509 = vmatpush1.msra.mxu0 %v4037
    %4510 = vmatprep.subr.mxu0 %v4030
    %4511 = vmatpush1.msra.mxu0 %v4029
    %4512 = vmatprep.subr.mxu0 %v4022
    %4513 = vmatpush1.msra.mxu0 %v4021
    %4514 = vmatprep.subr.mxu0 %v4014
    %4515 = vmatpush1.msra.mxu0 %v4013
    %4516 = vmatprep.subr.mxu0 %v4262
    %4517 = vmatpush2.msra.mxu0 %v4261
    %4518 = vmatprep.subr.mxu0 %v4254
    %4519 = vmatpush2.msra.mxu0 %v4253
    %4520 = vmatprep.subr.mxu0 %v4246
    %4521 = vmatpush2.msra.mxu0 %v4245
    %4522 = vmatprep.subr.mxu0 %v4238
    %4523 = vmatpush2.msra.mxu0 %v4237
    %4524 = vmatprep.subr.mxu0 %v4230
    %4525 = vmatpush2.msra.mxu0 %v4229
    %4526 = vmatprep.subr.mxu0 %v4222
    %4527 = vmatpush2.msra.mxu0 %v4221
    %4528 = vmatprep.subr.mxu0 %v4214
    %4529 = vmatpush2.msra.mxu0 %v4213
    %4530 = vmatprep.subr.mxu0 %v4206
    %4531 = vmatpush2.msra.mxu0 %v4205
    %4532 = vmatprep.subr.mxu0 %v4198
    %4533 = vmatpush2.msra.mxu0 %v4197
    %4534 = vmatprep.subr.mxu0 %v4190
    %4535 = vmatpush2.msra.mxu0 %v4189
    %4536 = vmatprep.subr.mxu0 %v4182
    %4537 = vmatpush2.msra.mxu0 %v4181
    %4538 = vmatprep.subr.mxu0 %v4174
    %4539 = vmatpush2.msra.mxu0 %v4173
    %4540 = vmatprep.subr.mxu0 %v4166
    %4541 = vmatpush2.msra.mxu0 %v4165
    %4542 = vmatprep.subr.mxu0 %v4158
    %4543 = vmatpush2.msra.mxu0 %v4157
    %4544 = vmatprep.subr.mxu0 %v4150
    %4545 = vmatpush2.msra.mxu0 %v4149
    %4546 = vmatprep.subr.mxu0 %v4142
    %4547 = vmatpush2.msra.mxu0 %v4141
    %4548 = vmatprep.mubr.f32.mxu0 0.0
    %4549 = vmatmul.mubr.f32.gmra.mxu0 0.0
    %v4550 = vpop.f32.mrf.mxu0
    %v4551 = vadd.f32 0.0, %v4550
    %v4552 = vpop.f32.mrf.mxu0
    %v4553 = vadd.f32 0.0, %v4552
    %4554 = vdwg.mxu0
    %v4555 = vadd.f32 %v4263, %v4338
    %v4556 = vadd.f32 %v4264, %v4340
    %v4557 = vadd.f32 %v4265, %v4409
    %v4558 = vadd.f32 %v4266, %v4411
    %v4559 = vadd.f32 %v4267, %v4480
    %v4560 = vadd.f32 %v4268, %v4482
    %v4561 = vadd.f32 %v4269, %v4551
    %v4562 = vadd.f32 %v4270, %v4553
    %v4563 = vxor.u32 %v4555, 2147483648
    %v4564 = vxor.u32 %v4556, 2147483648
    %v4565 = vmul.f32 %v4563, 1.442695
    %v4566 = vpow.pop %v4565
    %v4567 = vmul.f32 %v4564, 1.442695
    %v4568 = vpow.pop %v4567
    %v4569 = vadd.f32 %v4566, 1.0
    %v4570 = vadd.f32 %v4568, 1.0
    %v4571 = vrcp.pop %v4569
    %v4572 = vmul.f32 1.0, %v4571
    %v4573 = vrcp.pop %v4570
    %v4574 = vmul.f32 1.0, %v4573
    %v4575 = vxor.u32 %v4557, 2147483648
    %v4576 = vxor.u32 %v4558, 2147483648
    %v4577 = vmul.f32 %v4575, 1.442695
    %v4578 = vpow.pop %v4577
    %v4579 = vmul.f32 %v4576, 1.442695
    %v4580 = vpow.pop %v4579
    %v4581 = vadd.f32 %v4578, 1.0
    %v4582 = vadd.f32 %v4580, 1.0
    %v4583 = vrcp.pop %v4581
    %v4584 = vmul.f32 1.0, %v4583
    %v4585 = vrcp.pop %v4582
    %v4586 = vmul.f32 1.0, %v4585
    %v4587 = vtanh.pop %v4559
    %v4588 = vtanh.pop %v4560
    %v4589 = vxor.u32 %v4561, 2147483648
    %v4590 = vxor.u32 %v4562, 2147483648
    %v4591 = vmul.f32 %v4589, 1.442695
    %v4592 = vpow.pop %v4591
    %v4593 = vmul.f32 %v4590, 1.442695
    %v4594 = vpow.pop %v4593
    %v4595 = vadd.f32 %v4592, 1.0
    %v4596 = vadd.f32 %v4594, 1.0
    %v4597 = vrcp.pop %v4595
    %v4598 = vmul.f32 1.0, %v4597
    %v4599 = vrcp.pop %v4596
    %v4600 = vmul.f32 1.0, %v4599
    %v4601 = vmul.f32 %v4584, 0.0
    %v4602 = vmul.f32 %v4586, 0.0
    %v4603 = vmul.f32 %v4572, %v4587
    %v4604 = vmul.f32 %v4574, %v4588
    %v4605 = vadd.f32 %v4601, %v4603
    %v4606 = vadd.f32 %v4602, %v4604
    %v4607 = vtanh.pop %v4605
    %v4608 = vtanh.pop %v4606
    %v4609 = vmul.f32 %v4598, %v4607
    %v4610 = vmul.f32 %v4600, %v4608
    %4611 = vst [vmem:[#allocation2] sm:$0xff] %v4609
    %4612 = vst [vmem:[#allocation2 + $0x8] sm:$0xff] %v4610
    %s4613 = scalar_lea.vmem [#allocation3], 64
    %v4614 = vld [vmem:[%s4613] sm:$0xff]
    %v4615 = vld [vmem:[%s4613 + $0x8] sm:$0xff]
    %v4616 = vld [vmem:[%s4613 + $0x10] sm:$0xff]
    %v4617 = vld [vmem:[%s4613 + $0x18] sm:$0xff]
    %v4618 = vld [vmem:[%s4613 + $0x20] sm:$0xff]
    %v4619 = vld [vmem:[%s4613 + $0x28] sm:$0xff]
    %v4620 = vld [vmem:[%s4613 + $0x30] sm:$0xff]
    %v4621 = vld [vmem:[%s4613 + $0x38] sm:$0xff]
    %4622 = vmatprep.subr.mxu0 %v4128
    %4623 = vmatpush1.msra.mxu0 %v4127
    %4624 = vmatprep.subr.mxu0 %v4120
    %4625 = vmatpush1.msra.mxu0 %v4119
    %4626 = vmatprep.subr.mxu0 %v4112
    %4627 = vmatpush1.msra.mxu0 %v4111
    %4628 = vmatprep.subr.mxu0 %v4104
    %4629 = vmatpush1.msra.mxu0 %v4103
    %4630 = vmatprep.subr.mxu0 %v4096
    %4631 = vmatpush1.msra.mxu0 %v4095
    %4632 = vmatprep.subr.mxu0 %v4088
    %4633 = vmatpush1.msra.mxu0 %v4087
    %4634 = vmatprep.subr.mxu0 %v4080
    %4635 = vmatpush1.msra.mxu0 %v4079
    %4636 = vmatprep.subr.mxu0 %v4072
    %4637 = vmatpush1.msra.mxu0 %v4071
    %4638 = vmatprep.subr.mxu0 %v4064
    %4639 = vmatpush1.msra.mxu0 %v4063
    %4640 = vmatprep.subr.mxu0 %v4056
    %4641 = vmatpush1.msra.mxu0 %v4055
    %4642 = vmatprep.subr.mxu0 %v4048
    %4643 = vmatpush1.msra.mxu0 %v4047
    %4644 = vmatprep.subr.mxu0 %v4040
    %4645 = vmatpush1.msra.mxu0 %v4039
    %4646 = vmatprep.subr.mxu0 %v4032
    %4647 = vmatpush1.msra.mxu0 %v4031
    %4648 = vmatprep.subr.mxu0 %v4024
    %4649 = vmatpush1.msra.mxu0 %v4023
    %4650 = vmatprep.subr.mxu0 %v4016
    %4651 = vmatpush1.msra.mxu0 %v4015
    %4652 = vmatprep.subr.mxu0 %v4008
    %4653 = vmatpush1.msra.mxu0 %v4007
    %4654 = vmatprep.subr.mxu0 %v4256
    %4655 = vmatpush2.msra.mxu0 %v4255
    %4656 = vmatprep.subr.mxu0 %v4248
    %4657 = vmatpush2.msra.mxu0 %v4247
    %4658 = vmatprep.subr.mxu0 %v4240
    %4659 = vmatpush2.msra.mxu0 %v4239
    %4660 = vmatprep.subr.mxu0 %v4232
    %4661 = vmatpush2.msra.mxu0 %v4231
    %4662 = vmatprep.subr.mxu0 %v4224
    %4663 = vmatpush2.msra.mxu0 %v4223
    %4664 = vmatprep.subr.mxu0 %v4216
    %4665 = vmatpush2.msra.mxu0 %v4215
    %4666 = vmatprep.subr.mxu0 %v4208
    %4667 = vmatpush2.msra.mxu0 %v4207
    %4668 = vmatprep.subr.mxu0 %v4200
    %4669 = vmatpush2.msra.mxu0 %v4199
    %4670 = vmatprep.subr.mxu0 %v4192
    %4671 = vmatpush2.msra.mxu0 %v4191
    %4672 = vmatprep.subr.mxu0 %v4184
    %4673 = vmatpush2.msra.mxu0 %v4183
    %4674 = vmatprep.subr.mxu0 %v4176
    %4675 = vmatpush2.msra.mxu0 %v4175
    %4676 = vmatprep.subr.mxu0 %v4168
    %4677 = vmatpush2.msra.mxu0 %v4167
    %4678 = vmatprep.subr.mxu0 %v4160
    %4679 = vmatpush2.msra.mxu0 %v4159
    %4680 = vmatprep.subr.mxu0 %v4152
    %4681 = vmatpush2.msra.mxu0 %v4151
    %4682 = vmatprep.subr.mxu0 %v4144
    %4683 = vmatpush2.msra.mxu0 %v4143
    %4684 = vmatprep.subr.mxu0 %v4136
    %4685 = vmatpush2.msra.mxu0 %v4135
    %4686 = vmatprep.mubr.f32.mxu0 %v4610
    %4687 = vmatmul.mubr.f32.gmra.mxu0 %v4609
    %v4688 = vpop.f32.mrf.mxu0
    %v4689 = vadd.f32 0.0, %v4688
    %v4690 = vpop.f32.mrf.mxu0
    %v4691 = vadd.f32 0.0, %v4690
    %4692 = vdwg.mxu0
    %4693 = vmatprep.subr.mxu0 %v4130
    %4694 = vmatpush1.msra.mxu0 %v4129
    %4695 = vmatprep.subr.mxu0 %v4122
    %4696 = vmatpush1.msra.mxu0 %v4121
    %4697 = vmatprep.subr.mxu0 %v4114
    %4698 = vmatpush1.msra.mxu0 %v4113
    %4699 = vmatprep.subr.mxu0 %v4106
    %4700 = vmatpush1.msra.mxu0 %v4105
    %4701 = vmatprep.subr.mxu0 %v4098
    %4702 = vmatpush1.msra.mxu0 %v4097
    %4703 = vmatprep.subr.mxu0 %v4090
    %4704 = vmatpush1.msra.mxu0 %v4089
    %4705 = vmatprep.subr.mxu0 %v4082
    %4706 = vmatpush1.msra.mxu0 %v4081
    %4707 = vmatprep.subr.mxu0 %v4074
    %4708 = vmatpush1.msra.mxu0 %v4073
    %4709 = vmatprep.subr.mxu0 %v4066
    %4710 = vmatpush1.msra.mxu0 %v4065
    %4711 = vmatprep.subr.mxu0 %v4058
    %4712 = vmatpush1.msra.mxu0 %v4057
    %4713 = vmatprep.subr.mxu0 %v4050
    %4714 = vmatpush1.msra.mxu0 %v4049
    %4715 = vmatprep.subr.mxu0 %v4042
    %4716 = vmatpush1.msra.mxu0 %v4041
    %4717 = vmatprep.subr.mxu0 %v4034
    %4718 = vmatpush1.msra.mxu0 %v4033
    %4719 = vmatprep.subr.mxu0 %v4026
    %4720 = vmatpush1.msra.mxu0 %v4025
    %4721 = vmatprep.subr.mxu0 %v4018
    %4722 = vmatpush1.msra.mxu0 %v4017
    %4723 = vmatprep.subr.mxu0 %v4010
    %4724 = vmatpush1.msra.mxu0 %v4009
    %4725 = vmatprep.subr.mxu0 %v4258
    %4726 = vmatpush2.msra.mxu0 %v4257
    %4727 = vmatprep.subr.mxu0 %v4250
    %4728 = vmatpush2.msra.mxu0 %v4249
    %4729 = vmatprep.subr.mxu0 %v4242
    %4730 = vmatpush2.msra.mxu0 %v4241
    %4731 = vmatprep.subr.mxu0 %v4234
    %4732 = vmatpush2.msra.mxu0 %v4233
    %4733 = vmatprep.subr.mxu0 %v4226
    %4734 = vmatpush2.msra.mxu0 %v4225
    %4735 = vmatprep.subr.mxu0 %v4218
    %4736 = vmatpush2.msra.mxu0 %v4217
    %4737 = vmatprep.subr.mxu0 %v4210
    %4738 = vmatpush2.msra.mxu0 %v4209
    %4739 = vmatprep.subr.mxu0 %v4202
    %4740 = vmatpush2.msra.mxu0 %v4201
    %4741 = vmatprep.subr.mxu0 %v4194
    %4742 = vmatpush2.msra.mxu0 %v4193
    %4743 = vmatprep.subr.mxu0 %v4186
    %4744 = vmatpush2.msra.mxu0 %v4185
    %4745 = vmatprep.subr.mxu0 %v4178
    %4746 = vmatpush2.msra.mxu0 %v4177
    %4747 = vmatprep.subr.mxu0 %v4170
    %4748 = vmatpush2.msra.mxu0 %v4169
    %4749 = vmatprep.subr.mxu0 %v4162
    %4750 = vmatpush2.msra.mxu0 %v4161
    %4751 = vmatprep.subr.mxu0 %v4154
    %4752 = vmatpush2.msra.mxu0 %v4153
    %4753 = vmatprep.subr.mxu0 %v4146
    %4754 = vmatpush2.msra.mxu0 %v4145
    %4755 = vmatprep.subr.mxu0 %v4138
    %4756 = vmatpush2.msra.mxu0 %v4137
    %4757 = vmatprep.mubr.f32.mxu0 %v4610
    %4758 = vmatmul.mubr.f32.gmra.mxu0 %v4609
    %v4759 = vpop.f32.mrf.mxu0
    %v4760 = vadd.f32 0.0, %v4759
    %v4761 = vpop.f32.mrf.mxu0
    %v4762 = vadd.f32 0.0, %v4761
    %4763 = vdwg.mxu0
    %4764 = vmatprep.subr.mxu0 %v4132
    %4765 = vmatpush1.msra.mxu0 %v4131
    %4766 = vmatprep.subr.mxu0 %v4124
    %4767 = vmatpush1.msra.mxu0 %v4123
    %4768 = vmatprep.subr.mxu0 %v4116
    %4769 = vmatpush1.msra.mxu0 %v4115
    %4770 = vmatprep.subr.mxu0 %v4108
    %4771 = vmatpush1.msra.mxu0 %v4107
    %4772 = vmatprep.subr.mxu0 %v4100
    %4773 = vmatpush1.msra.mxu0 %v4099
    %4774 = vmatprep.subr.mxu0 %v4092
    %4775 = vmatpush1.msra.mxu0 %v4091
    %4776 = vmatprep.subr.mxu0 %v4084
    %4777 = vmatpush1.msra.mxu0 %v4083
    %4778 = vmatprep.subr.mxu0 %v4076
    %4779 = vmatpush1.msra.mxu0 %v4075
    %4780 = vmatprep.subr.mxu0 %v4068
    %4781 = vmatpush1.msra.mxu0 %v4067
    %4782 = vmatprep.subr.mxu0 %v4060
    %4783 = vmatpush1.msra.mxu0 %v4059
    %4784 = vmatprep.subr.mxu0 %v4052
    %4785 = vmatpush1.msra.mxu0 %v4051
    %4786 = vmatprep.subr.mxu0 %v4044
    %4787 = vmatpush1.msra.mxu0 %v4043
    %4788 = vmatprep.subr.mxu0 %v4036
    %4789 = vmatpush1.msra.mxu0 %v4035
    %4790 = vmatprep.subr.mxu0 %v4028
    %4791 = vmatpush1.msra.mxu0 %v4027
    %4792 = vmatprep.subr.mxu0 %v4020
    %4793 = vmatpush1.msra.mxu0 %v4019
    %4794 = vmatprep.subr.mxu0 %v4012
    %4795 = vmatpush1.msra.mxu0 %v4011
    %4796 = vmatprep.subr.mxu0 %v4260
    %4797 = vmatpush2.msra.mxu0 %v4259
    %4798 = vmatprep.subr.mxu0 %v4252
    %4799 = vmatpush2.msra.mxu0 %v4251
    %4800 = vmatprep.subr.mxu0 %v4244
    %4801 = vmatpush2.msra.mxu0 %v4243
    %4802 = vmatprep.subr.mxu0 %v4236
    %4803 = vmatpush2.msra.mxu0 %v4235
    %4804 = vmatprep.subr.mxu0 %v4228
    %4805 = vmatpush2.msra.mxu0 %v4227
    %4806 = vmatprep.subr.mxu0 %v4220
    %4807 = vmatpush2.msra.mxu0 %v4219
    %4808 = vmatprep.subr.mxu0 %v4212
    %4809 = vmatpush2.msra.mxu0 %v4211
    %4810 = vmatprep.subr.mxu0 %v4204
    %4811 = vmatpush2.msra.mxu0 %v4203
    %4812 = vmatprep.subr.mxu0 %v4196
    %4813 = vmatpush2.msra.mxu0 %v4195
    %4814 = vmatprep.subr.mxu0 %v4188
    %4815 = vmatpush2.msra.mxu0 %v4187
    %4816 = vmatprep.subr.mxu0 %v4180
    %4817 = vmatpush2.msra.mxu0 %v4179
    %4818 = vmatprep.subr.mxu0 %v4172
    %4819 = vmatpush2.msra.mxu0 %v4171
    %4820 = vmatprep.subr.mxu0 %v4164
    %4821 = vmatpush2.msra.mxu0 %v4163
    %4822 = vmatprep.subr.mxu0 %v4156
    %4823 = vmatpush2.msra.mxu0 %v4155
    %4824 = vmatprep.subr.mxu0 %v4148
    %4825 = vmatpush2.msra.mxu0 %v4147
    %4826 = vmatprep.subr.mxu0 %v4140
    %4827 = vmatpush2.msra.mxu0 %v4139
    %4828 = vmatprep.mubr.f32.mxu0 %v4610
    %4829 = vmatmul.mubr.f32.gmra.mxu0 %v4609
    %v4830 = vpop.f32.mrf.mxu0
    %v4831 = vadd.f32 0.0, %v4830
    %v4832 = vpop.f32.mrf.mxu0
    %v4833 = vadd.f32 0.0, %v4832
    %4834 = vdwg.mxu0
    %4835 = vmatprep.subr.mxu0 %v4134
    %4836 = vmatpush1.msra.mxu0 %v4133
    %4837 = vmatprep.subr.mxu0 %v4126
    %4838 = vmatpush1.msra.mxu0 %v4125
    %4839 = vmatprep.subr.mxu0 %v4118
    %4840 = vmatpush1.msra.mxu0 %v4117
    %4841 = vmatprep.subr.mxu0 %v4110
    %4842 = vmatpush1.msra.mxu0 %v4109
    %4843 = vmatprep.subr.mxu0 %v4102
    %4844 = vmatpush1.msra.mxu0 %v4101
    %4845 = vmatprep.subr.mxu0 %v4094
    %4846 = vmatpush1.msra.mxu0 %v4093
    %4847 = vmatprep.subr.mxu0 %v4086
    %4848 = vmatpush1.msra.mxu0 %v4085
    %4849 = vmatprep.subr.mxu0 %v4078
    %4850 = vmatpush1.msra.mxu0 %v4077
    %4851 = vmatprep.subr.mxu0 %v4070
    %4852 = vmatpush1.msra.mxu0 %v4069
    %4853 = vmatprep.subr.mxu0 %v4062
    %4854 = vmatpush1.msra.mxu0 %v4061
    %4855 = vmatprep.subr.mxu0 %v4054
    %4856 = vmatpush1.msra.mxu0 %v4053
    %4857 = vmatprep.subr.mxu0 %v4046
    %4858 = vmatpush1.msra.mxu0 %v4045
    %4859 = vmatprep.subr.mxu0 %v4038
    %4860 = vmatpush1.msra.mxu0 %v4037
    %4861 = vmatprep.subr.mxu0 %v4030
    %4862 = vmatpush1.msra.mxu0 %v4029
    %4863 = vmatprep.subr.mxu0 %v4022
    %4864 = vmatpush1.msra.mxu0 %v4021
    %4865 = vmatprep.subr.mxu0 %v4014
    %4866 = vmatpush1.msra.mxu0 %v4013
    %4867 = vmatprep.subr.mxu0 %v4262
    %4868 = vmatpush2.msra.mxu0 %v4261
    %4869 = vmatprep.subr.mxu0 %v4254
    %4870 = vmatpush2.msra.mxu0 %v4253
    %4871 = vmatprep.subr.mxu0 %v4246
    %4872 = vmatpush2.msra.mxu0 %v4245
    %4873 = vmatprep.subr.mxu0 %v4238
    %4874 = vmatpush2.msra.mxu0 %v4237
    %4875 = vmatprep.subr.mxu0 %v4230
    %4876 = vmatpush2.msra.mxu0 %v4229
    %4877 = vmatprep.subr.mxu0 %v4222
    %4878 = vmatpush2.msra.mxu0 %v4221
    %4879 = vmatprep.subr.mxu0 %v4214
    %4880 = vmatpush2.msra.mxu0 %v4213
    %4881 = vmatprep.subr.mxu0 %v4206
    %4882 = vmatpush2.msra.mxu0 %v4205
    %4883 = vmatprep.subr.mxu0 %v4198
    %4884 = vmatpush2.msra.mxu0 %v4197
    %4885 = vmatprep.subr.mxu0 %v4190
    %4886 = vmatpush2.msra.mxu0 %v4189
    %4887 = vmatprep.subr.mxu0 %v4182
    %4888 = vmatpush2.msra.mxu0 %v4181
    %4889 = vmatprep.subr.mxu0 %v4174
    %4890 = vmatpush2.msra.mxu0 %v4173
    %4891 = vmatprep.subr.mxu0 %v4166
    %4892 = vmatpush2.msra.mxu0 %v4165
    %4893 = vmatprep.subr.mxu0 %v4158
    %4894 = vmatpush2.msra.mxu0 %v4157
    %4895 = vmatprep.subr.mxu0 %v4150
    %4896 = vmatpush2.msra.mxu0 %v4149
    %4897 = vmatprep.subr.mxu0 %v4142
    %4898 = vmatpush2.msra.mxu0 %v4141
    %4899 = vmatprep.mubr.f32.mxu0 %v4610
    %4900 = vmatmul.mubr.f32.gmra.mxu0 %v4609
    %v4901 = vpop.f32.mrf.mxu0
    %v4902 = vadd.f32 0.0, %v4901
    %v4903 = vpop.f32.mrf.mxu0
    %v4904 = vadd.f32 0.0, %v4903
    %4905 = vdwg.mxu0
    %v4906 = vadd.f32 %v4614, %v4689
    %v4907 = vadd.f32 %v4615, %v4691
    %v4908 = vadd.f32 %v4616, %v4760
    %v4909 = vadd.f32 %v4617, %v4762
    %v4910 = vadd.f32 %v4618, %v4831
    %v4911 = vadd.f32 %v4619, %v4833
    %v4912 = vadd.f32 %v4620, %v4902
    %v4913 = vadd.f32 %v4621, %v4904
    %v4914 = vxor.u32 %v4906, 2147483648
    %v4915 = vxor.u32 %v4907, 2147483648
    %v4916 = vmul.f32 %v4914, 1.442695
    %v4917 = vpow.pop %v4916
    %v4918 = vmul.f32 %v4915, 1.442695
    %v4919 = vpow.pop %v4918
    %v4920 = vadd.f32 %v4917, 1.0
    %v4921 = vadd.f32 %v4919, 1.0
    %v4922 = vrcp.pop %v4920
    %v4923 = vmul.f32 1.0, %v4922
    %v4924 = vrcp.pop %v4921
    %v4925 = vmul.f32 1.0, %v4924
    %v4926 = vxor.u32 %v4908, 2147483648
    %v4927 = vxor.u32 %v4909, 2147483648
    %v4928 = vmul.f32 %v4926, 1.442695
    %v4929 = vpow.pop %v4928
    %v4930 = vmul.f32 %v4927, 1.442695
    %v4931 = vpow.pop %v4930
    %v4932 = vadd.f32 %v4929, 1.0
    %v4933 = vadd.f32 %v4931, 1.0
    %v4934 = vrcp.pop %v4932
    %v4935 = vmul.f32 1.0, %v4934
    %v4936 = vrcp.pop %v4933
    %v4937 = vmul.f32 1.0, %v4936
    %v4938 = vtanh.pop %v4910
    %v4939 = vtanh.pop %v4911
    %v4940 = vxor.u32 %v4912, 2147483648
    %v4941 = vxor.u32 %v4913, 2147483648
    %v4942 = vmul.f32 %v4940, 1.442695
    %v4943 = vpow.pop %v4942
    %v4944 = vmul.f32 %v4941, 1.442695
    %v4945 = vpow.pop %v4944
    %v4946 = vadd.f32 %v4943, 1.0
    %v4947 = vadd.f32 %v4945, 1.0
    %v4948 = vrcp.pop %v4946
    %v4949 = vmul.f32 1.0, %v4948
    %v4950 = vrcp.pop %v4947
    %v4951 = vmul.f32 1.0, %v4950
    %v4952 = vmul.f32 %v4935, %v4605
    %v4953 = vmul.f32 %v4937, %v4606
    %v4954 = vmul.f32 %v4923, %v4938
    %v4955 = vmul.f32 %v4925, %v4939
    %v4956 = vadd.f32 %v4952, %v4954
    %v4957 = vadd.f32 %v4953, %v4955
    %v4958 = vtanh.pop %v4956
    %v4959 = vtanh.pop %v4957
    %v4960 = vmul.f32 %v4949, %v4958
    %v4961 = vmul.f32 %v4951, %v4959
    %4962 = vst [vmem:[%s1062] sm:$0xff] %v4960
    %4963 = vst [vmem:[%s1062 + $0x8] sm:$0xff] %v4961
    %s4964 = scalar_lea.vmem [#allocation3], 128
    %v4965 = vld [vmem:[%s4964] sm:$0xff]
    %v4966 = vld [vmem:[%s4964 + $0x8] sm:$0xff]
    %v4967 = vld [vmem:[%s4964 + $0x10] sm:$0xff]
    %v4968 = vld [vmem:[%s4964 + $0x18] sm:$0xff]
    %v4969 = vld [vmem:[%s4964 + $0x20] sm:$0xff]
    %v4970 = vld [vmem:[%s4964 + $0x28] sm:$0xff]
    %v4971 = vld [vmem:[%s4964 + $0x30] sm:$0xff]
    %v4972 = vld [vmem:[%s4964 + $0x38] sm:$0xff]
    %4973 = vmatprep.subr.mxu0 %v4128
    %4974 = vmatpush1.msra.mxu0 %v4127
    %4975 = vmatprep.subr.mxu0 %v4120
    %4976 = vmatpush1.msra.mxu0 %v4119
    %4977 = vmatprep.subr.mxu0 %v4112
    %4978 = vmatpush1.msra.mxu0 %v4111
    %4979 = vmatprep.subr.mxu0 %v4104
    %4980 = vmatpush1.msra.mxu0 %v4103
    %4981 = vmatprep.subr.mxu0 %v4096
    %4982 = vmatpush1.msra.mxu0 %v4095
    %4983 = vmatprep.subr.mxu0 %v4088
    %4984 = vmatpush1.msra.mxu0 %v4087
    %4985 = vmatprep.subr.mxu0 %v4080
    %4986 = vmatpush1.msra.mxu0 %v4079
    %4987 = vmatprep.subr.mxu0 %v4072
    %4988 = vmatpush1.msra.mxu0 %v4071
    %4989 = vmatprep.subr.mxu0 %v4064
    %4990 = vmatpush1.msra.mxu0 %v4063
    %4991 = vmatprep.subr.mxu0 %v4056
    %4992 = vmatpush1.msra.mxu0 %v4055
    %4993 = vmatprep.subr.mxu0 %v4048
    %4994 = vmatpush1.msra.mxu0 %v4047
    %4995 = vmatprep.subr.mxu0 %v4040
    %4996 = vmatpush1.msra.mxu0 %v4039
    %4997 = vmatprep.subr.mxu0 %v4032
    %4998 = vmatpush1.msra.mxu0 %v4031
    %4999 = vmatprep.subr.mxu0 %v4024
    %5000 = vmatpush1.msra.mxu0 %v4023
    %5001 = vmatprep.subr.mxu0 %v4016
    %5002 = vmatpush1.msra.mxu0 %v4015
    %5003 = vmatprep.subr.mxu0 %v4008
    %5004 = vmatpush1.msra.mxu0 %v4007
    %5005 = vmatprep.subr.mxu0 %v4256
    %5006 = vmatpush2.msra.mxu0 %v4255
    %5007 = vmatprep.subr.mxu0 %v4248
    %5008 = vmatpush2.msra.mxu0 %v4247
    %5009 = vmatprep.subr.mxu0 %v4240
    %5010 = vmatpush2.msra.mxu0 %v4239
    %5011 = vmatprep.subr.mxu0 %v4232
    %5012 = vmatpush2.msra.mxu0 %v4231
    %5013 = vmatprep.subr.mxu0 %v4224
    %5014 = vmatpush2.msra.mxu0 %v4223
    %5015 = vmatprep.subr.mxu0 %v4216
    %5016 = vmatpush2.msra.mxu0 %v4215
    %5017 = vmatprep.subr.mxu0 %v4208
    %5018 = vmatpush2.msra.mxu0 %v4207
    %5019 = vmatprep.subr.mxu0 %v4200
    %5020 = vmatpush2.msra.mxu0 %v4199
    %5021 = vmatprep.subr.mxu0 %v4192
    %5022 = vmatpush2.msra.mxu0 %v4191
    %5023 = vmatprep.subr.mxu0 %v4184
    %5024 = vmatpush2.msra.mxu0 %v4183
    %5025 = vmatprep.subr.mxu0 %v4176
    %5026 = vmatpush2.msra.mxu0 %v4175
    %5027 = vmatprep.subr.mxu0 %v4168
    %5028 = vmatpush2.msra.mxu0 %v4167
    %5029 = vmatprep.subr.mxu0 %v4160
    %5030 = vmatpush2.msra.mxu0 %v4159
    %5031 = vmatprep.subr.mxu0 %v4152
    %5032 = vmatpush2.msra.mxu0 %v4151
    %5033 = vmatprep.subr.mxu0 %v4144
    %5034 = vmatpush2.msra.mxu0 %v4143
    %5035 = vmatprep.subr.mxu0 %v4136
    %5036 = vmatpush2.msra.mxu0 %v4135
    %5037 = vmatprep.mubr.f32.mxu0 %v4961
    %5038 = vmatmul.mubr.f32.gmra.mxu0 %v4960
    %v5039 = vpop.f32.mrf.mxu0
    %v5040 = vadd.f32 0.0, %v5039
    %v5041 = vpop.f32.mrf.mxu0
    %v5042 = vadd.f32 0.0, %v5041
    %5043 = vdwg.mxu0
    %5044 = vmatprep.subr.mxu0 %v4130
    %5045 = vmatpush1.msra.mxu0 %v4129
    %5046 = vmatprep.subr.mxu0 %v4122
    %5047 = vmatpush1.msra.mxu0 %v4121
    %5048 = vmatprep.subr.mxu0 %v4114
    %5049 = vmatpush1.msra.mxu0 %v4113
    %5050 = vmatprep.subr.mxu0 %v4106
    %5051 = vmatpush1.msra.mxu0 %v4105
    %5052 = vmatprep.subr.mxu0 %v4098
    %5053 = vmatpush1.msra.mxu0 %v4097
    %5054 = vmatprep.subr.mxu0 %v4090
    %5055 = vmatpush1.msra.mxu0 %v4089
    %5056 = vmatprep.subr.mxu0 %v4082
    %5057 = vmatpush1.msra.mxu0 %v4081
    %5058 = vmatprep.subr.mxu0 %v4074
    %5059 = vmatpush1.msra.mxu0 %v4073
    %5060 = vmatprep.subr.mxu0 %v4066
    %5061 = vmatpush1.msra.mxu0 %v4065
    %5062 = vmatprep.subr.mxu0 %v4058
    %5063 = vmatpush1.msra.mxu0 %v4057
    %5064 = vmatprep.subr.mxu0 %v4050
    %5065 = vmatpush1.msra.mxu0 %v4049
    %5066 = vmatprep.subr.mxu0 %v4042
    %5067 = vmatpush1.msra.mxu0 %v4041
    %5068 = vmatprep.subr.mxu0 %v4034
    %5069 = vmatpush1.msra.mxu0 %v4033
    %5070 = vmatprep.subr.mxu0 %v4026
    %5071 = vmatpush1.msra.mxu0 %v4025
    %5072 = vmatprep.subr.mxu0 %v4018
    %5073 = vmatpush1.msra.mxu0 %v4017
    %5074 = vmatprep.subr.mxu0 %v4010
    %5075 = vmatpush1.msra.mxu0 %v4009
    %5076 = vmatprep.subr.mxu0 %v4258
    %5077 = vmatpush2.msra.mxu0 %v4257
    %5078 = vmatprep.subr.mxu0 %v4250
    %5079 = vmatpush2.msra.mxu0 %v4249
    %5080 = vmatprep.subr.mxu0 %v4242
    %5081 = vmatpush2.msra.mxu0 %v4241
    %5082 = vmatprep.subr.mxu0 %v4234
    %5083 = vmatpush2.msra.mxu0 %v4233
    %5084 = vmatprep.subr.mxu0 %v4226
    %5085 = vmatpush2.msra.mxu0 %v4225
    %5086 = vmatprep.subr.mxu0 %v4218
    %5087 = vmatpush2.msra.mxu0 %v4217
    %5088 = vmatprep.subr.mxu0 %v4210
    %5089 = vmatpush2.msra.mxu0 %v4209
    %5090 = vmatprep.subr.mxu0 %v4202
    %5091 = vmatpush2.msra.mxu0 %v4201
    %5092 = vmatprep.subr.mxu0 %v4194
    %5093 = vmatpush2.msra.mxu0 %v4193
    %5094 = vmatprep.subr.mxu0 %v4186
    %5095 = vmatpush2.msra.mxu0 %v4185
    %5096 = vmatprep.subr.mxu0 %v4178
    %5097 = vmatpush2.msra.mxu0 %v4177
    %5098 = vmatprep.subr.mxu0 %v4170
    %5099 = vmatpush2.msra.mxu0 %v4169
    %5100 = vmatprep.subr.mxu0 %v4162
    %5101 = vmatpush2.msra.mxu0 %v4161
    %5102 = vmatprep.subr.mxu0 %v4154
    %5103 = vmatpush2.msra.mxu0 %v4153
    %5104 = vmatprep.subr.mxu0 %v4146
    %5105 = vmatpush2.msra.mxu0 %v4145
    %5106 = vmatprep.subr.mxu0 %v4138
    %5107 = vmatpush2.msra.mxu0 %v4137
    %5108 = vmatprep.mubr.f32.mxu0 %v4961
    %5109 = vmatmul.mubr.f32.gmra.mxu0 %v4960
    %v5110 = vpop.f32.mrf.mxu0
    %v5111 = vadd.f32 0.0, %v5110
    %v5112 = vpop.f32.mrf.mxu0
    %v5113 = vadd.f32 0.0, %v5112
    %5114 = vdwg.mxu0
    %5115 = vmatprep.subr.mxu0 %v4132
    %5116 = vmatpush1.msra.mxu0 %v4131
    %5117 = vmatprep.subr.mxu0 %v4124
    %5118 = vmatpush1.msra.mxu0 %v4123
    %5119 = vmatprep.subr.mxu0 %v4116
    %5120 = vmatpush1.msra.mxu0 %v4115
    %5121 = vmatprep.subr.mxu0 %v4108
    %5122 = vmatpush1.msra.mxu0 %v4107
    %5123 = vmatprep.subr.mxu0 %v4100
    %5124 = vmatpush1.msra.mxu0 %v4099
    %5125 = vmatprep.subr.mxu0 %v4092
    %5126 = vmatpush1.msra.mxu0 %v4091
    %5127 = vmatprep.subr.mxu0 %v4084
    %5128 = vmatpush1.msra.mxu0 %v4083
    %5129 = vmatprep.subr.mxu0 %v4076
    %5130 = vmatpush1.msra.mxu0 %v4075
    %5131 = vmatprep.subr.mxu0 %v4068
    %5132 = vmatpush1.msra.mxu0 %v4067
    %5133 = vmatprep.subr.mxu0 %v4060
    %5134 = vmatpush1.msra.mxu0 %v4059
    %5135 = vmatprep.subr.mxu0 %v4052
    %5136 = vmatpush1.msra.mxu0 %v4051
    %5137 = vmatprep.subr.mxu0 %v4044
    %5138 = vmatpush1.msra.mxu0 %v4043
    %5139 = vmatprep.subr.mxu0 %v4036
    %5140 = vmatpush1.msra.mxu0 %v4035
    %5141 = vmatprep.subr.mxu0 %v4028
    %5142 = vmatpush1.msra.mxu0 %v4027
    %5143 = vmatprep.subr.mxu0 %v4020
    %5144 = vmatpush1.msra.mxu0 %v4019
    %5145 = vmatprep.subr.mxu0 %v4012
    %5146 = vmatpush1.msra.mxu0 %v4011
    %5147 = vmatprep.subr.mxu0 %v4260
    %5148 = vmatpush2.msra.mxu0 %v4259
    %5149 = vmatprep.subr.mxu0 %v4252
    %5150 = vmatpush2.msra.mxu0 %v4251
    %5151 = vmatprep.subr.mxu0 %v4244
    %5152 = vmatpush2.msra.mxu0 %v4243
    %5153 = vmatprep.subr.mxu0 %v4236
    %5154 = vmatpush2.msra.mxu0 %v4235
    %5155 = vmatprep.subr.mxu0 %v4228
    %5156 = vmatpush2.msra.mxu0 %v4227
    %5157 = vmatprep.subr.mxu0 %v4220
    %5158 = vmatpush2.msra.mxu0 %v4219
    %5159 = vmatprep.subr.mxu0 %v4212
    %5160 = vmatpush2.msra.mxu0 %v4211
    %5161 = vmatprep.subr.mxu0 %v4204
    %5162 = vmatpush2.msra.mxu0 %v4203
    %5163 = vmatprep.subr.mxu0 %v4196
    %5164 = vmatpush2.msra.mxu0 %v4195
    %5165 = vmatprep.subr.mxu0 %v4188
    %5166 = vmatpush2.msra.mxu0 %v4187
    %5167 = vmatprep.subr.mxu0 %v4180
    %5168 = vmatpush2.msra.mxu0 %v4179
    %5169 = vmatprep.subr.mxu0 %v4172
    %5170 = vmatpush2.msra.mxu0 %v4171
    %5171 = vmatprep.subr.mxu0 %v4164
    %5172 = vmatpush2.msra.mxu0 %v4163
    %5173 = vmatprep.subr.mxu0 %v4156
    %5174 = vmatpush2.msra.mxu0 %v4155
    %5175 = vmatprep.subr.mxu0 %v4148
    %5176 = vmatpush2.msra.mxu0 %v4147
    %5177 = vmatprep.subr.mxu0 %v4140
    %5178 = vmatpush2.msra.mxu0 %v4139
    %5179 = vmatprep.mubr.f32.mxu0 %v4961
    %5180 = vmatmul.mubr.f32.gmra.mxu0 %v4960
    %v5181 = vpop.f32.mrf.mxu0
    %v5182 = vadd.f32 0.0, %v5181
    %v5183 = vpop.f32.mrf.mxu0
    %v5184 = vadd.f32 0.0, %v5183
    %5185 = vdwg.mxu0
    %5186 = vmatprep.subr.mxu0 %v4134
    %5187 = vmatpush1.msra.mxu0 %v4133
    %5188 = vmatprep.subr.mxu0 %v4126
    %5189 = vmatpush1.msra.mxu0 %v4125
    %5190 = vmatprep.subr.mxu0 %v4118
    %5191 = vmatpush1.msra.mxu0 %v4117
    %5192 = vmatprep.subr.mxu0 %v4110
    %5193 = vmatpush1.msra.mxu0 %v4109
    %5194 = vmatprep.subr.mxu0 %v4102
    %5195 = vmatpush1.msra.mxu0 %v4101
    %5196 = vmatprep.subr.mxu0 %v4094
    %5197 = vmatpush1.msra.mxu0 %v4093
    %5198 = vmatprep.subr.mxu0 %v4086
    %5199 = vmatpush1.msra.mxu0 %v4085
    %5200 = vmatprep.subr.mxu0 %v4078
    %5201 = vmatpush1.msra.mxu0 %v4077
    %5202 = vmatprep.subr.mxu0 %v4070
    %5203 = vmatpush1.msra.mxu0 %v4069
    %5204 = vmatprep.subr.mxu0 %v4062
    %5205 = vmatpush1.msra.mxu0 %v4061
    %5206 = vmatprep.subr.mxu0 %v4054
    %5207 = vmatpush1.msra.mxu0 %v4053
    %5208 = vmatprep.subr.mxu0 %v4046
    %5209 = vmatpush1.msra.mxu0 %v4045
    %5210 = vmatprep.subr.mxu0 %v4038
    %5211 = vmatpush1.msra.mxu0 %v4037
    %5212 = vmatprep.subr.mxu0 %v4030
    %5213 = vmatpush1.msra.mxu0 %v4029
    %5214 = vmatprep.subr.mxu0 %v4022
    %5215 = vmatpush1.msra.mxu0 %v4021
    %5216 = vmatprep.subr.mxu0 %v4014
    %5217 = vmatpush1.msra.mxu0 %v4013
    %5218 = vmatprep.subr.mxu0 %v4262
    %5219 = vmatpush2.msra.mxu0 %v4261
    %5220 = vmatprep.subr.mxu0 %v4254
    %5221 = vmatpush2.msra.mxu0 %v4253
    %5222 = vmatprep.subr.mxu0 %v4246
    %5223 = vmatpush2.msra.mxu0 %v4245
    %5224 = vmatprep.subr.mxu0 %v4238
    %5225 = vmatpush2.msra.mxu0 %v4237
    %5226 = vmatprep.subr.mxu0 %v4230
    %5227 = vmatpush2.msra.mxu0 %v4229
    %5228 = vmatprep.subr.mxu0 %v4222
    %5229 = vmatpush2.msra.mxu0 %v4221
    %5230 = vmatprep.subr.mxu0 %v4214
    %5231 = vmatpush2.msra.mxu0 %v4213
    %5232 = vmatprep.subr.mxu0 %v4206
    %5233 = vmatpush2.msra.mxu0 %v4205
    %5234 = vmatprep.subr.mxu0 %v4198
    %5235 = vmatpush2.msra.mxu0 %v4197
    %5236 = vmatprep.subr.mxu0 %v4190
    %5237 = vmatpush2.msra.mxu0 %v4189
    %5238 = vmatprep.subr.mxu0 %v4182
    %5239 = vmatpush2.msra.mxu0 %v4181
    %5240 = vmatprep.subr.mxu0 %v4174
    %5241 = vmatpush2.msra.mxu0 %v4173
    %5242 = vmatprep.subr.mxu0 %v4166
    %5243 = vmatpush2.msra.mxu0 %v4165
    %5244 = vmatprep.subr.mxu0 %v4158
    %5245 = vmatpush2.msra.mxu0 %v4157
    %5246 = vmatprep.subr.mxu0 %v4150
    %5247 = vmatpush2.msra.mxu0 %v4149
    %5248 = vmatprep.subr.mxu0 %v4142
    %5249 = vmatpush2.msra.mxu0 %v4141
    %5250 = vmatprep.mubr.f32.mxu0 %v4961
    %5251 = vmatmul.mubr.f32.gmra.mxu0 %v4960
    %v5252 = vpop.f32.mrf.mxu0
    %v5253 = vadd.f32 0.0, %v5252
    %v5254 = vpop.f32.mrf.mxu0
    %v5255 = vadd.f32 0.0, %v5254
    %5256 = vdwg.mxu0
    %v5257 = vadd.f32 %v4965, %v5040
    %v5258 = vadd.f32 %v4966, %v5042
    %v5259 = vadd.f32 %v4967, %v5111
    %v5260 = vadd.f32 %v4968, %v5113
    %v5261 = vadd.f32 %v4969, %v5182
    %v5262 = vadd.f32 %v4970, %v5184
    %v5263 = vadd.f32 %v4971, %v5253
    %v5264 = vadd.f32 %v4972, %v5255
    %v5265 = vxor.u32 %v5257, 2147483648
    %v5266 = vxor.u32 %v5258, 2147483648
    %v5267 = vmul.f32 %v5265, 1.442695
    %v5268 = vpow.pop %v5267
    %v5269 = vmul.f32 %v5266, 1.442695
    %v5270 = vpow.pop %v5269
    %v5271 = vadd.f32 %v5268, 1.0
    %v5272 = vadd.f32 %v5270, 1.0
    %v5273 = vrcp.pop %v5271
    %v5274 = vmul.f32 1.0, %v5273
    %v5275 = vrcp.pop %v5272
    %v5276 = vmul.f32 1.0, %v5275
    %v5277 = vxor.u32 %v5259, 2147483648
    %v5278 = vxor.u32 %v5260, 2147483648
    %v5279 = vmul.f32 %v5277, 1.442695
    %v5280 = vpow.pop %v5279
    %v5281 = vmul.f32 %v5278, 1.442695
    %v5282 = vpow.pop %v5281
    %v5283 = vadd.f32 %v5280, 1.0
    %v5284 = vadd.f32 %v5282, 1.0
    %v5285 = vrcp.pop %v5283
    %v5286 = vmul.f32 1.0, %v5285
    %v5287 = vrcp.pop %v5284
    %v5288 = vmul.f32 1.0, %v5287
    %v5289 = vtanh.pop %v5261
    %v5290 = vtanh.pop %v5262
    %v5291 = vxor.u32 %v5263, 2147483648
    %v5292 = vxor.u32 %v5264, 2147483648
    %v5293 = vmul.f32 %v5291, 1.442695
    %v5294 = vpow.pop %v5293
    %v5295 = vmul.f32 %v5292, 1.442695
    %v5296 = vpow.pop %v5295
    %v5297 = vadd.f32 %v5294, 1.0
    %v5298 = vadd.f32 %v5296, 1.0
    %v5299 = vrcp.pop %v5297
    %v5300 = vmul.f32 1.0, %v5299
    %v5301 = vrcp.pop %v5298
    %v5302 = vmul.f32 1.0, %v5301
    %v5303 = vmul.f32 %v5286, %v4956
    %v5304 = vmul.f32 %v5288, %v4957
    %v5305 = vmul.f32 %v5274, %v5289
    %v5306 = vmul.f32 %v5276, %v5290
    %v5307 = vadd.f32 %v5303, %v5305
    %v5308 = vadd.f32 %v5304, %v5306
    %v5309 = vtanh.pop %v5307
    %v5310 = vtanh.pop %v5308
    %v5311 = vmul.f32 %v5300, %v5309
    %v5312 = vmul.f32 %v5302, %v5310
    %5313 = vst [vmem:[%s1414] sm:$0xff] %v5311
    %5314 = vst [vmem:[%s1414 + $0x8] sm:$0xff] %v5312
    %s5315 = scalar_lea.vmem [#allocation3], 192
    %v5316 = vld [vmem:[%s5315] sm:$0xff]
    %v5317 = vld [vmem:[%s5315 + $0x8] sm:$0xff]
    %v5318 = vld [vmem:[%s5315 + $0x10] sm:$0xff]
    %v5319 = vld [vmem:[%s5315 + $0x18] sm:$0xff]
    %v5320 = vld [vmem:[%s5315 + $0x20] sm:$0xff]
    %v5321 = vld [vmem:[%s5315 + $0x28] sm:$0xff]
    %v5322 = vld [vmem:[%s5315 + $0x30] sm:$0xff]
    %v5323 = vld [vmem:[%s5315 + $0x38] sm:$0xff]
    %5324 = vmatprep.subr.mxu0 %v4128
    %5325 = vmatpush1.msra.mxu0 %v4127
    %5326 = vmatprep.subr.mxu0 %v4120
    %5327 = vmatpush1.msra.mxu0 %v4119
    %5328 = vmatprep.subr.mxu0 %v4112
    %5329 = vmatpush1.msra.mxu0 %v4111
    %5330 = vmatprep.subr.mxu0 %v4104
    %5331 = vmatpush1.msra.mxu0 %v4103
    %5332 = vmatprep.subr.mxu0 %v4096
    %5333 = vmatpush1.msra.mxu0 %v4095
    %5334 = vmatprep.subr.mxu0 %v4088
    %5335 = vmatpush1.msra.mxu0 %v4087
    %5336 = vmatprep.subr.mxu0 %v4080
    %5337 = vmatpush1.msra.mxu0 %v4079
    %5338 = vmatprep.subr.mxu0 %v4072
    %5339 = vmatpush1.msra.mxu0 %v4071
    %5340 = vmatprep.subr.mxu0 %v4064
    %5341 = vmatpush1.msra.mxu0 %v4063
    %5342 = vmatprep.subr.mxu0 %v4056
    %5343 = vmatpush1.msra.mxu0 %v4055
    %5344 = vmatprep.subr.mxu0 %v4048
    %5345 = vmatpush1.msra.mxu0 %v4047
    %5346 = vmatprep.subr.mxu0 %v4040
    %5347 = vmatpush1.msra.mxu0 %v4039
    %5348 = vmatprep.subr.mxu0 %v4032
    %5349 = vmatpush1.msra.mxu0 %v4031
    %5350 = vmatprep.subr.mxu0 %v4024
    %5351 = vmatpush1.msra.mxu0 %v4023
    %5352 = vmatprep.subr.mxu0 %v4016
    %5353 = vmatpush1.msra.mxu0 %v4015
    %5354 = vmatprep.subr.mxu0 %v4008
    %5355 = vmatpush1.msra.mxu0 %v4007
    %5356 = vmatprep.subr.mxu0 %v4256
    %5357 = vmatpush2.msra.mxu0 %v4255
    %5358 = vmatprep.subr.mxu0 %v4248
    %5359 = vmatpush2.msra.mxu0 %v4247
    %5360 = vmatprep.subr.mxu0 %v4240
    %5361 = vmatpush2.msra.mxu0 %v4239
    %5362 = vmatprep.subr.mxu0 %v4232
    %5363 = vmatpush2.msra.mxu0 %v4231
    %5364 = vmatprep.subr.mxu0 %v4224
    %5365 = vmatpush2.msra.mxu0 %v4223
    %5366 = vmatprep.subr.mxu0 %v4216
    %5367 = vmatpush2.msra.mxu0 %v4215
    %5368 = vmatprep.subr.mxu0 %v4208
    %5369 = vmatpush2.msra.mxu0 %v4207
    %5370 = vmatprep.subr.mxu0 %v4200
    %5371 = vmatpush2.msra.mxu0 %v4199
    %5372 = vmatprep.subr.mxu0 %v4192
    %5373 = vmatpush2.msra.mxu0 %v4191
    %5374 = vmatprep.subr.mxu0 %v4184
    %5375 = vmatpush2.msra.mxu0 %v4183
    %5376 = vmatprep.subr.mxu0 %v4176
    %5377 = vmatpush2.msra.mxu0 %v4175
    %5378 = vmatprep.subr.mxu0 %v4168
    %5379 = vmatpush2.msra.mxu0 %v4167
    %5380 = vmatprep.subr.mxu0 %v4160
    %5381 = vmatpush2.msra.mxu0 %v4159
    %5382 = vmatprep.subr.mxu0 %v4152
    %5383 = vmatpush2.msra.mxu0 %v4151
    %5384 = vmatprep.subr.mxu0 %v4144
    %5385 = vmatpush2.msra.mxu0 %v4143
    %5386 = vmatprep.subr.mxu0 %v4136
    %5387 = vmatpush2.msra.mxu0 %v4135
    %5388 = vmatprep.mubr.f32.mxu0 %v5312
    %5389 = vmatmul.mubr.f32.gmra.mxu0 %v5311
    %v5390 = vpop.f32.mrf.mxu0
    %v5391 = vadd.f32 0.0, %v5390
    %v5392 = vpop.f32.mrf.mxu0
    %v5393 = vadd.f32 0.0, %v5392
    %5394 = vdwg.mxu0
    %5395 = vmatprep.subr.mxu0 %v4130
    %5396 = vmatpush1.msra.mxu0 %v4129
    %5397 = vmatprep.subr.mxu0 %v4122
    %5398 = vmatpush1.msra.mxu0 %v4121
    %5399 = vmatprep.subr.mxu0 %v4114
    %5400 = vmatpush1.msra.mxu0 %v4113
    %5401 = vmatprep.subr.mxu0 %v4106
    %5402 = vmatpush1.msra.mxu0 %v4105
    %5403 = vmatprep.subr.mxu0 %v4098
    %5404 = vmatpush1.msra.mxu0 %v4097
    %5405 = vmatprep.subr.mxu0 %v4090
    %5406 = vmatpush1.msra.mxu0 %v4089
    %5407 = vmatprep.subr.mxu0 %v4082
    %5408 = vmatpush1.msra.mxu0 %v4081
    %5409 = vmatprep.subr.mxu0 %v4074
    %5410 = vmatpush1.msra.mxu0 %v4073
    %5411 = vmatprep.subr.mxu0 %v4066
    %5412 = vmatpush1.msra.mxu0 %v4065
    %5413 = vmatprep.subr.mxu0 %v4058
    %5414 = vmatpush1.msra.mxu0 %v4057
    %5415 = vmatprep.subr.mxu0 %v4050
    %5416 = vmatpush1.msra.mxu0 %v4049
    %5417 = vmatprep.subr.mxu0 %v4042
    %5418 = vmatpush1.msra.mxu0 %v4041
    %5419 = vmatprep.subr.mxu0 %v4034
    %5420 = vmatpush1.msra.mxu0 %v4033
    %5421 = vmatprep.subr.mxu0 %v4026
    %5422 = vmatpush1.msra.mxu0 %v4025
    %5423 = vmatprep.subr.mxu0 %v4018
    %5424 = vmatpush1.msra.mxu0 %v4017
    %5425 = vmatprep.subr.mxu0 %v4010
    %5426 = vmatpush1.msra.mxu0 %v4009
    %5427 = vmatprep.subr.mxu0 %v4258
    %5428 = vmatpush2.msra.mxu0 %v4257
    %5429 = vmatprep.subr.mxu0 %v4250
    %5430 = vmatpush2.msra.mxu0 %v4249
    %5431 = vmatprep.subr.mxu0 %v4242
    %5432 = vmatpush2.msra.mxu0 %v4241
    %5433 = vmatprep.subr.mxu0 %v4234
    %5434 = vmatpush2.msra.mxu0 %v4233
    %5435 = vmatprep.subr.mxu0 %v4226
    %5436 = vmatpush2.msra.mxu0 %v4225
    %5437 = vmatprep.subr.mxu0 %v4218
    %5438 = vmatpush2.msra.mxu0 %v4217
    %5439 = vmatprep.subr.mxu0 %v4210
    %5440 = vmatpush2.msra.mxu0 %v4209
    %5441 = vmatprep.subr.mxu0 %v4202
    %5442 = vmatpush2.msra.mxu0 %v4201
    %5443 = vmatprep.subr.mxu0 %v4194
    %5444 = vmatpush2.msra.mxu0 %v4193
    %5445 = vmatprep.subr.mxu0 %v4186
    %5446 = vmatpush2.msra.mxu0 %v4185
    %5447 = vmatprep.subr.mxu0 %v4178
    %5448 = vmatpush2.msra.mxu0 %v4177
    %5449 = vmatprep.subr.mxu0 %v4170
    %5450 = vmatpush2.msra.mxu0 %v4169
    %5451 = vmatprep.subr.mxu0 %v4162
    %5452 = vmatpush2.msra.mxu0 %v4161
    %5453 = vmatprep.subr.mxu0 %v4154
    %5454 = vmatpush2.msra.mxu0 %v4153
    %5455 = vmatprep.subr.mxu0 %v4146
    %5456 = vmatpush2.msra.mxu0 %v4145
    %5457 = vmatprep.subr.mxu0 %v4138
    %5458 = vmatpush2.msra.mxu0 %v4137
    %5459 = vmatprep.mubr.f32.mxu0 %v5312
    %5460 = vmatmul.mubr.f32.gmra.mxu0 %v5311
    %v5461 = vpop.f32.mrf.mxu0
    %v5462 = vadd.f32 0.0, %v5461
    %v5463 = vpop.f32.mrf.mxu0
    %v5464 = vadd.f32 0.0, %v5463
    %5465 = vdwg.mxu0
    %5466 = vmatprep.subr.mxu0 %v4132
    %5467 = vmatpush1.msra.mxu0 %v4131
    %5468 = vmatprep.subr.mxu0 %v4124
    %5469 = vmatpush1.msra.mxu0 %v4123
    %5470 = vmatprep.subr.mxu0 %v4116
    %5471 = vmatpush1.msra.mxu0 %v4115
    %5472 = vmatprep.subr.mxu0 %v4108
    %5473 = vmatpush1.msra.mxu0 %v4107
    %5474 = vmatprep.subr.mxu0 %v4100
    %5475 = vmatpush1.msra.mxu0 %v4099
    %5476 = vmatprep.subr.mxu0 %v4092
    %5477 = vmatpush1.msra.mxu0 %v4091
    %5478 = vmatprep.subr.mxu0 %v4084
    %5479 = vmatpush1.msra.mxu0 %v4083
    %5480 = vmatprep.subr.mxu0 %v4076
    %5481 = vmatpush1.msra.mxu0 %v4075
    %5482 = vmatprep.subr.mxu0 %v4068
    %5483 = vmatpush1.msra.mxu0 %v4067
    %5484 = vmatprep.subr.mxu0 %v4060
    %5485 = vmatpush1.msra.mxu0 %v4059
    %5486 = vmatprep.subr.mxu0 %v4052
    %5487 = vmatpush1.msra.mxu0 %v4051
    %5488 = vmatprep.subr.mxu0 %v4044
    %5489 = vmatpush1.msra.mxu0 %v4043
    %5490 = vmatprep.subr.mxu0 %v4036
    %5491 = vmatpush1.msra.mxu0 %v4035
    %5492 = vmatprep.subr.mxu0 %v4028
    %5493 = vmatpush1.msra.mxu0 %v4027
    %5494 = vmatprep.subr.mxu0 %v4020
    %5495 = vmatpush1.msra.mxu0 %v4019
    %5496 = vmatprep.subr.mxu0 %v4012
    %5497 = vmatpush1.msra.mxu0 %v4011
    %5498 = vmatprep.subr.mxu0 %v4260
    %5499 = vmatpush2.msra.mxu0 %v4259
    %5500 = vmatprep.subr.mxu0 %v4252
    %5501 = vmatpush2.msra.mxu0 %v4251
    %5502 = vmatprep.subr.mxu0 %v4244
    %5503 = vmatpush2.msra.mxu0 %v4243
    %5504 = vmatprep.subr.mxu0 %v4236
    %5505 = vmatpush2.msra.mxu0 %v4235
    %5506 = vmatprep.subr.mxu0 %v4228
    %5507 = vmatpush2.msra.mxu0 %v4227
    %5508 = vmatprep.subr.mxu0 %v4220
    %5509 = vmatpush2.msra.mxu0 %v4219
    %5510 = vmatprep.subr.mxu0 %v4212
    %5511 = vmatpush2.msra.mxu0 %v4211
    %5512 = vmatprep.subr.mxu0 %v4204
    %5513 = vmatpush2.msra.mxu0 %v4203
    %5514 = vmatprep.subr.mxu0 %v4196
    %5515 = vmatpush2.msra.mxu0 %v4195
    %5516 = vmatprep.subr.mxu0 %v4188
    %5517 = vmatpush2.msra.mxu0 %v4187
    %5518 = vmatprep.subr.mxu0 %v4180
    %5519 = vmatpush2.msra.mxu0 %v4179
    %5520 = vmatprep.subr.mxu0 %v4172
    %5521 = vmatpush2.msra.mxu0 %v4171
    %5522 = vmatprep.subr.mxu0 %v4164
    %5523 = vmatpush2.msra.mxu0 %v4163
    %5524 = vmatprep.subr.mxu0 %v4156
    %5525 = vmatpush2.msra.mxu0 %v4155
    %5526 = vmatprep.subr.mxu0 %v4148
    %5527 = vmatpush2.msra.mxu0 %v4147
    %5528 = vmatprep.subr.mxu0 %v4140
    %5529 = vmatpush2.msra.mxu0 %v4139
    %5530 = vmatprep.mubr.f32.mxu0 %v5312
    %5531 = vmatmul.mubr.f32.gmra.mxu0 %v5311
    %v5532 = vpop.f32.mrf.mxu0
    %v5533 = vadd.f32 0.0, %v5532
    %v5534 = vpop.f32.mrf.mxu0
    %v5535 = vadd.f32 0.0, %v5534
    %5536 = vdwg.mxu0
    %5537 = vmatprep.subr.mxu0 %v4134
    %5538 = vmatpush1.msra.mxu0 %v4133
    %5539 = vmatprep.subr.mxu0 %v4126
    %5540 = vmatpush1.msra.mxu0 %v4125
    %5541 = vmatprep.subr.mxu0 %v4118
    %5542 = vmatpush1.msra.mxu0 %v4117
    %5543 = vmatprep.subr.mxu0 %v4110
    %5544 = vmatpush1.msra.mxu0 %v4109
    %5545 = vmatprep.subr.mxu0 %v4102
    %5546 = vmatpush1.msra.mxu0 %v4101
    %5547 = vmatprep.subr.mxu0 %v4094
    %5548 = vmatpush1.msra.mxu0 %v4093
    %5549 = vmatprep.subr.mxu0 %v4086
    %5550 = vmatpush1.msra.mxu0 %v4085
    %5551 = vmatprep.subr.mxu0 %v4078
    %5552 = vmatpush1.msra.mxu0 %v4077
    %5553 = vmatprep.subr.mxu0 %v4070
    %5554 = vmatpush1.msra.mxu0 %v4069
    %5555 = vmatprep.subr.mxu0 %v4062
    %5556 = vmatpush1.msra.mxu0 %v4061
    %5557 = vmatprep.subr.mxu0 %v4054
    %5558 = vmatpush1.msra.mxu0 %v4053
    %5559 = vmatprep.subr.mxu0 %v4046
    %5560 = vmatpush1.msra.mxu0 %v4045
    %5561 = vmatprep.subr.mxu0 %v4038
    %5562 = vmatpush1.msra.mxu0 %v4037
    %5563 = vmatprep.subr.mxu0 %v4030
    %5564 = vmatpush1.msra.mxu0 %v4029
    %5565 = vmatprep.subr.mxu0 %v4022
    %5566 = vmatpush1.msra.mxu0 %v4021
    %5567 = vmatprep.subr.mxu0 %v4014
    %5568 = vmatpush1.msra.mxu0 %v4013
    %5569 = vmatprep.subr.mxu0 %v4262
    %5570 = vmatpush2.msra.mxu0 %v4261
    %5571 = vmatprep.subr.mxu0 %v4254
    %5572 = vmatpush2.msra.mxu0 %v4253
    %5573 = vmatprep.subr.mxu0 %v4246
    %5574 = vmatpush2.msra.mxu0 %v4245
    %5575 = vmatprep.subr.mxu0 %v4238
    %5576 = vmatpush2.msra.mxu0 %v4237
    %5577 = vmatprep.subr.mxu0 %v4230
    %5578 = vmatpush2.msra.mxu0 %v4229
    %5579 = vmatprep.subr.mxu0 %v4222
    %5580 = vmatpush2.msra.mxu0 %v4221
    %5581 = vmatprep.subr.mxu0 %v4214
    %5582 = vmatpush2.msra.mxu0 %v4213
    %5583 = vmatprep.subr.mxu0 %v4206
    %5584 = vmatpush2.msra.mxu0 %v4205
    %5585 = vmatprep.subr.mxu0 %v4198
    %5586 = vmatpush2.msra.mxu0 %v4197
    %5587 = vmatprep.subr.mxu0 %v4190
    %5588 = vmatpush2.msra.mxu0 %v4189
    %5589 = vmatprep.subr.mxu0 %v4182
    %5590 = vmatpush2.msra.mxu0 %v4181
    %5591 = vmatprep.subr.mxu0 %v4174
    %5592 = vmatpush2.msra.mxu0 %v4173
    %5593 = vmatprep.subr.mxu0 %v4166
    %5594 = vmatpush2.msra.mxu0 %v4165
    %5595 = vmatprep.subr.mxu0 %v4158
    %5596 = vmatpush2.msra.mxu0 %v4157
    %5597 = vmatprep.subr.mxu0 %v4150
    %5598 = vmatpush2.msra.mxu0 %v4149
    %5599 = vmatprep.subr.mxu0 %v4142
    %5600 = vmatpush2.msra.mxu0 %v4141
    %5601 = vmatprep.mubr.f32.mxu0 %v5312
    %5602 = vmatmul.mubr.f32.gmra.mxu0 %v5311
    %v5603 = vpop.f32.mrf.mxu0
    %v5604 = vadd.f32 0.0, %v5603
    %v5605 = vpop.f32.mrf.mxu0
    %v5606 = vadd.f32 0.0, %v5605
    %5607 = vdwg.mxu0
    %v5608 = vadd.f32 %v5316, %v5391
    %v5609 = vadd.f32 %v5317, %v5393
    %v5610 = vadd.f32 %v5318, %v5462
    %v5611 = vadd.f32 %v5319, %v5464
    %v5612 = vadd.f32 %v5320, %v5533
    %v5613 = vadd.f32 %v5321, %v5535
    %v5614 = vadd.f32 %v5322, %v5604
    %v5615 = vadd.f32 %v5323, %v5606
    %v5616 = vxor.u32 %v5608, 2147483648
    %v5617 = vxor.u32 %v5609, 2147483648
    %v5618 = vmul.f32 %v5616, 1.442695
    %v5619 = vpow.pop %v5618
    %v5620 = vmul.f32 %v5617, 1.442695
    %v5621 = vpow.pop %v5620
    %v5622 = vadd.f32 %v5619, 1.0
    %v5623 = vadd.f32 %v5621, 1.0
    %v5624 = vrcp.pop %v5622
    %v5625 = vmul.f32 1.0, %v5624
    %v5626 = vrcp.pop %v5623
    %v5627 = vmul.f32 1.0, %v5626
    %v5628 = vxor.u32 %v5610, 2147483648
    %v5629 = vxor.u32 %v5611, 2147483648
    %v5630 = vmul.f32 %v5628, 1.442695
    %v5631 = vpow.pop %v5630
    %v5632 = vmul.f32 %v5629, 1.442695
    %v5633 = vpow.pop %v5632
    %v5634 = vadd.f32 %v5631, 1.0
    %v5635 = vadd.f32 %v5633, 1.0
    %v5636 = vrcp.pop %v5634
    %v5637 = vmul.f32 1.0, %v5636
    %v5638 = vrcp.pop %v5635
    %v5639 = vmul.f32 1.0, %v5638
    %v5640 = vtanh.pop %v5612
    %v5641 = vtanh.pop %v5613
    %v5642 = vxor.u32 %v5614, 2147483648
    %v5643 = vxor.u32 %v5615, 2147483648
    %v5644 = vmul.f32 %v5642, 1.442695
    %v5645 = vpow.pop %v5644
    %v5646 = vmul.f32 %v5643, 1.442695
    %v5647 = vpow.pop %v5646
    %v5648 = vadd.f32 %v5645, 1.0
    %v5649 = vadd.f32 %v5647, 1.0
    %v5650 = vrcp.pop %v5648
    %v5651 = vmul.f32 1.0, %v5650
    %v5652 = vrcp.pop %v5649
    %v5653 = vmul.f32 1.0, %v5652
    %v5654 = vmul.f32 %v5637, %v5307
    %v5655 = vmul.f32 %v5639, %v5308
    %v5656 = vmul.f32 %v5625, %v5640
    %v5657 = vmul.f32 %v5627, %v5641
    %v5658 = vadd.f32 %v5654, %v5656
    %v5659 = vadd.f32 %v5655, %v5657
    %v5660 = vtanh.pop %v5658
    %v5661 = vtanh.pop %v5659
    %v5662 = vmul.f32 %v5651, %v5660
    %v5663 = vmul.f32 %v5653, %v5661
    %5664 = vst [vmem:[%s1766] sm:$0xff] %v5662
    %5665 = vst [vmem:[%s1766 + $0x8] sm:$0xff] %v5663
    %s5666 = scalar_lea.vmem [#allocation3], 256
    %v5667 = vld [vmem:[%s5666] sm:$0xff]
    %v5668 = vld [vmem:[%s5666 + $0x8] sm:$0xff]
    %v5669 = vld [vmem:[%s5666 + $0x10] sm:$0xff]
    %v5670 = vld [vmem:[%s5666 + $0x18] sm:$0xff]
    %v5671 = vld [vmem:[%s5666 + $0x20] sm:$0xff]
    %v5672 = vld [vmem:[%s5666 + $0x28] sm:$0xff]
    %v5673 = vld [vmem:[%s5666 + $0x30] sm:$0xff]
    %v5674 = vld [vmem:[%s5666 + $0x38] sm:$0xff]
    %5675 = vmatprep.subr.mxu0 %v4128
    %5676 = vmatpush1.msra.mxu0 %v4127
    %5677 = vmatprep.subr.mxu0 %v4120
    %5678 = vmatpush1.msra.mxu0 %v4119
    %5679 = vmatprep.subr.mxu0 %v4112
    %5680 = vmatpush1.msra.mxu0 %v4111
    %5681 = vmatprep.subr.mxu0 %v4104
    %5682 = vmatpush1.msra.mxu0 %v4103
    %5683 = vmatprep.subr.mxu0 %v4096
    %5684 = vmatpush1.msra.mxu0 %v4095
    %5685 = vmatprep.subr.mxu0 %v4088
    %5686 = vmatpush1.msra.mxu0 %v4087
    %5687 = vmatprep.subr.mxu0 %v4080
    %5688 = vmatpush1.msra.mxu0 %v4079
    %5689 = vmatprep.subr.mxu0 %v4072
    %5690 = vmatpush1.msra.mxu0 %v4071
    %5691 = vmatprep.subr.mxu0 %v4064
    %5692 = vmatpush1.msra.mxu0 %v4063
    %5693 = vmatprep.subr.mxu0 %v4056
    %5694 = vmatpush1.msra.mxu0 %v4055
    %5695 = vmatprep.subr.mxu0 %v4048
    %5696 = vmatpush1.msra.mxu0 %v4047
    %5697 = vmatprep.subr.mxu0 %v4040
    %5698 = vmatpush1.msra.mxu0 %v4039
    %5699 = vmatprep.subr.mxu0 %v4032
    %5700 = vmatpush1.msra.mxu0 %v4031
    %5701 = vmatprep.subr.mxu0 %v4024
    %5702 = vmatpush1.msra.mxu0 %v4023
    %5703 = vmatprep.subr.mxu0 %v4016
    %5704 = vmatpush1.msra.mxu0 %v4015
    %5705 = vmatprep.subr.mxu0 %v4008
    %5706 = vmatpush1.msra.mxu0 %v4007
    %5707 = vmatprep.subr.mxu0 %v4256
    %5708 = vmatpush2.msra.mxu0 %v4255
    %5709 = vmatprep.subr.mxu0 %v4248
    %5710 = vmatpush2.msra.mxu0 %v4247
    %5711 = vmatprep.subr.mxu0 %v4240
    %5712 = vmatpush2.msra.mxu0 %v4239
    %5713 = vmatprep.subr.mxu0 %v4232
    %5714 = vmatpush2.msra.mxu0 %v4231
    %5715 = vmatprep.subr.mxu0 %v4224
    %5716 = vmatpush2.msra.mxu0 %v4223
    %5717 = vmatprep.subr.mxu0 %v4216
    %5718 = vmatpush2.msra.mxu0 %v4215
    %5719 = vmatprep.subr.mxu0 %v4208
    %5720 = vmatpush2.msra.mxu0 %v4207
    %5721 = vmatprep.subr.mxu0 %v4200
    %5722 = vmatpush2.msra.mxu0 %v4199
    %5723 = vmatprep.subr.mxu0 %v4192
    %5724 = vmatpush2.msra.mxu0 %v4191
    %5725 = vmatprep.subr.mxu0 %v4184
    %5726 = vmatpush2.msra.mxu0 %v4183
    %5727 = vmatprep.subr.mxu0 %v4176
    %5728 = vmatpush2.msra.mxu0 %v4175
    %5729 = vmatprep.subr.mxu0 %v4168
    %5730 = vmatpush2.msra.mxu0 %v4167
    %5731 = vmatprep.subr.mxu0 %v4160
    %5732 = vmatpush2.msra.mxu0 %v4159
    %5733 = vmatprep.subr.mxu0 %v4152
    %5734 = vmatpush2.msra.mxu0 %v4151
    %5735 = vmatprep.subr.mxu0 %v4144
    %5736 = vmatpush2.msra.mxu0 %v4143
    %5737 = vmatprep.subr.mxu0 %v4136
    %5738 = vmatpush2.msra.mxu0 %v4135
    %5739 = vmatprep.mubr.f32.mxu0 %v5663
    %5740 = vmatmul.mubr.f32.gmra.mxu0 %v5662
    %v5741 = vpop.f32.mrf.mxu0
    %v5742 = vadd.f32 0.0, %v5741
    %v5743 = vpop.f32.mrf.mxu0
    %v5744 = vadd.f32 0.0, %v5743
    %5745 = vdwg.mxu0
    %5746 = vmatprep.subr.mxu0 %v4130
    %5747 = vmatpush1.msra.mxu0 %v4129
    %5748 = vmatprep.subr.mxu0 %v4122
    %5749 = vmatpush1.msra.mxu0 %v4121
    %5750 = vmatprep.subr.mxu0 %v4114
    %5751 = vmatpush1.msra.mxu0 %v4113
    %5752 = vmatprep.subr.mxu0 %v4106
    %5753 = vmatpush1.msra.mxu0 %v4105
    %5754 = vmatprep.subr.mxu0 %v4098
    %5755 = vmatpush1.msra.mxu0 %v4097
    %5756 = vmatprep.subr.mxu0 %v4090
    %5757 = vmatpush1.msra.mxu0 %v4089
    %5758 = vmatprep.subr.mxu0 %v4082
    %5759 = vmatpush1.msra.mxu0 %v4081
    %5760 = vmatprep.subr.mxu0 %v4074
    %5761 = vmatpush1.msra.mxu0 %v4073
    %5762 = vmatprep.subr.mxu0 %v4066
    %5763 = vmatpush1.msra.mxu0 %v4065
    %5764 = vmatprep.subr.mxu0 %v4058
    %5765 = vmatpush1.msra.mxu0 %v4057
    %5766 = vmatprep.subr.mxu0 %v4050
    %5767 = vmatpush1.msra.mxu0 %v4049
    %5768 = vmatprep.subr.mxu0 %v4042
    %5769 = vmatpush1.msra.mxu0 %v4041
    %5770 = vmatprep.subr.mxu0 %v4034
    %5771 = vmatpush1.msra.mxu0 %v4033
    %5772 = vmatprep.subr.mxu0 %v4026
    %5773 = vmatpush1.msra.mxu0 %v4025
    %5774 = vmatprep.subr.mxu0 %v4018
    %5775 = vmatpush1.msra.mxu0 %v4017
    %5776 = vmatprep.subr.mxu0 %v4010
    %5777 = vmatpush1.msra.mxu0 %v4009
    %5778 = vmatprep.subr.mxu0 %v4258
    %5779 = vmatpush2.msra.mxu0 %v4257
    %5780 = vmatprep.subr.mxu0 %v4250
    %5781 = vmatpush2.msra.mxu0 %v4249
    %5782 = vmatprep.subr.mxu0 %v4242
    %5783 = vmatpush2.msra.mxu0 %v4241
    %5784 = vmatprep.subr.mxu0 %v4234
    %5785 = vmatpush2.msra.mxu0 %v4233
    %5786 = vmatprep.subr.mxu0 %v4226
    %5787 = vmatpush2.msra.mxu0 %v4225
    %5788 = vmatprep.subr.mxu0 %v4218
    %5789 = vmatpush2.msra.mxu0 %v4217
    %5790 = vmatprep.subr.mxu0 %v4210
    %5791 = vmatpush2.msra.mxu0 %v4209
    %5792 = vmatprep.subr.mxu0 %v4202
    %5793 = vmatpush2.msra.mxu0 %v4201
    %5794 = vmatprep.subr.mxu0 %v4194
    %5795 = vmatpush2.msra.mxu0 %v4193
    %5796 = vmatprep.subr.mxu0 %v4186
    %5797 = vmatpush2.msra.mxu0 %v4185
    %5798 = vmatprep.subr.mxu0 %v4178
    %5799 = vmatpush2.msra.mxu0 %v4177
    %5800 = vmatprep.subr.mxu0 %v4170
    %5801 = vmatpush2.msra.mxu0 %v4169
    %5802 = vmatprep.subr.mxu0 %v4162
    %5803 = vmatpush2.msra.mxu0 %v4161
    %5804 = vmatprep.subr.mxu0 %v4154
    %5805 = vmatpush2.msra.mxu0 %v4153
    %5806 = vmatprep.subr.mxu0 %v4146
    %5807 = vmatpush2.msra.mxu0 %v4145
    %5808 = vmatprep.subr.mxu0 %v4138
    %5809 = vmatpush2.msra.mxu0 %v4137
    %5810 = vmatprep.mubr.f32.mxu0 %v5663
    %5811 = vmatmul.mubr.f32.gmra.mxu0 %v5662
    %v5812 = vpop.f32.mrf.mxu0
    %v5813 = vadd.f32 0.0, %v5812
    %v5814 = vpop.f32.mrf.mxu0
    %v5815 = vadd.f32 0.0, %v5814
    %5816 = vdwg.mxu0
    %5817 = vmatprep.subr.mxu0 %v4132
    %5818 = vmatpush1.msra.mxu0 %v4131
    %5819 = vmatprep.subr.mxu0 %v4124
    %5820 = vmatpush1.msra.mxu0 %v4123
    %5821 = vmatprep.subr.mxu0 %v4116
    %5822 = vmatpush1.msra.mxu0 %v4115
    %5823 = vmatprep.subr.mxu0 %v4108
    %5824 = vmatpush1.msra.mxu0 %v4107
    %5825 = vmatprep.subr.mxu0 %v4100
    %5826 = vmatpush1.msra.mxu0 %v4099
    %5827 = vmatprep.subr.mxu0 %v4092
    %5828 = vmatpush1.msra.mxu0 %v4091
    %5829 = vmatprep.subr.mxu0 %v4084
    %5830 = vmatpush1.msra.mxu0 %v4083
    %5831 = vmatprep.subr.mxu0 %v4076
    %5832 = vmatpush1.msra.mxu0 %v4075
    %5833 = vmatprep.subr.mxu0 %v4068
    %5834 = vmatpush1.msra.mxu0 %v4067
    %5835 = vmatprep.subr.mxu0 %v4060
    %5836 = vmatpush1.msra.mxu0 %v4059
    %5837 = vmatprep.subr.mxu0 %v4052
    %5838 = vmatpush1.msra.mxu0 %v4051
    %5839 = vmatprep.subr.mxu0 %v4044
    %5840 = vmatpush1.msra.mxu0 %v4043
    %5841 = vmatprep.subr.mxu0 %v4036
    %5842 = vmatpush1.msra.mxu0 %v4035
    %5843 = vmatprep.subr.mxu0 %v4028
    %5844 = vmatpush1.msra.mxu0 %v4027
    %5845 = vmatprep.subr.mxu0 %v4020
    %5846 = vmatpush1.msra.mxu0 %v4019
    %5847 = vmatprep.subr.mxu0 %v4012
    %5848 = vmatpush1.msra.mxu0 %v4011
    %5849 = vmatprep.subr.mxu0 %v4260
    %5850 = vmatpush2.msra.mxu0 %v4259
    %5851 = vmatprep.subr.mxu0 %v4252
    %5852 = vmatpush2.msra.mxu0 %v4251
    %5853 = vmatprep.subr.mxu0 %v4244
    %5854 = vmatpush2.msra.mxu0 %v4243
    %5855 = vmatprep.subr.mxu0 %v4236
    %5856 = vmatpush2.msra.mxu0 %v4235
    %5857 = vmatprep.subr.mxu0 %v4228
    %5858 = vmatpush2.msra.mxu0 %v4227
    %5859 = vmatprep.subr.mxu0 %v4220
    %5860 = vmatpush2.msra.mxu0 %v4219
    %5861 = vmatprep.subr.mxu0 %v4212
    %5862 = vmatpush2.msra.mxu0 %v4211
    %5863 = vmatprep.subr.mxu0 %v4204
    %5864 = vmatpush2.msra.mxu0 %v4203
    %5865 = vmatprep.subr.mxu0 %v4196
    %5866 = vmatpush2.msra.mxu0 %v4195
    %5867 = vmatprep.subr.mxu0 %v4188
    %5868 = vmatpush2.msra.mxu0 %v4187
    %5869 = vmatprep.subr.mxu0 %v4180
    %5870 = vmatpush2.msra.mxu0 %v4179
    %5871 = vmatprep.subr.mxu0 %v4172
    %5872 = vmatpush2.msra.mxu0 %v4171
    %5873 = vmatprep.subr.mxu0 %v4164
    %5874 = vmatpush2.msra.mxu0 %v4163
    %5875 = vmatprep.subr.mxu0 %v4156
    %5876 = vmatpush2.msra.mxu0 %v4155
    %5877 = vmatprep.subr.mxu0 %v4148
    %5878 = vmatpush2.msra.mxu0 %v4147
    %5879 = vmatprep.subr.mxu0 %v4140
    %5880 = vmatpush2.msra.mxu0 %v4139
    %5881 = vmatprep.mubr.f32.mxu0 %v5663
    %5882 = vmatmul.mubr.f32.gmra.mxu0 %v5662
    %v5883 = vpop.f32.mrf.mxu0
    %v5884 = vadd.f32 0.0, %v5883
    %v5885 = vpop.f32.mrf.mxu0
    %v5886 = vadd.f32 0.0, %v5885
    %5887 = vdwg.mxu0
    %5888 = vmatprep.subr.mxu0 %v4134
    %5889 = vmatpush1.msra.mxu0 %v4133
    %5890 = vmatprep.subr.mxu0 %v4126
    %5891 = vmatpush1.msra.mxu0 %v4125
    %5892 = vmatprep.subr.mxu0 %v4118
    %5893 = vmatpush1.msra.mxu0 %v4117
    %5894 = vmatprep.subr.mxu0 %v4110
    %5895 = vmatpush1.msra.mxu0 %v4109
    %5896 = vmatprep.subr.mxu0 %v4102
    %5897 = vmatpush1.msra.mxu0 %v4101
    %5898 = vmatprep.subr.mxu0 %v4094
    %5899 = vmatpush1.msra.mxu0 %v4093
    %5900 = vmatprep.subr.mxu0 %v4086
    %5901 = vmatpush1.msra.mxu0 %v4085
    %5902 = vmatprep.subr.mxu0 %v4078
    %5903 = vmatpush1.msra.mxu0 %v4077
    %5904 = vmatprep.subr.mxu0 %v4070
    %5905 = vmatpush1.msra.mxu0 %v4069
    %5906 = vmatprep.subr.mxu0 %v4062
    %5907 = vmatpush1.msra.mxu0 %v4061
    %5908 = vmatprep.subr.mxu0 %v4054
    %5909 = vmatpush1.msra.mxu0 %v4053
    %5910 = vmatprep.subr.mxu0 %v4046
    %5911 = vmatpush1.msra.mxu0 %v4045
    %5912 = vmatprep.subr.mxu0 %v4038
    %5913 = vmatpush1.msra.mxu0 %v4037
    %5914 = vmatprep.subr.mxu0 %v4030
    %5915 = vmatpush1.msra.mxu0 %v4029
    %5916 = vmatprep.subr.mxu0 %v4022
    %5917 = vmatpush1.msra.mxu0 %v4021
    %5918 = vmatprep.subr.mxu0 %v4014
    %5919 = vmatpush1.msra.mxu0 %v4013
    %5920 = vmatprep.subr.mxu0 %v4262
    %5921 = vmatpush2.msra.mxu0 %v4261
    %5922 = vmatprep.subr.mxu0 %v4254
    %5923 = vmatpush2.msra.mxu0 %v4253
    %5924 = vmatprep.subr.mxu0 %v4246
    %5925 = vmatpush2.msra.mxu0 %v4245
    %5926 = vmatprep.subr.mxu0 %v4238
    %5927 = vmatpush2.msra.mxu0 %v4237
    %5928 = vmatprep.subr.mxu0 %v4230
    %5929 = vmatpush2.msra.mxu0 %v4229
    %5930 = vmatprep.subr.mxu0 %v4222
    %5931 = vmatpush2.msra.mxu0 %v4221
    %5932 = vmatprep.subr.mxu0 %v4214
    %5933 = vmatpush2.msra.mxu0 %v4213
    %5934 = vmatprep.subr.mxu0 %v4206
    %5935 = vmatpush2.msra.mxu0 %v4205
    %5936 = vmatprep.subr.mxu0 %v4198
    %5937 = vmatpush2.msra.mxu0 %v4197
    %5938 = vmatprep.subr.mxu0 %v4190
    %5939 = vmatpush2.msra.mxu0 %v4189
    %5940 = vmatprep.subr.mxu0 %v4182
    %5941 = vmatpush2.msra.mxu0 %v4181
    %5942 = vmatprep.subr.mxu0 %v4174
    %5943 = vmatpush2.msra.mxu0 %v4173
    %5944 = vmatprep.subr.mxu0 %v4166
    %5945 = vmatpush2.msra.mxu0 %v4165
    %5946 = vmatprep.subr.mxu0 %v4158
    %5947 = vmatpush2.msra.mxu0 %v4157
    %5948 = vmatprep.subr.mxu0 %v4150
    %5949 = vmatpush2.msra.mxu0 %v4149
    %5950 = vmatprep.subr.mxu0 %v4142
    %5951 = vmatpush2.msra.mxu0 %v4141
    %5952 = vmatprep.mubr.f32.mxu0 %v5663
    %5953 = vmatmul.mubr.f32.gmra.mxu0 %v5662
    %v5954 = vpop.f32.mrf.mxu0
    %v5955 = vadd.f32 0.0, %v5954
    %v5956 = vpop.f32.mrf.mxu0
    %v5957 = vadd.f32 0.0, %v5956
    %5958 = vdwg.mxu0
    %v5959 = vadd.f32 %v5667, %v5742
    %v5960 = vadd.f32 %v5668, %v5744
    %v5961 = vadd.f32 %v5669, %v5813
    %v5962 = vadd.f32 %v5670, %v5815
    %v5963 = vadd.f32 %v5671, %v5884
    %v5964 = vadd.f32 %v5672, %v5886
    %v5965 = vadd.f32 %v5673, %v5955
    %v5966 = vadd.f32 %v5674, %v5957
    %v5967 = vxor.u32 %v5959, 2147483648
    %v5968 = vxor.u32 %v5960, 2147483648
    %v5969 = vmul.f32 %v5967, 1.442695
    %v5970 = vpow.pop %v5969
    %v5971 = vmul.f32 %v5968, 1.442695
    %v5972 = vpow.pop %v5971
    %v5973 = vadd.f32 %v5970, 1.0
    %v5974 = vadd.f32 %v5972, 1.0
    %v5975 = vrcp.pop %v5973
    %v5976 = vmul.f32 1.0, %v5975
    %v5977 = vrcp.pop %v5974
    %v5978 = vmul.f32 1.0, %v5977
    %v5979 = vxor.u32 %v5961, 2147483648
    %v5980 = vxor.u32 %v5962, 2147483648
    %v5981 = vmul.f32 %v5979, 1.442695
    %v5982 = vpow.pop %v5981
    %v5983 = vmul.f32 %v5980, 1.442695
    %v5984 = vpow.pop %v5983
    %v5985 = vadd.f32 %v5982, 1.0
    %v5986 = vadd.f32 %v5984, 1.0
    %v5987 = vrcp.pop %v5985
    %v5988 = vmul.f32 1.0, %v5987
    %v5989 = vrcp.pop %v5986
    %v5990 = vmul.f32 1.0, %v5989
    %v5991 = vtanh.pop %v5963
    %v5992 = vtanh.pop %v5964
    %v5993 = vxor.u32 %v5965, 2147483648
    %v5994 = vxor.u32 %v5966, 2147483648
    %v5995 = vmul.f32 %v5993, 1.442695
    %v5996 = vpow.pop %v5995
    %v5997 = vmul.f32 %v5994, 1.442695
    %v5998 = vpow.pop %v5997
    %v5999 = vadd.f32 %v5996, 1.0
    %v6000 = vadd.f32 %v5998, 1.0
    %v6001 = vrcp.pop %v5999
    %v6002 = vmul.f32 1.0, %v6001
    %v6003 = vrcp.pop %v6000
    %v6004 = vmul.f32 1.0, %v6003
    %v6005 = vmul.f32 %v5988, %v5658
    %v6006 = vmul.f32 %v5990, %v5659
    %v6007 = vmul.f32 %v5976, %v5991
    %v6008 = vmul.f32 %v5978, %v5992
    %v6009 = vadd.f32 %v6005, %v6007
    %v6010 = vadd.f32 %v6006, %v6008
    %v6011 = vtanh.pop %v6009
    %v6012 = vtanh.pop %v6010
    %v6013 = vmul.f32 %v6002, %v6011
    %v6014 = vmul.f32 %v6004, %v6012
    %6015 = vst [vmem:[%s2118] sm:$0xff] %v6013
    %6016 = vst [vmem:[%s2118 + $0x8] sm:$0xff] %v6014
    %s6017 = scalar_lea.vmem [#allocation3], 320
    %v6018 = vld [vmem:[%s6017] sm:$0xff]
    %v6019 = vld [vmem:[%s6017 + $0x8] sm:$0xff]
    %v6020 = vld [vmem:[%s6017 + $0x10] sm:$0xff]
    %v6021 = vld [vmem:[%s6017 + $0x18] sm:$0xff]
    %v6022 = vld [vmem:[%s6017 + $0x20] sm:$0xff]
    %v6023 = vld [vmem:[%s6017 + $0x28] sm:$0xff]
    %v6024 = vld [vmem:[%s6017 + $0x30] sm:$0xff]
    %v6025 = vld [vmem:[%s6017 + $0x38] sm:$0xff]
    %6026 = vmatprep.subr.mxu0 %v4128
    %6027 = vmatpush1.msra.mxu0 %v4127
    %6028 = vmatprep.subr.mxu0 %v4120
    %6029 = vmatpush1.msra.mxu0 %v4119
    %6030 = vmatprep.subr.mxu0 %v4112
    %6031 = vmatpush1.msra.mxu0 %v4111
    %6032 = vmatprep.subr.mxu0 %v4104
    %6033 = vmatpush1.msra.mxu0 %v4103
    %6034 = vmatprep.subr.mxu0 %v4096
    %6035 = vmatpush1.msra.mxu0 %v4095
    %6036 = vmatprep.subr.mxu0 %v4088
    %6037 = vmatpush1.msra.mxu0 %v4087
    %6038 = vmatprep.subr.mxu0 %v4080
    %6039 = vmatpush1.msra.mxu0 %v4079
    %6040 = vmatprep.subr.mxu0 %v4072
    %6041 = vmatpush1.msra.mxu0 %v4071
    %6042 = vmatprep.subr.mxu0 %v4064
    %6043 = vmatpush1.msra.mxu0 %v4063
    %6044 = vmatprep.subr.mxu0 %v4056
    %6045 = vmatpush1.msra.mxu0 %v4055
    %6046 = vmatprep.subr.mxu0 %v4048
    %6047 = vmatpush1.msra.mxu0 %v4047
    %6048 = vmatprep.subr.mxu0 %v4040
    %6049 = vmatpush1.msra.mxu0 %v4039
    %6050 = vmatprep.subr.mxu0 %v4032
    %6051 = vmatpush1.msra.mxu0 %v4031
    %6052 = vmatprep.subr.mxu0 %v4024
    %6053 = vmatpush1.msra.mxu0 %v4023
    %6054 = vmatprep.subr.mxu0 %v4016
    %6055 = vmatpush1.msra.mxu0 %v4015
    %6056 = vmatprep.subr.mxu0 %v4008
    %6057 = vmatpush1.msra.mxu0 %v4007
    %6058 = vmatprep.subr.mxu0 %v4256
    %6059 = vmatpush2.msra.mxu0 %v4255
    %6060 = vmatprep.subr.mxu0 %v4248
    %6061 = vmatpush2.msra.mxu0 %v4247
    %6062 = vmatprep.subr.mxu0 %v4240
    %6063 = vmatpush2.msra.mxu0 %v4239
    %6064 = vmatprep.subr.mxu0 %v4232
    %6065 = vmatpush2.msra.mxu0 %v4231
    %6066 = vmatprep.subr.mxu0 %v4224
    %6067 = vmatpush2.msra.mxu0 %v4223
    %6068 = vmatprep.subr.mxu0 %v4216
    %6069 = vmatpush2.msra.mxu0 %v4215
    %6070 = vmatprep.subr.mxu0 %v4208
    %6071 = vmatpush2.msra.mxu0 %v4207
    %6072 = vmatprep.subr.mxu0 %v4200
    %6073 = vmatpush2.msra.mxu0 %v4199
    %6074 = vmatprep.subr.mxu0 %v4192
    %6075 = vmatpush2.msra.mxu0 %v4191
    %6076 = vmatprep.subr.mxu0 %v4184
    %6077 = vmatpush2.msra.mxu0 %v4183
    %6078 = vmatprep.subr.mxu0 %v4176
    %6079 = vmatpush2.msra.mxu0 %v4175
    %6080 = vmatprep.subr.mxu0 %v4168
    %6081 = vmatpush2.msra.mxu0 %v4167
    %6082 = vmatprep.subr.mxu0 %v4160
    %6083 = vmatpush2.msra.mxu0 %v4159
    %6084 = vmatprep.subr.mxu0 %v4152
    %6085 = vmatpush2.msra.mxu0 %v4151
    %6086 = vmatprep.subr.mxu0 %v4144
    %6087 = vmatpush2.msra.mxu0 %v4143
    %6088 = vmatprep.subr.mxu0 %v4136
    %6089 = vmatpush2.msra.mxu0 %v4135
    %6090 = vmatprep.mubr.f32.mxu0 %v6014
    %6091 = vmatmul.mubr.f32.gmra.mxu0 %v6013
    %v6092 = vpop.f32.mrf.mxu0
    %v6093 = vadd.f32 0.0, %v6092
    %v6094 = vpop.f32.mrf.mxu0
    %v6095 = vadd.f32 0.0, %v6094
    %6096 = vdwg.mxu0
    %6097 = vmatprep.subr.mxu0 %v4130
    %6098 = vmatpush1.msra.mxu0 %v4129
    %6099 = vmatprep.subr.mxu0 %v4122
    %6100 = vmatpush1.msra.mxu0 %v4121
    %6101 = vmatprep.subr.mxu0 %v4114
    %6102 = vmatpush1.msra.mxu0 %v4113
    %6103 = vmatprep.subr.mxu0 %v4106
    %6104 = vmatpush1.msra.mxu0 %v4105
    %6105 = vmatprep.subr.mxu0 %v4098
    %6106 = vmatpush1.msra.mxu0 %v4097
    %6107 = vmatprep.subr.mxu0 %v4090
    %6108 = vmatpush1.msra.mxu0 %v4089
    %6109 = vmatprep.subr.mxu0 %v4082
    %6110 = vmatpush1.msra.mxu0 %v4081
    %6111 = vmatprep.subr.mxu0 %v4074
    %6112 = vmatpush1.msra.mxu0 %v4073
    %6113 = vmatprep.subr.mxu0 %v4066
    %6114 = vmatpush1.msra.mxu0 %v4065
    %6115 = vmatprep.subr.mxu0 %v4058
    %6116 = vmatpush1.msra.mxu0 %v4057
    %6117 = vmatprep.subr.mxu0 %v4050
    %6118 = vmatpush1.msra.mxu0 %v4049
    %6119 = vmatprep.subr.mxu0 %v4042
    %6120 = vmatpush1.msra.mxu0 %v4041
    %6121 = vmatprep.subr.mxu0 %v4034
    %6122 = vmatpush1.msra.mxu0 %v4033
    %6123 = vmatprep.subr.mxu0 %v4026
    %6124 = vmatpush1.msra.mxu0 %v4025
    %6125 = vmatprep.subr.mxu0 %v4018
    %6126 = vmatpush1.msra.mxu0 %v4017
    %6127 = vmatprep.subr.mxu0 %v4010
    %6128 = vmatpush1.msra.mxu0 %v4009
    %6129 = vmatprep.subr.mxu0 %v4258
    %6130 = vmatpush2.msra.mxu0 %v4257
    %6131 = vmatprep.subr.mxu0 %v4250
    %6132 = vmatpush2.msra.mxu0 %v4249
    %6133 = vmatprep.subr.mxu0 %v4242
    %6134 = vmatpush2.msra.mxu0 %v4241
    %6135 = vmatprep.subr.mxu0 %v4234
    %6136 = vmatpush2.msra.mxu0 %v4233
    %6137 = vmatprep.subr.mxu0 %v4226
    %6138 = vmatpush2.msra.mxu0 %v4225
    %6139 = vmatprep.subr.mxu0 %v4218
    %6140 = vmatpush2.msra.mxu0 %v4217
    %6141 = vmatprep.subr.mxu0 %v4210
    %6142 = vmatpush2.msra.mxu0 %v4209
    %6143 = vmatprep.subr.mxu0 %v4202
    %6144 = vmatpush2.msra.mxu0 %v4201
    %6145 = vmatprep.subr.mxu0 %v4194
    %6146 = vmatpush2.msra.mxu0 %v4193
    %6147 = vmatprep.subr.mxu0 %v4186
    %6148 = vmatpush2.msra.mxu0 %v4185
    %6149 = vmatprep.subr.mxu0 %v4178
    %6150 = vmatpush2.msra.mxu0 %v4177
    %6151 = vmatprep.subr.mxu0 %v4170
    %6152 = vmatpush2.msra.mxu0 %v4169
    %6153 = vmatprep.subr.mxu0 %v4162
    %6154 = vmatpush2.msra.mxu0 %v4161
    %6155 = vmatprep.subr.mxu0 %v4154
    %6156 = vmatpush2.msra.mxu0 %v4153
    %6157 = vmatprep.subr.mxu0 %v4146
    %6158 = vmatpush2.msra.mxu0 %v4145
    %6159 = vmatprep.subr.mxu0 %v4138
    %6160 = vmatpush2.msra.mxu0 %v4137
    %6161 = vmatprep.mubr.f32.mxu0 %v6014
    %6162 = vmatmul.mubr.f32.gmra.mxu0 %v6013
    %v6163 = vpop.f32.mrf.mxu0
    %v6164 = vadd.f32 0.0, %v6163
    %v6165 = vpop.f32.mrf.mxu0
    %v6166 = vadd.f32 0.0, %v6165
    %6167 = vdwg.mxu0
    %6168 = vmatprep.subr.mxu0 %v4132
    %6169 = vmatpush1.msra.mxu0 %v4131
    %6170 = vmatprep.subr.mxu0 %v4124
    %6171 = vmatpush1.msra.mxu0 %v4123
    %6172 = vmatprep.subr.mxu0 %v4116
    %6173 = vmatpush1.msra.mxu0 %v4115
    %6174 = vmatprep.subr.mxu0 %v4108
    %6175 = vmatpush1.msra.mxu0 %v4107
    %6176 = vmatprep.subr.mxu0 %v4100
    %6177 = vmatpush1.msra.mxu0 %v4099
    %6178 = vmatprep.subr.mxu0 %v4092
    %6179 = vmatpush1.msra.mxu0 %v4091
    %6180 = vmatprep.subr.mxu0 %v4084
    %6181 = vmatpush1.msra.mxu0 %v4083
    %6182 = vmatprep.subr.mxu0 %v4076
    %6183 = vmatpush1.msra.mxu0 %v4075
    %6184 = vmatprep.subr.mxu0 %v4068
    %6185 = vmatpush1.msra.mxu0 %v4067
    %6186 = vmatprep.subr.mxu0 %v4060
    %6187 = vmatpush1.msra.mxu0 %v4059
    %6188 = vmatprep.subr.mxu0 %v4052
    %6189 = vmatpush1.msra.mxu0 %v4051
    %6190 = vmatprep.subr.mxu0 %v4044
    %6191 = vmatpush1.msra.mxu0 %v4043
    %6192 = vmatprep.subr.mxu0 %v4036
    %6193 = vmatpush1.msra.mxu0 %v4035
    %6194 = vmatprep.subr.mxu0 %v4028
    %6195 = vmatpush1.msra.mxu0 %v4027
    %6196 = vmatprep.subr.mxu0 %v4020
    %6197 = vmatpush1.msra.mxu0 %v4019
    %6198 = vmatprep.subr.mxu0 %v4012
    %6199 = vmatpush1.msra.mxu0 %v4011
    %6200 = vmatprep.subr.mxu0 %v4260
    %6201 = vmatpush2.msra.mxu0 %v4259
    %6202 = vmatprep.subr.mxu0 %v4252
    %6203 = vmatpush2.msra.mxu0 %v4251
    %6204 = vmatprep.subr.mxu0 %v4244
    %6205 = vmatpush2.msra.mxu0 %v4243
    %6206 = vmatprep.subr.mxu0 %v4236
    %6207 = vmatpush2.msra.mxu0 %v4235
    %6208 = vmatprep.subr.mxu0 %v4228
    %6209 = vmatpush2.msra.mxu0 %v4227
    %6210 = vmatprep.subr.mxu0 %v4220
    %6211 = vmatpush2.msra.mxu0 %v4219
    %6212 = vmatprep.subr.mxu0 %v4212
    %6213 = vmatpush2.msra.mxu0 %v4211
    %6214 = vmatprep.subr.mxu0 %v4204
    %6215 = vmatpush2.msra.mxu0 %v4203
    %6216 = vmatprep.subr.mxu0 %v4196
    %6217 = vmatpush2.msra.mxu0 %v4195
    %6218 = vmatprep.subr.mxu0 %v4188
    %6219 = vmatpush2.msra.mxu0 %v4187
    %6220 = vmatprep.subr.mxu0 %v4180
    %6221 = vmatpush2.msra.mxu0 %v4179
    %6222 = vmatprep.subr.mxu0 %v4172
    %6223 = vmatpush2.msra.mxu0 %v4171
    %6224 = vmatprep.subr.mxu0 %v4164
    %6225 = vmatpush2.msra.mxu0 %v4163
    %6226 = vmatprep.subr.mxu0 %v4156
    %6227 = vmatpush2.msra.mxu0 %v4155
    %6228 = vmatprep.subr.mxu0 %v4148
    %6229 = vmatpush2.msra.mxu0 %v4147
    %6230 = vmatprep.subr.mxu0 %v4140
    %6231 = vmatpush2.msra.mxu0 %v4139
    %6232 = vmatprep.mubr.f32.mxu0 %v6014
    %6233 = vmatmul.mubr.f32.gmra.mxu0 %v6013
    %v6234 = vpop.f32.mrf.mxu0
    %v6235 = vadd.f32 0.0, %v6234
    %v6236 = vpop.f32.mrf.mxu0
    %v6237 = vadd.f32 0.0, %v6236
    %6238 = vdwg.mxu0
    %6239 = vmatprep.subr.mxu0 %v4134
    %6240 = vmatpush1.msra.mxu0 %v4133
    %6241 = vmatprep.subr.mxu0 %v4126
    %6242 = vmatpush1.msra.mxu0 %v4125
    %6243 = vmatprep.subr.mxu0 %v4118
    %6244 = vmatpush1.msra.mxu0 %v4117
    %6245 = vmatprep.subr.mxu0 %v4110
    %6246 = vmatpush1.msra.mxu0 %v4109
    %6247 = vmatprep.subr.mxu0 %v4102
    %6248 = vmatpush1.msra.mxu0 %v4101
    %6249 = vmatprep.subr.mxu0 %v4094
    %6250 = vmatpush1.msra.mxu0 %v4093
    %6251 = vmatprep.subr.mxu0 %v4086
    %6252 = vmatpush1.msra.mxu0 %v4085
    %6253 = vmatprep.subr.mxu0 %v4078
    %6254 = vmatpush1.msra.mxu0 %v4077
    %6255 = vmatprep.subr.mxu0 %v4070
    %6256 = vmatpush1.msra.mxu0 %v4069
    %6257 = vmatprep.subr.mxu0 %v4062
    %6258 = vmatpush1.msra.mxu0 %v4061
    %6259 = vmatprep.subr.mxu0 %v4054
    %6260 = vmatpush1.msra.mxu0 %v4053
    %6261 = vmatprep.subr.mxu0 %v4046
    %6262 = vmatpush1.msra.mxu0 %v4045
    %6263 = vmatprep.subr.mxu0 %v4038
    %6264 = vmatpush1.msra.mxu0 %v4037
    %6265 = vmatprep.subr.mxu0 %v4030
    %6266 = vmatpush1.msra.mxu0 %v4029
    %6267 = vmatprep.subr.mxu0 %v4022
    %6268 = vmatpush1.msra.mxu0 %v4021
    %6269 = vmatprep.subr.mxu0 %v4014
    %6270 = vmatpush1.msra.mxu0 %v4013
    %6271 = vmatprep.subr.mxu0 %v4262
    %6272 = vmatpush2.msra.mxu0 %v4261
    %6273 = vmatprep.subr.mxu0 %v4254
    %6274 = vmatpush2.msra.mxu0 %v4253
    %6275 = vmatprep.subr.mxu0 %v4246
    %6276 = vmatpush2.msra.mxu0 %v4245
    %6277 = vmatprep.subr.mxu0 %v4238
    %6278 = vmatpush2.msra.mxu0 %v4237
    %6279 = vmatprep.subr.mxu0 %v4230
    %6280 = vmatpush2.msra.mxu0 %v4229
    %6281 = vmatprep.subr.mxu0 %v4222
    %6282 = vmatpush2.msra.mxu0 %v4221
    %6283 = vmatprep.subr.mxu0 %v4214
    %6284 = vmatpush2.msra.mxu0 %v4213
    %6285 = vmatprep.subr.mxu0 %v4206
    %6286 = vmatpush2.msra.mxu0 %v4205
    %6287 = vmatprep.subr.mxu0 %v4198
    %6288 = vmatpush2.msra.mxu0 %v4197
    %6289 = vmatprep.subr.mxu0 %v4190
    %6290 = vmatpush2.msra.mxu0 %v4189
    %6291 = vmatprep.subr.mxu0 %v4182
    %6292 = vmatpush2.msra.mxu0 %v4181
    %6293 = vmatprep.subr.mxu0 %v4174
    %6294 = vmatpush2.msra.mxu0 %v4173
    %6295 = vmatprep.subr.mxu0 %v4166
    %6296 = vmatpush2.msra.mxu0 %v4165
    %6297 = vmatprep.subr.mxu0 %v4158
    %6298 = vmatpush2.msra.mxu0 %v4157
    %6299 = vmatprep.subr.mxu0 %v4150
    %6300 = vmatpush2.msra.mxu0 %v4149
    %6301 = vmatprep.subr.mxu0 %v4142
    %6302 = vmatpush2.msra.mxu0 %v4141
    %6303 = vmatprep.mubr.f32.mxu0 %v6014
    %6304 = vmatmul.mubr.f32.gmra.mxu0 %v6013
    %v6305 = vpop.f32.mrf.mxu0
    %v6306 = vadd.f32 0.0, %v6305
    %v6307 = vpop.f32.mrf.mxu0
    %v6308 = vadd.f32 0.0, %v6307
    %6309 = vdwg.mxu0
    %v6310 = vadd.f32 %v6018, %v6093
    %v6311 = vadd.f32 %v6019, %v6095
    %v6312 = vadd.f32 %v6020, %v6164
    %v6313 = vadd.f32 %v6021, %v6166
    %v6314 = vadd.f32 %v6022, %v6235
    %v6315 = vadd.f32 %v6023, %v6237
    %v6316 = vadd.f32 %v6024, %v6306
    %v6317 = vadd.f32 %v6025, %v6308
    %v6318 = vxor.u32 %v6310, 2147483648
    %v6319 = vxor.u32 %v6311, 2147483648
    %v6320 = vmul.f32 %v6318, 1.442695
    %v6321 = vpow.pop %v6320
    %v6322 = vmul.f32 %v6319, 1.442695
    %v6323 = vpow.pop %v6322
    %v6324 = vadd.f32 %v6321, 1.0
    %v6325 = vadd.f32 %v6323, 1.0
    %v6326 = vrcp.pop %v6324
    %v6327 = vmul.f32 1.0, %v6326
    %v6328 = vrcp.pop %v6325
    %v6329 = vmul.f32 1.0, %v6328
    %v6330 = vxor.u32 %v6312, 2147483648
    %v6331 = vxor.u32 %v6313, 2147483648
    %v6332 = vmul.f32 %v6330, 1.442695
    %v6333 = vpow.pop %v6332
    %v6334 = vmul.f32 %v6331, 1.442695
    %v6335 = vpow.pop %v6334
    %v6336 = vadd.f32 %v6333, 1.0
    %v6337 = vadd.f32 %v6335, 1.0
    %v6338 = vrcp.pop %v6336
    %v6339 = vmul.f32 1.0, %v6338
    %v6340 = vrcp.pop %v6337
    %v6341 = vmul.f32 1.0, %v6340
    %v6342 = vtanh.pop %v6314
    %v6343 = vtanh.pop %v6315
    %v6344 = vxor.u32 %v6316, 2147483648
    %v6345 = vxor.u32 %v6317, 2147483648
    %v6346 = vmul.f32 %v6344, 1.442695
    %v6347 = vpow.pop %v6346
    %v6348 = vmul.f32 %v6345, 1.442695
    %v6349 = vpow.pop %v6348
    %v6350 = vadd.f32 %v6347, 1.0
    %v6351 = vadd.f32 %v6349, 1.0
    %v6352 = vrcp.pop %v6350
    %v6353 = vmul.f32 1.0, %v6352
    %v6354 = vrcp.pop %v6351
    %v6355 = vmul.f32 1.0, %v6354
    %v6356 = vmul.f32 %v6339, %v6009
    %v6357 = vmul.f32 %v6341, %v6010
    %v6358 = vmul.f32 %v6327, %v6342
    %v6359 = vmul.f32 %v6329, %v6343
    %v6360 = vadd.f32 %v6356, %v6358
    %v6361 = vadd.f32 %v6357, %v6359
    %v6362 = vtanh.pop %v6360
    %v6363 = vtanh.pop %v6361
    %v6364 = vmul.f32 %v6353, %v6362
    %v6365 = vmul.f32 %v6355, %v6363
    %6366 = vst [vmem:[%s2470] sm:$0xff] %v6364
    %6367 = vst [vmem:[%s2470 + $0x8] sm:$0xff] %v6365
    %s6368 = scalar_lea.vmem [#allocation3], 384
    %v6369 = vld [vmem:[%s6368] sm:$0xff]
    %v6370 = vld [vmem:[%s6368 + $0x8] sm:$0xff]
    %v6371 = vld [vmem:[%s6368 + $0x10] sm:$0xff]
    %v6372 = vld [vmem:[%s6368 + $0x18] sm:$0xff]
    %v6373 = vld [vmem:[%s6368 + $0x20] sm:$0xff]
    %v6374 = vld [vmem:[%s6368 + $0x28] sm:$0xff]
    %v6375 = vld [vmem:[%s6368 + $0x30] sm:$0xff]
    %v6376 = vld [vmem:[%s6368 + $0x38] sm:$0xff]
    %6377 = vmatprep.subr.mxu0 %v4128
    %6378 = vmatpush1.msra.mxu0 %v4127
    %6379 = vmatprep.subr.mxu0 %v4120
    %6380 = vmatpush1.msra.mxu0 %v4119
    %6381 = vmatprep.subr.mxu0 %v4112
    %6382 = vmatpush1.msra.mxu0 %v4111
    %6383 = vmatprep.subr.mxu0 %v4104
    %6384 = vmatpush1.msra.mxu0 %v4103
    %6385 = vmatprep.subr.mxu0 %v4096
    %6386 = vmatpush1.msra.mxu0 %v4095
    %6387 = vmatprep.subr.mxu0 %v4088
    %6388 = vmatpush1.msra.mxu0 %v4087
    %6389 = vmatprep.subr.mxu0 %v4080
    %6390 = vmatpush1.msra.mxu0 %v4079
    %6391 = vmatprep.subr.mxu0 %v4072
    %6392 = vmatpush1.msra.mxu0 %v4071
    %6393 = vmatprep.subr.mxu0 %v4064
    %6394 = vmatpush1.msra.mxu0 %v4063
    %6395 = vmatprep.subr.mxu0 %v4056
    %6396 = vmatpush1.msra.mxu0 %v4055
    %6397 = vmatprep.subr.mxu0 %v4048
    %6398 = vmatpush1.msra.mxu0 %v4047
    %6399 = vmatprep.subr.mxu0 %v4040
    %6400 = vmatpush1.msra.mxu0 %v4039
    %6401 = vmatprep.subr.mxu0 %v4032
    %6402 = vmatpush1.msra.mxu0 %v4031
    %6403 = vmatprep.subr.mxu0 %v4024
    %6404 = vmatpush1.msra.mxu0 %v4023
    %6405 = vmatprep.subr.mxu0 %v4016
    %6406 = vmatpush1.msra.mxu0 %v4015
    %6407 = vmatprep.subr.mxu0 %v4008
    %6408 = vmatpush1.msra.mxu0 %v4007
    %6409 = vmatprep.subr.mxu0 %v4256
    %6410 = vmatpush2.msra.mxu0 %v4255
    %6411 = vmatprep.subr.mxu0 %v4248
    %6412 = vmatpush2.msra.mxu0 %v4247
    %6413 = vmatprep.subr.mxu0 %v4240
    %6414 = vmatpush2.msra.mxu0 %v4239
    %6415 = vmatprep.subr.mxu0 %v4232
    %6416 = vmatpush2.msra.mxu0 %v4231
    %6417 = vmatprep.subr.mxu0 %v4224
    %6418 = vmatpush2.msra.mxu0 %v4223
    %6419 = vmatprep.subr.mxu0 %v4216
    %6420 = vmatpush2.msra.mxu0 %v4215
    %6421 = vmatprep.subr.mxu0 %v4208
    %6422 = vmatpush2.msra.mxu0 %v4207
    %6423 = vmatprep.subr.mxu0 %v4200
    %6424 = vmatpush2.msra.mxu0 %v4199
    %6425 = vmatprep.subr.mxu0 %v4192
    %6426 = vmatpush2.msra.mxu0 %v4191
    %6427 = vmatprep.subr.mxu0 %v4184
    %6428 = vmatpush2.msra.mxu0 %v4183
    %6429 = vmatprep.subr.mxu0 %v4176
    %6430 = vmatpush2.msra.mxu0 %v4175
    %6431 = vmatprep.subr.mxu0 %v4168
    %6432 = vmatpush2.msra.mxu0 %v4167
    %6433 = vmatprep.subr.mxu0 %v4160
    %6434 = vmatpush2.msra.mxu0 %v4159
    %6435 = vmatprep.subr.mxu0 %v4152
    %6436 = vmatpush2.msra.mxu0 %v4151
    %6437 = vmatprep.subr.mxu0 %v4144
    %6438 = vmatpush2.msra.mxu0 %v4143
    %6439 = vmatprep.subr.mxu0 %v4136
    %6440 = vmatpush2.msra.mxu0 %v4135
    %6441 = vmatprep.mubr.f32.mxu0 %v6365
    %6442 = vmatmul.mubr.f32.gmra.mxu0 %v6364
    %v6443 = vpop.f32.mrf.mxu0
    %v6444 = vadd.f32 0.0, %v6443
    %v6445 = vpop.f32.mrf.mxu0
    %v6446 = vadd.f32 0.0, %v6445
    %6447 = vdwg.mxu0
    %6448 = vmatprep.subr.mxu0 %v4130
    %6449 = vmatpush1.msra.mxu0 %v4129
    %6450 = vmatprep.subr.mxu0 %v4122
    %6451 = vmatpush1.msra.mxu0 %v4121
    %6452 = vmatprep.subr.mxu0 %v4114
    %6453 = vmatpush1.msra.mxu0 %v4113
    %6454 = vmatprep.subr.mxu0 %v4106
    %6455 = vmatpush1.msra.mxu0 %v4105
    %6456 = vmatprep.subr.mxu0 %v4098
    %6457 = vmatpush1.msra.mxu0 %v4097
    %6458 = vmatprep.subr.mxu0 %v4090
    %6459 = vmatpush1.msra.mxu0 %v4089
    %6460 = vmatprep.subr.mxu0 %v4082
    %6461 = vmatpush1.msra.mxu0 %v4081
    %6462 = vmatprep.subr.mxu0 %v4074
    %6463 = vmatpush1.msra.mxu0 %v4073
    %6464 = vmatprep.subr.mxu0 %v4066
    %6465 = vmatpush1.msra.mxu0 %v4065
    %6466 = vmatprep.subr.mxu0 %v4058
    %6467 = vmatpush1.msra.mxu0 %v4057
    %6468 = vmatprep.subr.mxu0 %v4050
    %6469 = vmatpush1.msra.mxu0 %v4049
    %6470 = vmatprep.subr.mxu0 %v4042
    %6471 = vmatpush1.msra.mxu0 %v4041
    %6472 = vmatprep.subr.mxu0 %v4034
    %6473 = vmatpush1.msra.mxu0 %v4033
    %6474 = vmatprep.subr.mxu0 %v4026
    %6475 = vmatpush1.msra.mxu0 %v4025
    %6476 = vmatprep.subr.mxu0 %v4018
    %6477 = vmatpush1.msra.mxu0 %v4017
    %6478 = vmatprep.subr.mxu0 %v4010
    %6479 = vmatpush1.msra.mxu0 %v4009
    %6480 = vmatprep.subr.mxu0 %v4258
    %6481 = vmatpush2.msra.mxu0 %v4257
    %6482 = vmatprep.subr.mxu0 %v4250
    %6483 = vmatpush2.msra.mxu0 %v4249
    %6484 = vmatprep.subr.mxu0 %v4242
    %6485 = vmatpush2.msra.mxu0 %v4241
    %6486 = vmatprep.subr.mxu0 %v4234
    %6487 = vmatpush2.msra.mxu0 %v4233
    %6488 = vmatprep.subr.mxu0 %v4226
    %6489 = vmatpush2.msra.mxu0 %v4225
    %6490 = vmatprep.subr.mxu0 %v4218
    %6491 = vmatpush2.msra.mxu0 %v4217
    %6492 = vmatprep.subr.mxu0 %v4210
    %6493 = vmatpush2.msra.mxu0 %v4209
    %6494 = vmatprep.subr.mxu0 %v4202
    %6495 = vmatpush2.msra.mxu0 %v4201
    %6496 = vmatprep.subr.mxu0 %v4194
    %6497 = vmatpush2.msra.mxu0 %v4193
    %6498 = vmatprep.subr.mxu0 %v4186
    %6499 = vmatpush2.msra.mxu0 %v4185
    %6500 = vmatprep.subr.mxu0 %v4178
    %6501 = vmatpush2.msra.mxu0 %v4177
    %6502 = vmatprep.subr.mxu0 %v4170
    %6503 = vmatpush2.msra.mxu0 %v4169
    %6504 = vmatprep.subr.mxu0 %v4162
    %6505 = vmatpush2.msra.mxu0 %v4161
    %6506 = vmatprep.subr.mxu0 %v4154
    %6507 = vmatpush2.msra.mxu0 %v4153
    %6508 = vmatprep.subr.mxu0 %v4146
    %6509 = vmatpush2.msra.mxu0 %v4145
    %6510 = vmatprep.subr.mxu0 %v4138
    %6511 = vmatpush2.msra.mxu0 %v4137
    %6512 = vmatprep.mubr.f32.mxu0 %v6365
    %6513 = vmatmul.mubr.f32.gmra.mxu0 %v6364
    %v6514 = vpop.f32.mrf.mxu0
    %v6515 = vadd.f32 0.0, %v6514
    %v6516 = vpop.f32.mrf.mxu0
    %v6517 = vadd.f32 0.0, %v6516
    %6518 = vdwg.mxu0
    %6519 = vmatprep.subr.mxu0 %v4132
    %6520 = vmatpush1.msra.mxu0 %v4131
    %6521 = vmatprep.subr.mxu0 %v4124
    %6522 = vmatpush1.msra.mxu0 %v4123
    %6523 = vmatprep.subr.mxu0 %v4116
    %6524 = vmatpush1.msra.mxu0 %v4115
    %6525 = vmatprep.subr.mxu0 %v4108
    %6526 = vmatpush1.msra.mxu0 %v4107
    %6527 = vmatprep.subr.mxu0 %v4100
    %6528 = vmatpush1.msra.mxu0 %v4099
    %6529 = vmatprep.subr.mxu0 %v4092
    %6530 = vmatpush1.msra.mxu0 %v4091
    %6531 = vmatprep.subr.mxu0 %v4084
    %6532 = vmatpush1.msra.mxu0 %v4083
    %6533 = vmatprep.subr.mxu0 %v4076
    %6534 = vmatpush1.msra.mxu0 %v4075
    %6535 = vmatprep.subr.mxu0 %v4068
    %6536 = vmatpush1.msra.mxu0 %v4067
    %6537 = vmatprep.subr.mxu0 %v4060
    %6538 = vmatpush1.msra.mxu0 %v4059
    %6539 = vmatprep.subr.mxu0 %v4052
    %6540 = vmatpush1.msra.mxu0 %v4051
    %6541 = vmatprep.subr.mxu0 %v4044
    %6542 = vmatpush1.msra.mxu0 %v4043
    %6543 = vmatprep.subr.mxu0 %v4036
    %6544 = vmatpush1.msra.mxu0 %v4035
    %6545 = vmatprep.subr.mxu0 %v4028
    %6546 = vmatpush1.msra.mxu0 %v4027
    %6547 = vmatprep.subr.mxu0 %v4020
    %6548 = vmatpush1.msra.mxu0 %v4019
    %6549 = vmatprep.subr.mxu0 %v4012
    %6550 = vmatpush1.msra.mxu0 %v4011
    %6551 = vmatprep.subr.mxu0 %v4260
    %6552 = vmatpush2.msra.mxu0 %v4259
    %6553 = vmatprep.subr.mxu0 %v4252
    %6554 = vmatpush2.msra.mxu0 %v4251
    %6555 = vmatprep.subr.mxu0 %v4244
    %6556 = vmatpush2.msra.mxu0 %v4243
    %6557 = vmatprep.subr.mxu0 %v4236
    %6558 = vmatpush2.msra.mxu0 %v4235
    %6559 = vmatprep.subr.mxu0 %v4228
    %6560 = vmatpush2.msra.mxu0 %v4227
    %6561 = vmatprep.subr.mxu0 %v4220
    %6562 = vmatpush2.msra.mxu0 %v4219
    %6563 = vmatprep.subr.mxu0 %v4212
    %6564 = vmatpush2.msra.mxu0 %v4211
    %6565 = vmatprep.subr.mxu0 %v4204
    %6566 = vmatpush2.msra.mxu0 %v4203
    %6567 = vmatprep.subr.mxu0 %v4196
    %6568 = vmatpush2.msra.mxu0 %v4195
    %6569 = vmatprep.subr.mxu0 %v4188
    %6570 = vmatpush2.msra.mxu0 %v4187
    %6571 = vmatprep.subr.mxu0 %v4180
    %6572 = vmatpush2.msra.mxu0 %v4179
    %6573 = vmatprep.subr.mxu0 %v4172
    %6574 = vmatpush2.msra.mxu0 %v4171
    %6575 = vmatprep.subr.mxu0 %v4164
    %6576 = vmatpush2.msra.mxu0 %v4163
    %6577 = vmatprep.subr.mxu0 %v4156
    %6578 = vmatpush2.msra.mxu0 %v4155
    %6579 = vmatprep.subr.mxu0 %v4148
    %6580 = vmatpush2.msra.mxu0 %v4147
    %6581 = vmatprep.subr.mxu0 %v4140
    %6582 = vmatpush2.msra.mxu0 %v4139
    %6583 = vmatprep.mubr.f32.mxu0 %v6365
    %6584 = vmatmul.mubr.f32.gmra.mxu0 %v6364
    %v6585 = vpop.f32.mrf.mxu0
    %v6586 = vadd.f32 0.0, %v6585
    %v6587 = vpop.f32.mrf.mxu0
    %v6588 = vadd.f32 0.0, %v6587
    %6589 = vdwg.mxu0
    %6590 = vmatprep.subr.mxu0 %v4134
    %6591 = vmatpush1.msra.mxu0 %v4133
    %6592 = vmatprep.subr.mxu0 %v4126
    %6593 = vmatpush1.msra.mxu0 %v4125
    %6594 = vmatprep.subr.mxu0 %v4118
    %6595 = vmatpush1.msra.mxu0 %v4117
    %6596 = vmatprep.subr.mxu0 %v4110
    %6597 = vmatpush1.msra.mxu0 %v4109
    %6598 = vmatprep.subr.mxu0 %v4102
    %6599 = vmatpush1.msra.mxu0 %v4101
    %6600 = vmatprep.subr.mxu0 %v4094
    %6601 = vmatpush1.msra.mxu0 %v4093
    %6602 = vmatprep.subr.mxu0 %v4086
    %6603 = vmatpush1.msra.mxu0 %v4085
    %6604 = vmatprep.subr.mxu0 %v4078
    %6605 = vmatpush1.msra.mxu0 %v4077
    %6606 = vmatprep.subr.mxu0 %v4070
    %6607 = vmatpush1.msra.mxu0 %v4069
    %6608 = vmatprep.subr.mxu0 %v4062
    %6609 = vmatpush1.msra.mxu0 %v4061
    %6610 = vmatprep.subr.mxu0 %v4054
    %6611 = vmatpush1.msra.mxu0 %v4053
    %6612 = vmatprep.subr.mxu0 %v4046
    %6613 = vmatpush1.msra.mxu0 %v4045
    %6614 = vmatprep.subr.mxu0 %v4038
    %6615 = vmatpush1.msra.mxu0 %v4037
    %6616 = vmatprep.subr.mxu0 %v4030
    %6617 = vmatpush1.msra.mxu0 %v4029
    %6618 = vmatprep.subr.mxu0 %v4022
    %6619 = vmatpush1.msra.mxu0 %v4021
    %6620 = vmatprep.subr.mxu0 %v4014
    %6621 = vmatpush1.msra.mxu0 %v4013
    %6622 = vmatprep.subr.mxu0 %v4262
    %6623 = vmatpush2.msra.mxu0 %v4261
    %6624 = vmatprep.subr.mxu0 %v4254
    %6625 = vmatpush2.msra.mxu0 %v4253
    %6626 = vmatprep.subr.mxu0 %v4246
    %6627 = vmatpush2.msra.mxu0 %v4245
    %6628 = vmatprep.subr.mxu0 %v4238
    %6629 = vmatpush2.msra.mxu0 %v4237
    %6630 = vmatprep.subr.mxu0 %v4230
    %6631 = vmatpush2.msra.mxu0 %v4229
    %6632 = vmatprep.subr.mxu0 %v4222
    %6633 = vmatpush2.msra.mxu0 %v4221
    %6634 = vmatprep.subr.mxu0 %v4214
    %6635 = vmatpush2.msra.mxu0 %v4213
    %6636 = vmatprep.subr.mxu0 %v4206
    %6637 = vmatpush2.msra.mxu0 %v4205
    %6638 = vmatprep.subr.mxu0 %v4198
    %6639 = vmatpush2.msra.mxu0 %v4197
    %6640 = vmatprep.subr.mxu0 %v4190
    %6641 = vmatpush2.msra.mxu0 %v4189
    %6642 = vmatprep.subr.mxu0 %v4182
    %6643 = vmatpush2.msra.mxu0 %v4181
    %6644 = vmatprep.subr.mxu0 %v4174
    %6645 = vmatpush2.msra.mxu0 %v4173
    %6646 = vmatprep.subr.mxu0 %v4166
    %6647 = vmatpush2.msra.mxu0 %v4165
    %6648 = vmatprep.subr.mxu0 %v4158
    %6649 = vmatpush2.msra.mxu0 %v4157
    %6650 = vmatprep.subr.mxu0 %v4150
    %6651 = vmatpush2.msra.mxu0 %v4149
    %6652 = vmatprep.subr.mxu0 %v4142
    %6653 = vmatpush2.msra.mxu0 %v4141
    %6654 = vmatprep.mubr.f32.mxu0 %v6365
    %6655 = vmatmul.mubr.f32.gmra.mxu0 %v6364
    %v6656 = vpop.f32.mrf.mxu0
    %v6657 = vadd.f32 0.0, %v6656
    %v6658 = vpop.f32.mrf.mxu0
    %v6659 = vadd.f32 0.0, %v6658
    %6660 = vdwg.mxu0
    %v6661 = vadd.f32 %v6369, %v6444
    %v6662 = vadd.f32 %v6370, %v6446
    %v6663 = vadd.f32 %v6371, %v6515
    %v6664 = vadd.f32 %v6372, %v6517
    %v6665 = vadd.f32 %v6373, %v6586
    %v6666 = vadd.f32 %v6374, %v6588
    %v6667 = vadd.f32 %v6375, %v6657
    %v6668 = vadd.f32 %v6376, %v6659
    %v6669 = vxor.u32 %v6661, 2147483648
    %v6670 = vxor.u32 %v6662, 2147483648
    %v6671 = vmul.f32 %v6669, 1.442695
    %v6672 = vpow.pop %v6671
    %v6673 = vmul.f32 %v6670, 1.442695
    %v6674 = vpow.pop %v6673
    %v6675 = vadd.f32 %v6672, 1.0
    %v6676 = vadd.f32 %v6674, 1.0
    %v6677 = vrcp.pop %v6675
    %v6678 = vmul.f32 1.0, %v6677
    %v6679 = vrcp.pop %v6676
    %v6680 = vmul.f32 1.0, %v6679
    %v6681 = vxor.u32 %v6663, 2147483648
    %v6682 = vxor.u32 %v6664, 2147483648
    %v6683 = vmul.f32 %v6681, 1.442695
    %v6684 = vpow.pop %v6683
    %v6685 = vmul.f32 %v6682, 1.442695
    %v6686 = vpow.pop %v6685
    %v6687 = vadd.f32 %v6684, 1.0
    %v6688 = vadd.f32 %v6686, 1.0
    %v6689 = vrcp.pop %v6687
    %v6690 = vmul.f32 1.0, %v6689
    %v6691 = vrcp.pop %v6688
    %v6692 = vmul.f32 1.0, %v6691
    %v6693 = vtanh.pop %v6665
    %v6694 = vtanh.pop %v6666
    %v6695 = vxor.u32 %v6667, 2147483648
    %v6696 = vxor.u32 %v6668, 2147483648
    %v6697 = vmul.f32 %v6695, 1.442695
    %v6698 = vpow.pop %v6697
    %v6699 = vmul.f32 %v6696, 1.442695
    %v6700 = vpow.pop %v6699
    %v6701 = vadd.f32 %v6698, 1.0
    %v6702 = vadd.f32 %v6700, 1.0
    %v6703 = vrcp.pop %v6701
    %v6704 = vmul.f32 1.0, %v6703
    %v6705 = vrcp.pop %v6702
    %v6706 = vmul.f32 1.0, %v6705
    %v6707 = vmul.f32 %v6690, %v6360
    %v6708 = vmul.f32 %v6692, %v6361
    %v6709 = vmul.f32 %v6678, %v6693
    %v6710 = vmul.f32 %v6680, %v6694
    %v6711 = vadd.f32 %v6707, %v6709
    %v6712 = vadd.f32 %v6708, %v6710
    %v6713 = vtanh.pop %v6711
    %v6714 = vtanh.pop %v6712
    %v6715 = vmul.f32 %v6704, %v6713
    %v6716 = vmul.f32 %v6706, %v6714
    %6717 = vst [vmem:[%s2822] sm:$0xff] %v6715
    %6718 = vst [vmem:[%s2822 + $0x8] sm:$0xff] %v6716
    %s6719 = scalar_lea.vmem [#allocation3], 448
    %v6720 = vld [vmem:[%s6719] sm:$0xff]
    %v6721 = vld [vmem:[%s6719 + $0x8] sm:$0xff]
    %v6722 = vld [vmem:[%s6719 + $0x10] sm:$0xff]
    %v6723 = vld [vmem:[%s6719 + $0x18] sm:$0xff]
    %v6724 = vld [vmem:[%s6719 + $0x20] sm:$0xff]
    %v6725 = vld [vmem:[%s6719 + $0x28] sm:$0xff]
    %v6726 = vld [vmem:[%s6719 + $0x30] sm:$0xff]
    %v6727 = vld [vmem:[%s6719 + $0x38] sm:$0xff]
    %6728 = vmatprep.subr.mxu0 %v4128
    %6729 = vmatpush1.msra.mxu0 %v4127
    %6730 = vmatprep.subr.mxu0 %v4120
    %6731 = vmatpush1.msra.mxu0 %v4119
    %6732 = vmatprep.subr.mxu0 %v4112
    %6733 = vmatpush1.msra.mxu0 %v4111
    %6734 = vmatprep.subr.mxu0 %v4104
    %6735 = vmatpush1.msra.mxu0 %v4103
    %6736 = vmatprep.subr.mxu0 %v4096
    %6737 = vmatpush1.msra.mxu0 %v4095
    %6738 = vmatprep.subr.mxu0 %v4088
    %6739 = vmatpush1.msra.mxu0 %v4087
    %6740 = vmatprep.subr.mxu0 %v4080
    %6741 = vmatpush1.msra.mxu0 %v4079
    %6742 = vmatprep.subr.mxu0 %v4072
    %6743 = vmatpush1.msra.mxu0 %v4071
    %6744 = vmatprep.subr.mxu0 %v4064
    %6745 = vmatpush1.msra.mxu0 %v4063
    %6746 = vmatprep.subr.mxu0 %v4056
    %6747 = vmatpush1.msra.mxu0 %v4055
    %6748 = vmatprep.subr.mxu0 %v4048
    %6749 = vmatpush1.msra.mxu0 %v4047
    %6750 = vmatprep.subr.mxu0 %v4040
    %6751 = vmatpush1.msra.mxu0 %v4039
    %6752 = vmatprep.subr.mxu0 %v4032
    %6753 = vmatpush1.msra.mxu0 %v4031
    %6754 = vmatprep.subr.mxu0 %v4024
    %6755 = vmatpush1.msra.mxu0 %v4023
    %6756 = vmatprep.subr.mxu0 %v4016
    %6757 = vmatpush1.msra.mxu0 %v4015
    %6758 = vmatprep.subr.mxu0 %v4008
    %6759 = vmatpush1.msra.mxu0 %v4007
    %6760 = vmatprep.subr.mxu0 %v4256
    %6761 = vmatpush2.msra.mxu0 %v4255
    %6762 = vmatprep.subr.mxu0 %v4248
    %6763 = vmatpush2.msra.mxu0 %v4247
    %6764 = vmatprep.subr.mxu0 %v4240
    %6765 = vmatpush2.msra.mxu0 %v4239
    %6766 = vmatprep.subr.mxu0 %v4232
    %6767 = vmatpush2.msra.mxu0 %v4231
    %6768 = vmatprep.subr.mxu0 %v4224
    %6769 = vmatpush2.msra.mxu0 %v4223
    %6770 = vmatprep.subr.mxu0 %v4216
    %6771 = vmatpush2.msra.mxu0 %v4215
    %6772 = vmatprep.subr.mxu0 %v4208
    %6773 = vmatpush2.msra.mxu0 %v4207
    %6774 = vmatprep.subr.mxu0 %v4200
    %6775 = vmatpush2.msra.mxu0 %v4199
    %6776 = vmatprep.subr.mxu0 %v4192
    %6777 = vmatpush2.msra.mxu0 %v4191
    %6778 = vmatprep.subr.mxu0 %v4184
    %6779 = vmatpush2.msra.mxu0 %v4183
    %6780 = vmatprep.subr.mxu0 %v4176
    %6781 = vmatpush2.msra.mxu0 %v4175
    %6782 = vmatprep.subr.mxu0 %v4168
    %6783 = vmatpush2.msra.mxu0 %v4167
    %6784 = vmatprep.subr.mxu0 %v4160
    %6785 = vmatpush2.msra.mxu0 %v4159
    %6786 = vmatprep.subr.mxu0 %v4152
    %6787 = vmatpush2.msra.mxu0 %v4151
    %6788 = vmatprep.subr.mxu0 %v4144
    %6789 = vmatpush2.msra.mxu0 %v4143
    %6790 = vmatprep.subr.mxu0 %v4136
    %6791 = vmatpush2.msra.mxu0 %v4135
    %6792 = vmatprep.mubr.f32.mxu0 %v6716
    %6793 = vmatmul.mubr.f32.gmra.mxu0 %v6715
    %v6794 = vpop.f32.mrf.mxu0
    %v6795 = vadd.f32 0.0, %v6794
    %v6796 = vpop.f32.mrf.mxu0
    %v6797 = vadd.f32 0.0, %v6796
    %6798 = vdwg.mxu0
    %6799 = vmatprep.subr.mxu0 %v4130
    %6800 = vmatpush1.msra.mxu0 %v4129
    %6801 = vmatprep.subr.mxu0 %v4122
    %6802 = vmatpush1.msra.mxu0 %v4121
    %6803 = vmatprep.subr.mxu0 %v4114
    %6804 = vmatpush1.msra.mxu0 %v4113
    %6805 = vmatprep.subr.mxu0 %v4106
    %6806 = vmatpush1.msra.mxu0 %v4105
    %6807 = vmatprep.subr.mxu0 %v4098
    %6808 = vmatpush1.msra.mxu0 %v4097
    %6809 = vmatprep.subr.mxu0 %v4090
    %6810 = vmatpush1.msra.mxu0 %v4089
    %6811 = vmatprep.subr.mxu0 %v4082
    %6812 = vmatpush1.msra.mxu0 %v4081
    %6813 = vmatprep.subr.mxu0 %v4074
    %6814 = vmatpush1.msra.mxu0 %v4073
    %6815 = vmatprep.subr.mxu0 %v4066
    %6816 = vmatpush1.msra.mxu0 %v4065
    %6817 = vmatprep.subr.mxu0 %v4058
    %6818 = vmatpush1.msra.mxu0 %v4057
    %6819 = vmatprep.subr.mxu0 %v4050
    %6820 = vmatpush1.msra.mxu0 %v4049
    %6821 = vmatprep.subr.mxu0 %v4042
    %6822 = vmatpush1.msra.mxu0 %v4041
    %6823 = vmatprep.subr.mxu0 %v4034
    %6824 = vmatpush1.msra.mxu0 %v4033
    %6825 = vmatprep.subr.mxu0 %v4026
    %6826 = vmatpush1.msra.mxu0 %v4025
    %6827 = vmatprep.subr.mxu0 %v4018
    %6828 = vmatpush1.msra.mxu0 %v4017
    %6829 = vmatprep.subr.mxu0 %v4010
    %6830 = vmatpush1.msra.mxu0 %v4009
    %6831 = vmatprep.subr.mxu0 %v4258
    %6832 = vmatpush2.msra.mxu0 %v4257
    %6833 = vmatprep.subr.mxu0 %v4250
    %6834 = vmatpush2.msra.mxu0 %v4249
    %6835 = vmatprep.subr.mxu0 %v4242
    %6836 = vmatpush2.msra.mxu0 %v4241
    %6837 = vmatprep.subr.mxu0 %v4234
    %6838 = vmatpush2.msra.mxu0 %v4233
    %6839 = vmatprep.subr.mxu0 %v4226
    %6840 = vmatpush2.msra.mxu0 %v4225
    %6841 = vmatprep.subr.mxu0 %v4218
    %6842 = vmatpush2.msra.mxu0 %v4217
    %6843 = vmatprep.subr.mxu0 %v4210
    %6844 = vmatpush2.msra.mxu0 %v4209
    %6845 = vmatprep.subr.mxu0 %v4202
    %6846 = vmatpush2.msra.mxu0 %v4201
    %6847 = vmatprep.subr.mxu0 %v4194
    %6848 = vmatpush2.msra.mxu0 %v4193
    %6849 = vmatprep.subr.mxu0 %v4186
    %6850 = vmatpush2.msra.mxu0 %v4185
    %6851 = vmatprep.subr.mxu0 %v4178
    %6852 = vmatpush2.msra.mxu0 %v4177
    %6853 = vmatprep.subr.mxu0 %v4170
    %6854 = vmatpush2.msra.mxu0 %v4169
    %6855 = vmatprep.subr.mxu0 %v4162
    %6856 = vmatpush2.msra.mxu0 %v4161
    %6857 = vmatprep.subr.mxu0 %v4154
    %6858 = vmatpush2.msra.mxu0 %v4153
    %6859 = vmatprep.subr.mxu0 %v4146
    %6860 = vmatpush2.msra.mxu0 %v4145
    %6861 = vmatprep.subr.mxu0 %v4138
    %6862 = vmatpush2.msra.mxu0 %v4137
    %6863 = vmatprep.mubr.f32.mxu0 %v6716
    %6864 = vmatmul.mubr.f32.gmra.mxu0 %v6715
    %v6865 = vpop.f32.mrf.mxu0
    %v6866 = vadd.f32 0.0, %v6865
    %v6867 = vpop.f32.mrf.mxu0
    %v6868 = vadd.f32 0.0, %v6867
    %6869 = vdwg.mxu0
    %6870 = vmatprep.subr.mxu0 %v4132
    %6871 = vmatpush1.msra.mxu0 %v4131
    %6872 = vmatprep.subr.mxu0 %v4124
    %6873 = vmatpush1.msra.mxu0 %v4123
    %6874 = vmatprep.subr.mxu0 %v4116
    %6875 = vmatpush1.msra.mxu0 %v4115
    %6876 = vmatprep.subr.mxu0 %v4108
    %6877 = vmatpush1.msra.mxu0 %v4107
    %6878 = vmatprep.subr.mxu0 %v4100
    %6879 = vmatpush1.msra.mxu0 %v4099
    %6880 = vmatprep.subr.mxu0 %v4092
    %6881 = vmatpush1.msra.mxu0 %v4091
    %6882 = vmatprep.subr.mxu0 %v4084
    %6883 = vmatpush1.msra.mxu0 %v4083
    %6884 = vmatprep.subr.mxu0 %v4076
    %6885 = vmatpush1.msra.mxu0 %v4075
    %6886 = vmatprep.subr.mxu0 %v4068
    %6887 = vmatpush1.msra.mxu0 %v4067
    %6888 = vmatprep.subr.mxu0 %v4060
    %6889 = vmatpush1.msra.mxu0 %v4059
    %6890 = vmatprep.subr.mxu0 %v4052
    %6891 = vmatpush1.msra.mxu0 %v4051
    %6892 = vmatprep.subr.mxu0 %v4044
    %6893 = vmatpush1.msra.mxu0 %v4043
    %6894 = vmatprep.subr.mxu0 %v4036
    %6895 = vmatpush1.msra.mxu0 %v4035
    %6896 = vmatprep.subr.mxu0 %v4028
    %6897 = vmatpush1.msra.mxu0 %v4027
    %6898 = vmatprep.subr.mxu0 %v4020
    %6899 = vmatpush1.msra.mxu0 %v4019
    %6900 = vmatprep.subr.mxu0 %v4012
    %6901 = vmatpush1.msra.mxu0 %v4011
    %6902 = vmatprep.subr.mxu0 %v4260
    %6903 = vmatpush2.msra.mxu0 %v4259
    %6904 = vmatprep.subr.mxu0 %v4252
    %6905 = vmatpush2.msra.mxu0 %v4251
    %6906 = vmatprep.subr.mxu0 %v4244
    %6907 = vmatpush2.msra.mxu0 %v4243
    %6908 = vmatprep.subr.mxu0 %v4236
    %6909 = vmatpush2.msra.mxu0 %v4235
    %6910 = vmatprep.subr.mxu0 %v4228
    %6911 = vmatpush2.msra.mxu0 %v4227
    %6912 = vmatprep.subr.mxu0 %v4220
    %6913 = vmatpush2.msra.mxu0 %v4219
    %6914 = vmatprep.subr.mxu0 %v4212
    %6915 = vmatpush2.msra.mxu0 %v4211
    %6916 = vmatprep.subr.mxu0 %v4204
    %6917 = vmatpush2.msra.mxu0 %v4203
    %6918 = vmatprep.subr.mxu0 %v4196
    %6919 = vmatpush2.msra.mxu0 %v4195
    %6920 = vmatprep.subr.mxu0 %v4188
    %6921 = vmatpush2.msra.mxu0 %v4187
    %6922 = vmatprep.subr.mxu0 %v4180
    %6923 = vmatpush2.msra.mxu0 %v4179
    %6924 = vmatprep.subr.mxu0 %v4172
    %6925 = vmatpush2.msra.mxu0 %v4171
    %6926 = vmatprep.subr.mxu0 %v4164
    %6927 = vmatpush2.msra.mxu0 %v4163
    %6928 = vmatprep.subr.mxu0 %v4156
    %6929 = vmatpush2.msra.mxu0 %v4155
    %6930 = vmatprep.subr.mxu0 %v4148
    %6931 = vmatpush2.msra.mxu0 %v4147
    %6932 = vmatprep.subr.mxu0 %v4140
    %6933 = vmatpush2.msra.mxu0 %v4139
    %6934 = vmatprep.mubr.f32.mxu0 %v6716
    %6935 = vmatmul.mubr.f32.gmra.mxu0 %v6715
    %v6936 = vpop.f32.mrf.mxu0
    %v6937 = vadd.f32 0.0, %v6936
    %v6938 = vpop.f32.mrf.mxu0
    %v6939 = vadd.f32 0.0, %v6938
    %6940 = vdwg.mxu0
    %6941 = vmatprep.subr.mxu0 %v4134
    %6942 = vmatpush1.msra.mxu0 %v4133
    %6943 = vmatprep.subr.mxu0 %v4126
    %6944 = vmatpush1.msra.mxu0 %v4125
    %6945 = vmatprep.subr.mxu0 %v4118
    %6946 = vmatpush1.msra.mxu0 %v4117
    %6947 = vmatprep.subr.mxu0 %v4110
    %6948 = vmatpush1.msra.mxu0 %v4109
    %6949 = vmatprep.subr.mxu0 %v4102
    %6950 = vmatpush1.msra.mxu0 %v4101
    %6951 = vmatprep.subr.mxu0 %v4094
    %6952 = vmatpush1.msra.mxu0 %v4093
    %6953 = vmatprep.subr.mxu0 %v4086
    %6954 = vmatpush1.msra.mxu0 %v4085
    %6955 = vmatprep.subr.mxu0 %v4078
    %6956 = vmatpush1.msra.mxu0 %v4077
    %6957 = vmatprep.subr.mxu0 %v4070
    %6958 = vmatpush1.msra.mxu0 %v4069
    %6959 = vmatprep.subr.mxu0 %v4062
    %6960 = vmatpush1.msra.mxu0 %v4061
    %6961 = vmatprep.subr.mxu0 %v4054
    %6962 = vmatpush1.msra.mxu0 %v4053
    %6963 = vmatprep.subr.mxu0 %v4046
    %6964 = vmatpush1.msra.mxu0 %v4045
    %6965 = vmatprep.subr.mxu0 %v4038
    %6966 = vmatpush1.msra.mxu0 %v4037
    %6967 = vmatprep.subr.mxu0 %v4030
    %6968 = vmatpush1.msra.mxu0 %v4029
    %6969 = vmatprep.subr.mxu0 %v4022
    %6970 = vmatpush1.msra.mxu0 %v4021
    %6971 = vmatprep.subr.mxu0 %v4014
    %6972 = vmatpush1.msra.mxu0 %v4013
    %6973 = vmatprep.subr.mxu0 %v4262
    %6974 = vmatpush2.msra.mxu0 %v4261
    %6975 = vmatprep.subr.mxu0 %v4254
    %6976 = vmatpush2.msra.mxu0 %v4253
    %6977 = vmatprep.subr.mxu0 %v4246
    %6978 = vmatpush2.msra.mxu0 %v4245
    %6979 = vmatprep.subr.mxu0 %v4238
    %6980 = vmatpush2.msra.mxu0 %v4237
    %6981 = vmatprep.subr.mxu0 %v4230
    %6982 = vmatpush2.msra.mxu0 %v4229
    %6983 = vmatprep.subr.mxu0 %v4222
    %6984 = vmatpush2.msra.mxu0 %v4221
    %6985 = vmatprep.subr.mxu0 %v4214
    %6986 = vmatpush2.msra.mxu0 %v4213
    %6987 = vmatprep.subr.mxu0 %v4206
    %6988 = vmatpush2.msra.mxu0 %v4205
    %6989 = vmatprep.subr.mxu0 %v4198
    %6990 = vmatpush2.msra.mxu0 %v4197
    %6991 = vmatprep.subr.mxu0 %v4190
    %6992 = vmatpush2.msra.mxu0 %v4189
    %6993 = vmatprep.subr.mxu0 %v4182
    %6994 = vmatpush2.msra.mxu0 %v4181
    %6995 = vmatprep.subr.mxu0 %v4174
    %6996 = vmatpush2.msra.mxu0 %v4173
    %6997 = vmatprep.subr.mxu0 %v4166
    %6998 = vmatpush2.msra.mxu0 %v4165
    %6999 = vmatprep.subr.mxu0 %v4158
    %7000 = vmatpush2.msra.mxu0 %v4157
    %7001 = vmatprep.subr.mxu0 %v4150
    %7002 = vmatpush2.msra.mxu0 %v4149
    %7003 = vmatprep.subr.mxu0 %v4142
    %7004 = vmatpush2.msra.mxu0 %v4141
    %7005 = vmatprep.mubr.f32.mxu0 %v6716
    %7006 = vmatmul.mubr.f32.gmra.mxu0 %v6715
    %v7007 = vpop.f32.mrf.mxu0
    %v7008 = vadd.f32 0.0, %v7007
    %v7009 = vpop.f32.mrf.mxu0
    %v7010 = vadd.f32 0.0, %v7009
    %7011 = vdwg.mxu0
    %v7012 = vadd.f32 %v6720, %v6795
    %v7013 = vadd.f32 %v6721, %v6797
    %v7014 = vadd.f32 %v6722, %v6866
    %v7015 = vadd.f32 %v6723, %v6868
    %v7016 = vadd.f32 %v6724, %v6937
    %v7017 = vadd.f32 %v6725, %v6939
    %v7018 = vadd.f32 %v6726, %v7008
    %v7019 = vadd.f32 %v6727, %v7010
    %v7020 = vxor.u32 %v7012, 2147483648
    %v7021 = vxor.u32 %v7013, 2147483648
    %v7022 = vmul.f32 %v7020, 1.442695
    %v7023 = vpow.pop %v7022
    %v7024 = vmul.f32 %v7021, 1.442695
    %v7025 = vpow.pop %v7024
    %v7026 = vadd.f32 %v7023, 1.0
    %v7027 = vadd.f32 %v7025, 1.0
    %v7028 = vrcp.pop %v7026
    %v7029 = vmul.f32 1.0, %v7028
    %v7030 = vrcp.pop %v7027
    %v7031 = vmul.f32 1.0, %v7030
    %v7032 = vxor.u32 %v7014, 2147483648
    %v7033 = vxor.u32 %v7015, 2147483648
    %v7034 = vmul.f32 %v7032, 1.442695
    %v7035 = vpow.pop %v7034
    %v7036 = vmul.f32 %v7033, 1.442695
    %v7037 = vpow.pop %v7036
    %v7038 = vadd.f32 %v7035, 1.0
    %v7039 = vadd.f32 %v7037, 1.0
    %v7040 = vrcp.pop %v7038
    %v7041 = vmul.f32 1.0, %v7040
    %v7042 = vrcp.pop %v7039
    %v7043 = vmul.f32 1.0, %v7042
    %v7044 = vtanh.pop %v7016
    %v7045 = vtanh.pop %v7017
    %v7046 = vxor.u32 %v7018, 2147483648
    %v7047 = vxor.u32 %v7019, 2147483648
    %v7048 = vmul.f32 %v7046, 1.442695
    %v7049 = vpow.pop %v7048
    %v7050 = vmul.f32 %v7047, 1.442695
    %v7051 = vpow.pop %v7050
    %v7052 = vadd.f32 %v7049, 1.0
    %v7053 = vadd.f32 %v7051, 1.0
    %v7054 = vrcp.pop %v7052
    %v7055 = vmul.f32 1.0, %v7054
    %v7056 = vrcp.pop %v7053
    %v7057 = vmul.f32 1.0, %v7056
    %v7058 = vmul.f32 %v7041, %v6711
    %v7059 = vmul.f32 %v7043, %v6712
    %v7060 = vmul.f32 %v7029, %v7044
    %v7061 = vmul.f32 %v7031, %v7045
    %v7062 = vadd.f32 %v7058, %v7060
    %v7063 = vadd.f32 %v7059, %v7061
    %v7064 = vtanh.pop %v7062
    %v7065 = vtanh.pop %v7063
    %v7066 = vmul.f32 %v7055, %v7064
    %v7067 = vmul.f32 %v7057, %v7065
    %7068 = vst [vmem:[%s3174] sm:$0xff] %v7066
    %7069 = vst [vmem:[%s3174 + $0x8] sm:$0xff] %v7067
    %v7070 = vld [vmem:[#allocation2] sm:$0xff]
    %v7071 = vld [vmem:[#allocation2 + $0x8] sm:$0xff]
    %v7072 = vld [vmem:[#allocation2 + $0x10] sm:$0xff]
    %v7073 = vld [vmem:[#allocation2 + $0x18] sm:$0xff]
    %v7074 = vld [vmem:[#allocation2 + $0x20] sm:$0xff]
    %v7075 = vld [vmem:[#allocation2 + $0x28] sm:$0xff]
    %v7076 = vld [vmem:[#allocation2 + $0x30] sm:$0xff]
    %v7077 = vld [vmem:[#allocation2 + $0x38] sm:$0xff]
    %v7078 = vld [vmem:[#allocation2 + $0x40] sm:$0xff]
    %v7079 = vld [vmem:[#allocation2 + $0x48] sm:$0xff]
    %v7080 = vld [vmem:[#allocation2 + $0x50] sm:$0xff]
    %v7081 = vld [vmem:[#allocation2 + $0x58] sm:$0xff]
    %v7082 = vld [vmem:[#allocation2 + $0x60] sm:$0xff]
    %v7083 = vld [vmem:[#allocation2 + $0x68] sm:$0xff]
    %v7084 = vld [vmem:[#allocation2 + $0x70] sm:$0xff]
    %v7085 = vld [vmem:[#allocation2 + $0x78] sm:$0xff]
    %v7086 = vld [vmem:[#allocation13] sm:$0xff]
    %v7087 = vld [vmem:[#allocation13 + $0x8] sm:$0xff]
    %v7088 = vld [vmem:[#allocation13 + $0x10] sm:$0xff]
    %v7089 = vld [vmem:[#allocation13 + $0x18] sm:$0xff]
    %v7090 = vld [vmem:[#allocation13 + $0x20] sm:$0xff]
    %v7091 = vld [vmem:[#allocation13 + $0x28] sm:$0xff]
    %v7092 = vld [vmem:[#allocation13 + $0x30] sm:$0xff]
    %v7093 = vld [vmem:[#allocation13 + $0x38] sm:$0xff]
    %v7094 = vld [vmem:[#allocation13 + $0x40] sm:$0xff]
    %v7095 = vld [vmem:[#allocation13 + $0x48] sm:$0xff]
    %v7096 = vld [vmem:[#allocation13 + $0x50] sm:$0xff]
    %v7097 = vld [vmem:[#allocation13 + $0x58] sm:$0xff]
    %v7098 = vld [vmem:[#allocation13 + $0x60] sm:$0xff]
    %v7099 = vld [vmem:[#allocation13 + $0x68] sm:$0xff]
    %v7100 = vld [vmem:[#allocation13 + $0x70] sm:$0xff]
    %v7101 = vld [vmem:[#allocation13 + $0x78] sm:$0xff]
    %v7102 = vld [vmem:[#allocation13 + $0x80] sm:$0xff]
    %v7103 = vld [vmem:[#allocation13 + $0x88] sm:$0xff]
    %v7104 = vld [vmem:[#allocation13 + $0x90] sm:$0xff]
    %v7105 = vld [vmem:[#allocation13 + $0x98] sm:$0xff]
    %v7106 = vld [vmem:[#allocation13 + $0xa0] sm:$0xff]
    %v7107 = vld [vmem:[#allocation13 + $0xa8] sm:$0xff]
    %v7108 = vld [vmem:[#allocation13 + $0xb0] sm:$0xff]
    %v7109 = vld [vmem:[#allocation13 + $0xb8] sm:$0xff]
    %v7110 = vld [vmem:[#allocation13 + $0xc0] sm:$0xff]
    %v7111 = vld [vmem:[#allocation13 + $0xc8] sm:$0xff]
    %v7112 = vld [vmem:[#allocation13 + $0xd0] sm:$0xff]
    %v7113 = vld [vmem:[#allocation13 + $0xd8] sm:$0xff]
    %v7114 = vld [vmem:[#allocation13 + $0xe0] sm:$0xff]
    %v7115 = vld [vmem:[#allocation13 + $0xe8] sm:$0xff]
    %v7116 = vld [vmem:[#allocation13 + $0xf0] sm:$0xff]
    %v7117 = vld [vmem:[#allocation13 + $0xf8] sm:$0xff]
    %v7118 = vld [vmem:[%s6] sm:$0x1]
    %v7120 = vlaneseq
    %v7121 = vshrl.u32 %v7120, 7
    %v7122 = vsub.s32 0, %v7121
    %v7123 = vrot.slane %v7118, %v7122
    %7125 = vmatprep.subr.mxu0 0.0
    %7126 = vmatpush1.msra.mxu0 %v7101
    %7127 = vmatprep.subr.mxu0 0.0
    %7128 = vmatpush1.msra.mxu0 %v7100
    %7129 = vmatprep.subr.mxu0 0.0
    %7130 = vmatpush1.msra.mxu0 %v7099
    %7131 = vmatprep.subr.mxu0 0.0
    %7132 = vmatpush1.msra.mxu0 %v7098
    %7133 = vmatprep.subr.mxu0 0.0
    %7134 = vmatpush1.msra.mxu0 %v7097
    %7135 = vmatprep.subr.mxu0 0.0
    %7136 = vmatpush1.msra.mxu0 %v7096
    %7137 = vmatprep.subr.mxu0 0.0
    %7138 = vmatpush1.msra.mxu0 %v7095
    %7139 = vmatprep.subr.mxu0 0.0
    %7140 = vmatpush1.msra.mxu0 %v7094
    %7141 = vmatprep.subr.mxu0 0.0
    %7142 = vmatpush1.msra.mxu0 %v7093
    %7143 = vmatprep.subr.mxu0 0.0
    %7144 = vmatpush1.msra.mxu0 %v7092
    %7145 = vmatprep.subr.mxu0 0.0
    %7146 = vmatpush1.msra.mxu0 %v7091
    %7147 = vmatprep.subr.mxu0 0.0
    %7148 = vmatpush1.msra.mxu0 %v7090
    %7149 = vmatprep.subr.mxu0 0.0
    %7150 = vmatpush1.msra.mxu0 %v7089
    %7151 = vmatprep.subr.mxu0 0.0
    %7152 = vmatpush1.msra.mxu0 %v7088
    %7153 = vmatprep.subr.mxu0 0.0
    %7154 = vmatpush1.msra.mxu0 %v7087
    %7155 = vmatprep.subr.mxu0 0.0
    %7156 = vmatpush1.msra.mxu0 %v7086
    %7157 = vmatprep.subr.mxu0 0.0
    %7158 = vmatpush2.msra.mxu0 %v7117
    %7159 = vmatprep.subr.mxu0 0.0
    %7160 = vmatpush2.msra.mxu0 %v7116
    %7161 = vmatprep.subr.mxu0 0.0
    %7162 = vmatpush2.msra.mxu0 %v7115
    %7163 = vmatprep.subr.mxu0 0.0
    %7164 = vmatpush2.msra.mxu0 %v7114
    %7165 = vmatprep.subr.mxu0 0.0
    %7166 = vmatpush2.msra.mxu0 %v7113
    %7167 = vmatprep.subr.mxu0 0.0
    %7168 = vmatpush2.msra.mxu0 %v7112
    %7169 = vmatprep.subr.mxu0 0.0
    %7170 = vmatpush2.msra.mxu0 %v7111
    %7171 = vmatprep.subr.mxu0 0.0
    %7172 = vmatpush2.msra.mxu0 %v7110
    %7173 = vmatprep.subr.mxu0 0.0
    %7174 = vmatpush2.msra.mxu0 %v7109
    %7175 = vmatprep.subr.mxu0 0.0
    %7176 = vmatpush2.msra.mxu0 %v7108
    %7177 = vmatprep.subr.mxu0 0.0
    %7178 = vmatpush2.msra.mxu0 %v7107
    %7179 = vmatprep.subr.mxu0 0.0
    %7180 = vmatpush2.msra.mxu0 %v7106
    %7181 = vmatprep.subr.mxu0 0.0
    %7182 = vmatpush2.msra.mxu0 %v7105
    %7183 = vmatprep.subr.mxu0 0.0
    %7184 = vmatpush2.msra.mxu0 %v7104
    %7185 = vmatprep.subr.mxu0 0.0
    %7186 = vmatpush2.msra.mxu0 %v7103
    %7187 = vmatprep.subr.mxu0 0.0
    %7188 = vmatpush2.msra.mxu0 %v7102
    %7189 = vmatprep.mubr.f32.mxu0 %v7071
    %7190 = vmatmul.mubr.f32.gmra.mxu0 %v7070
    %v7191 = vpop.f32.mrf.mxu0
    %v7192 = vadd.f32 %v7123, %v7191
    %v7193 = vpop.f32.mrf.mxu0
    %7194 = vmatprep.mubr.f32.mxu0 %v7073
    %7195 = vmatmul.mubr.f32.gmra.mxu0 %v7072
    %v7196 = vpop.f32.mrf.mxu0
    %v7197 = vadd.f32 %v7123, %v7196
    %v7198 = vpop.f32.mrf.mxu0
    %7199 = vmatprep.mubr.f32.mxu0 %v7075
    %7200 = vmatmul.mubr.f32.gmra.mxu0 %v7074
    %v7201 = vpop.f32.mrf.mxu0
    %v7202 = vadd.f32 %v7123, %v7201
    %v7203 = vpop.f32.mrf.mxu0
    %7204 = vmatprep.mubr.f32.mxu0 %v7077
    %7205 = vmatmul.mubr.f32.gmra.mxu0 %v7076
    %v7206 = vpop.f32.mrf.mxu0
    %v7207 = vadd.f32 %v7123, %v7206
    %v7208 = vpop.f32.mrf.mxu0
    %7209 = vmatprep.mubr.f32.mxu0 %v7079
    %7210 = vmatmul.mubr.f32.gmra.mxu0 %v7078
    %v7211 = vpop.f32.mrf.mxu0
    %v7212 = vadd.f32 %v7123, %v7211
    %v7213 = vpop.f32.mrf.mxu0
    %7214 = vmatprep.mubr.f32.mxu0 %v7081
    %7215 = vmatmul.mubr.f32.gmra.mxu0 %v7080
    %v7216 = vpop.f32.mrf.mxu0
    %v7217 = vadd.f32 %v7123, %v7216
    %v7218 = vpop.f32.mrf.mxu0
    %7219 = vmatprep.mubr.f32.mxu0 %v7083
    %7220 = vmatmul.mubr.f32.gmra.mxu0 %v7082
    %v7221 = vpop.f32.mrf.mxu0
    %v7222 = vadd.f32 %v7123, %v7221
    %v7223 = vpop.f32.mrf.mxu0
    %7224 = vmatprep.mubr.f32.mxu0 %v7085
    %7225 = vmatmul.mubr.f32.gmra.mxu0 %v7084
    %v7226 = vpop.f32.mrf.mxu0
    %v7227 = vadd.f32 %v7123, %v7226
    %v7228 = vpop.f32.mrf.mxu0
    %7229 = vdwg.mxu0
    %7230 = vst [vmem:[#allocation15] sm:$0xff] %v7192
    %7231 = vst [vmem:[#allocation15 + $0x8] sm:$0xff] %v7197
    %7232 = vst [vmem:[#allocation15 + $0x10] sm:$0xff] %v7202
    %7233 = vst [vmem:[#allocation15 + $0x18] sm:$0xff] %v7207
    %7234 = vst [vmem:[#allocation15 + $0x20] sm:$0xff] %v7212
    %7235 = vst [vmem:[#allocation15 + $0x28] sm:$0xff] %v7217
    %7236 = vst [vmem:[#allocation15 + $0x30] sm:$0xff] %v7222
    %7237 = vst [vmem:[#allocation15 + $0x38] sm:$0xff] %v7227
    // Predicated region
    $region54: #{tpu_custom_call.1} parent=1 // pred_check
      _
    $region55: #{tpu_custom_call.1} parent=1 // pred_check_branch
      %7239 = sbr.rel (0) target = $region57
    $region56: #{tpu_custom_call.1} parent=1 // pred_region
      %s7241 = ssub.s32 1024, 1024
      %7242 = vsyncadd [#allocation6], %s7241
      %s7243 = sshll.u32 [#allocation15], 4
      %s7244 = int_to_ptr.vmem [resolvable:$true] %s7243
      %7249 = dma.vmem_to_hbm [thread:$0]  %s7244, 1024, %s7, [#allocation6], 128, 128, 8
    $region57: #{tpu_custom_call.1} parent=1 // pred_fallthru
      _
    // Predicated region
    $region58: #{tpu_custom_call.1} parent=1 // pred_check
      _
    $region59: #{tpu_custom_call.1} parent=1 // pred_check_branch
      %7251 = sbr.rel (0) target = $region61
    $region60: #{tpu_custom_call.1} parent=1 // pred_region
      %7252 = dma.done [#allocation6], 1024
    $region61: #{tpu_custom_call.1} parent=1 // pred_fallthru
      _
    %7253 = vsyncpa [#allocation5], 1
    %7254 = vsyncpa [#allocation8], 1
    %7255 = vsyncpa [#allocation11], 1
    %7256 = vsyncpa [#allocation14], 1
    %7257 = vsyncpa [#allocation6], 1

</llo_original>
